<compile_context>
chip_gen: v7x
topology: tpu7x:2x2x1
jax: 0.10.0
libtpu: 0.0.40
codegen_flags: <defaults>
</compile_context>

<pallas_src>
import jax
import jax.numpy as jnp
from jax import lax
from jax.experimental import pallas as pl
from jax.experimental.pallas import tpu as pltpu

TEMPERATURE = 50.0
EPS = 1e-8


def _dense_cl_kernel(img_ref, pos_ref, neg_ref, invp_ref, out_ref,
                     m_ref, best_ref, sneg_ref):
    # img_ref : (D, tq)  query tile, native dtype
    # pos_ref : (D, tk)  positive key tile, native dtype
    # neg_ref : (D, tk)  negative key tile, native dtype
    # invp_ref: (1, tk)  f32, precomputed 1 / max(||pos_j||, EPS)
    # out_ref : (8, 128) per-(batch, query-tile) partial-sum slab
    # m_ref, best_ref, sneg_ref: (tq, 1) f32 running stats across key tiles
    k_idx = pl.program_id(2)
    inv_t = jnp.float32(1.0 / TEMPERATURE)

    @pl.when(k_idx == 0)
    def _():
        m_ref[...] = jnp.full_like(m_ref, -jnp.inf)
        best_ref[...] = jnp.zeros_like(best_ref)
        sneg_ref[...] = jnp.zeros_like(sneg_ref)

    img = img_ref[...]                                   # (D, tq), native dtype
    dn = (((0,), (0,)), ((), ()))                        # contract over D

    # --- negatives: streamed softmax denominator. Consumed immediately so the
    #     (tq, tk) temporaries die before the positive path starts (reduces
    #     live vregs / spill traffic). 1/T is applied to the small f32 gram.
    gram_neg = lax.dot_general(img, neg_ref[...], dn,
                               preferred_element_type=jnp.float32) * inv_t
    sneg_ref[...] += jnp.sum(jnp.exp(gram_neg), axis=-1, keepdims=True)

    # --- positives: streamed argmax of the cosine similarity. The per-query
    #     norm and the uniform 1/T scale cannot change the argmax over key
    #     columns, so only the precomputed per-positive inverse norm is used.
    gram_pos = lax.dot_general(img, pos_ref[...], dn,
                               preferred_element_type=jnp.float32)    # (tq, tk)
    cos = gram_pos * invp_ref[...]                                    # (tq, tk)
    tile_max = jnp.max(cos, axis=-1, keepdims=True)                   # (tq, 1)
    # Gather the raw dot at the tile argmax via a max-based select (no int32
    # iota / min-index / one-hot passes). Tie-break among *exactly* equal
    # cosines becomes "largest raw dot" instead of "first index"; only
    # relevant for duplicate/degenerate positive columns.
    tile_dot = jnp.max(jnp.where(cos == tile_max, gram_pos, -jnp.inf),
                       axis=-1, keepdims=True)                        # (tq, 1)
    is_new = tile_max > m_ref[...]   # strict ">" keeps the earlier key tile on ties
    best_ref[...] = jnp.where(is_new, tile_dot, best_ref[...])
    m_ref[...] = jnp.maximum(m_ref[...], tile_max)

    # --- finalize: write this (batch, query-tile) partial sum exactly once.
    @pl.when(k_idx == pl.num_programs(2) - 1)
    def _():
        dot_pos = best_ref[...] * inv_t                               # (tq, 1)
        # -log(exp_pos / (exp_pos + sum_neg)) == log(exp_pos + sum_neg) - dot/T.
        # No max-subtraction, matching the PyTorch reference's behavior for
        # very large activations.
        loss_i = jnp.log(jnp.exp(dot_pos) + sneg_ref[...]) - dot_pos  # (tq, 1)
        out_ref[...] = jnp.zeros_like(out_ref) + jnp.sum(loss_i)


def _vmem_budget_bytes():
    """Per-generation VMEM limit: physical capacity minus headroom for Mosaic
    internal scratch / semaphores (~112 MiB on v5e/v6e, ~48 MiB on v7x).
    Falls back to a v7x-safe 48 MiB if the hardware query is unavailable."""
    try:
        cap = int(pltpu.get_tpu_info().vmem_capacity_bytes)
    except Exception:
        cap = 64 * 1024 * 1024
    return max(cap - 16 * 1024 * 1024, 32 * 1024 * 1024)


def _choose_tiles(D, S, itemsize, vmem_budget):
    """Pick (tq, tk) so operand tiles + (tq, tk) intermediates stay well under
    the VMEM budget (larger tiles on v5e/v6e's 128 MiB, smaller on v7x's
    64 MiB). Falls back to full-extent blocks when S is not lane-aligned."""
    if S % 128 != 0:
        # TODO(synk): validate the lane-padded full-extent fallback for odd S
        # (S % 128 != 0) with interpret mode before relying on it at scale.
        return S, S
    for tq in (512, 256, 128):
        if S % tq:
            continue
        for tk in (512, 256, 128):
            if S % tk:
                continue
            est = (2 * D * tq * itemsize        # query tile (double-buffered)
                   + 4 * D * tk * itemsize      # pos + neg tiles (double-buffered)
                   + 2 * 8 * tk * 4             # inv_p tile (sublane-padded, dbl-buf)
                   + 6 * tq * tk * 4            # live (tq, tk) f32 intermediates
                   + 3 * tq * 128 * 4           # (tq, 1) scratches (lane-padded)
                   + 2 * 8 * 128 * 4)           # output slab
            if est * 2 <= vmem_budget:          # keep >= 2x headroom for spills
                return tq, tk
    return 128, 128


def dense_contrastive_loss(dense_img, dense_pos, dense_neg):
    assert dense_img.shape == dense_pos.shape == dense_neg.shape, \
        "input shapes should be the same"
    B, D = dense_img.shape[0], dense_img.shape[1]
    S = 1
    for d in dense_img.shape[2:]:
        S *= d

    # Keep the caller's dtype (bf16 stays bf16 -> fast MXU path and half the
    # HBM traffic); all f32 math happens on small per-tile intermediates.
    img = dense_img.reshape(B, D, S)
    pos = dense_pos.reshape(B, D, S)
    neg = dense_neg.reshape(B, D, S)

    # Per-positive inverse norms, hoisted fully out of the kernel: each key
    # column's norm is computed exactly once (the old kernel recomputed all S
    # norms on every query-tile step). Computing it here (rather than in a
    # q==0-gated scratch) keeps the query-tile grid axis "parallel" for v7x
    # megacore; the cost is one small rsqrt-reduction producing B*S floats.
    pos32 = pos.astype(jnp.float32)
    inv_p = lax.rsqrt(jnp.maximum(jnp.sum(pos32 * pos32, axis=1, keepdims=True),
                                  jnp.float32(EPS * EPS)))             # (B, 1, S)

    vmem_limit = _vmem_budget_bytes()
    tq, tk = _choose_tiles(D, S, jnp.dtype(img.dtype).itemsize, vmem_limit)
    n_q, n_k = S // tq, S // tk

    partial = pl.pallas_call(
        _dense_cl_kernel,
        out_shape=jax.ShapeDtypeStruct((B, n_q, 8, 128), jnp.float32),
        grid=(B, n_q, n_k),
        in_specs=[
            pl.BlockSpec((None, D, tq), lambda b, q, k: (b, 0, q)),   # queries
            pl.BlockSpec((None, D, tk), lambda b, q, k: (b, 0, k)),   # positives
            pl.BlockSpec((None, D, tk), lambda b, q, k: (b, 0, k)),   # negatives
            pl.BlockSpec((None, 1, tk), lambda b, q, k: (b, 0, k)),   # 1/||pos||
        ],
        out_specs=pl.BlockSpec((None, None, 8, 128),
                               lambda b, q, k: (b, q, 0, 0)),
        scratch_shapes=[
            pltpu.VMEM((tq, 1), jnp.float32),   # running max cosine
            pltpu.VMEM((tq, 1), jnp.float32),   # raw dot at the running argmax
            pltpu.VMEM((tq, 1), jnp.float32),   # running sum of exp(q.n / T)
        ],
        compiler_params=pltpu.CompilerParams(
            # Batch and query-tile axes are embarrassingly parallel (each owns
            # a distinct output block), so B=1 still fills both v7x cores; the
            # key-tile axis carries the streamed reduction.
            dimension_semantics=("parallel", "parallel", "arbitrary"),
            vmem_limit_bytes=vmem_limit,
        ),
    )(img, pos, neg, inv_p)

    # mean over batch of (per-batch loss_sum / S) == total / (S * B)
    return jnp.sum(partial[:, :, 0, 0]) / float(S * B)


def reference_loss(dense_img, dense_pos, dense_neg):
    """Vectorized plain-JAX translation of the PyTorch forward (validation)."""
    B, D = dense_img.shape[0], dense_img.shape[1]
    S = 1
    for d in dense_img.shape[2:]:
        S *= d
    img = dense_img.reshape(B, D, S).astype(jnp.float32)
    pos = dense_pos.reshape(B, D, S).astype(jnp.float32)
    neg = dense_neg.reshape(B, D, S).astype(jnp.float32)
    T = TEMPERATURE
    qn = jnp.sqrt(jnp.sum(img * img, axis=1))                     # (B, S)
    pn = jnp.sqrt(jnp.sum(pos * pos, axis=1))                     # (B, S)
    gram_pp = jnp.einsum("bdq,bdk->bqk", img, pos)                # (B, S, S)
    dist = gram_pp / (jnp.maximum(qn, EPS)[:, :, None] *
                      jnp.maximum(pn, EPS)[:, None, :])
    max_i = jnp.argmax(dist, axis=2)                              # (B, S)
    dot_pos = jnp.take_along_axis(gram_pp, max_i[:, :, None],
                                  axis=2)[..., 0]                 # (B, S)
    exp_pos = jnp.exp(dot_pos / T)
    gram_nn = jnp.einsum("bdq,bdk->bqk", img, neg)                # (B, S, S)
    sum_neg = jnp.sum(jnp.exp(gram_nn / T), axis=2)               # (B, S)
    loss = -jnp.log(exp_pos / (exp_pos + sum_neg))                # (B, S)
    # sum_i then mean over batch of (loss_sum / S) == mean over (b, i)
    return jnp.mean(loss)


if __name__ == "__main__":
    key = jax.random.PRNGKey(0)
    k1, k2, k3 = jax.random.split(key, 3)
    B, D, H, W = 2, 32, 32, 32        # S = 1024 -> grid (2, 2, 2) with 512 tiles
    dense_img = jax.random.normal(k1, (B, D, H, W), dtype=jnp.float32)
    dense_pos = jax.random.normal(k2, (B, D, H, W), dtype=jnp.float32)
    dense_neg = jax.random.normal(k3, (B, D, H, W), dtype=jnp.float32)

    out = dense_contrastive_loss(dense_img, dense_pos, dense_neg)
    out = jax.block_until_ready(out)

    ref = reference_loss(dense_img, dense_pos, dense_neg)
    ref = jax.block_until_ready(ref)

    assert jnp.isfinite(out), "kernel produced non-finite loss"
    assert jnp.allclose(out, ref, rtol=1e-4, atol=1e-4), (out, ref)
    print("KERNEL_OK")
</pallas_src>

<mosaic_0001>
module attributes {stable_mosaic.version = 11 : i64} {
  func.func @_dense_cl_kernel(%arg0: i32, %arg1: i32, %arg2: i32, %arg3: memref<1x32x512xf32, #tpu.memory_space<vmem>>, %arg4: memref<1x32x512xf32, #tpu.memory_space<vmem>>, %arg5: memref<1x32x512xf32, #tpu.memory_space<vmem>>, %arg6: memref<1x1x512xf32, #tpu.memory_space<vmem>>, %arg7: memref<1x1x8x128xf32, #tpu.memory_space<vmem>>, %arg8: memref<512x1xf32, #tpu.memory_space<vmem>>, %arg9: memref<512x1xf32, #tpu.memory_space<vmem>>, %arg10: memref<512x1xf32, #tpu.memory_space<vmem>>) attributes {dimension_semantics = [#tpu.dimension_semantics<parallel>, #tpu.dimension_semantics<parallel>, #tpu.dimension_semantics<arbitrary>], iteration_bounds = array<i64: 2, 2, 2>, scalar_prefetch = 0 : i64, scratch_operands = 3 : i64, tpu.core_type = #tpu.core_type<tc>, window_params = [{transform_indices = @transform_0, window_bounds = array<i64: 1, 32, 512>}, {transform_indices = @transform_1, window_bounds = array<i64: 1, 32, 512>}, {transform_indices = @transform_2, window_bounds = array<i64: 1, 32, 512>}, {transform_indices = @transform_3, window_bounds = array<i64: 1, 1, 512>}, {transform_indices = @transform_4, window_bounds = array<i64: 1, 1, 8, 128>}]} {
    %c0_i32 = arith.constant 0 : i32
    %0 = arith.cmpi eq, %arg2, %c0_i32 : i32
    %1 = arith.extui %0 : i1 to i32
    %c0_i32_0 = arith.constant 0 : i32
    %2 = arith.cmpi ne, %1, %c0_i32_0 : i32
    scf.if %2 {
      %cst_34 = arith.constant 0xFF800000 : f32
      %42 = vector.broadcast %cst_34 : f32 to vector<512x1xf32>
      %c0_35 = arith.constant 0 : index
      %c0_36 = arith.constant 0 : index
      %43 = vector.load %arg8[%c0_35, %c0_36] : memref<512x1xf32, #tpu.memory_space<vmem>>, vector<512x1xf32>
      tpu.vector_store %arg8[%c0_35, %c0_36], %42 {strides = array<i32>} : memref<512x1xf32, #tpu.memory_space<vmem>>, vector<512x1xf32>,
      %cst_37 = arith.constant 0.000000e+00 : f32
      %44 = vector.broadcast %cst_37 : f32 to vector<512x1xf32>
      %c0_38 = arith.constant 0 : index
      %c0_39 = arith.constant 0 : index
      %45 = vector.load %arg9[%c0_38, %c0_39] : memref<512x1xf32, #tpu.memory_space<vmem>>, vector<512x1xf32>
      tpu.vector_store %arg9[%c0_38, %c0_39], %44 {strides = array<i32>} : memref<512x1xf32, #tpu.memory_space<vmem>>, vector<512x1xf32>,
      %cst_40 = arith.constant 0.000000e+00 : f32
      %46 = vector.broadcast %cst_40 : f32 to vector<512x1xf32>
      %c0_41 = arith.constant 0 : index
      %c0_42 = arith.constant 0 : index
      %47 = vector.load %arg10[%c0_41, %c0_42] : memref<512x1xf32, #tpu.memory_space<vmem>>, vector<512x1xf32>
      tpu.vector_store %arg10[%c0_41, %c0_42], %46 {strides = array<i32>} : memref<512x1xf32, #tpu.memory_space<vmem>>, vector<512x1xf32>,
    } else {
    }
    %c0 = arith.constant 0 : index
    %c0_1 = arith.constant 0 : index
    %c0_2 = arith.constant 0 : index
    %3 = vector.load %arg3[%c0, %c0_1, %c0_2] : memref<1x32x512xf32, #tpu.memory_space<vmem>>, vector<1x32x512xf32>
    %4 = vector.shape_cast %3 : vector<1x32x512xf32> to vector<32x512xf32>
    %c0_3 = arith.constant 0 : index
    %c0_4 = arith.constant 0 : index
    %c0_5 = arith.constant 0 : index
    %5 = vector.load %arg5[%c0_3, %c0_4, %c0_5] : memref<1x32x512xf32, #tpu.memory_space<vmem>>, vector<1x32x512xf32>
    %6 = vector.shape_cast %5 : vector<1x32x512xf32> to vector<32x512xf32>
    %cst = arith.constant dense<0.000000e+00> : vector<512x512xf32>
    %7 = tpu.matmul %4, %6, %cst {dimension_numbers = #tpu.dot_dimension_numbers<[0], [0], [1], [1], [0, 1, 1, 1], [], []>} : vector<32x512xf32>, vector<32x512xf32>, vector<512x512xf32> -> vector<512x512xf32>
    %cst_6 = arith.constant 2.000000e-02 : f32
    %8 = vector.broadcast %cst_6 : f32 to vector<512x512xf32>
    %9 = arith.mulf %7, %8 : vector<512x512xf32>
    %c0_7 = arith.constant 0 : index
    %c0_8 = arith.constant 0 : index
    %10 = vector.load %arg10[%c0_7, %c0_8] : memref<512x1xf32, #tpu.memory_space<vmem>>, vector<512x1xf32>
    %11 = math.exp %9 : vector<512x512xf32>
    %cst_9 = arith.constant dense<0.000000e+00> : vector<512xf32>
    %12 = vector.multi_reduction <add>, %11, %cst_9 [1] : vector<512x512xf32> to vector<512xf32>
    %13 = vector.shape_cast %12 : vector<512xf32> to vector<512x1xf32>
    %14 = arith.addf %10, %13 : vector<512x1xf32>
    %c0_10 = arith.constant 0 : index
    %c0_11 = arith.constant 0 : index
    %15 = vector.load %arg10[%c0_10, %c0_11] : memref<512x1xf32, #tpu.memory_space<vmem>>, vector<512x1xf32>
    tpu.vector_store %arg10[%c0_10, %c0_11], %14 {strides = array<i32>} : memref<512x1xf32, #tpu.memory_space<vmem>>, vector<512x1xf32>,
    %c0_12 = arith.constant 0 : index
    %c0_13 = arith.constant 0 : index
    %c0_14 = arith.constant 0 : index
    %16 = vector.load %arg4[%c0_12, %c0_13, %c0_14] : memref<1x32x512xf32, #tpu.memory_space<vmem>>, vector<1x32x512xf32>
    %17 = vector.shape_cast %16 : vector<1x32x512xf32> to vector<32x512xf32>
    %cst_15 = arith.constant dense<0.000000e+00> : vector<512x512xf32>
    %18 = tpu.matmul %4, %17, %cst_15 {dimension_numbers = #tpu.dot_dimension_numbers<[0], [0], [1], [1], [0, 1, 1, 1], [], []>} : vector<32x512xf32>, vector<32x512xf32>, vector<512x512xf32> -> vector<512x512xf32>
    %c0_16 = arith.constant 0 : index
    %c0_17 = arith.constant 0 : index
    %c0_18 = arith.constant 0 : index
    %19 = vector.load %arg6[%c0_16, %c0_17, %c0_18] : memref<1x1x512xf32, #tpu.memory_space<vmem>>, vector<1x1x512xf32>
    %20 = vector.shape_cast %19 : vector<1x1x512xf32> to vector<1x512xf32>
    %21 = vector.broadcast %20 : vector<1x512xf32> to vector<512x512xf32>
    %22 = arith.mulf %18, %21 : vector<512x512xf32>
    %cst_19 = arith.constant dense<0xFF800000> : vector<512xf32>
    %23 = vector.multi_reduction <maximumf>, %22, %cst_19 [1] : vector<512x512xf32> to vector<512xf32>
    %24 = vector.shape_cast %23 : vector<512xf32> to vector<512x1xf32>
    %25 = vector.broadcast %24 : vector<512x1xf32> to vector<512x512xf32>
    %26 = arith.cmpf oeq, %22, %25 : vector<512x512xf32>
    %cst_20 = arith.constant 0xFF800000 : f32
    %27 = vector.broadcast %cst_20 : f32 to vector<512x512xf32>
    %28 = arith.select %26, %18, %27 : vector<512x512xi1>, vector<512x512xf32>
    %cst_21 = arith.constant dense<0xFF800000> : vector<512xf32>
    %29 = vector.multi_reduction <maximumf>, %28, %cst_21 [1] : vector<512x512xf32> to vector<512xf32>
    %30 = vector.shape_cast %29 : vector<512xf32> to vector<512x1xf32>
    %c0_22 = arith.constant 0 : index
    %c0_23 = arith.constant 0 : index
    %31 = vector.load %arg8[%c0_22, %c0_23] : memref<512x1xf32, #tpu.memory_space<vmem>>, vector<512x1xf32>
    %32 = arith.cmpf ogt, %24, %31 : vector<512x1xf32>
    %c0_24 = arith.constant 0 : index
    %c0_25 = arith.constant 0 : index
    %33 = vector.load %arg9[%c0_24, %c0_25] : memref<512x1xf32, #tpu.memory_space<vmem>>, vector<512x1xf32>
    %34 = arith.select %32, %30, %33 : vector<512x1xi1>, vector<512x1xf32>
    %c0_26 = arith.constant 0 : index
    %c0_27 = arith.constant 0 : index
    %35 = vector.load %arg9[%c0_26, %c0_27] : memref<512x1xf32, #tpu.memory_space<vmem>>, vector<512x1xf32>
    tpu.vector_store %arg9[%c0_26, %c0_27], %34 {strides = array<i32>} : memref<512x1xf32, #tpu.memory_space<vmem>>, vector<512x1xf32>,
    %c0_28 = arith.constant 0 : index
    %c0_29 = arith.constant 0 : index
    %36 = vector.load %arg8[%c0_28, %c0_29] : memref<512x1xf32, #tpu.memory_space<vmem>>, vector<512x1xf32>
    %37 = arith.maximumf %36, %24 : vector<512x1xf32>
    %c0_30 = arith.constant 0 : index
    %c0_31 = arith.constant 0 : index
    %38 = vector.load %arg8[%c0_30, %c0_31] : memref<512x1xf32, #tpu.memory_space<vmem>>, vector<512x1xf32>
    tpu.vector_store %arg8[%c0_30, %c0_31], %37 {strides = array<i32>} : memref<512x1xf32, #tpu.memory_space<vmem>>, vector<512x1xf32>,
    %c1_i32 = arith.constant 1 : i32
    %39 = arith.cmpi eq, %arg2, %c1_i32 : i32
    %40 = arith.extui %39 : i1 to i32
    %cst_32 = arith.constant 2.000000e-02 : f32
    %c0_i32_33 = arith.constant 0 : i32
    %41 = arith.cmpi ne, %40, %c0_i32_33 : i32
    scf.if %41 {
      %c0_34 = arith.constant 0 : index
      %c0_35 = arith.constant 0 : index
      %42 = vector.load %arg9[%c0_34, %c0_35] : memref<512x1xf32, #tpu.memory_space<vmem>>, vector<512x1xf32>
      %43 = vector.broadcast %cst_32 : f32 to vector<512x1xf32>
      %44 = arith.mulf %42, %43 : vector<512x1xf32>
      %45 = math.exp %44 : vector<512x1xf32>
      %c0_36 = arith.constant 0 : index
      %c0_37 = arith.constant 0 : index
      %46 = vector.load %arg10[%c0_36, %c0_37] : memref<512x1xf32, #tpu.memory_space<vmem>>, vector<512x1xf32>
      %47 = arith.addf %45, %46 : vector<512x1xf32>
      %48 = math.log %47 : vector<512x1xf32>
      %49 = arith.subf %48, %44 : vector<512x1xf32>
      %cst_38 = arith.constant 0.000000e+00 : f32
      %50 = vector.broadcast %cst_38 : f32 to vector<8x128xf32>
      %51 = vector.shape_cast %49 : vector<512x1xf32> to vector<1x512x1xf32>
      %cst_39 = arith.constant dense<0.000000e+00> : vector<1xf32>
      %52 = vector.multi_reduction <add>, %51, %cst_39 [1, 2] : vector<1x512x1xf32> to vector<1xf32>
      %53 = vector.shape_cast %52 : vector<1xf32> to vector<1x1x1xf32>
      %54 = vector.extract %53[0, 0, 0] : f32 from vector<1x1x1xf32>
      %55 = vector.broadcast %54 : f32 to vector<8x128xf32>
      %56 = arith.addf %50, %55 : vector<8x128xf32>
      %c0_40 = arith.constant 0 : index
      %c0_41 = arith.constant 0 : index
      %c0_42 = arith.constant 0 : index
      %c0_43 = arith.constant 0 : index
      %57 = vector.load %arg7[%c0_40, %c0_41, %c0_42, %c0_43] : memref<1x1x8x128xf32, #tpu.memory_space<vmem>>, vector<1x1x8x128xf32>
      %58 = vector.shape_cast %57 : vector<1x1x8x128xf32> to vector<8x128xf32>
      %59 = vector.shape_cast %56 : vector<8x128xf32> to vector<1x1x8x128xf32>
      tpu.vector_store %arg7[%c0_40, %c0_41, %c0_42, %c0_43], %59 {strides = array<i32>} : memref<1x1x8x128xf32, #tpu.memory_space<vmem>>, vector<1x1x8x128xf32>,
    } else {
    }
    return
  }
  func.func @transform_0(%arg0: i32, %arg1: i32, %arg2: i32) -> (i32, i32, i32) {
    %c0_i32 = arith.constant 0 : i32
    %c0_i32_0 = arith.constant 0 : i32
    return %arg0, %c0_i32, %arg1 : i32, i32, i32
  }
  func.func @transform_1(%arg0: i32, %arg1: i32, %arg2: i32) -> (i32, i32, i32) {
    %c0_i32 = arith.constant 0 : i32
    %c0_i32_0 = arith.constant 0 : i32
    return %arg0, %c0_i32, %arg2 : i32, i32, i32
  }
  func.func @transform_2(%arg0: i32, %arg1: i32, %arg2: i32) -> (i32, i32, i32) {
    %c0_i32 = arith.constant 0 : i32
    %c0_i32_0 = arith.constant 0 : i32
    return %arg0, %c0_i32, %arg2 : i32, i32, i32
  }
  func.func @transform_3(%arg0: i32, %arg1: i32, %arg2: i32) -> (i32, i32, i32) {
    %c0_i32 = arith.constant 0 : i32
    %c0_i32_0 = arith.constant 0 : i32
    return %arg0, %c0_i32, %arg2 : i32, i32, i32
  }
  func.func @transform_4(%arg0: i32, %arg1: i32, %arg2: i32) -> (i32, i32, i32, i32) {
    %c0_i32 = arith.constant 0 : i32
    %c0_i32_0 = arith.constant 0 : i32
    %c0_i32_1 = arith.constant 0 : i32
    return %arg0, %arg1, %c0_i32, %c0_i32_0 : i32, i32, i32, i32
  }
}

</mosaic_0001>

<llo_original>
// kernel: tpu_custom_call.1
$region0: #{tpu_custom_call.1}
  #allocation0 [shape = 'u32[]', space=smem, size = 0x4, offset = 0x4, fixed_abs, tag = 'smem constant byte address 0x4 - core index']
  #allocation1 [shape = 'u32[144,128]{1,0:T(1,128)}', space=vmem, size = 0x12000, scoped, tag = 'internal scratch']
  #allocation2 [shape = 'f32[512,1]{1,0:T(8,128)}', space=vmem, size = 0x40000, scoped, tag = 'scratch operand']
  #allocation3 [shape = 'f32[512,1]{1,0:T(8,128)}', space=vmem, size = 0x40000, scoped, tag = 'scratch operand']
  #allocation4 [shape = 'f32[512,1]{1,0:T(8,128)}', space=vmem, size = 0x40000, scoped, tag = 'scratch operand']
  %s0 = inlined_call_operand.hbm [shape: f32[2,32,1024], index: 0, kind: input, shape index: {}]
  %s1 = inlined_call_operand.hbm [shape: f32[2,32,1024], index: 1, kind: input, shape index: {}]
  %s2 = inlined_call_operand.hbm [shape: f32[2,32,1024], index: 2, kind: input, shape index: {}]
  %s3 = inlined_call_operand.hbm [shape: f32[2,1,1024], index: 3, kind: input, shape index: {}]
  %s4 = inlined_call_operand.hbm [shape: f32[2,2,8,128], index: 4, kind: output, shape index: {}]
  %s5 = sld [smem:[#allocation0]]
  $region73: #{tpu_custom_call.1} parent=0
    _
  %s7 = ssub.s32 1, %s5
  %s8 = scalar_select 0, %s7, %s5
  $region1: #{tpu_custom_call.1} parent=0
    #allocation5 [shape = 'u8[131072]{0}', space=vmem, size = 0x20000, scoped, tag = 'input window, operand 0']
    #allocation6 [shape = 's32[2]{0}', space=sflag, size = 0x8, scoped, tag = 'scoped memory for tpu_custom_call.1']
    #allocation7 [shape = 's32[2]{0}', space=sflag, size = 0x8, scoped, tag = 'scoped memory for tpu_custom_call.1']
    #allocation8 [shape = 'u8[131072]{0}', space=vmem, size = 0x20000, scoped, tag = 'input window, operand 1']
    #allocation9 [shape = 's32[2]{0}', space=sflag, size = 0x8, scoped, tag = 'scoped memory for tpu_custom_call.1']
    #allocation10 [shape = 'u8[131072]{0}', space=vmem, size = 0x20000, scoped, tag = 'input window, operand 2']
    #allocation11 [shape = 'u8[4096]{0}', space=vmem, size = 0x1000, scoped, tag = 'input window, operand 3']
    #allocation12 [shape = 's32[2]{0}', space=sflag, size = 0x8, scoped, tag = 'scoped memory for tpu_custom_call.1']
    #allocation13 [shape = 'u8[8192]{0}', space=vmem, size = 0x2000, scoped, tag = 'output window, operand 0']
    %9 = vsyncpa [#allocation6], 0
    %s10 = scalar_lea.sflag [#allocation6], 1
    %11 = vsyncpa %s10, 0
    %12 = vsyncpa [#allocation9], 0
    %s13 = scalar_lea.sflag [#allocation9], 1
    %14 = vsyncpa %s13, 0
    %15 = vsyncpa [#allocation12], 0
    %s16 = scalar_lea.sflag [#allocation12], 1
    %17 = vsyncpa %s16, 0
    %18 = vsyncpa [#allocation7], 0
    %s19 = scalar_lea.sflag [#allocation7], 1
    %20 = vsyncpa %s19, 0
    loop: start=0, step=1, limit=10
    $region2: #{tpu_custom_call.1} parent=1 // loop_pre_header
      _
    $region3: #{tpu_custom_call.1} parent=1 // loop_header
      %s22 = sphi 0, %s26
      %p23 = scmp.ge.s32.totalorder %s22, 10
      %s29 = sphi 0, %s48
      %s30 = sphi 0, %s44
      %s31 = sphi 0, %s40
      %s32 = sphi 0, %s29
      %s33 = sphi 0, %s30
      %s34 = sphi 0, %s31
      %s35 = sphi 0, %s32
      %s36 = sphi 0, %s33
      %s37 = sphi 0, %s34
      %s53 = sphi 0, %s55
      %s56 = sphi 0, %s53
      %s57 = sphi 0, %s56
      %s73 = sphi 0, %s57
      %s81 = sphi 0, %s83
      %s84 = sphi 0, %s81
      %s85 = sphi 0, %s84
      %s101 = sphi 0, %s85
      %s109 = sphi 0, %s111
      %s112 = sphi 0, %s109
      %s113 = sphi 0, %s112
      %s129 = sphi 0, %s113
      %s137 = sphi 0, %s139
      %s140 = sphi 0, %s137
      %s141 = sphi 0, %s140
      %s157 = sphi 0, %s141
      %s165 = sphi 0, %s167
      %s168 = sphi 0, %s165
      %s169 = sphi 0, %s168
      %s185 = sphi 0, %s169
    $region4: #{tpu_custom_call.1} parent=1 // loop_header_branch
      %25 = sbr.rel (%p23) target = $region8
    $region5: #{tpu_custom_call.1} parent=1 // loop_body
      %s27 = ssub.s32 %s22, 1
      %s28 = ssub.s32 %s22, 2
      %s38 = sadd.s32 1, %s31
      %p39 = scmp.ge.s32.totalorder %s38, 2
      %s40 = scalar_select %p39, 0, %s38
      %s41 = sadd.s32 1, %s30
      %s42 = scalar_select %p39, %s41, %s30
      %p43 = scmp.ge.s32.totalorder %s42, 2
      %s44 = scalar_select %p43, 0, %s42
      %s45 = sadd.s32 1, %s29
      %s46 = scalar_select %p43, %s45, %s29
      %p47 = scmp.ge.s32.totalorder %s46, 2
      %s48 = scalar_select %p47, 0, %s46
      %s49 = ssub.s32 %s29, %s48
      %s50 = ssub.s32 %s30, %s44
      %s51 = sor.u32 %s49, %s50
      %p52 = scmp.eq.s32.totalorder %s51, 0
      %s54 = sadd.s32 %s53, 1
      %s55 = scalar_select %p52, %s53, %s54
      %p58 = pneg %p52
      %p59 = scmp.eq.s32.totalorder %s22, 7
      %p60 = por %p58, %p59
      %p61 = scmp.ne.s32.totalorder %s53, %s56
      %p62 = scmp.eq.s32.totalorder %s22, 0
      %p63 = por %p61, %p62
      %p64 = scmp.ne.s32.totalorder %s53, %s56
      %p65 = scmp.eq.s32.totalorder %s27, 7
      %p66 = por %p64, %p65
      %p67 = scmp.ne.s32.totalorder %s56, %s57
      %p68 = scmp.eq.s32.totalorder %s27, 0
      %p69 = por %p67, %p68
      %p70 = scmp.ne.s32.totalorder %s56, %s57
      %p71 = scmp.eq.s32.totalorder %s28, 7
      %p72 = por %p70, %p71
      %p74 = scmp.ne.s32.totalorder %s57, %s73
      %p75 = scmp.eq.s32.totalorder %s28, 0
      %p76 = por %p74, %p75
      %s77 = ssub.s32 %s29, %s48
      %s78 = ssub.s32 %s31, %s40
      %s79 = sor.u32 %s77, %s78
      %p80 = scmp.eq.s32.totalorder %s79, 0
      %s82 = sadd.s32 %s81, 1
      %s83 = scalar_select %p80, %s81, %s82
      %p86 = pneg %p80
      %p87 = scmp.eq.s32.totalorder %s22, 7
      %p88 = por %p86, %p87
      %p89 = scmp.ne.s32.totalorder %s81, %s84
      %p90 = scmp.eq.s32.totalorder %s22, 0
      %p91 = por %p89, %p90
      %p92 = scmp.ne.s32.totalorder %s81, %s84
      %p93 = scmp.eq.s32.totalorder %s27, 7
      %p94 = por %p92, %p93
      %p95 = scmp.ne.s32.totalorder %s84, %s85
      %p96 = scmp.eq.s32.totalorder %s27, 0
      %p97 = por %p95, %p96
      %p98 = scmp.ne.s32.totalorder %s84, %s85
      %p99 = scmp.eq.s32.totalorder %s28, 7
      %p100 = por %p98, %p99
      %p102 = scmp.ne.s32.totalorder %s85, %s101
      %p103 = scmp.eq.s32.totalorder %s28, 0
      %p104 = por %p102, %p103
      %s105 = ssub.s32 %s29, %s48
      %s106 = ssub.s32 %s31, %s40
      %s107 = sor.u32 %s105, %s106
      %p108 = scmp.eq.s32.totalorder %s107, 0
      %s110 = sadd.s32 %s109, 1
      %s111 = scalar_select %p108, %s109, %s110
      %p114 = pneg %p108
      %p115 = scmp.eq.s32.totalorder %s22, 7
      %p116 = por %p114, %p115
      %p117 = scmp.ne.s32.totalorder %s109, %s112
      %p118 = scmp.eq.s32.totalorder %s22, 0
      %p119 = por %p117, %p118
      %p120 = scmp.ne.s32.totalorder %s109, %s112
      %p121 = scmp.eq.s32.totalorder %s27, 7
      %p122 = por %p120, %p121
      %p123 = scmp.ne.s32.totalorder %s112, %s113
      %p124 = scmp.eq.s32.totalorder %s27, 0
      %p125 = por %p123, %p124
      %p126 = scmp.ne.s32.totalorder %s112, %s113
      %p127 = scmp.eq.s32.totalorder %s28, 7
      %p128 = por %p126, %p127
      %p130 = scmp.ne.s32.totalorder %s113, %s129
      %p131 = scmp.eq.s32.totalorder %s28, 0
      %p132 = por %p130, %p131
      %s133 = ssub.s32 %s29, %s48
      %s134 = ssub.s32 %s31, %s40
      %s135 = sor.u32 %s133, %s134
      %p136 = scmp.eq.s32.totalorder %s135, 0
      %s138 = sadd.s32 %s137, 1
      %s139 = scalar_select %p136, %s137, %s138
      %p142 = pneg %p136
      %p143 = scmp.eq.s32.totalorder %s22, 7
      %p144 = por %p142, %p143
      %p145 = scmp.ne.s32.totalorder %s137, %s140
      %p146 = scmp.eq.s32.totalorder %s22, 0
      %p147 = por %p145, %p146
      %p148 = scmp.ne.s32.totalorder %s137, %s140
      %p149 = scmp.eq.s32.totalorder %s27, 7
      %p150 = por %p148, %p149
      %p151 = scmp.ne.s32.totalorder %s140, %s141
      %p152 = scmp.eq.s32.totalorder %s27, 0
      %p153 = por %p151, %p152
      %p154 = scmp.ne.s32.totalorder %s140, %s141
      %p155 = scmp.eq.s32.totalorder %s28, 7
      %p156 = por %p154, %p155
      %p158 = scmp.ne.s32.totalorder %s141, %s157
      %p159 = scmp.eq.s32.totalorder %s28, 0
      %p160 = por %p158, %p159
      %s161 = ssub.s32 %s29, %s48
      %s162 = ssub.s32 %s30, %s44
      %s163 = sor.u32 %s161, %s162
      %p164 = scmp.eq.s32.totalorder %s163, 0
      %s166 = sadd.s32 %s165, 1
      %s167 = scalar_select %p164, %s165, %s166
      %p170 = pneg %p164
      %p171 = scmp.eq.s32.totalorder %s22, 7
      %p172 = por %p170, %p171
      %p173 = scmp.ne.s32.totalorder %s165, %s168
      %p174 = scmp.eq.s32.totalorder %s22, 0
      %p175 = por %p173, %p174
      %p176 = scmp.ne.s32.totalorder %s165, %s168
      %p177 = scmp.eq.s32.totalorder %s27, 7
      %p178 = por %p176, %p177
      %p179 = scmp.ne.s32.totalorder %s168, %s169
      %p180 = scmp.eq.s32.totalorder %s27, 0
      %p181 = por %p179, %p180
      %p182 = scmp.ne.s32.totalorder %s168, %s169
      %p183 = scmp.eq.s32.totalorder %s28, 7
      %p184 = por %p182, %p183
      %p186 = scmp.ne.s32.totalorder %s169, %s185
      %p187 = scmp.eq.s32.totalorder %s28, 0
      %p188 = por %p186, %p187
      %p189 = scmp.le.s32.totalorder 1, %s22
      %p190 = scmp.lt.s32.totalorder %s22, 9
      %p191 = pnand %p189, %p190
      %p192 = pneg %p191
      // Predicated region
      $region9: #{tpu_custom_call.1} parent=5 // pred_check
        _
      $region10: #{tpu_custom_call.1} parent=5 // pred_check_branch
        %194 = sbr.rel (%p191) target = $region12
      $region11: #{tpu_custom_call.1} parent=5 // pred_region
        %s195 = ssub.s32 %s22, 1
      $region12: #{tpu_custom_call.1} parent=5 // pred_fallthru
        _
      %p196 = scmp.lt.s32.totalorder %s22, 8
      // Predicated region
      $region13: #{tpu_custom_call.1} parent=5 // pred_check
        %p197 = pneg %p196
      $region14: #{tpu_custom_call.1} parent=5 // pred_check_branch
        %199 = sbr.rel (%p197) target = $region16
      $region15: #{tpu_custom_call.1} parent=5 // pred_region
        // Predicated region
        $region17: #{tpu_custom_call.1} parent=15 // pred_check
          %p200 = pneg %p63
        $region18: #{tpu_custom_call.1} parent=15 // pred_check_branch
          %202 = sbr.rel (%p200) target = $region20
        $region19: #{tpu_custom_call.1} parent=15 // pred_region
          %s203 = sand.u32 %s53, 1
          %s204 = scalar_lea.sflag [#allocation6], %s203
          %s205 = sand.u32 %s53, 1
          %s206 = smul.addr %s205, 128
          %s207 = scalar_lea.vmem [#allocation5], %s206
          %s208 = smul.u32 4, %s30
          %s210 = ssub.s32 2048, 2048
          %211 = vsyncadd %s204, %s210
          %s212 = smul.addr %s29, 32
          %s213 = sadd.s32 %s208, %s212
          %s214 = smul.addr %s213, 128
          %s215 = scalar_lea.hbm %s0, %s214
          %s216 = sshll.u32 %s207, 4
          %s217 = int_to_ptr.vmem [resolvable:$true] %s216
          %222 = dma.hbm_to_vmem [thread:$0]  %s215, 2048, %s217, %s204, 1024, 512, 32
        $region20: #{tpu_custom_call.1} parent=15 // pred_fallthru
          _
        // Predicated region
        $region21: #{tpu_custom_call.1} parent=15 // pred_check
          %p223 = pneg %p91
        $region22: #{tpu_custom_call.1} parent=15 // pred_check_branch
          %225 = sbr.rel (%p223) target = $region24
        $region23: #{tpu_custom_call.1} parent=15 // pred_region
          %s226 = sand.u32 %s22, 1
          %s227 = scalar_lea.sflag [#allocation9], %s226
          %s228 = sand.u32 %s81, 1
          %s229 = smul.addr %s228, 128
          %s230 = scalar_lea.vmem [#allocation8], %s229
          %s231 = smul.u32 4, %s31
          %s233 = ssub.s32 2048, 2048
          %234 = vsyncadd %s227, %s233
          %s235 = smul.addr %s29, 32
          %s236 = sadd.s32 %s231, %s235
          %s237 = smul.addr %s236, 128
          %s238 = scalar_lea.hbm %s1, %s237
          %s239 = sshll.u32 %s230, 4
          %s240 = int_to_ptr.vmem [resolvable:$true] %s239
          %245 = dma.hbm_to_vmem [thread:$0]  %s238, 2048, %s240, %s227, 1024, 512, 32
        $region24: #{tpu_custom_call.1} parent=15 // pred_fallthru
          _
        // Predicated region
        $region25: #{tpu_custom_call.1} parent=15 // pred_check
          %p246 = pneg %p119
        $region26: #{tpu_custom_call.1} parent=15 // pred_check_branch
          %248 = sbr.rel (%p246) target = $region28
        $region27: #{tpu_custom_call.1} parent=15 // pred_region
          %s249 = sand.u32 %s22, 1
          %s250 = scalar_lea.sflag [#allocation9], %s249
          %s251 = sand.u32 %s109, 1
          %s252 = smul.addr %s251, 128
          %s253 = scalar_lea.vmem [#allocation10], %s252
          %s254 = smul.u32 4, %s31
          %s256 = ssub.s32 2048, 2048
          %257 = vsyncadd %s250, %s256
          %s258 = smul.addr %s29, 32
          %s259 = sadd.s32 %s254, %s258
          %s260 = smul.addr %s259, 128
          %s261 = scalar_lea.hbm %s2, %s260
          %s262 = sshll.u32 %s253, 4
          %s263 = int_to_ptr.vmem [resolvable:$true] %s262
          %268 = dma.hbm_to_vmem [thread:$0]  %s261, 2048, %s263, %s250, 1024, 512, 32
        $region28: #{tpu_custom_call.1} parent=15 // pred_fallthru
          _
        // Predicated region
        $region29: #{tpu_custom_call.1} parent=15 // pred_check
          %p269 = pneg %p147
        $region30: #{tpu_custom_call.1} parent=15 // pred_check_branch
          %271 = sbr.rel (%p269) target = $region32
        $region31: #{tpu_custom_call.1} parent=15 // pred_region
          %s272 = sand.u32 %s137, 1
          %s273 = scalar_lea.sflag [#allocation12], %s272
          %s274 = sand.u32 %s137, 1
          %s275 = smul.addr %s274, 4
          %s276 = scalar_lea.vmem [#allocation11], %s275
          %s277 = smul.u32 4, %s31
          %s279 = ssub.s32 64, 64
          %280 = vsyncadd %s273, %s279
          %s281 = smul.addr %s29, 8
          %s282 = sadd.s32 %s277, %s281
          %s283 = smul.addr %s282, 16
          %s284 = scalar_lea.hbm %s3, %s283
          %s286 = sshll.u32 %s276, 4
          %s287 = int_to_ptr.vmem [resolvable:$true] %s286
          %289 = dma.hbm_to_vmem [thread:$0]  %s284, 64, %s287, %s273
        $region32: #{tpu_custom_call.1} parent=15 // pred_fallthru
          _
      $region16: #{tpu_custom_call.1} parent=5 // pred_fallthru
        _
      %p290 = scmp.le.s32.totalorder 1, %s22
      %p291 = scmp.lt.s32.totalorder %s22, 9
      %p292 = pnand %p290, %p291
      %p293 = pneg %p292
      // Predicated region
      $region33: #{tpu_custom_call.1} parent=5 // pred_check
        _
      $region34: #{tpu_custom_call.1} parent=5 // pred_check_branch
        %295 = sbr.rel (%p292) target = $region36
      $region35: #{tpu_custom_call.1} parent=5 // pred_region
        %s296 = ssub.s32 %s22, 1
        %s297 = sand.u32 %s56, 1
        %s298 = scalar_lea.sflag [#allocation6], %s297
        %s299 = sand.u32 %s56, 1
        %s300 = smul.addr %s299, 128
        %s301 = scalar_lea.vmem [#allocation5], %s300
        // Predicated region
        $region37: #{tpu_custom_call.1} parent=35 // pred_check
          %p302 = pneg %p69
        $region38: #{tpu_custom_call.1} parent=35 // pred_check_branch
          %304 = sbr.rel (%p302) target = $region40
        $region39: #{tpu_custom_call.1} parent=35 // pred_region
          %305 = dma.done %s298, 2048
        $region40: #{tpu_custom_call.1} parent=35 // pred_fallthru
          _
        %s306 = sand.u32 %s27, 1
        %s307 = scalar_lea.sflag [#allocation9], %s306
        %s308 = sand.u32 %s84, 1
        %s309 = smul.addr %s308, 128
        %s310 = scalar_lea.vmem [#allocation8], %s309
        // Predicated region
        $region41: #{tpu_custom_call.1} parent=35 // pred_check
          %p311 = pneg %p97
        $region42: #{tpu_custom_call.1} parent=35 // pred_check_branch
          %313 = sbr.rel (%p311) target = $region44
        $region43: #{tpu_custom_call.1} parent=35 // pred_region
          %314 = dma.done %s307, 2048
        $region44: #{tpu_custom_call.1} parent=35 // pred_fallthru
          _
        %s315 = sand.u32 %s27, 1
        %s316 = scalar_lea.sflag [#allocation9], %s315
        %s317 = sand.u32 %s112, 1
        %s318 = smul.addr %s317, 128
        %s319 = scalar_lea.vmem [#allocation10], %s318
        // Predicated region
        $region45: #{tpu_custom_call.1} parent=35 // pred_check
          %p320 = pneg %p125
        $region46: #{tpu_custom_call.1} parent=35 // pred_check_branch
          %322 = sbr.rel (%p320) target = $region48
        $region47: #{tpu_custom_call.1} parent=35 // pred_region
          %323 = dma.done %s316, 2048
        $region48: #{tpu_custom_call.1} parent=35 // pred_fallthru
          _
        %s324 = sand.u32 %s140, 1
        %s325 = scalar_lea.sflag [#allocation12], %s324
        %s326 = sand.u32 %s140, 1
        %s327 = smul.addr %s326, 4
        %s328 = scalar_lea.vmem [#allocation11], %s327
        // Predicated region
        $region49: #{tpu_custom_call.1} parent=35 // pred_check
          %p329 = pneg %p153
        $region50: #{tpu_custom_call.1} parent=35 // pred_check_branch
          %331 = sbr.rel (%p329) target = $region52
        $region51: #{tpu_custom_call.1} parent=35 // pred_region
          %332 = dma.done %s325, 64
        $region52: #{tpu_custom_call.1} parent=35 // pred_fallthru
          _
        %s333 = sand.u32 %s56, 1
        %s334 = scalar_lea.sflag [#allocation6], %s333
        %s335 = sand.u32 %s56, 1
        %s336 = smul.addr %s335, 128
        %s337 = scalar_lea.vmem [#allocation5], %s336
        %p338 = pneg %p69
        %p339 = pneg %p66
        %s340 = sand.u32 %s27, 1
        %s341 = scalar_lea.sflag [#allocation9], %s340
        %s342 = sand.u32 %s84, 1
        %s343 = smul.addr %s342, 128
        %s344 = scalar_lea.vmem [#allocation8], %s343
        %p345 = pneg %p97
        %p346 = pneg %p94
        %s347 = sand.u32 %s27, 1
        %s348 = scalar_lea.sflag [#allocation9], %s347
        %s349 = sand.u32 %s112, 1
        %s350 = smul.addr %s349, 128
        %s351 = scalar_lea.vmem [#allocation10], %s350
        %p352 = pneg %p125
        %p353 = pneg %p122
        %s354 = sand.u32 %s140, 1
        %s355 = scalar_lea.sflag [#allocation12], %s354
        %s356 = sand.u32 %s140, 1
        %s357 = smul.addr %s356, 4
        %s358 = scalar_lea.vmem [#allocation11], %s357
        %p359 = pneg %p153
        %p360 = pneg %p150
        %p361 = pneg %p181
        %p362 = pneg %p178
        %s363 = sand.u32 %s168, 1
        %s364 = scalar_lea.sflag [#allocation7], %s363
        %s365 = sand.u32 %s168, 1
        %s366 = smul.addr %s365, 8
        %s367 = scalar_lea.vmem [#allocation13], %s366
        %s368 = smul.u32 4, %s33
        %s369 = smul.u32 4, %s34
        %s370 = smul.u32 4, %s34
        %s371 = smul.u32 4, %s34
        %p372 = scmp.eq.s32.totalorder %s34, 0
        // Predicated region
        $region53: #{tpu_custom_call.1} parent=35 // pred_check
          %p373 = pneg %p372
        $region54: #{tpu_custom_call.1} parent=35 // pred_check_branch
          %375 = sbr.rel (%p373) target = $region56
        $region55: #{tpu_custom_call.1} parent=35 // pred_region
          %vm376 = vcmask 7168
          %377 = vst.msk [vmem:[#allocation2] sm:$0xff] %vm376, -inf
          %378 = vst.msk [vmem:[#allocation2 + $0x8] sm:$0xff] %vm376, -inf
          %379 = vst.msk [vmem:[#allocation2 + $0x10] sm:$0xff] %vm376, -inf
          %380 = vst.msk [vmem:[#allocation2 + $0x18] sm:$0xff] %vm376, -inf
          %381 = vst.msk [vmem:[#allocation2 + $0x20] sm:$0xff] %vm376, -inf
          %382 = vst.msk [vmem:[#allocation2 + $0x28] sm:$0xff] %vm376, -inf
          %383 = vst.msk [vmem:[#allocation2 + $0x30] sm:$0xff] %vm376, -inf
          %384 = vst.msk [vmem:[#allocation2 + $0x38] sm:$0xff] %vm376, -inf
          %385 = vst.msk [vmem:[#allocation2 + $0x40] sm:$0xff] %vm376, -inf
          %386 = vst.msk [vmem:[#allocation2 + $0x48] sm:$0xff] %vm376, -inf
          %387 = vst.msk [vmem:[#allocation2 + $0x50] sm:$0xff] %vm376, -inf
          %388 = vst.msk [vmem:[#allocation2 + $0x58] sm:$0xff] %vm376, -inf
          %389 = vst.msk [vmem:[#allocation2 + $0x60] sm:$0xff] %vm376, -inf
          %390 = vst.msk [vmem:[#allocation2 + $0x68] sm:$0xff] %vm376, -inf
          %391 = vst.msk [vmem:[#allocation2 + $0x70] sm:$0xff] %vm376, -inf
          %392 = vst.msk [vmem:[#allocation2 + $0x78] sm:$0xff] %vm376, -inf
          %393 = vst.msk [vmem:[#allocation2 + $0x80] sm:$0xff] %vm376, -inf
          %394 = vst.msk [vmem:[#allocation2 + $0x88] sm:$0xff] %vm376, -inf
          %395 = vst.msk [vmem:[#allocation2 + $0x90] sm:$0xff] %vm376, -inf
          %396 = vst.msk [vmem:[#allocation2 + $0x98] sm:$0xff] %vm376, -inf
          %397 = vst.msk [vmem:[#allocation2 + $0xa0] sm:$0xff] %vm376, -inf
          %398 = vst.msk [vmem:[#allocation2 + $0xa8] sm:$0xff] %vm376, -inf
          %399 = vst.msk [vmem:[#allocation2 + $0xb0] sm:$0xff] %vm376, -inf
          %400 = vst.msk [vmem:[#allocation2 + $0xb8] sm:$0xff] %vm376, -inf
          %401 = vst.msk [vmem:[#allocation2 + $0xc0] sm:$0xff] %vm376, -inf
          %402 = vst.msk [vmem:[#allocation2 + $0xc8] sm:$0xff] %vm376, -inf
          %403 = vst.msk [vmem:[#allocation2 + $0xd0] sm:$0xff] %vm376, -inf
          %404 = vst.msk [vmem:[#allocation2 + $0xd8] sm:$0xff] %vm376, -inf
          %405 = vst.msk [vmem:[#allocation2 + $0xe0] sm:$0xff] %vm376, -inf
          %406 = vst.msk [vmem:[#allocation2 + $0xe8] sm:$0xff] %vm376, -inf
          %407 = vst.msk [vmem:[#allocation2 + $0xf0] sm:$0xff] %vm376, -inf
          %408 = vst.msk [vmem:[#allocation2 + $0xf8] sm:$0xff] %vm376, -inf
          %409 = vst.msk [vmem:[#allocation2 + $0x100] sm:$0xff] %vm376, -inf
          %410 = vst.msk [vmem:[#allocation2 + $0x108] sm:$0xff] %vm376, -inf
          %411 = vst.msk [vmem:[#allocation2 + $0x110] sm:$0xff] %vm376, -inf
          %412 = vst.msk [vmem:[#allocation2 + $0x118] sm:$0xff] %vm376, -inf
          %413 = vst.msk [vmem:[#allocation2 + $0x120] sm:$0xff] %vm376, -inf
          %414 = vst.msk [vmem:[#allocation2 + $0x128] sm:$0xff] %vm376, -inf
          %415 = vst.msk [vmem:[#allocation2 + $0x130] sm:$0xff] %vm376, -inf
          %416 = vst.msk [vmem:[#allocation2 + $0x138] sm:$0xff] %vm376, -inf
          %417 = vst.msk [vmem:[#allocation2 + $0x140] sm:$0xff] %vm376, -inf
          %418 = vst.msk [vmem:[#allocation2 + $0x148] sm:$0xff] %vm376, -inf
          %419 = vst.msk [vmem:[#allocation2 + $0x150] sm:$0xff] %vm376, -inf
          %420 = vst.msk [vmem:[#allocation2 + $0x158] sm:$0xff] %vm376, -inf
          %421 = vst.msk [vmem:[#allocation2 + $0x160] sm:$0xff] %vm376, -inf
          %422 = vst.msk [vmem:[#allocation2 + $0x168] sm:$0xff] %vm376, -inf
          %423 = vst.msk [vmem:[#allocation2 + $0x170] sm:$0xff] %vm376, -inf
          %424 = vst.msk [vmem:[#allocation2 + $0x178] sm:$0xff] %vm376, -inf
          %425 = vst.msk [vmem:[#allocation2 + $0x180] sm:$0xff] %vm376, -inf
          %426 = vst.msk [vmem:[#allocation2 + $0x188] sm:$0xff] %vm376, -inf
          %427 = vst.msk [vmem:[#allocation2 + $0x190] sm:$0xff] %vm376, -inf
          %428 = vst.msk [vmem:[#allocation2 + $0x198] sm:$0xff] %vm376, -inf
          %429 = vst.msk [vmem:[#allocation2 + $0x1a0] sm:$0xff] %vm376, -inf
          %430 = vst.msk [vmem:[#allocation2 + $0x1a8] sm:$0xff] %vm376, -inf
          %431 = vst.msk [vmem:[#allocation2 + $0x1b0] sm:$0xff] %vm376, -inf
          %432 = vst.msk [vmem:[#allocation2 + $0x1b8] sm:$0xff] %vm376, -inf
          %433 = vst.msk [vmem:[#allocation2 + $0x1c0] sm:$0xff] %vm376, -inf
          %434 = vst.msk [vmem:[#allocation2 + $0x1c8] sm:$0xff] %vm376, -inf
          %435 = vst.msk [vmem:[#allocation2 + $0x1d0] sm:$0xff] %vm376, -inf
          %436 = vst.msk [vmem:[#allocation2 + $0x1d8] sm:$0xff] %vm376, -inf
          %437 = vst.msk [vmem:[#allocation2 + $0x1e0] sm:$0xff] %vm376, -inf
          %438 = vst.msk [vmem:[#allocation2 + $0x1e8] sm:$0xff] %vm376, -inf
          %439 = vst.msk [vmem:[#allocation2 + $0x1f0] sm:$0xff] %vm376, -inf
          %440 = vst.msk [vmem:[#allocation2 + $0x1f8] sm:$0xff] %vm376, -inf
          %441 = vst.msk [vmem:[#allocation3] sm:$0xff] %vm376, 0.0
          %442 = vst.msk [vmem:[#allocation3 + $0x8] sm:$0xff] %vm376, 0.0
          %443 = vst.msk [vmem:[#allocation3 + $0x10] sm:$0xff] %vm376, 0.0
          %444 = vst.msk [vmem:[#allocation3 + $0x18] sm:$0xff] %vm376, 0.0
          %445 = vst.msk [vmem:[#allocation3 + $0x20] sm:$0xff] %vm376, 0.0
          %446 = vst.msk [vmem:[#allocation3 + $0x28] sm:$0xff] %vm376, 0.0
          %447 = vst.msk [vmem:[#allocation3 + $0x30] sm:$0xff] %vm376, 0.0
          %448 = vst.msk [vmem:[#allocation3 + $0x38] sm:$0xff] %vm376, 0.0
          %449 = vst.msk [vmem:[#allocation3 + $0x40] sm:$0xff] %vm376, 0.0
          %450 = vst.msk [vmem:[#allocation3 + $0x48] sm:$0xff] %vm376, 0.0
          %451 = vst.msk [vmem:[#allocation3 + $0x50] sm:$0xff] %vm376, 0.0
          %452 = vst.msk [vmem:[#allocation3 + $0x58] sm:$0xff] %vm376, 0.0
          %453 = vst.msk [vmem:[#allocation3 + $0x60] sm:$0xff] %vm376, 0.0
          %454 = vst.msk [vmem:[#allocation3 + $0x68] sm:$0xff] %vm376, 0.0
          %455 = vst.msk [vmem:[#allocation3 + $0x70] sm:$0xff] %vm376, 0.0
          %456 = vst.msk [vmem:[#allocation3 + $0x78] sm:$0xff] %vm376, 0.0
          %457 = vst.msk [vmem:[#allocation3 + $0x80] sm:$0xff] %vm376, 0.0
          %458 = vst.msk [vmem:[#allocation3 + $0x88] sm:$0xff] %vm376, 0.0
          %459 = vst.msk [vmem:[#allocation3 + $0x90] sm:$0xff] %vm376, 0.0
          %460 = vst.msk [vmem:[#allocation3 + $0x98] sm:$0xff] %vm376, 0.0
          %461 = vst.msk [vmem:[#allocation3 + $0xa0] sm:$0xff] %vm376, 0.0
          %462 = vst.msk [vmem:[#allocation3 + $0xa8] sm:$0xff] %vm376, 0.0
          %463 = vst.msk [vmem:[#allocation3 + $0xb0] sm:$0xff] %vm376, 0.0
          %464 = vst.msk [vmem:[#allocation3 + $0xb8] sm:$0xff] %vm376, 0.0
          %465 = vst.msk [vmem:[#allocation3 + $0xc0] sm:$0xff] %vm376, 0.0
          %466 = vst.msk [vmem:[#allocation3 + $0xc8] sm:$0xff] %vm376, 0.0
          %467 = vst.msk [vmem:[#allocation3 + $0xd0] sm:$0xff] %vm376, 0.0
          %468 = vst.msk [vmem:[#allocation3 + $0xd8] sm:$0xff] %vm376, 0.0
          %469 = vst.msk [vmem:[#allocation3 + $0xe0] sm:$0xff] %vm376, 0.0
          %470 = vst.msk [vmem:[#allocation3 + $0xe8] sm:$0xff] %vm376, 0.0
          %471 = vst.msk [vmem:[#allocation3 + $0xf0] sm:$0xff] %vm376, 0.0
          %472 = vst.msk [vmem:[#allocation3 + $0xf8] sm:$0xff] %vm376, 0.0
          %473 = vst.msk [vmem:[#allocation3 + $0x100] sm:$0xff] %vm376, 0.0
          %474 = vst.msk [vmem:[#allocation3 + $0x108] sm:$0xff] %vm376, 0.0
          %475 = vst.msk [vmem:[#allocation3 + $0x110] sm:$0xff] %vm376, 0.0
          %476 = vst.msk [vmem:[#allocation3 + $0x118] sm:$0xff] %vm376, 0.0
          %477 = vst.msk [vmem:[#allocation3 + $0x120] sm:$0xff] %vm376, 0.0
          %478 = vst.msk [vmem:[#allocation3 + $0x128] sm:$0xff] %vm376, 0.0
          %479 = vst.msk [vmem:[#allocation3 + $0x130] sm:$0xff] %vm376, 0.0
          %480 = vst.msk [vmem:[#allocation3 + $0x138] sm:$0xff] %vm376, 0.0
          %481 = vst.msk [vmem:[#allocation3 + $0x140] sm:$0xff] %vm376, 0.0
          %482 = vst.msk [vmem:[#allocation3 + $0x148] sm:$0xff] %vm376, 0.0
          %483 = vst.msk [vmem:[#allocation3 + $0x150] sm:$0xff] %vm376, 0.0
          %484 = vst.msk [vmem:[#allocation3 + $0x158] sm:$0xff] %vm376, 0.0
          %485 = vst.msk [vmem:[#allocation3 + $0x160] sm:$0xff] %vm376, 0.0
          %486 = vst.msk [vmem:[#allocation3 + $0x168] sm:$0xff] %vm376, 0.0
          %487 = vst.msk [vmem:[#allocation3 + $0x170] sm:$0xff] %vm376, 0.0
          %488 = vst.msk [vmem:[#allocation3 + $0x178] sm:$0xff] %vm376, 0.0
          %489 = vst.msk [vmem:[#allocation3 + $0x180] sm:$0xff] %vm376, 0.0
          %490 = vst.msk [vmem:[#allocation3 + $0x188] sm:$0xff] %vm376, 0.0
          %491 = vst.msk [vmem:[#allocation3 + $0x190] sm:$0xff] %vm376, 0.0
          %492 = vst.msk [vmem:[#allocation3 + $0x198] sm:$0xff] %vm376, 0.0
          %493 = vst.msk [vmem:[#allocation3 + $0x1a0] sm:$0xff] %vm376, 0.0
          %494 = vst.msk [vmem:[#allocation3 + $0x1a8] sm:$0xff] %vm376, 0.0
          %495 = vst.msk [vmem:[#allocation3 + $0x1b0] sm:$0xff] %vm376, 0.0
          %496 = vst.msk [vmem:[#allocation3 + $0x1b8] sm:$0xff] %vm376, 0.0
          %497 = vst.msk [vmem:[#allocation3 + $0x1c0] sm:$0xff] %vm376, 0.0
          %498 = vst.msk [vmem:[#allocation3 + $0x1c8] sm:$0xff] %vm376, 0.0
          %499 = vst.msk [vmem:[#allocation3 + $0x1d0] sm:$0xff] %vm376, 0.0
          %500 = vst.msk [vmem:[#allocation3 + $0x1d8] sm:$0xff] %vm376, 0.0
          %501 = vst.msk [vmem:[#allocation3 + $0x1e0] sm:$0xff] %vm376, 0.0
          %502 = vst.msk [vmem:[#allocation3 + $0x1e8] sm:$0xff] %vm376, 0.0
          %503 = vst.msk [vmem:[#allocation3 + $0x1f0] sm:$0xff] %vm376, 0.0
          %504 = vst.msk [vmem:[#allocation3 + $0x1f8] sm:$0xff] %vm376, 0.0
          %505 = vst.msk [vmem:[#allocation4] sm:$0xff] %vm376, 0.0
          %506 = vst.msk [vmem:[#allocation4 + $0x8] sm:$0xff] %vm376, 0.0
          %507 = vst.msk [vmem:[#allocation4 + $0x10] sm:$0xff] %vm376, 0.0
          %508 = vst.msk [vmem:[#allocation4 + $0x18] sm:$0xff] %vm376, 0.0
          %509 = vst.msk [vmem:[#allocation4 + $0x20] sm:$0xff] %vm376, 0.0
          %510 = vst.msk [vmem:[#allocation4 + $0x28] sm:$0xff] %vm376, 0.0
          %511 = vst.msk [vmem:[#allocation4 + $0x30] sm:$0xff] %vm376, 0.0
          %512 = vst.msk [vmem:[#allocation4 + $0x38] sm:$0xff] %vm376, 0.0
          %513 = vst.msk [vmem:[#allocation4 + $0x40] sm:$0xff] %vm376, 0.0
          %514 = vst.msk [vmem:[#allocation4 + $0x48] sm:$0xff] %vm376, 0.0
          %515 = vst.msk [vmem:[#allocation4 + $0x50] sm:$0xff] %vm376, 0.0
          %516 = vst.msk [vmem:[#allocation4 + $0x58] sm:$0xff] %vm376, 0.0
          %517 = vst.msk [vmem:[#allocation4 + $0x60] sm:$0xff] %vm376, 0.0
          %518 = vst.msk [vmem:[#allocation4 + $0x68] sm:$0xff] %vm376, 0.0
          %519 = vst.msk [vmem:[#allocation4 + $0x70] sm:$0xff] %vm376, 0.0
          %520 = vst.msk [vmem:[#allocation4 + $0x78] sm:$0xff] %vm376, 0.0
          %521 = vst.msk [vmem:[#allocation4 + $0x80] sm:$0xff] %vm376, 0.0
          %522 = vst.msk [vmem:[#allocation4 + $0x88] sm:$0xff] %vm376, 0.0
          %523 = vst.msk [vmem:[#allocation4 + $0x90] sm:$0xff] %vm376, 0.0
          %524 = vst.msk [vmem:[#allocation4 + $0x98] sm:$0xff] %vm376, 0.0
          %525 = vst.msk [vmem:[#allocation4 + $0xa0] sm:$0xff] %vm376, 0.0
          %526 = vst.msk [vmem:[#allocation4 + $0xa8] sm:$0xff] %vm376, 0.0
          %527 = vst.msk [vmem:[#allocation4 + $0xb0] sm:$0xff] %vm376, 0.0
          %528 = vst.msk [vmem:[#allocation4 + $0xb8] sm:$0xff] %vm376, 0.0
          %529 = vst.msk [vmem:[#allocation4 + $0xc0] sm:$0xff] %vm376, 0.0
          %530 = vst.msk [vmem:[#allocation4 + $0xc8] sm:$0xff] %vm376, 0.0
          %531 = vst.msk [vmem:[#allocation4 + $0xd0] sm:$0xff] %vm376, 0.0
          %532 = vst.msk [vmem:[#allocation4 + $0xd8] sm:$0xff] %vm376, 0.0
          %533 = vst.msk [vmem:[#allocation4 + $0xe0] sm:$0xff] %vm376, 0.0
          %534 = vst.msk [vmem:[#allocation4 + $0xe8] sm:$0xff] %vm376, 0.0
          %535 = vst.msk [vmem:[#allocation4 + $0xf0] sm:$0xff] %vm376, 0.0
          %536 = vst.msk [vmem:[#allocation4 + $0xf8] sm:$0xff] %vm376, 0.0
          %537 = vst.msk [vmem:[#allocation4 + $0x100] sm:$0xff] %vm376, 0.0
          %538 = vst.msk [vmem:[#allocation4 + $0x108] sm:$0xff] %vm376, 0.0
          %539 = vst.msk [vmem:[#allocation4 + $0x110] sm:$0xff] %vm376, 0.0
          %540 = vst.msk [vmem:[#allocation4 + $0x118] sm:$0xff] %vm376, 0.0
          %541 = vst.msk [vmem:[#allocation4 + $0x120] sm:$0xff] %vm376, 0.0
          %542 = vst.msk [vmem:[#allocation4 + $0x128] sm:$0xff] %vm376, 0.0
          %543 = vst.msk [vmem:[#allocation4 + $0x130] sm:$0xff] %vm376, 0.0
          %544 = vst.msk [vmem:[#allocation4 + $0x138] sm:$0xff] %vm376, 0.0
          %545 = vst.msk [vmem:[#allocation4 + $0x140] sm:$0xff] %vm376, 0.0
          %546 = vst.msk [vmem:[#allocation4 + $0x148] sm:$0xff] %vm376, 0.0
          %547 = vst.msk [vmem:[#allocation4 + $0x150] sm:$0xff] %vm376, 0.0
          %548 = vst.msk [vmem:[#allocation4 + $0x158] sm:$0xff] %vm376, 0.0
          %549 = vst.msk [vmem:[#allocation4 + $0x160] sm:$0xff] %vm376, 0.0
          %550 = vst.msk [vmem:[#allocation4 + $0x168] sm:$0xff] %vm376, 0.0
          %551 = vst.msk [vmem:[#allocation4 + $0x170] sm:$0xff] %vm376, 0.0
          %552 = vst.msk [vmem:[#allocation4 + $0x178] sm:$0xff] %vm376, 0.0
          %553 = vst.msk [vmem:[#allocation4 + $0x180] sm:$0xff] %vm376, 0.0
          %554 = vst.msk [vmem:[#allocation4 + $0x188] sm:$0xff] %vm376, 0.0
          %555 = vst.msk [vmem:[#allocation4 + $0x190] sm:$0xff] %vm376, 0.0
          %556 = vst.msk [vmem:[#allocation4 + $0x198] sm:$0xff] %vm376, 0.0
          %557 = vst.msk [vmem:[#allocation4 + $0x1a0] sm:$0xff] %vm376, 0.0
          %558 = vst.msk [vmem:[#allocation4 + $0x1a8] sm:$0xff] %vm376, 0.0
          %559 = vst.msk [vmem:[#allocation4 + $0x1b0] sm:$0xff] %vm376, 0.0
          %560 = vst.msk [vmem:[#allocation4 + $0x1b8] sm:$0xff] %vm376, 0.0
          %561 = vst.msk [vmem:[#allocation4 + $0x1c0] sm:$0xff] %vm376, 0.0
          %562 = vst.msk [vmem:[#allocation4 + $0x1c8] sm:$0xff] %vm376, 0.0
          %563 = vst.msk [vmem:[#allocation4 + $0x1d0] sm:$0xff] %vm376, 0.0
          %564 = vst.msk [vmem:[#allocation4 + $0x1d8] sm:$0xff] %vm376, 0.0
          %565 = vst.msk [vmem:[#allocation4 + $0x1e0] sm:$0xff] %vm376, 0.0
          %566 = vst.msk [vmem:[#allocation4 + $0x1e8] sm:$0xff] %vm376, 0.0
          %567 = vst.msk [vmem:[#allocation4 + $0x1f0] sm:$0xff] %vm376, 0.0
          %568 = vst.msk [vmem:[#allocation4 + $0x1f8] sm:$0xff] %vm376, 0.0
        $region56: #{tpu_custom_call.1} parent=35 // pred_fallthru
          _
        %v569 = vld [vmem:[%s301] sm:$0xff]
        %v570 = vld [vmem:[%s301 + $0x8] sm:$0xff]
        %v571 = vld [vmem:[%s301 + $0x10] sm:$0xff]
        %v572 = vld [vmem:[%s301 + $0x18] sm:$0xff]
        %v573 = vld [vmem:[%s301 + $0x20] sm:$0xff]
        %v574 = vld [vmem:[%s301 + $0x28] sm:$0xff]
        %v575 = vld [vmem:[%s301 + $0x30] sm:$0xff]
        %v576 = vld [vmem:[%s301 + $0x38] sm:$0xff]
        %v577 = vld [vmem:[%s301 + $0x40] sm:$0xff]
        %v578 = vld [vmem:[%s301 + $0x48] sm:$0xff]
        %v579 = vld [vmem:[%s301 + $0x50] sm:$0xff]
        %v580 = vld [vmem:[%s301 + $0x58] sm:$0xff]
        %v581 = vld [vmem:[%s301 + $0x60] sm:$0xff]
        %v582 = vld [vmem:[%s301 + $0x68] sm:$0xff]
        %v583 = vld [vmem:[%s301 + $0x70] sm:$0xff]
        %v584 = vld [vmem:[%s301 + $0x78] sm:$0xff]
        %v585 = vld [vmem:[%s319] sm:$0xff]
        %v586 = vld [vmem:[%s319 + $0x8] sm:$0xff]
        %v587 = vld [vmem:[%s319 + $0x10] sm:$0xff]
        %v588 = vld [vmem:[%s319 + $0x18] sm:$0xff]
        %v589 = vld [vmem:[%s319 + $0x20] sm:$0xff]
        %v590 = vld [vmem:[%s319 + $0x28] sm:$0xff]
        %v591 = vld [vmem:[%s319 + $0x30] sm:$0xff]
        %v592 = vld [vmem:[%s319 + $0x38] sm:$0xff]
        %v593 = vld [vmem:[%s319 + $0x40] sm:$0xff]
        %v594 = vld [vmem:[%s319 + $0x48] sm:$0xff]
        %v595 = vld [vmem:[%s319 + $0x50] sm:$0xff]
        %v596 = vld [vmem:[%s319 + $0x58] sm:$0xff]
        %v597 = vld [vmem:[%s319 + $0x60] sm:$0xff]
        %v598 = vld [vmem:[%s319 + $0x68] sm:$0xff]
        %v599 = vld [vmem:[%s319 + $0x70] sm:$0xff]
        %v600 = vld [vmem:[%s319 + $0x78] sm:$0xff]
        %601 = vxpose.xlu0.b32.start [1/16] %v569, 128
        %602 = vxpose.xlu0.b32.cont [2/16] %v573, 128
        %603 = vxpose.xlu0.b32.cont [3/16] %v577, 128
        %604 = vxpose.xlu0.b32.cont [4/16] %v581, 128
        %605 = vxpose.xlu0.b32.cont [5/16] 0.0, 128
        %606 = vxpose.xlu0.b32.cont [6/16] 0.0, 128
        %607 = vxpose.xlu0.b32.cont [7/16] 0.0, 128
        %608 = vxpose.xlu0.b32.cont [8/16] 0.0, 128
        %609 = vxpose.xlu0.b32.cont [9/16] 0.0, 128
        %610 = vxpose.xlu0.b32.cont [10/16] 0.0, 128
        %611 = vxpose.xlu0.b32.cont [11/16] 0.0, 128
        %612 = vxpose.xlu0.b32.cont [12/16] 0.0, 128
        %613 = vxpose.xlu0.b32.cont [13/16] 0.0, 128
        %614 = vxpose.xlu0.b32.cont [14/16] 0.0, 128
        %615 = vxpose.xlu0.b32.cont [15/16] 0.0, 128
        %616 = vxpose.xlu0.b32.end [16/16] 0.0, 128
        %v617 = vpop.trf.xlu0
        %v618 = vpop.trf.xlu0
        %v619 = vpop.trf.xlu0
        %v620 = vpop.trf.xlu0
        %v621 = vpop.trf.xlu0
        %v622 = vpop.trf.xlu0
        %v623 = vpop.trf.xlu0
        %v624 = vpop.trf.xlu0
        %v625 = vpop.trf.xlu0
        %v626 = vpop.trf.xlu0
        %v627 = vpop.trf.xlu0
        %v628 = vpop.trf.xlu0
        %v629 = vpop.trf.xlu0
        %v630 = vpop.trf.xlu0
        %v631 = vpop.trf.xlu0
        %v632 = vpop.trf.xlu0
        %633 = vxpose.xlu0.b32.start [1/16] %v570, 128
        %634 = vxpose.xlu0.b32.cont [2/16] %v574, 128
        %635 = vxpose.xlu0.b32.cont [3/16] %v578, 128
        %636 = vxpose.xlu0.b32.cont [4/16] %v582, 128
        %637 = vxpose.xlu0.b32.cont [5/16] 0.0, 128
        %638 = vxpose.xlu0.b32.cont [6/16] 0.0, 128
        %639 = vxpose.xlu0.b32.cont [7/16] 0.0, 128
        %640 = vxpose.xlu0.b32.cont [8/16] 0.0, 128
        %641 = vxpose.xlu0.b32.cont [9/16] 0.0, 128
        %642 = vxpose.xlu0.b32.cont [10/16] 0.0, 128
        %643 = vxpose.xlu0.b32.cont [11/16] 0.0, 128
        %644 = vxpose.xlu0.b32.cont [12/16] 0.0, 128
        %645 = vxpose.xlu0.b32.cont [13/16] 0.0, 128
        %646 = vxpose.xlu0.b32.cont [14/16] 0.0, 128
        %647 = vxpose.xlu0.b32.cont [15/16] 0.0, 128
        %648 = vxpose.xlu0.b32.end [16/16] 0.0, 128
        %v649 = vpop.trf.xlu0
        %v650 = vpop.trf.xlu0
        %v651 = vpop.trf.xlu0
        %v652 = vpop.trf.xlu0
        %v653 = vpop.trf.xlu0
        %v654 = vpop.trf.xlu0
        %v655 = vpop.trf.xlu0
        %v656 = vpop.trf.xlu0
        %v657 = vpop.trf.xlu0
        %v658 = vpop.trf.xlu0
        %v659 = vpop.trf.xlu0
        %v660 = vpop.trf.xlu0
        %v661 = vpop.trf.xlu0
        %v662 = vpop.trf.xlu0
        %v663 = vpop.trf.xlu0
        %v664 = vpop.trf.xlu0
        %665 = vxpose.xlu0.b32.start [1/16] %v571, 128
        %666 = vxpose.xlu0.b32.cont [2/16] %v575, 128
        %667 = vxpose.xlu0.b32.cont [3/16] %v579, 128
        %668 = vxpose.xlu0.b32.cont [4/16] %v583, 128
        %669 = vxpose.xlu0.b32.cont [5/16] 0.0, 128
        %670 = vxpose.xlu0.b32.cont [6/16] 0.0, 128
        %671 = vxpose.xlu0.b32.cont [7/16] 0.0, 128
        %672 = vxpose.xlu0.b32.cont [8/16] 0.0, 128
        %673 = vxpose.xlu0.b32.cont [9/16] 0.0, 128
        %674 = vxpose.xlu0.b32.cont [10/16] 0.0, 128
        %675 = vxpose.xlu0.b32.cont [11/16] 0.0, 128
        %676 = vxpose.xlu0.b32.cont [12/16] 0.0, 128
        %677 = vxpose.xlu0.b32.cont [13/16] 0.0, 128
        %678 = vxpose.xlu0.b32.cont [14/16] 0.0, 128
        %679 = vxpose.xlu0.b32.cont [15/16] 0.0, 128
        %680 = vxpose.xlu0.b32.end [16/16] 0.0, 128
        %v681 = vpop.trf.xlu0
        %v682 = vpop.trf.xlu0
        %v683 = vpop.trf.xlu0
        %v684 = vpop.trf.xlu0
        %v685 = vpop.trf.xlu0
        %v686 = vpop.trf.xlu0
        %v687 = vpop.trf.xlu0
        %v688 = vpop.trf.xlu0
        %v689 = vpop.trf.xlu0
        %v690 = vpop.trf.xlu0
        %v691 = vpop.trf.xlu0
        %v692 = vpop.trf.xlu0
        %v693 = vpop.trf.xlu0
        %v694 = vpop.trf.xlu0
        %v695 = vpop.trf.xlu0
        %v696 = vpop.trf.xlu0
        %697 = vxpose.xlu0.b32.start [1/16] %v572, 128
        %698 = vxpose.xlu0.b32.cont [2/16] %v576, 128
        %699 = vxpose.xlu0.b32.cont [3/16] %v580, 128
        %700 = vxpose.xlu0.b32.cont [4/16] %v584, 128
        %701 = vxpose.xlu0.b32.cont [5/16] 0.0, 128
        %702 = vxpose.xlu0.b32.cont [6/16] 0.0, 128
        %703 = vxpose.xlu0.b32.cont [7/16] 0.0, 128
        %704 = vxpose.xlu0.b32.cont [8/16] 0.0, 128
        %705 = vxpose.xlu0.b32.cont [9/16] 0.0, 128
        %706 = vxpose.xlu0.b32.cont [10/16] 0.0, 128
        %707 = vxpose.xlu0.b32.cont [11/16] 0.0, 128
        %708 = vxpose.xlu0.b32.cont [12/16] 0.0, 128
        %709 = vxpose.xlu0.b32.cont [13/16] 0.0, 128
        %710 = vxpose.xlu0.b32.cont [14/16] 0.0, 128
        %711 = vxpose.xlu0.b32.cont [15/16] 0.0, 128
        %712 = vxpose.xlu0.b32.end [16/16] 0.0, 128
        %v713 = vpop.trf.xlu0
        %v714 = vpop.trf.xlu0
        %v715 = vpop.trf.xlu0
        %v716 = vpop.trf.xlu0
        %v717 = vpop.trf.xlu0
        %v718 = vpop.trf.xlu0
        %v719 = vpop.trf.xlu0
        %v720 = vpop.trf.xlu0
        %v721 = vpop.trf.xlu0
        %v722 = vpop.trf.xlu0
        %v723 = vpop.trf.xlu0
        %v724 = vpop.trf.xlu0
        %v725 = vpop.trf.xlu0
        %v726 = vpop.trf.xlu0
        %v727 = vpop.trf.xlu0
        %v728 = vpop.trf.xlu0
        %vm729 = vcmask 261120
        %v731 = vsel %vm729, %v617, 0
        %v734 = vsel %vm729, %v618, 0
        %v737 = vsel %vm729, %v619, 0
        %v740 = vsel %vm729, %v620, 0
        %v743 = vsel %vm729, %v621, 0
        %v746 = vsel %vm729, %v622, 0
        %v749 = vsel %vm729, %v623, 0
        %v752 = vsel %vm729, %v624, 0
        %v755 = vsel %vm729, %v625, 0
        %v758 = vsel %vm729, %v626, 0
        %v761 = vsel %vm729, %v627, 0
        %v764 = vsel %vm729, %v628, 0
        %v767 = vsel %vm729, %v629, 0
        %v770 = vsel %vm729, %v630, 0
        %v773 = vsel %vm729, %v631, 0
        %v776 = vsel %vm729, %v632, 0
        %v779 = vsel %vm729, %v649, 0
        %v782 = vsel %vm729, %v650, 0
        %v785 = vsel %vm729, %v651, 0
        %v788 = vsel %vm729, %v652, 0
        %v791 = vsel %vm729, %v653, 0
        %v794 = vsel %vm729, %v654, 0
        %v797 = vsel %vm729, %v655, 0
        %v800 = vsel %vm729, %v656, 0
        %v803 = vsel %vm729, %v657, 0
        %v806 = vsel %vm729, %v658, 0
        %v809 = vsel %vm729, %v659, 0
        %v812 = vsel %vm729, %v660, 0
        %v815 = vsel %vm729, %v661, 0
        %v818 = vsel %vm729, %v662, 0
        %v821 = vsel %vm729, %v663, 0
        %v824 = vsel %vm729, %v664, 0
        %v827 = vsel %vm729, %v681, 0
        %v830 = vsel %vm729, %v682, 0
        %v833 = vsel %vm729, %v683, 0
        %v836 = vsel %vm729, %v684, 0
        %v839 = vsel %vm729, %v685, 0
        %v842 = vsel %vm729, %v686, 0
        %v845 = vsel %vm729, %v687, 0
        %v848 = vsel %vm729, %v688, 0
        %v851 = vsel %vm729, %v689, 0
        %v854 = vsel %vm729, %v690, 0
        %v857 = vsel %vm729, %v691, 0
        %v860 = vsel %vm729, %v692, 0
        %v863 = vsel %vm729, %v693, 0
        %v866 = vsel %vm729, %v694, 0
        %v869 = vsel %vm729, %v695, 0
        %v872 = vsel %vm729, %v696, 0
        %v875 = vsel %vm729, %v713, 0
        %v878 = vsel %vm729, %v714, 0
        %v881 = vsel %vm729, %v715, 0
        %v884 = vsel %vm729, %v716, 0
        %v887 = vsel %vm729, %v717, 0
        %v890 = vsel %vm729, %v718, 0
        %v893 = vsel %vm729, %v719, 0
        %v896 = vsel %vm729, %v720, 0
        %v899 = vsel %vm729, %v721, 0
        %v902 = vsel %vm729, %v722, 0
        %v905 = vsel %vm729, %v723, 0
        %v908 = vsel %vm729, %v724, 0
        %v911 = vsel %vm729, %v725, 0
        %v914 = vsel %vm729, %v726, 0
        %v917 = vsel %vm729, %v727, 0
        %v920 = vsel %vm729, %v728, 0
        %922 = vmatprep.subr.mxu0 %v586
        %923 = vmatpush1.msra.mxu0 %v585
        %924 = vmatprep.subr.mxu0 %v590
        %925 = vmatpush1.msra.mxu0 %v589
        %926 = vmatprep.subr.mxu0 %v594
        %927 = vmatpush1.msra.mxu0 %v593
        %928 = vmatprep.subr.mxu0 %v598
        %929 = vmatpush1.msra.mxu0 %v597
        %930 = vmatprep.subr.mxu0 0.0
        %931 = vmatpush1.msra.mxu0 0.0
        %932 = vmatprep.subr.mxu0 0.0
        %933 = vmatpush1.msra.mxu0 0.0
        %934 = vmatprep.subr.mxu0 0.0
        %935 = vmatpush1.msra.mxu0 0.0
        %936 = vmatprep.subr.mxu0 0.0
        %937 = vmatpush1.msra.mxu0 0.0
        %938 = vmatprep.subr.mxu0 0.0
        %939 = vmatpush1.msra.mxu0 0.0
        %940 = vmatprep.subr.mxu0 0.0
        %941 = vmatpush1.msra.mxu0 0.0
        %942 = vmatprep.subr.mxu0 0.0
        %943 = vmatpush1.msra.mxu0 0.0
        %944 = vmatprep.subr.mxu0 0.0
        %945 = vmatpush1.msra.mxu0 0.0
        %946 = vmatprep.subr.mxu0 0.0
        %947 = vmatpush1.msra.mxu0 0.0
        %948 = vmatprep.subr.mxu0 0.0
        %949 = vmatpush1.msra.mxu0 0.0
        %950 = vmatprep.subr.mxu0 0.0
        %951 = vmatpush1.msra.mxu0 0.0
        %952 = vmatprep.subr.mxu0 0.0
        %953 = vmatpush1.msra.mxu0 0.0
        %954 = vmatprep.subr.mxu0 0.0
        %955 = vmatpush1.msra.mxu0 0.0
        %956 = vmatprep.subr.mxu0 0.0
        %957 = vmatpush1.msra.mxu0 0.0
        %958 = vmatprep.subr.mxu0 0.0
        %959 = vmatpush1.msra.mxu0 0.0
        %960 = vmatprep.subr.mxu0 0.0
        %961 = vmatpush1.msra.mxu0 0.0
        %962 = vmatprep.subr.mxu0 0.0
        %963 = vmatpush1.msra.mxu0 0.0
        %964 = vmatprep.subr.mxu0 0.0
        %965 = vmatpush1.msra.mxu0 0.0
        %966 = vmatprep.subr.mxu0 0.0
        %967 = vmatpush1.msra.mxu0 0.0
        %968 = vmatprep.subr.mxu0 0.0
        %969 = vmatpush1.msra.mxu0 0.0
        %970 = vmatprep.subr.mxu0 0.0
        %971 = vmatpush1.msra.mxu0 0.0
        %972 = vmatprep.subr.mxu0 0.0
        %973 = vmatpush1.msra.mxu0 0.0
        %974 = vmatprep.subr.mxu0 0.0
        %975 = vmatpush1.msra.mxu0 0.0
        %976 = vmatprep.subr.mxu0 0.0
        %977 = vmatpush1.msra.mxu0 0.0
        %978 = vmatprep.subr.mxu0 0.0
        %979 = vmatpush1.msra.mxu0 0.0
        %980 = vmatprep.subr.mxu0 0.0
        %981 = vmatpush1.msra.mxu0 0.0
        %982 = vmatprep.subr.mxu0 0.0
        %983 = vmatpush1.msra.mxu0 0.0
        %984 = vmatprep.subr.mxu0 0.0
        %985 = vmatpush1.msra.mxu0 0.0
        %986 = vmatprep.mubr.f32.mxu0 0.0
        %987 = vmatmul.mubr.f32.gmra.mrb[0].mxu0 %v731
        %v988 = vpop.f32.mrb[0].mxu0
        %v989 = vadd.f32 0.0, %v988
        %v990 = vpop.f32.mrb[0].mxu0
        %v991 = vadd.f32 0.0, %v990
        %992 = vmatprep.mubr.f32.mxu0 0.0
        %993 = vmatmul.mubr.f32.gmra.mrb[0].mxu0 %v734
        %v994 = vpop.f32.mrb[0].mxu0
        %v995 = vadd.f32 0.0, %v994
        %v996 = vpop.f32.mrb[0].mxu0
        %v997 = vadd.f32 0.0, %v996
        %998 = vmatprep.mubr.f32.mxu0 0.0
        %999 = vmatmul.mubr.f32.gmra.mrb[0].mxu0 %v737
        %v1000 = vpop.f32.mrb[0].mxu0
        %v1001 = vadd.f32 0.0, %v1000
        %v1002 = vpop.f32.mrb[0].mxu0
        %v1003 = vadd.f32 0.0, %v1002
        %1004 = vmatprep.mubr.f32.mxu0 0.0
        %1005 = vmatmul.mubr.f32.gmra.mrb[0].mxu0 %v740
        %v1006 = vpop.f32.mrb[0].mxu0
        %v1007 = vadd.f32 0.0, %v1006
        %v1008 = vpop.f32.mrb[0].mxu0
        %v1009 = vadd.f32 0.0, %v1008
        %1010 = vmatprep.mubr.f32.mxu0 0.0
        %1011 = vmatmul.mubr.f32.gmra.mrb[0].mxu0 %v743
        %v1012 = vpop.f32.mrb[0].mxu0
        %v1013 = vadd.f32 0.0, %v1012
        %v1014 = vpop.f32.mrb[0].mxu0
        %v1015 = vadd.f32 0.0, %v1014
        %1016 = vmatprep.mubr.f32.mxu0 0.0
        %1017 = vmatmul.mubr.f32.gmra.mrb[0].mxu0 %v746
        %v1018 = vpop.f32.mrb[0].mxu0
        %v1019 = vadd.f32 0.0, %v1018
        %v1020 = vpop.f32.mrb[0].mxu0
        %v1021 = vadd.f32 0.0, %v1020
        %1022 = vmatprep.mubr.f32.mxu0 0.0
        %1023 = vmatmul.mubr.f32.gmra.mrb[0].mxu0 %v749
        %v1024 = vpop.f32.mrb[0].mxu0
        %v1025 = vadd.f32 0.0, %v1024
        %v1026 = vpop.f32.mrb[0].mxu0
        %v1027 = vadd.f32 0.0, %v1026
        %1028 = vmatprep.mubr.f32.mxu0 0.0
        %1029 = vmatmul.mubr.f32.gmra.mrb[0].mxu0 %v752
        %v1030 = vpop.f32.mrb[0].mxu0
        %v1031 = vadd.f32 0.0, %v1030
        %v1032 = vpop.f32.mrb[0].mxu0
        %v1033 = vadd.f32 0.0, %v1032
        %1034 = vmatprep.mubr.f32.mxu0 0.0
        %1035 = vmatmul.mubr.f32.gmra.mrb[0].mxu0 %v755
        %v1036 = vpop.f32.mrb[0].mxu0
        %v1037 = vadd.f32 0.0, %v1036
        %v1038 = vpop.f32.mrb[0].mxu0
        %v1039 = vadd.f32 0.0, %v1038
        %1040 = vmatprep.mubr.f32.mxu0 0.0
        %1041 = vmatmul.mubr.f32.gmra.mrb[0].mxu0 %v758
        %v1042 = vpop.f32.mrb[0].mxu0
        %v1043 = vadd.f32 0.0, %v1042
        %v1044 = vpop.f32.mrb[0].mxu0
        %v1045 = vadd.f32 0.0, %v1044
        %1046 = vmatprep.mubr.f32.mxu0 0.0
        %1047 = vmatmul.mubr.f32.gmra.mrb[0].mxu0 %v761
        %v1048 = vpop.f32.mrb[0].mxu0
        %v1049 = vadd.f32 0.0, %v1048
        %v1050 = vpop.f32.mrb[0].mxu0
        %v1051 = vadd.f32 0.0, %v1050
        %1052 = vmatprep.mubr.f32.mxu0 0.0
        %1053 = vmatmul.mubr.f32.gmra.mrb[0].mxu0 %v764
        %v1054 = vpop.f32.mrb[0].mxu0
        %v1055 = vadd.f32 0.0, %v1054
        %v1056 = vpop.f32.mrb[0].mxu0
        %v1057 = vadd.f32 0.0, %v1056
        %1058 = vmatprep.mubr.f32.mxu0 0.0
        %1059 = vmatmul.mubr.f32.gmra.mrb[0].mxu0 %v767
        %v1060 = vpop.f32.mrb[0].mxu0
        %v1061 = vadd.f32 0.0, %v1060
        %v1062 = vpop.f32.mrb[0].mxu0
        %v1063 = vadd.f32 0.0, %v1062
        %1064 = vmatprep.mubr.f32.mxu0 0.0
        %1065 = vmatmul.mubr.f32.gmra.mrb[0].mxu0 %v770
        %v1066 = vpop.f32.mrb[0].mxu0
        %v1067 = vadd.f32 0.0, %v1066
        %v1068 = vpop.f32.mrb[0].mxu0
        %v1069 = vadd.f32 0.0, %v1068
        %1070 = vmatprep.mubr.f32.mxu0 0.0
        %1071 = vmatmul.mubr.f32.gmra.mrb[0].mxu0 %v773
        %v1072 = vpop.f32.mrb[0].mxu0
        %v1073 = vadd.f32 0.0, %v1072
        %v1074 = vpop.f32.mrb[0].mxu0
        %v1075 = vadd.f32 0.0, %v1074
        %1076 = vmatprep.mubr.f32.mxu0 0.0
        %1077 = vmatmul.mubr.f32.gmra.mrb[0].mxu0 %v776
        %v1078 = vpop.f32.mrb[0].mxu0
        %v1079 = vadd.f32 0.0, %v1078
        %v1080 = vpop.f32.mrb[0].mxu0
        %v1081 = vadd.f32 0.0, %v1080
        %1082 = vmatprep.mubr.f32.mxu0 0.0
        %1083 = vmatmul.mubr.f32.gmra.mrb[0].mxu0 %v779
        %v1084 = vpop.f32.mrb[0].mxu0
        %v1085 = vadd.f32 0.0, %v1084
        %v1086 = vpop.f32.mrb[0].mxu0
        %v1087 = vadd.f32 0.0, %v1086
        %1088 = vmatprep.mubr.f32.mxu0 0.0
        %1089 = vmatmul.mubr.f32.gmra.mrb[0].mxu0 %v782
        %v1090 = vpop.f32.mrb[0].mxu0
        %v1091 = vadd.f32 0.0, %v1090
        %v1092 = vpop.f32.mrb[0].mxu0
        %v1093 = vadd.f32 0.0, %v1092
        %1094 = vmatprep.mubr.f32.mxu0 0.0
        %1095 = vmatmul.mubr.f32.gmra.mrb[0].mxu0 %v785
        %v1096 = vpop.f32.mrb[0].mxu0
        %v1097 = vadd.f32 0.0, %v1096
        %v1098 = vpop.f32.mrb[0].mxu0
        %v1099 = vadd.f32 0.0, %v1098
        %1100 = vmatprep.mubr.f32.mxu0 0.0
        %1101 = vmatmul.mubr.f32.gmra.mrb[0].mxu0 %v788
        %v1102 = vpop.f32.mrb[0].mxu0
        %v1103 = vadd.f32 0.0, %v1102
        %v1104 = vpop.f32.mrb[0].mxu0
        %v1105 = vadd.f32 0.0, %v1104
        %1106 = vmatprep.mubr.f32.mxu0 0.0
        %1107 = vmatmul.mubr.f32.gmra.mrb[0].mxu0 %v791
        %v1108 = vpop.f32.mrb[0].mxu0
        %v1109 = vadd.f32 0.0, %v1108
        %v1110 = vpop.f32.mrb[0].mxu0
        %v1111 = vadd.f32 0.0, %v1110
        %1112 = vmatprep.mubr.f32.mxu0 0.0
        %1113 = vmatmul.mubr.f32.gmra.mrb[0].mxu0 %v794
        %v1114 = vpop.f32.mrb[0].mxu0
        %v1115 = vadd.f32 0.0, %v1114
        %v1116 = vpop.f32.mrb[0].mxu0
        %v1117 = vadd.f32 0.0, %v1116
        %1118 = vmatprep.mubr.f32.mxu0 0.0
        %1119 = vmatmul.mubr.f32.gmra.mrb[0].mxu0 %v797
        %v1120 = vpop.f32.mrb[0].mxu0
        %v1121 = vadd.f32 0.0, %v1120
        %v1122 = vpop.f32.mrb[0].mxu0
        %v1123 = vadd.f32 0.0, %v1122
        %1124 = vmatprep.mubr.f32.mxu0 0.0
        %1125 = vmatmul.mubr.f32.gmra.mrb[0].mxu0 %v800
        %v1126 = vpop.f32.mrb[0].mxu0
        %v1127 = vadd.f32 0.0, %v1126
        %v1128 = vpop.f32.mrb[0].mxu0
        %v1129 = vadd.f32 0.0, %v1128
        %1130 = vmatprep.mubr.f32.mxu0 0.0
        %1131 = vmatmul.mubr.f32.gmra.mrb[0].mxu0 %v803
        %v1132 = vpop.f32.mrb[0].mxu0
        %v1133 = vadd.f32 0.0, %v1132
        %v1134 = vpop.f32.mrb[0].mxu0
        %v1135 = vadd.f32 0.0, %v1134
        %1136 = vmatprep.mubr.f32.mxu0 0.0
        %1137 = vmatmul.mubr.f32.gmra.mrb[0].mxu0 %v806
        %v1138 = vpop.f32.mrb[0].mxu0
        %v1139 = vadd.f32 0.0, %v1138
        %v1140 = vpop.f32.mrb[0].mxu0
        %v1141 = vadd.f32 0.0, %v1140
        %1142 = vmatprep.mubr.f32.mxu0 0.0
        %1143 = vmatmul.mubr.f32.gmra.mrb[0].mxu0 %v809
        %v1144 = vpop.f32.mrb[0].mxu0
        %v1145 = vadd.f32 0.0, %v1144
        %v1146 = vpop.f32.mrb[0].mxu0
        %v1147 = vadd.f32 0.0, %v1146
        %1148 = vmatprep.mubr.f32.mxu0 0.0
        %1149 = vmatmul.mubr.f32.gmra.mrb[0].mxu0 %v812
        %v1150 = vpop.f32.mrb[0].mxu0
        %v1151 = vadd.f32 0.0, %v1150
        %v1152 = vpop.f32.mrb[0].mxu0
        %v1153 = vadd.f32 0.0, %v1152
        %1154 = vmatprep.mubr.f32.mxu0 0.0
        %1155 = vmatmul.mubr.f32.gmra.mrb[0].mxu0 %v815
        %v1156 = vpop.f32.mrb[0].mxu0
        %v1157 = vadd.f32 0.0, %v1156
        %v1158 = vpop.f32.mrb[0].mxu0
        %v1159 = vadd.f32 0.0, %v1158
        %1160 = vmatprep.mubr.f32.mxu0 0.0
        %1161 = vmatmul.mubr.f32.gmra.mrb[0].mxu0 %v818
        %v1162 = vpop.f32.mrb[0].mxu0
        %v1163 = vadd.f32 0.0, %v1162
        %v1164 = vpop.f32.mrb[0].mxu0
        %v1165 = vadd.f32 0.0, %v1164
        %1166 = vmatprep.mubr.f32.mxu0 0.0
        %1167 = vmatmul.mubr.f32.gmra.mrb[0].mxu0 %v821
        %v1168 = vpop.f32.mrb[0].mxu0
        %v1169 = vadd.f32 0.0, %v1168
        %v1170 = vpop.f32.mrb[0].mxu0
        %v1171 = vadd.f32 0.0, %v1170
        %1172 = vmatprep.mubr.f32.mxu0 0.0
        %1173 = vmatmul.mubr.f32.gmra.mrb[0].mxu0 %v824
        %v1174 = vpop.f32.mrb[0].mxu0
        %v1175 = vadd.f32 0.0, %v1174
        %v1176 = vpop.f32.mrb[0].mxu0
        %v1177 = vadd.f32 0.0, %v1176
        %1178 = vmatprep.mubr.f32.mxu0 0.0
        %1179 = vmatmul.mubr.f32.gmra.mrb[0].mxu0 %v827
        %v1180 = vpop.f32.mrb[0].mxu0
        %v1181 = vadd.f32 0.0, %v1180
        %v1182 = vpop.f32.mrb[0].mxu0
        %v1183 = vadd.f32 0.0, %v1182
        %1184 = vmatprep.mubr.f32.mxu0 0.0
        %1185 = vmatmul.mubr.f32.gmra.mrb[0].mxu0 %v830
        %v1186 = vpop.f32.mrb[0].mxu0
        %v1187 = vadd.f32 0.0, %v1186
        %v1188 = vpop.f32.mrb[0].mxu0
        %v1189 = vadd.f32 0.0, %v1188
        %1190 = vmatprep.mubr.f32.mxu0 0.0
        %1191 = vmatmul.mubr.f32.gmra.mrb[0].mxu0 %v833
        %v1192 = vpop.f32.mrb[0].mxu0
        %v1193 = vadd.f32 0.0, %v1192
        %v1194 = vpop.f32.mrb[0].mxu0
        %v1195 = vadd.f32 0.0, %v1194
        %1196 = vmatprep.mubr.f32.mxu0 0.0
        %1197 = vmatmul.mubr.f32.gmra.mrb[0].mxu0 %v836
        %v1198 = vpop.f32.mrb[0].mxu0
        %v1199 = vadd.f32 0.0, %v1198
        %v1200 = vpop.f32.mrb[0].mxu0
        %v1201 = vadd.f32 0.0, %v1200
        %1202 = vmatprep.mubr.f32.mxu0 0.0
        %1203 = vmatmul.mubr.f32.gmra.mrb[0].mxu0 %v839
        %v1204 = vpop.f32.mrb[0].mxu0
        %v1205 = vadd.f32 0.0, %v1204
        %v1206 = vpop.f32.mrb[0].mxu0
        %v1207 = vadd.f32 0.0, %v1206
        %1208 = vmatprep.mubr.f32.mxu0 0.0
        %1209 = vmatmul.mubr.f32.gmra.mrb[0].mxu0 %v842
        %v1210 = vpop.f32.mrb[0].mxu0
        %v1211 = vadd.f32 0.0, %v1210
        %v1212 = vpop.f32.mrb[0].mxu0
        %v1213 = vadd.f32 0.0, %v1212
        %1214 = vmatprep.mubr.f32.mxu0 0.0
        %1215 = vmatmul.mubr.f32.gmra.mrb[0].mxu0 %v845
        %v1216 = vpop.f32.mrb[0].mxu0
        %v1217 = vadd.f32 0.0, %v1216
        %v1218 = vpop.f32.mrb[0].mxu0
        %v1219 = vadd.f32 0.0, %v1218
        %1220 = vmatprep.mubr.f32.mxu0 0.0
        %1221 = vmatmul.mubr.f32.gmra.mrb[0].mxu0 %v848
        %v1222 = vpop.f32.mrb[0].mxu0
        %v1223 = vadd.f32 0.0, %v1222
        %v1224 = vpop.f32.mrb[0].mxu0
        %v1225 = vadd.f32 0.0, %v1224
        %1226 = vmatprep.mubr.f32.mxu0 0.0
        %1227 = vmatmul.mubr.f32.gmra.mrb[0].mxu0 %v851
        %v1228 = vpop.f32.mrb[0].mxu0
        %v1229 = vadd.f32 0.0, %v1228
        %v1230 = vpop.f32.mrb[0].mxu0
        %v1231 = vadd.f32 0.0, %v1230
        %1232 = vmatprep.mubr.f32.mxu0 0.0
        %1233 = vmatmul.mubr.f32.gmra.mrb[0].mxu0 %v854
        %v1234 = vpop.f32.mrb[0].mxu0
        %v1235 = vadd.f32 0.0, %v1234
        %v1236 = vpop.f32.mrb[0].mxu0
        %v1237 = vadd.f32 0.0, %v1236
        %1238 = vmatprep.mubr.f32.mxu0 0.0
        %1239 = vmatmul.mubr.f32.gmra.mrb[0].mxu0 %v857
        %v1240 = vpop.f32.mrb[0].mxu0
        %v1241 = vadd.f32 0.0, %v1240
        %v1242 = vpop.f32.mrb[0].mxu0
        %v1243 = vadd.f32 0.0, %v1242
        %1244 = vmatprep.mubr.f32.mxu0 0.0
        %1245 = vmatmul.mubr.f32.gmra.mrb[0].mxu0 %v860
        %v1246 = vpop.f32.mrb[0].mxu0
        %v1247 = vadd.f32 0.0, %v1246
        %v1248 = vpop.f32.mrb[0].mxu0
        %v1249 = vadd.f32 0.0, %v1248
        %1250 = vmatprep.mubr.f32.mxu0 0.0
        %1251 = vmatmul.mubr.f32.gmra.mrb[0].mxu0 %v863
        %v1252 = vpop.f32.mrb[0].mxu0
        %v1253 = vadd.f32 0.0, %v1252
        %v1254 = vpop.f32.mrb[0].mxu0
        %v1255 = vadd.f32 0.0, %v1254
        %1256 = vmatprep.mubr.f32.mxu0 0.0
        %1257 = vmatmul.mubr.f32.gmra.mrb[0].mxu0 %v866
        %v1258 = vpop.f32.mrb[0].mxu0
        %v1259 = vadd.f32 0.0, %v1258
        %v1260 = vpop.f32.mrb[0].mxu0
        %v1261 = vadd.f32 0.0, %v1260
        %1262 = vmatprep.mubr.f32.mxu0 0.0
        %1263 = vmatmul.mubr.f32.gmra.mrb[0].mxu0 %v869
        %v1264 = vpop.f32.mrb[0].mxu0
        %v1265 = vadd.f32 0.0, %v1264
        %v1266 = vpop.f32.mrb[0].mxu0
        %v1267 = vadd.f32 0.0, %v1266
        %1268 = vmatprep.mubr.f32.mxu0 0.0
        %1269 = vmatmul.mubr.f32.gmra.mrb[0].mxu0 %v872
        %v1270 = vpop.f32.mrb[0].mxu0
        %v1271 = vadd.f32 0.0, %v1270
        %v1272 = vpop.f32.mrb[0].mxu0
        %v1273 = vadd.f32 0.0, %v1272
        %1274 = vmatprep.mubr.f32.mxu0 0.0
        %1275 = vmatmul.mubr.f32.gmra.mrb[0].mxu0 %v875
        %v1276 = vpop.f32.mrb[0].mxu0
        %v1277 = vadd.f32 0.0, %v1276
        %v1278 = vpop.f32.mrb[0].mxu0
        %v1279 = vadd.f32 0.0, %v1278
        %1280 = vmatprep.mubr.f32.mxu0 0.0
        %1281 = vmatmul.mubr.f32.gmra.mrb[0].mxu0 %v878
        %v1282 = vpop.f32.mrb[0].mxu0
        %v1283 = vadd.f32 0.0, %v1282
        %v1284 = vpop.f32.mrb[0].mxu0
        %v1285 = vadd.f32 0.0, %v1284
        %1286 = vmatprep.mubr.f32.mxu0 0.0
        %1287 = vmatmul.mubr.f32.gmra.mrb[0].mxu0 %v881
        %v1288 = vpop.f32.mrb[0].mxu0
        %v1289 = vadd.f32 0.0, %v1288
        %v1290 = vpop.f32.mrb[0].mxu0
        %v1291 = vadd.f32 0.0, %v1290
        %1292 = vmatprep.mubr.f32.mxu0 0.0
        %1293 = vmatmul.mubr.f32.gmra.mrb[0].mxu0 %v884
        %v1294 = vpop.f32.mrb[0].mxu0
        %v1295 = vadd.f32 0.0, %v1294
        %v1296 = vpop.f32.mrb[0].mxu0
        %v1297 = vadd.f32 0.0, %v1296
        %1298 = vmatprep.mubr.f32.mxu0 0.0
        %1299 = vmatmul.mubr.f32.gmra.mrb[0].mxu0 %v887
        %v1300 = vpop.f32.mrb[0].mxu0
        %v1301 = vadd.f32 0.0, %v1300
        %v1302 = vpop.f32.mrb[0].mxu0
        %v1303 = vadd.f32 0.0, %v1302
        %1304 = vmatprep.mubr.f32.mxu0 0.0
        %1305 = vmatmul.mubr.f32.gmra.mrb[0].mxu0 %v890
        %v1306 = vpop.f32.mrb[0].mxu0
        %v1307 = vadd.f32 0.0, %v1306
        %v1308 = vpop.f32.mrb[0].mxu0
        %v1309 = vadd.f32 0.0, %v1308
        %1310 = vmatprep.mubr.f32.mxu0 0.0
        %1311 = vmatmul.mubr.f32.gmra.mrb[0].mxu0 %v893
        %v1312 = vpop.f32.mrb[0].mxu0
        %v1313 = vadd.f32 0.0, %v1312
        %v1314 = vpop.f32.mrb[0].mxu0
        %v1315 = vadd.f32 0.0, %v1314
        %1316 = vmatprep.mubr.f32.mxu0 0.0
        %1317 = vmatmul.mubr.f32.gmra.mrb[0].mxu0 %v896
        %v1318 = vpop.f32.mrb[0].mxu0
        %v1319 = vadd.f32 0.0, %v1318
        %v1320 = vpop.f32.mrb[0].mxu0
        %v1321 = vadd.f32 0.0, %v1320
        %1322 = vmatprep.mubr.f32.mxu0 0.0
        %1323 = vmatmul.mubr.f32.gmra.mrb[0].mxu0 %v899
        %v1324 = vpop.f32.mrb[0].mxu0
        %v1325 = vadd.f32 0.0, %v1324
        %v1326 = vpop.f32.mrb[0].mxu0
        %v1327 = vadd.f32 0.0, %v1326
        %1328 = vmatprep.mubr.f32.mxu0 0.0
        %1329 = vmatmul.mubr.f32.gmra.mrb[0].mxu0 %v902
        %v1330 = vpop.f32.mrb[0].mxu0
        %v1331 = vadd.f32 0.0, %v1330
        %v1332 = vpop.f32.mrb[0].mxu0
        %v1333 = vadd.f32 0.0, %v1332
        %1334 = vmatprep.mubr.f32.mxu0 0.0
        %1335 = vmatmul.mubr.f32.gmra.mrb[0].mxu0 %v905
        %v1336 = vpop.f32.mrb[0].mxu0
        %v1337 = vadd.f32 0.0, %v1336
        %v1338 = vpop.f32.mrb[0].mxu0
        %v1339 = vadd.f32 0.0, %v1338
        %1340 = vmatprep.mubr.f32.mxu0 0.0
        %1341 = vmatmul.mubr.f32.gmra.mrb[0].mxu0 %v908
        %v1342 = vpop.f32.mrb[0].mxu0
        %v1343 = vadd.f32 0.0, %v1342
        %v1344 = vpop.f32.mrb[0].mxu0
        %v1345 = vadd.f32 0.0, %v1344
        %1346 = vmatprep.mubr.f32.mxu0 0.0
        %1347 = vmatmul.mubr.f32.gmra.mrb[0].mxu0 %v911
        %v1348 = vpop.f32.mrb[0].mxu0
        %v1349 = vadd.f32 0.0, %v1348
        %v1350 = vpop.f32.mrb[0].mxu0
        %v1351 = vadd.f32 0.0, %v1350
        %1352 = vmatprep.mubr.f32.mxu0 0.0
        %1353 = vmatmul.mubr.f32.gmra.mrb[0].mxu0 %v914
        %v1354 = vpop.f32.mrb[0].mxu0
        %v1355 = vadd.f32 0.0, %v1354
        %v1356 = vpop.f32.mrb[0].mxu0
        %v1357 = vadd.f32 0.0, %v1356
        %1358 = vmatprep.mubr.f32.mxu0 0.0
        %1359 = vmatmul.mubr.f32.gmra.mrb[0].mxu0 %v917
        %v1360 = vpop.f32.mrb[0].mxu0
        %v1361 = vadd.f32 0.0, %v1360
        %v1362 = vpop.f32.mrb[0].mxu0
        %v1363 = vadd.f32 0.0, %v1362
        %1364 = vmatprep.mubr.f32.mxu0 0.0
        %1365 = vmatmul.mubr.f32.gmra.mrb[0].mxu0 %v920
        %v1366 = vpop.f32.mrb[0].mxu0
        %v1367 = vadd.f32 0.0, %v1366
        %v1368 = vpop.f32.mrb[0].mxu0
        %v1369 = vadd.f32 0.0, %v1368
        %1370 = vdwg.mxu0
        %1371 = vmatprep.subr.mxu0 %v588
        %1372 = vmatpush1.msra.mxu0 %v587
        %1373 = vmatprep.subr.mxu0 %v592
        %1374 = vmatpush1.msra.mxu0 %v591
        %1375 = vmatprep.subr.mxu0 %v596
        %1376 = vmatpush1.msra.mxu0 %v595
        %1377 = vmatprep.subr.mxu0 %v600
        %1378 = vmatpush1.msra.mxu0 %v599
        %1379 = vmatprep.subr.mxu0 0.0
        %1380 = vmatpush1.msra.mxu0 0.0
        %1381 = vmatprep.subr.mxu0 0.0
        %1382 = vmatpush1.msra.mxu0 0.0
        %1383 = vmatprep.subr.mxu0 0.0
        %1384 = vmatpush1.msra.mxu0 0.0
        %1385 = vmatprep.subr.mxu0 0.0
        %1386 = vmatpush1.msra.mxu0 0.0
        %1387 = vmatprep.subr.mxu0 0.0
        %1388 = vmatpush1.msra.mxu0 0.0
        %1389 = vmatprep.subr.mxu0 0.0
        %1390 = vmatpush1.msra.mxu0 0.0
        %1391 = vmatprep.subr.mxu0 0.0
        %1392 = vmatpush1.msra.mxu0 0.0
        %1393 = vmatprep.subr.mxu0 0.0
        %1394 = vmatpush1.msra.mxu0 0.0
        %1395 = vmatprep.subr.mxu0 0.0
        %1396 = vmatpush1.msra.mxu0 0.0
        %1397 = vmatprep.subr.mxu0 0.0
        %1398 = vmatpush1.msra.mxu0 0.0
        %1399 = vmatprep.subr.mxu0 0.0
        %1400 = vmatpush1.msra.mxu0 0.0
        %1401 = vmatprep.subr.mxu0 0.0
        %1402 = vmatpush1.msra.mxu0 0.0
        %1403 = vmatprep.subr.mxu0 0.0
        %1404 = vmatpush1.msra.mxu0 0.0
        %1405 = vmatprep.subr.mxu0 0.0
        %1406 = vmatpush1.msra.mxu0 0.0
        %1407 = vmatprep.subr.mxu0 0.0
        %1408 = vmatpush1.msra.mxu0 0.0
        %1409 = vmatprep.subr.mxu0 0.0
        %1410 = vmatpush1.msra.mxu0 0.0
        %1411 = vmatprep.subr.mxu0 0.0
        %1412 = vmatpush1.msra.mxu0 0.0
        %1413 = vmatprep.subr.mxu0 0.0
        %1414 = vmatpush1.msra.mxu0 0.0
        %1415 = vmatprep.subr.mxu0 0.0
        %1416 = vmatpush1.msra.mxu0 0.0
        %1417 = vmatprep.subr.mxu0 0.0
        %1418 = vmatpush1.msra.mxu0 0.0
        %1419 = vmatprep.subr.mxu0 0.0
        %1420 = vmatpush1.msra.mxu0 0.0
        %1421 = vmatprep.subr.mxu0 0.0
        %1422 = vmatpush1.msra.mxu0 0.0
        %1423 = vmatprep.subr.mxu0 0.0
        %1424 = vmatpush1.msra.mxu0 0.0
        %1425 = vmatprep.subr.mxu0 0.0
        %1426 = vmatpush1.msra.mxu0 0.0
        %1427 = vmatprep.subr.mxu0 0.0
        %1428 = vmatpush1.msra.mxu0 0.0
        %1429 = vmatprep.subr.mxu0 0.0
        %1430 = vmatpush1.msra.mxu0 0.0
        %1431 = vmatprep.subr.mxu0 0.0
        %1432 = vmatpush1.msra.mxu0 0.0
        %1433 = vmatprep.subr.mxu0 0.0
        %1434 = vmatpush1.msra.mxu0 0.0
        %1435 = vmatprep.mubr.f32.mxu0 0.0
        %1436 = vmatmul.mubr.f32.gmra.mrb[0].mxu0 %v731
        %v1437 = vpop.f32.mrb[0].mxu0
        %v1438 = vadd.f32 0.0, %v1437
        %v1439 = vpop.f32.mrb[0].mxu0
        %v1440 = vadd.f32 0.0, %v1439
        %1441 = vmatprep.mubr.f32.mxu0 0.0
        %1442 = vmatmul.mubr.f32.gmra.mrb[0].mxu0 %v734
        %v1443 = vpop.f32.mrb[0].mxu0
        %v1444 = vadd.f32 0.0, %v1443
        %v1445 = vpop.f32.mrb[0].mxu0
        %v1446 = vadd.f32 0.0, %v1445
        %1447 = vmatprep.mubr.f32.mxu0 0.0
        %1448 = vmatmul.mubr.f32.gmra.mrb[0].mxu0 %v737
        %v1449 = vpop.f32.mrb[0].mxu0
        %v1450 = vadd.f32 0.0, %v1449
        %v1451 = vpop.f32.mrb[0].mxu0
        %v1452 = vadd.f32 0.0, %v1451
        %1453 = vmatprep.mubr.f32.mxu0 0.0
        %1454 = vmatmul.mubr.f32.gmra.mrb[0].mxu0 %v740
        %v1455 = vpop.f32.mrb[0].mxu0
        %v1456 = vadd.f32 0.0, %v1455
        %v1457 = vpop.f32.mrb[0].mxu0
        %v1458 = vadd.f32 0.0, %v1457
        %1459 = vmatprep.mubr.f32.mxu0 0.0
        %1460 = vmatmul.mubr.f32.gmra.mrb[0].mxu0 %v743
        %v1461 = vpop.f32.mrb[0].mxu0
        %v1462 = vadd.f32 0.0, %v1461
        %v1463 = vpop.f32.mrb[0].mxu0
        %v1464 = vadd.f32 0.0, %v1463
        %1465 = vmatprep.mubr.f32.mxu0 0.0
        %1466 = vmatmul.mubr.f32.gmra.mrb[0].mxu0 %v746
        %v1467 = vpop.f32.mrb[0].mxu0
        %v1468 = vadd.f32 0.0, %v1467
        %v1469 = vpop.f32.mrb[0].mxu0
        %v1470 = vadd.f32 0.0, %v1469
        %1471 = vmatprep.mubr.f32.mxu0 0.0
        %1472 = vmatmul.mubr.f32.gmra.mrb[0].mxu0 %v749
        %v1473 = vpop.f32.mrb[0].mxu0
        %v1474 = vadd.f32 0.0, %v1473
        %v1475 = vpop.f32.mrb[0].mxu0
        %v1476 = vadd.f32 0.0, %v1475
        %1477 = vmatprep.mubr.f32.mxu0 0.0
        %1478 = vmatmul.mubr.f32.gmra.mrb[0].mxu0 %v752
        %v1479 = vpop.f32.mrb[0].mxu0
        %v1480 = vadd.f32 0.0, %v1479
        %v1481 = vpop.f32.mrb[0].mxu0
        %v1482 = vadd.f32 0.0, %v1481
        %1483 = vmatprep.mubr.f32.mxu0 0.0
        %1484 = vmatmul.mubr.f32.gmra.mrb[0].mxu0 %v755
        %v1485 = vpop.f32.mrb[0].mxu0
        %v1486 = vadd.f32 0.0, %v1485
        %v1487 = vpop.f32.mrb[0].mxu0
        %v1488 = vadd.f32 0.0, %v1487
        %1489 = vmatprep.mubr.f32.mxu0 0.0
        %1490 = vmatmul.mubr.f32.gmra.mrb[0].mxu0 %v758
        %v1491 = vpop.f32.mrb[0].mxu0
        %v1492 = vadd.f32 0.0, %v1491
        %v1493 = vpop.f32.mrb[0].mxu0
        %v1494 = vadd.f32 0.0, %v1493
        %1495 = vmatprep.mubr.f32.mxu0 0.0
        %1496 = vmatmul.mubr.f32.gmra.mrb[0].mxu0 %v761
        %v1497 = vpop.f32.mrb[0].mxu0
        %v1498 = vadd.f32 0.0, %v1497
        %v1499 = vpop.f32.mrb[0].mxu0
        %v1500 = vadd.f32 0.0, %v1499
        %1501 = vmatprep.mubr.f32.mxu0 0.0
        %1502 = vmatmul.mubr.f32.gmra.mrb[0].mxu0 %v764
        %v1503 = vpop.f32.mrb[0].mxu0
        %v1504 = vadd.f32 0.0, %v1503
        %v1505 = vpop.f32.mrb[0].mxu0
        %v1506 = vadd.f32 0.0, %v1505
        %1507 = vmatprep.mubr.f32.mxu0 0.0
        %1508 = vmatmul.mubr.f32.gmra.mrb[0].mxu0 %v767
        %v1509 = vpop.f32.mrb[0].mxu0
        %v1510 = vadd.f32 0.0, %v1509
        %v1511 = vpop.f32.mrb[0].mxu0
        %v1512 = vadd.f32 0.0, %v1511
        %1513 = vmatprep.mubr.f32.mxu0 0.0
        %1514 = vmatmul.mubr.f32.gmra.mrb[0].mxu0 %v770
        %v1515 = vpop.f32.mrb[0].mxu0
        %v1516 = vadd.f32 0.0, %v1515
        %v1517 = vpop.f32.mrb[0].mxu0
        %v1518 = vadd.f32 0.0, %v1517
        %1519 = vmatprep.mubr.f32.mxu0 0.0
        %1520 = vmatmul.mubr.f32.gmra.mrb[0].mxu0 %v773
        %v1521 = vpop.f32.mrb[0].mxu0
        %v1522 = vadd.f32 0.0, %v1521
        %v1523 = vpop.f32.mrb[0].mxu0
        %v1524 = vadd.f32 0.0, %v1523
        %1525 = vmatprep.mubr.f32.mxu0 0.0
        %1526 = vmatmul.mubr.f32.gmra.mrb[0].mxu0 %v776
        %v1527 = vpop.f32.mrb[0].mxu0
        %v1528 = vadd.f32 0.0, %v1527
        %v1529 = vpop.f32.mrb[0].mxu0
        %v1530 = vadd.f32 0.0, %v1529
        %1531 = vmatprep.mubr.f32.mxu0 0.0
        %1532 = vmatmul.mubr.f32.gmra.mrb[0].mxu0 %v779
        %v1533 = vpop.f32.mrb[0].mxu0
        %v1534 = vadd.f32 0.0, %v1533
        %v1535 = vpop.f32.mrb[0].mxu0
        %v1536 = vadd.f32 0.0, %v1535
        %1537 = vmatprep.mubr.f32.mxu0 0.0
        %1538 = vmatmul.mubr.f32.gmra.mrb[0].mxu0 %v782
        %v1539 = vpop.f32.mrb[0].mxu0
        %v1540 = vadd.f32 0.0, %v1539
        %v1541 = vpop.f32.mrb[0].mxu0
        %v1542 = vadd.f32 0.0, %v1541
        %1543 = vmatprep.mubr.f32.mxu0 0.0
        %1544 = vmatmul.mubr.f32.gmra.mrb[0].mxu0 %v785
        %v1545 = vpop.f32.mrb[0].mxu0
        %v1546 = vadd.f32 0.0, %v1545
        %v1547 = vpop.f32.mrb[0].mxu0
        %v1548 = vadd.f32 0.0, %v1547
        %1549 = vmatprep.mubr.f32.mxu0 0.0
        %1550 = vmatmul.mubr.f32.gmra.mrb[0].mxu0 %v788
        %v1551 = vpop.f32.mrb[0].mxu0
        %v1552 = vadd.f32 0.0, %v1551
        %v1553 = vpop.f32.mrb[0].mxu0
        %v1554 = vadd.f32 0.0, %v1553
        %1555 = vmatprep.mubr.f32.mxu0 0.0
        %1556 = vmatmul.mubr.f32.gmra.mrb[0].mxu0 %v791
        %v1557 = vpop.f32.mrb[0].mxu0
        %v1558 = vadd.f32 0.0, %v1557
        %v1559 = vpop.f32.mrb[0].mxu0
        %v1560 = vadd.f32 0.0, %v1559
        %1561 = vmatprep.mubr.f32.mxu0 0.0
        %1562 = vmatmul.mubr.f32.gmra.mrb[0].mxu0 %v794
        %v1563 = vpop.f32.mrb[0].mxu0
        %v1564 = vadd.f32 0.0, %v1563
        %v1565 = vpop.f32.mrb[0].mxu0
        %v1566 = vadd.f32 0.0, %v1565
        %1567 = vmatprep.mubr.f32.mxu0 0.0
        %1568 = vmatmul.mubr.f32.gmra.mrb[0].mxu0 %v797
        %v1569 = vpop.f32.mrb[0].mxu0
        %v1570 = vadd.f32 0.0, %v1569
        %v1571 = vpop.f32.mrb[0].mxu0
        %v1572 = vadd.f32 0.0, %v1571
        %1573 = vmatprep.mubr.f32.mxu0 0.0
        %1574 = vmatmul.mubr.f32.gmra.mrb[0].mxu0 %v800
        %v1575 = vpop.f32.mrb[0].mxu0
        %v1576 = vadd.f32 0.0, %v1575
        %v1577 = vpop.f32.mrb[0].mxu0
        %v1578 = vadd.f32 0.0, %v1577
        %1579 = vmatprep.mubr.f32.mxu0 0.0
        %1580 = vmatmul.mubr.f32.gmra.mrb[0].mxu0 %v803
        %v1581 = vpop.f32.mrb[0].mxu0
        %v1582 = vadd.f32 0.0, %v1581
        %v1583 = vpop.f32.mrb[0].mxu0
        %v1584 = vadd.f32 0.0, %v1583
        %1585 = vmatprep.mubr.f32.mxu0 0.0
        %1586 = vmatmul.mubr.f32.gmra.mrb[0].mxu0 %v806
        %v1587 = vpop.f32.mrb[0].mxu0
        %v1588 = vadd.f32 0.0, %v1587
        %v1589 = vpop.f32.mrb[0].mxu0
        %v1590 = vadd.f32 0.0, %v1589
        %1591 = vmatprep.mubr.f32.mxu0 0.0
        %1592 = vmatmul.mubr.f32.gmra.mrb[0].mxu0 %v809
        %v1593 = vpop.f32.mrb[0].mxu0
        %v1594 = vadd.f32 0.0, %v1593
        %v1595 = vpop.f32.mrb[0].mxu0
        %v1596 = vadd.f32 0.0, %v1595
        %1597 = vmatprep.mubr.f32.mxu0 0.0
        %1598 = vmatmul.mubr.f32.gmra.mrb[0].mxu0 %v812
        %v1599 = vpop.f32.mrb[0].mxu0
        %v1600 = vadd.f32 0.0, %v1599
        %v1601 = vpop.f32.mrb[0].mxu0
        %v1602 = vadd.f32 0.0, %v1601
        %1603 = vmatprep.mubr.f32.mxu0 0.0
        %1604 = vmatmul.mubr.f32.gmra.mrb[0].mxu0 %v815
        %v1605 = vpop.f32.mrb[0].mxu0
        %v1606 = vadd.f32 0.0, %v1605
        %v1607 = vpop.f32.mrb[0].mxu0
        %v1608 = vadd.f32 0.0, %v1607
        %1609 = vmatprep.mubr.f32.mxu0 0.0
        %1610 = vmatmul.mubr.f32.gmra.mrb[0].mxu0 %v818
        %v1611 = vpop.f32.mrb[0].mxu0
        %v1612 = vadd.f32 0.0, %v1611
        %v1613 = vpop.f32.mrb[0].mxu0
        %v1614 = vadd.f32 0.0, %v1613
        %1615 = vmatprep.mubr.f32.mxu0 0.0
        %1616 = vmatmul.mubr.f32.gmra.mrb[0].mxu0 %v821
        %v1617 = vpop.f32.mrb[0].mxu0
        %v1618 = vadd.f32 0.0, %v1617
        %v1619 = vpop.f32.mrb[0].mxu0
        %v1620 = vadd.f32 0.0, %v1619
        %1621 = vmatprep.mubr.f32.mxu0 0.0
        %1622 = vmatmul.mubr.f32.gmra.mrb[0].mxu0 %v824
        %v1623 = vpop.f32.mrb[0].mxu0
        %v1624 = vadd.f32 0.0, %v1623
        %v1625 = vpop.f32.mrb[0].mxu0
        %v1626 = vadd.f32 0.0, %v1625
        %1627 = vmatprep.mubr.f32.mxu0 0.0
        %1628 = vmatmul.mubr.f32.gmra.mrb[0].mxu0 %v827
        %v1629 = vpop.f32.mrb[0].mxu0
        %v1630 = vadd.f32 0.0, %v1629
        %v1631 = vpop.f32.mrb[0].mxu0
        %v1632 = vadd.f32 0.0, %v1631
        %1633 = vmatprep.mubr.f32.mxu0 0.0
        %1634 = vmatmul.mubr.f32.gmra.mrb[0].mxu0 %v830
        %v1635 = vpop.f32.mrb[0].mxu0
        %v1636 = vadd.f32 0.0, %v1635
        %v1637 = vpop.f32.mrb[0].mxu0
        %v1638 = vadd.f32 0.0, %v1637
        %1639 = vmatprep.mubr.f32.mxu0 0.0
        %1640 = vmatmul.mubr.f32.gmra.mrb[0].mxu0 %v833
        %v1641 = vpop.f32.mrb[0].mxu0
        %v1642 = vadd.f32 0.0, %v1641
        %v1643 = vpop.f32.mrb[0].mxu0
        %v1644 = vadd.f32 0.0, %v1643
        %1645 = vmatprep.mubr.f32.mxu0 0.0
        %1646 = vmatmul.mubr.f32.gmra.mrb[0].mxu0 %v836
        %v1647 = vpop.f32.mrb[0].mxu0
        %v1648 = vadd.f32 0.0, %v1647
        %v1649 = vpop.f32.mrb[0].mxu0
        %v1650 = vadd.f32 0.0, %v1649
        %1651 = vmatprep.mubr.f32.mxu0 0.0
        %1652 = vmatmul.mubr.f32.gmra.mrb[0].mxu0 %v839
        %v1653 = vpop.f32.mrb[0].mxu0
        %v1654 = vadd.f32 0.0, %v1653
        %v1655 = vpop.f32.mrb[0].mxu0
        %v1656 = vadd.f32 0.0, %v1655
        %1657 = vmatprep.mubr.f32.mxu0 0.0
        %1658 = vmatmul.mubr.f32.gmra.mrb[0].mxu0 %v842
        %v1659 = vpop.f32.mrb[0].mxu0
        %v1660 = vadd.f32 0.0, %v1659
        %v1661 = vpop.f32.mrb[0].mxu0
        %v1662 = vadd.f32 0.0, %v1661
        %1663 = vmatprep.mubr.f32.mxu0 0.0
        %1664 = vmatmul.mubr.f32.gmra.mrb[0].mxu0 %v845
        %v1665 = vpop.f32.mrb[0].mxu0
        %v1666 = vadd.f32 0.0, %v1665
        %v1667 = vpop.f32.mrb[0].mxu0
        %v1668 = vadd.f32 0.0, %v1667
        %1669 = vmatprep.mubr.f32.mxu0 0.0
        %1670 = vmatmul.mubr.f32.gmra.mrb[0].mxu0 %v848
        %v1671 = vpop.f32.mrb[0].mxu0
        %v1672 = vadd.f32 0.0, %v1671
        %v1673 = vpop.f32.mrb[0].mxu0
        %v1674 = vadd.f32 0.0, %v1673
        %1675 = vmatprep.mubr.f32.mxu0 0.0
        %1676 = vmatmul.mubr.f32.gmra.mrb[0].mxu0 %v851
        %v1677 = vpop.f32.mrb[0].mxu0
        %v1678 = vadd.f32 0.0, %v1677
        %v1679 = vpop.f32.mrb[0].mxu0
        %v1680 = vadd.f32 0.0, %v1679
        %1681 = vmatprep.mubr.f32.mxu0 0.0
        %1682 = vmatmul.mubr.f32.gmra.mrb[0].mxu0 %v854
        %v1683 = vpop.f32.mrb[0].mxu0
        %v1684 = vadd.f32 0.0, %v1683
        %v1685 = vpop.f32.mrb[0].mxu0
        %v1686 = vadd.f32 0.0, %v1685
        %1687 = vmatprep.mubr.f32.mxu0 0.0
        %1688 = vmatmul.mubr.f32.gmra.mrb[0].mxu0 %v857
        %v1689 = vpop.f32.mrb[0].mxu0
        %v1690 = vadd.f32 0.0, %v1689
        %v1691 = vpop.f32.mrb[0].mxu0
        %v1692 = vadd.f32 0.0, %v1691
        %1693 = vmatprep.mubr.f32.mxu0 0.0
        %1694 = vmatmul.mubr.f32.gmra.mrb[0].mxu0 %v860
        %v1695 = vpop.f32.mrb[0].mxu0
        %v1696 = vadd.f32 0.0, %v1695
        %v1697 = vpop.f32.mrb[0].mxu0
        %v1698 = vadd.f32 0.0, %v1697
        %1699 = vmatprep.mubr.f32.mxu0 0.0
        %1700 = vmatmul.mubr.f32.gmra.mrb[0].mxu0 %v863
        %v1701 = vpop.f32.mrb[0].mxu0
        %v1702 = vadd.f32 0.0, %v1701
        %v1703 = vpop.f32.mrb[0].mxu0
        %v1704 = vadd.f32 0.0, %v1703
        %1705 = vmatprep.mubr.f32.mxu0 0.0
        %1706 = vmatmul.mubr.f32.gmra.mrb[0].mxu0 %v866
        %v1707 = vpop.f32.mrb[0].mxu0
        %v1708 = vadd.f32 0.0, %v1707
        %v1709 = vpop.f32.mrb[0].mxu0
        %v1710 = vadd.f32 0.0, %v1709
        %1711 = vmatprep.mubr.f32.mxu0 0.0
        %1712 = vmatmul.mubr.f32.gmra.mrb[0].mxu0 %v869
        %v1713 = vpop.f32.mrb[0].mxu0
        %v1714 = vadd.f32 0.0, %v1713
        %v1715 = vpop.f32.mrb[0].mxu0
        %v1716 = vadd.f32 0.0, %v1715
        %1717 = vmatprep.mubr.f32.mxu0 0.0
        %1718 = vmatmul.mubr.f32.gmra.mrb[0].mxu0 %v872
        %v1719 = vpop.f32.mrb[0].mxu0
        %v1720 = vadd.f32 0.0, %v1719
        %v1721 = vpop.f32.mrb[0].mxu0
        %v1722 = vadd.f32 0.0, %v1721
        %1723 = vmatprep.mubr.f32.mxu0 0.0
        %1724 = vmatmul.mubr.f32.gmra.mrb[0].mxu0 %v875
        %v1725 = vpop.f32.mrb[0].mxu0
        %v1726 = vadd.f32 0.0, %v1725
        %v1727 = vpop.f32.mrb[0].mxu0
        %v1728 = vadd.f32 0.0, %v1727
        %1729 = vmatprep.mubr.f32.mxu0 0.0
        %1730 = vmatmul.mubr.f32.gmra.mrb[0].mxu0 %v878
        %v1731 = vpop.f32.mrb[0].mxu0
        %v1732 = vadd.f32 0.0, %v1731
        %v1733 = vpop.f32.mrb[0].mxu0
        %v1734 = vadd.f32 0.0, %v1733
        %1735 = vmatprep.mubr.f32.mxu0 0.0
        %1736 = vmatmul.mubr.f32.gmra.mrb[0].mxu0 %v881
        %v1737 = vpop.f32.mrb[0].mxu0
        %v1738 = vadd.f32 0.0, %v1737
        %v1739 = vpop.f32.mrb[0].mxu0
        %v1740 = vadd.f32 0.0, %v1739
        %1741 = vmatprep.mubr.f32.mxu0 0.0
        %1742 = vmatmul.mubr.f32.gmra.mrb[0].mxu0 %v884
        %v1743 = vpop.f32.mrb[0].mxu0
        %v1744 = vadd.f32 0.0, %v1743
        %v1745 = vpop.f32.mrb[0].mxu0
        %v1746 = vadd.f32 0.0, %v1745
        %1747 = vmatprep.mubr.f32.mxu0 0.0
        %1748 = vmatmul.mubr.f32.gmra.mrb[0].mxu0 %v887
        %v1749 = vpop.f32.mrb[0].mxu0
        %v1750 = vadd.f32 0.0, %v1749
        %v1751 = vpop.f32.mrb[0].mxu0
        %v1752 = vadd.f32 0.0, %v1751
        %1753 = vmatprep.mubr.f32.mxu0 0.0
        %1754 = vmatmul.mubr.f32.gmra.mrb[0].mxu0 %v890
        %v1755 = vpop.f32.mrb[0].mxu0
        %v1756 = vadd.f32 0.0, %v1755
        %v1757 = vpop.f32.mrb[0].mxu0
        %v1758 = vadd.f32 0.0, %v1757
        %1759 = vmatprep.mubr.f32.mxu0 0.0
        %1760 = vmatmul.mubr.f32.gmra.mrb[0].mxu0 %v893
        %v1761 = vpop.f32.mrb[0].mxu0
        %v1762 = vadd.f32 0.0, %v1761
        %v1763 = vpop.f32.mrb[0].mxu0
        %v1764 = vadd.f32 0.0, %v1763
        %1765 = vmatprep.mubr.f32.mxu0 0.0
        %1766 = vmatmul.mubr.f32.gmra.mrb[0].mxu0 %v896
        %v1767 = vpop.f32.mrb[0].mxu0
        %v1768 = vadd.f32 0.0, %v1767
        %v1769 = vpop.f32.mrb[0].mxu0
        %v1770 = vadd.f32 0.0, %v1769
        %1771 = vmatprep.mubr.f32.mxu0 0.0
        %1772 = vmatmul.mubr.f32.gmra.mrb[0].mxu0 %v899
        %v1773 = vpop.f32.mrb[0].mxu0
        %v1774 = vadd.f32 0.0, %v1773
        %v1775 = vpop.f32.mrb[0].mxu0
        %v1776 = vadd.f32 0.0, %v1775
        %1777 = vmatprep.mubr.f32.mxu0 0.0
        %1778 = vmatmul.mubr.f32.gmra.mrb[0].mxu0 %v902
        %v1779 = vpop.f32.mrb[0].mxu0
        %v1780 = vadd.f32 0.0, %v1779
        %v1781 = vpop.f32.mrb[0].mxu0
        %v1782 = vadd.f32 0.0, %v1781
        %1783 = vmatprep.mubr.f32.mxu0 0.0
        %1784 = vmatmul.mubr.f32.gmra.mrb[0].mxu0 %v905
        %v1785 = vpop.f32.mrb[0].mxu0
        %v1786 = vadd.f32 0.0, %v1785
        %v1787 = vpop.f32.mrb[0].mxu0
        %v1788 = vadd.f32 0.0, %v1787
        %1789 = vmatprep.mubr.f32.mxu0 0.0
        %1790 = vmatmul.mubr.f32.gmra.mrb[0].mxu0 %v908
        %v1791 = vpop.f32.mrb[0].mxu0
        %v1792 = vadd.f32 0.0, %v1791
        %v1793 = vpop.f32.mrb[0].mxu0
        %v1794 = vadd.f32 0.0, %v1793
        %1795 = vmatprep.mubr.f32.mxu0 0.0
        %1796 = vmatmul.mubr.f32.gmra.mrb[0].mxu0 %v911
        %v1797 = vpop.f32.mrb[0].mxu0
        %v1798 = vadd.f32 0.0, %v1797
        %v1799 = vpop.f32.mrb[0].mxu0
        %v1800 = vadd.f32 0.0, %v1799
        %1801 = vmatprep.mubr.f32.mxu0 0.0
        %1802 = vmatmul.mubr.f32.gmra.mrb[0].mxu0 %v914
        %v1803 = vpop.f32.mrb[0].mxu0
        %v1804 = vadd.f32 0.0, %v1803
        %v1805 = vpop.f32.mrb[0].mxu0
        %v1806 = vadd.f32 0.0, %v1805
        %1807 = vmatprep.mubr.f32.mxu0 0.0
        %1808 = vmatmul.mubr.f32.gmra.mrb[0].mxu0 %v917
        %v1809 = vpop.f32.mrb[0].mxu0
        %v1810 = vadd.f32 0.0, %v1809
        %v1811 = vpop.f32.mrb[0].mxu0
        %v1812 = vadd.f32 0.0, %v1811
        %1813 = vmatprep.mubr.f32.mxu0 0.0
        %1814 = vmatmul.mubr.f32.gmra.mrb[0].mxu0 %v920
        %v1815 = vpop.f32.mrb[0].mxu0
        %v1816 = vadd.f32 0.0, %v1815
        %v1817 = vpop.f32.mrb[0].mxu0
        %v1818 = vadd.f32 0.0, %v1817
        %1819 = vdwg.mxu0
        %v1820 = vmul.f32 %v989, 0.02
        %v1821 = vmul.f32 %v991, 0.02
        %v1822 = vmul.f32 %v1438, 0.02
        %v1823 = vmul.f32 %v1440, 0.02
        %v1824 = vmul.f32 %v995, 0.02
        %v1825 = vmul.f32 %v997, 0.02
        %v1826 = vmul.f32 %v1444, 0.02
        %v1827 = vmul.f32 %v1446, 0.02
        %v1828 = vmul.f32 %v1001, 0.02
        %v1829 = vmul.f32 %v1003, 0.02
        %v1830 = vmul.f32 %v1450, 0.02
        %v1831 = vmul.f32 %v1452, 0.02
        %v1832 = vmul.f32 %v1007, 0.02
        %v1833 = vmul.f32 %v1009, 0.02
        %v1834 = vmul.f32 %v1456, 0.02
        %v1835 = vmul.f32 %v1458, 0.02
        %v1836 = vmul.f32 %v1013, 0.02
        %v1837 = vmul.f32 %v1015, 0.02
        %v1838 = vmul.f32 %v1462, 0.02
        %v1839 = vmul.f32 %v1464, 0.02
        %v1840 = vmul.f32 %v1019, 0.02
        %v1841 = vmul.f32 %v1021, 0.02
        %v1842 = vmul.f32 %v1468, 0.02
        %v1843 = vmul.f32 %v1470, 0.02
        %v1844 = vmul.f32 %v1025, 0.02
        %v1845 = vmul.f32 %v1027, 0.02
        %v1846 = vmul.f32 %v1474, 0.02
        %v1847 = vmul.f32 %v1476, 0.02
        %v1848 = vmul.f32 %v1031, 0.02
        %v1849 = vmul.f32 %v1033, 0.02
        %v1850 = vmul.f32 %v1480, 0.02
        %v1851 = vmul.f32 %v1482, 0.02
        %v1852 = vmul.f32 %v1037, 0.02
        %v1853 = vmul.f32 %v1039, 0.02
        %v1854 = vmul.f32 %v1486, 0.02
        %v1855 = vmul.f32 %v1488, 0.02
        %v1856 = vmul.f32 %v1043, 0.02
        %v1857 = vmul.f32 %v1045, 0.02
        %v1858 = vmul.f32 %v1492, 0.02
        %v1859 = vmul.f32 %v1494, 0.02
        %v1860 = vmul.f32 %v1049, 0.02
        %v1861 = vmul.f32 %v1051, 0.02
        %v1862 = vmul.f32 %v1498, 0.02
        %v1863 = vmul.f32 %v1500, 0.02
        %v1864 = vmul.f32 %v1055, 0.02
        %v1865 = vmul.f32 %v1057, 0.02
        %v1866 = vmul.f32 %v1504, 0.02
        %v1867 = vmul.f32 %v1506, 0.02
        %v1868 = vmul.f32 %v1061, 0.02
        %v1869 = vmul.f32 %v1063, 0.02
        %v1870 = vmul.f32 %v1510, 0.02
        %v1871 = vmul.f32 %v1512, 0.02
        %v1872 = vmul.f32 %v1067, 0.02
        %v1873 = vmul.f32 %v1069, 0.02
        %v1874 = vmul.f32 %v1516, 0.02
        %v1875 = vmul.f32 %v1518, 0.02
        %v1876 = vmul.f32 %v1073, 0.02
        %v1877 = vmul.f32 %v1075, 0.02
        %v1878 = vmul.f32 %v1522, 0.02
        %v1879 = vmul.f32 %v1524, 0.02
        %v1880 = vmul.f32 %v1079, 0.02
        %v1881 = vmul.f32 %v1081, 0.02
        %v1882 = vmul.f32 %v1528, 0.02
        %v1883 = vmul.f32 %v1530, 0.02
        %v1884 = vmul.f32 %v1085, 0.02
        %v1885 = vmul.f32 %v1087, 0.02
        %v1886 = vmul.f32 %v1534, 0.02
        %v1887 = vmul.f32 %v1536, 0.02
        %v1888 = vmul.f32 %v1091, 0.02
        %v1889 = vmul.f32 %v1093, 0.02
        %v1890 = vmul.f32 %v1540, 0.02
        %v1891 = vmul.f32 %v1542, 0.02
        %v1892 = vmul.f32 %v1097, 0.02
        %v1893 = vmul.f32 %v1099, 0.02
        %v1894 = vmul.f32 %v1546, 0.02
        %v1895 = vmul.f32 %v1548, 0.02
        %v1896 = vmul.f32 %v1103, 0.02
        %v1897 = vmul.f32 %v1105, 0.02
        %v1898 = vmul.f32 %v1552, 0.02
        %v1899 = vmul.f32 %v1554, 0.02
        %v1900 = vmul.f32 %v1109, 0.02
        %v1901 = vmul.f32 %v1111, 0.02
        %v1902 = vmul.f32 %v1558, 0.02
        %v1903 = vmul.f32 %v1560, 0.02
        %v1904 = vmul.f32 %v1115, 0.02
        %v1905 = vmul.f32 %v1117, 0.02
        %v1906 = vmul.f32 %v1564, 0.02
        %v1907 = vmul.f32 %v1566, 0.02
        %v1908 = vmul.f32 %v1121, 0.02
        %v1909 = vmul.f32 %v1123, 0.02
        %v1910 = vmul.f32 %v1570, 0.02
        %v1911 = vmul.f32 %v1572, 0.02
        %v1912 = vmul.f32 %v1127, 0.02
        %v1913 = vmul.f32 %v1129, 0.02
        %v1914 = vmul.f32 %v1576, 0.02
        %v1915 = vmul.f32 %v1578, 0.02
        %v1916 = vmul.f32 %v1133, 0.02
        %v1917 = vmul.f32 %v1135, 0.02
        %v1918 = vmul.f32 %v1582, 0.02
        %v1919 = vmul.f32 %v1584, 0.02
        %v1920 = vmul.f32 %v1139, 0.02
        %v1921 = vmul.f32 %v1141, 0.02
        %v1922 = vmul.f32 %v1588, 0.02
        %v1923 = vmul.f32 %v1590, 0.02
        %v1924 = vmul.f32 %v1145, 0.02
        %v1925 = vmul.f32 %v1147, 0.02
        %v1926 = vmul.f32 %v1594, 0.02
        %v1927 = vmul.f32 %v1596, 0.02
        %v1928 = vmul.f32 %v1151, 0.02
        %v1929 = vmul.f32 %v1153, 0.02
        %v1930 = vmul.f32 %v1600, 0.02
        %v1931 = vmul.f32 %v1602, 0.02
        %v1932 = vmul.f32 %v1157, 0.02
        %v1933 = vmul.f32 %v1159, 0.02
        %v1934 = vmul.f32 %v1606, 0.02
        %v1935 = vmul.f32 %v1608, 0.02
        %v1936 = vmul.f32 %v1163, 0.02
        %v1937 = vmul.f32 %v1165, 0.02
        %v1938 = vmul.f32 %v1612, 0.02
        %v1939 = vmul.f32 %v1614, 0.02
        %v1940 = vmul.f32 %v1169, 0.02
        %v1941 = vmul.f32 %v1171, 0.02
        %v1942 = vmul.f32 %v1618, 0.02
        %v1943 = vmul.f32 %v1620, 0.02
        %v1944 = vmul.f32 %v1175, 0.02
        %v1945 = vmul.f32 %v1177, 0.02
        %v1946 = vmul.f32 %v1624, 0.02
        %v1947 = vmul.f32 %v1626, 0.02
        %v1948 = vmul.f32 %v1181, 0.02
        %v1949 = vmul.f32 %v1183, 0.02
        %v1950 = vmul.f32 %v1630, 0.02
        %v1951 = vmul.f32 %v1632, 0.02
        %v1952 = vmul.f32 %v1187, 0.02
        %v1953 = vmul.f32 %v1189, 0.02
        %v1954 = vmul.f32 %v1636, 0.02
        %v1955 = vmul.f32 %v1638, 0.02
        %v1956 = vmul.f32 %v1193, 0.02
        %v1957 = vmul.f32 %v1195, 0.02
        %v1958 = vmul.f32 %v1642, 0.02
        %v1959 = vmul.f32 %v1644, 0.02
        %v1960 = vmul.f32 %v1199, 0.02
        %v1961 = vmul.f32 %v1201, 0.02
        %v1962 = vmul.f32 %v1648, 0.02
        %v1963 = vmul.f32 %v1650, 0.02
        %v1964 = vmul.f32 %v1205, 0.02
        %v1965 = vmul.f32 %v1207, 0.02
        %v1966 = vmul.f32 %v1654, 0.02
        %v1967 = vmul.f32 %v1656, 0.02
        %v1968 = vmul.f32 %v1211, 0.02
        %v1969 = vmul.f32 %v1213, 0.02
        %v1970 = vmul.f32 %v1660, 0.02
        %v1971 = vmul.f32 %v1662, 0.02
        %v1972 = vmul.f32 %v1217, 0.02
        %v1973 = vmul.f32 %v1219, 0.02
        %v1974 = vmul.f32 %v1666, 0.02
        %v1975 = vmul.f32 %v1668, 0.02
        %v1976 = vmul.f32 %v1223, 0.02
        %v1977 = vmul.f32 %v1225, 0.02
        %v1978 = vmul.f32 %v1672, 0.02
        %v1979 = vmul.f32 %v1674, 0.02
        %v1980 = vmul.f32 %v1229, 0.02
        %v1981 = vmul.f32 %v1231, 0.02
        %v1982 = vmul.f32 %v1678, 0.02
        %v1983 = vmul.f32 %v1680, 0.02
        %v1984 = vmul.f32 %v1235, 0.02
        %v1985 = vmul.f32 %v1237, 0.02
        %v1986 = vmul.f32 %v1684, 0.02
        %v1987 = vmul.f32 %v1686, 0.02
        %v1988 = vmul.f32 %v1241, 0.02
        %v1989 = vmul.f32 %v1243, 0.02
        %v1990 = vmul.f32 %v1690, 0.02
        %v1991 = vmul.f32 %v1692, 0.02
        %v1992 = vmul.f32 %v1247, 0.02
        %v1993 = vmul.f32 %v1249, 0.02
        %v1994 = vmul.f32 %v1696, 0.02
        %v1995 = vmul.f32 %v1698, 0.02
        %v1996 = vmul.f32 %v1253, 0.02
        %v1997 = vmul.f32 %v1255, 0.02
        %v1998 = vmul.f32 %v1702, 0.02
        %v1999 = vmul.f32 %v1704, 0.02
        %v2000 = vmul.f32 %v1259, 0.02
        %v2001 = vmul.f32 %v1261, 0.02
        %v2002 = vmul.f32 %v1708, 0.02
        %v2003 = vmul.f32 %v1710, 0.02
        %v2004 = vmul.f32 %v1265, 0.02
        %v2005 = vmul.f32 %v1267, 0.02
        %v2006 = vmul.f32 %v1714, 0.02
        %v2007 = vmul.f32 %v1716, 0.02
        %v2008 = vmul.f32 %v1271, 0.02
        %v2009 = vmul.f32 %v1273, 0.02
        %v2010 = vmul.f32 %v1720, 0.02
        %v2011 = vmul.f32 %v1722, 0.02
        %v2012 = vmul.f32 %v1277, 0.02
        %v2013 = vmul.f32 %v1279, 0.02
        %v2014 = vmul.f32 %v1726, 0.02
        %v2015 = vmul.f32 %v1728, 0.02
        %v2016 = vmul.f32 %v1283, 0.02
        %v2017 = vmul.f32 %v1285, 0.02
        %v2018 = vmul.f32 %v1732, 0.02
        %v2019 = vmul.f32 %v1734, 0.02
        %v2020 = vmul.f32 %v1289, 0.02
        %v2021 = vmul.f32 %v1291, 0.02
        %v2022 = vmul.f32 %v1738, 0.02
        %v2023 = vmul.f32 %v1740, 0.02
        %v2024 = vmul.f32 %v1295, 0.02
        %v2025 = vmul.f32 %v1297, 0.02
        %v2026 = vmul.f32 %v1744, 0.02
        %v2027 = vmul.f32 %v1746, 0.02
        %v2028 = vmul.f32 %v1301, 0.02
        %v2029 = vmul.f32 %v1303, 0.02
        %v2030 = vmul.f32 %v1750, 0.02
        %v2031 = vmul.f32 %v1752, 0.02
        %v2032 = vmul.f32 %v1307, 0.02
        %v2033 = vmul.f32 %v1309, 0.02
        %v2034 = vmul.f32 %v1756, 0.02
        %v2035 = vmul.f32 %v1758, 0.02
        %v2036 = vmul.f32 %v1313, 0.02
        %v2037 = vmul.f32 %v1315, 0.02
        %v2038 = vmul.f32 %v1762, 0.02
        %v2039 = vmul.f32 %v1764, 0.02
        %v2040 = vmul.f32 %v1319, 0.02
        %v2041 = vmul.f32 %v1321, 0.02
        %v2042 = vmul.f32 %v1768, 0.02
        %v2043 = vmul.f32 %v1770, 0.02
        %v2044 = vmul.f32 %v1325, 0.02
        %v2045 = vmul.f32 %v1327, 0.02
        %v2046 = vmul.f32 %v1774, 0.02
        %v2047 = vmul.f32 %v1776, 0.02
        %v2048 = vmul.f32 %v1331, 0.02
        %v2049 = vmul.f32 %v1333, 0.02
        %v2050 = vmul.f32 %v1780, 0.02
        %v2051 = vmul.f32 %v1782, 0.02
        %v2052 = vmul.f32 %v1337, 0.02
        %v2053 = vmul.f32 %v1339, 0.02
        %v2054 = vmul.f32 %v1786, 0.02
        %v2055 = vmul.f32 %v1788, 0.02
        %v2056 = vmul.f32 %v1343, 0.02
        %v2057 = vmul.f32 %v1345, 0.02
        %v2058 = vmul.f32 %v1792, 0.02
        %v2059 = vmul.f32 %v1794, 0.02
        %v2060 = vmul.f32 %v1349, 0.02
        %v2061 = vmul.f32 %v1351, 0.02
        %v2062 = vmul.f32 %v1798, 0.02
        %v2063 = vmul.f32 %v1800, 0.02
        %v2064 = vmul.f32 %v1355, 0.02
        %v2065 = vmul.f32 %v1357, 0.02
        %v2066 = vmul.f32 %v1804, 0.02
        %v2067 = vmul.f32 %v1806, 0.02
        %v2068 = vmul.f32 %v1361, 0.02
        %v2069 = vmul.f32 %v1363, 0.02
        %v2070 = vmul.f32 %v1810, 0.02
        %v2071 = vmul.f32 %v1812, 0.02
        %v2072 = vmul.f32 %v1367, 0.02
        %v2073 = vmul.f32 %v1369, 0.02
        %v2074 = vmul.f32 %v1816, 0.02
        %v2075 = vmul.f32 %v1818, 0.02
        %v2076 = vld [vmem:[#allocation4] sm:$0xff]
        %v2077 = vld [vmem:[#allocation4 + $0x8] sm:$0xff]
        %v2078 = vld [vmem:[#allocation4 + $0x10] sm:$0xff]
        %v2079 = vld [vmem:[#allocation4 + $0x18] sm:$0xff]
        %v2080 = vld [vmem:[#allocation4 + $0x20] sm:$0xff]
        %v2081 = vld [vmem:[#allocation4 + $0x28] sm:$0xff]
        %v2082 = vld [vmem:[#allocation4 + $0x30] sm:$0xff]
        %v2083 = vld [vmem:[#allocation4 + $0x38] sm:$0xff]
        %v2084 = vld [vmem:[#allocation4 + $0x40] sm:$0xff]
        %v2085 = vld [vmem:[#allocation4 + $0x48] sm:$0xff]
        %v2086 = vld [vmem:[#allocation4 + $0x50] sm:$0xff]
        %v2087 = vld [vmem:[#allocation4 + $0x58] sm:$0xff]
        %v2088 = vld [vmem:[#allocation4 + $0x60] sm:$0xff]
        %v2089 = vld [vmem:[#allocation4 + $0x68] sm:$0xff]
        %v2090 = vld [vmem:[#allocation4 + $0x70] sm:$0xff]
        %v2091 = vld [vmem:[#allocation4 + $0x78] sm:$0xff]
        %v2092 = vld [vmem:[#allocation4 + $0x80] sm:$0xff]
        %v2093 = vld [vmem:[#allocation4 + $0x88] sm:$0xff]
        %v2094 = vld [vmem:[#allocation4 + $0x90] sm:$0xff]
        %v2095 = vld [vmem:[#allocation4 + $0x98] sm:$0xff]
        %v2096 = vld [vmem:[#allocation4 + $0xa0] sm:$0xff]
        %v2097 = vld [vmem:[#allocation4 + $0xa8] sm:$0xff]
        %v2098 = vld [vmem:[#allocation4 + $0xb0] sm:$0xff]
        %v2099 = vld [vmem:[#allocation4 + $0xb8] sm:$0xff]
        %v2100 = vld [vmem:[#allocation4 + $0xc0] sm:$0xff]
        %v2101 = vld [vmem:[#allocation4 + $0xc8] sm:$0xff]
        %v2102 = vld [vmem:[#allocation4 + $0xd0] sm:$0xff]
        %v2103 = vld [vmem:[#allocation4 + $0xd8] sm:$0xff]
        %v2104 = vld [vmem:[#allocation4 + $0xe0] sm:$0xff]
        %v2105 = vld [vmem:[#allocation4 + $0xe8] sm:$0xff]
        %v2106 = vld [vmem:[#allocation4 + $0xf0] sm:$0xff]
        %v2107 = vld [vmem:[#allocation4 + $0xf8] sm:$0xff]
        %v2108 = vld [vmem:[#allocation4 + $0x100] sm:$0xff]
        %v2109 = vld [vmem:[#allocation4 + $0x108] sm:$0xff]
        %v2110 = vld [vmem:[#allocation4 + $0x110] sm:$0xff]
        %v2111 = vld [vmem:[#allocation4 + $0x118] sm:$0xff]
        %v2112 = vld [vmem:[#allocation4 + $0x120] sm:$0xff]
        %v2113 = vld [vmem:[#allocation4 + $0x128] sm:$0xff]
        %v2114 = vld [vmem:[#allocation4 + $0x130] sm:$0xff]
        %v2115 = vld [vmem:[#allocation4 + $0x138] sm:$0xff]
        %v2116 = vld [vmem:[#allocation4 + $0x140] sm:$0xff]
        %v2117 = vld [vmem:[#allocation4 + $0x148] sm:$0xff]
        %v2118 = vld [vmem:[#allocation4 + $0x150] sm:$0xff]
        %v2119 = vld [vmem:[#allocation4 + $0x158] sm:$0xff]
        %v2120 = vld [vmem:[#allocation4 + $0x160] sm:$0xff]
        %v2121 = vld [vmem:[#allocation4 + $0x168] sm:$0xff]
        %v2122 = vld [vmem:[#allocation4 + $0x170] sm:$0xff]
        %v2123 = vld [vmem:[#allocation4 + $0x178] sm:$0xff]
        %v2124 = vld [vmem:[#allocation4 + $0x180] sm:$0xff]
        %v2125 = vld [vmem:[#allocation4 + $0x188] sm:$0xff]
        %v2126 = vld [vmem:[#allocation4 + $0x190] sm:$0xff]
        %v2127 = vld [vmem:[#allocation4 + $0x198] sm:$0xff]
        %v2128 = vld [vmem:[#allocation4 + $0x1a0] sm:$0xff]
        %v2129 = vld [vmem:[#allocation4 + $0x1a8] sm:$0xff]
        %v2130 = vld [vmem:[#allocation4 + $0x1b0] sm:$0xff]
        %v2131 = vld [vmem:[#allocation4 + $0x1b8] sm:$0xff]
        %v2132 = vld [vmem:[#allocation4 + $0x1c0] sm:$0xff]
        %v2133 = vld [vmem:[#allocation4 + $0x1c8] sm:$0xff]
        %v2134 = vld [vmem:[#allocation4 + $0x1d0] sm:$0xff]
        %v2135 = vld [vmem:[#allocation4 + $0x1d8] sm:$0xff]
        %v2136 = vld [vmem:[#allocation4 + $0x1e0] sm:$0xff]
        %v2137 = vld [vmem:[#allocation4 + $0x1e8] sm:$0xff]
        %v2138 = vld [vmem:[#allocation4 + $0x1f0] sm:$0xff]
        %v2139 = vld [vmem:[#allocation4 + $0x1f8] sm:$0xff]
        %v2140 = vmul.f32 %v1820, 1.442695
        %v2141 = vpow.pop %v2140
        %v2142 = vmul.f32 %v1821, 1.442695
        %v2143 = vpow.pop %v2142
        %v2144 = vmul.f32 %v1822, 1.442695
        %v2145 = vpow.pop %v2144
        %v2146 = vmul.f32 %v1823, 1.442695
        %v2147 = vpow.pop %v2146
        %v2148 = vmul.f32 %v1824, 1.442695
        %v2149 = vpow.pop %v2148
        %v2150 = vmul.f32 %v1825, 1.442695
        %v2151 = vpow.pop %v2150
        %v2152 = vmul.f32 %v1826, 1.442695
        %v2153 = vpow.pop %v2152
        %v2154 = vmul.f32 %v1827, 1.442695
        %v2155 = vpow.pop %v2154
        %v2156 = vmul.f32 %v1828, 1.442695
        %v2157 = vpow.pop %v2156
        %v2158 = vmul.f32 %v1829, 1.442695
        %v2159 = vpow.pop %v2158
        %v2160 = vmul.f32 %v1830, 1.442695
        %v2161 = vpow.pop %v2160
        %v2162 = vmul.f32 %v1831, 1.442695
        %v2163 = vpow.pop %v2162
        %v2164 = vmul.f32 %v1832, 1.442695
        %v2165 = vpow.pop %v2164
        %v2166 = vmul.f32 %v1833, 1.442695
        %v2167 = vpow.pop %v2166
        %v2168 = vmul.f32 %v1834, 1.442695
        %v2169 = vpow.pop %v2168
        %v2170 = vmul.f32 %v1835, 1.442695
        %v2171 = vpow.pop %v2170
        %v2172 = vmul.f32 %v1836, 1.442695
        %v2173 = vpow.pop %v2172
        %v2174 = vmul.f32 %v1837, 1.442695
        %v2175 = vpow.pop %v2174
        %v2176 = vmul.f32 %v1838, 1.442695
        %v2177 = vpow.pop %v2176
        %v2178 = vmul.f32 %v1839, 1.442695
        %v2179 = vpow.pop %v2178
        %v2180 = vmul.f32 %v1840, 1.442695
        %v2181 = vpow.pop %v2180
        %v2182 = vmul.f32 %v1841, 1.442695
        %v2183 = vpow.pop %v2182
        %v2184 = vmul.f32 %v1842, 1.442695
        %v2185 = vpow.pop %v2184
        %v2186 = vmul.f32 %v1843, 1.442695
        %v2187 = vpow.pop %v2186
        %v2188 = vmul.f32 %v1844, 1.442695
        %v2189 = vpow.pop %v2188
        %v2190 = vmul.f32 %v1845, 1.442695
        %v2191 = vpow.pop %v2190
        %v2192 = vmul.f32 %v1846, 1.442695
        %v2193 = vpow.pop %v2192
        %v2194 = vmul.f32 %v1847, 1.442695
        %v2195 = vpow.pop %v2194
        %v2196 = vmul.f32 %v1848, 1.442695
        %v2197 = vpow.pop %v2196
        %v2198 = vmul.f32 %v1849, 1.442695
        %v2199 = vpow.pop %v2198
        %v2200 = vmul.f32 %v1850, 1.442695
        %v2201 = vpow.pop %v2200
        %v2202 = vmul.f32 %v1851, 1.442695
        %v2203 = vpow.pop %v2202
        %v2204 = vmul.f32 %v1852, 1.442695
        %v2205 = vpow.pop %v2204
        %v2206 = vmul.f32 %v1853, 1.442695
        %v2207 = vpow.pop %v2206
        %v2208 = vmul.f32 %v1854, 1.442695
        %v2209 = vpow.pop %v2208
        %v2210 = vmul.f32 %v1855, 1.442695
        %v2211 = vpow.pop %v2210
        %v2212 = vmul.f32 %v1856, 1.442695
        %v2213 = vpow.pop %v2212
        %v2214 = vmul.f32 %v1857, 1.442695
        %v2215 = vpow.pop %v2214
        %v2216 = vmul.f32 %v1858, 1.442695
        %v2217 = vpow.pop %v2216
        %v2218 = vmul.f32 %v1859, 1.442695
        %v2219 = vpow.pop %v2218
        %v2220 = vmul.f32 %v1860, 1.442695
        %v2221 = vpow.pop %v2220
        %v2222 = vmul.f32 %v1861, 1.442695
        %v2223 = vpow.pop %v2222
        %v2224 = vmul.f32 %v1862, 1.442695
        %v2225 = vpow.pop %v2224
        %v2226 = vmul.f32 %v1863, 1.442695
        %v2227 = vpow.pop %v2226
        %v2228 = vmul.f32 %v1864, 1.442695
        %v2229 = vpow.pop %v2228
        %v2230 = vmul.f32 %v1865, 1.442695
        %v2231 = vpow.pop %v2230
        %v2232 = vmul.f32 %v1866, 1.442695
        %v2233 = vpow.pop %v2232
        %v2234 = vmul.f32 %v1867, 1.442695
        %v2235 = vpow.pop %v2234
        %v2236 = vmul.f32 %v1868, 1.442695
        %v2237 = vpow.pop %v2236
        %v2238 = vmul.f32 %v1869, 1.442695
        %v2239 = vpow.pop %v2238
        %v2240 = vmul.f32 %v1870, 1.442695
        %v2241 = vpow.pop %v2240
        %v2242 = vmul.f32 %v1871, 1.442695
        %v2243 = vpow.pop %v2242
        %v2244 = vmul.f32 %v1872, 1.442695
        %v2245 = vpow.pop %v2244
        %v2246 = vmul.f32 %v1873, 1.442695
        %v2247 = vpow.pop %v2246
        %v2248 = vmul.f32 %v1874, 1.442695
        %v2249 = vpow.pop %v2248
        %v2250 = vmul.f32 %v1875, 1.442695
        %v2251 = vpow.pop %v2250
        %v2252 = vmul.f32 %v1876, 1.442695
        %v2253 = vpow.pop %v2252
        %v2254 = vmul.f32 %v1877, 1.442695
        %v2255 = vpow.pop %v2254
        %v2256 = vmul.f32 %v1878, 1.442695
        %v2257 = vpow.pop %v2256
        %v2258 = vmul.f32 %v1879, 1.442695
        %v2259 = vpow.pop %v2258
        %v2260 = vmul.f32 %v1880, 1.442695
        %v2261 = vpow.pop %v2260
        %v2262 = vmul.f32 %v1881, 1.442695
        %v2263 = vpow.pop %v2262
        %v2264 = vmul.f32 %v1882, 1.442695
        %v2265 = vpow.pop %v2264
        %v2266 = vmul.f32 %v1883, 1.442695
        %v2267 = vpow.pop %v2266
        %v2268 = vmul.f32 %v1884, 1.442695
        %v2269 = vpow.pop %v2268
        %v2270 = vmul.f32 %v1885, 1.442695
        %v2271 = vpow.pop %v2270
        %v2272 = vmul.f32 %v1886, 1.442695
        %v2273 = vpow.pop %v2272
        %v2274 = vmul.f32 %v1887, 1.442695
        %v2275 = vpow.pop %v2274
        %v2276 = vmul.f32 %v1888, 1.442695
        %v2277 = vpow.pop %v2276
        %v2278 = vmul.f32 %v1889, 1.442695
        %v2279 = vpow.pop %v2278
        %v2280 = vmul.f32 %v1890, 1.442695
        %v2281 = vpow.pop %v2280
        %v2282 = vmul.f32 %v1891, 1.442695
        %v2283 = vpow.pop %v2282
        %v2284 = vmul.f32 %v1892, 1.442695
        %v2285 = vpow.pop %v2284
        %v2286 = vmul.f32 %v1893, 1.442695
        %v2287 = vpow.pop %v2286
        %v2288 = vmul.f32 %v1894, 1.442695
        %v2289 = vpow.pop %v2288
        %v2290 = vmul.f32 %v1895, 1.442695
        %v2291 = vpow.pop %v2290
        %v2292 = vmul.f32 %v1896, 1.442695
        %v2293 = vpow.pop %v2292
        %v2294 = vmul.f32 %v1897, 1.442695
        %v2295 = vpow.pop %v2294
        %v2296 = vmul.f32 %v1898, 1.442695
        %v2297 = vpow.pop %v2296
        %v2298 = vmul.f32 %v1899, 1.442695
        %v2299 = vpow.pop %v2298
        %v2300 = vmul.f32 %v1900, 1.442695
        %v2301 = vpow.pop %v2300
        %v2302 = vmul.f32 %v1901, 1.442695
        %v2303 = vpow.pop %v2302
        %v2304 = vmul.f32 %v1902, 1.442695
        %v2305 = vpow.pop %v2304
        %v2306 = vmul.f32 %v1903, 1.442695
        %v2307 = vpow.pop %v2306
        %v2308 = vmul.f32 %v1904, 1.442695
        %v2309 = vpow.pop %v2308
        %v2310 = vmul.f32 %v1905, 1.442695
        %v2311 = vpow.pop %v2310
        %v2312 = vmul.f32 %v1906, 1.442695
        %v2313 = vpow.pop %v2312
        %v2314 = vmul.f32 %v1907, 1.442695
        %v2315 = vpow.pop %v2314
        %v2316 = vmul.f32 %v1908, 1.442695
        %v2317 = vpow.pop %v2316
        %v2318 = vmul.f32 %v1909, 1.442695
        %v2319 = vpow.pop %v2318
        %v2320 = vmul.f32 %v1910, 1.442695
        %v2321 = vpow.pop %v2320
        %v2322 = vmul.f32 %v1911, 1.442695
        %v2323 = vpow.pop %v2322
        %v2324 = vmul.f32 %v1912, 1.442695
        %v2325 = vpow.pop %v2324
        %v2326 = vmul.f32 %v1913, 1.442695
        %v2327 = vpow.pop %v2326
        %v2328 = vmul.f32 %v1914, 1.442695
        %v2329 = vpow.pop %v2328
        %v2330 = vmul.f32 %v1915, 1.442695
        %v2331 = vpow.pop %v2330
        %v2332 = vmul.f32 %v1916, 1.442695
        %v2333 = vpow.pop %v2332
        %v2334 = vmul.f32 %v1917, 1.442695
        %v2335 = vpow.pop %v2334
        %v2336 = vmul.f32 %v1918, 1.442695
        %v2337 = vpow.pop %v2336
        %v2338 = vmul.f32 %v1919, 1.442695
        %v2339 = vpow.pop %v2338
        %v2340 = vmul.f32 %v1920, 1.442695
        %v2341 = vpow.pop %v2340
        %v2342 = vmul.f32 %v1921, 1.442695
        %v2343 = vpow.pop %v2342
        %v2344 = vmul.f32 %v1922, 1.442695
        %v2345 = vpow.pop %v2344
        %v2346 = vmul.f32 %v1923, 1.442695
        %v2347 = vpow.pop %v2346
        %v2348 = vmul.f32 %v1924, 1.442695
        %v2349 = vpow.pop %v2348
        %v2350 = vmul.f32 %v1925, 1.442695
        %v2351 = vpow.pop %v2350
        %v2352 = vmul.f32 %v1926, 1.442695
        %v2353 = vpow.pop %v2352
        %v2354 = vmul.f32 %v1927, 1.442695
        %v2355 = vpow.pop %v2354
        %v2356 = vmul.f32 %v1928, 1.442695
        %v2357 = vpow.pop %v2356
        %v2358 = vmul.f32 %v1929, 1.442695
        %v2359 = vpow.pop %v2358
        %v2360 = vmul.f32 %v1930, 1.442695
        %v2361 = vpow.pop %v2360
        %v2362 = vmul.f32 %v1931, 1.442695
        %v2363 = vpow.pop %v2362
        %v2364 = vmul.f32 %v1932, 1.442695
        %v2365 = vpow.pop %v2364
        %v2366 = vmul.f32 %v1933, 1.442695
        %v2367 = vpow.pop %v2366
        %v2368 = vmul.f32 %v1934, 1.442695
        %v2369 = vpow.pop %v2368
        %v2370 = vmul.f32 %v1935, 1.442695
        %v2371 = vpow.pop %v2370
        %v2372 = vmul.f32 %v1936, 1.442695
        %v2373 = vpow.pop %v2372
        %v2374 = vmul.f32 %v1937, 1.442695
        %v2375 = vpow.pop %v2374
        %v2376 = vmul.f32 %v1938, 1.442695
        %v2377 = vpow.pop %v2376
        %v2378 = vmul.f32 %v1939, 1.442695
        %v2379 = vpow.pop %v2378
        %v2380 = vmul.f32 %v1940, 1.442695
        %v2381 = vpow.pop %v2380
        %v2382 = vmul.f32 %v1941, 1.442695
        %v2383 = vpow.pop %v2382
        %v2384 = vmul.f32 %v1942, 1.442695
        %v2385 = vpow.pop %v2384
        %v2386 = vmul.f32 %v1943, 1.442695
        %v2387 = vpow.pop %v2386
        %v2388 = vmul.f32 %v1944, 1.442695
        %v2389 = vpow.pop %v2388
        %v2390 = vmul.f32 %v1945, 1.442695
        %v2391 = vpow.pop %v2390
        %v2392 = vmul.f32 %v1946, 1.442695
        %v2393 = vpow.pop %v2392
        %v2394 = vmul.f32 %v1947, 1.442695
        %v2395 = vpow.pop %v2394
        %v2396 = vmul.f32 %v1948, 1.442695
        %v2397 = vpow.pop %v2396
        %v2398 = vmul.f32 %v1949, 1.442695
        %v2399 = vpow.pop %v2398
        %v2400 = vmul.f32 %v1950, 1.442695
        %v2401 = vpow.pop %v2400
        %v2402 = vmul.f32 %v1951, 1.442695
        %v2403 = vpow.pop %v2402
        %v2404 = vmul.f32 %v1952, 1.442695
        %v2405 = vpow.pop %v2404
        %v2406 = vmul.f32 %v1953, 1.442695
        %v2407 = vpow.pop %v2406
        %v2408 = vmul.f32 %v1954, 1.442695
        %v2409 = vpow.pop %v2408
        %v2410 = vmul.f32 %v1955, 1.442695
        %v2411 = vpow.pop %v2410
        %v2412 = vmul.f32 %v1956, 1.442695
        %v2413 = vpow.pop %v2412
        %v2414 = vmul.f32 %v1957, 1.442695
        %v2415 = vpow.pop %v2414
        %v2416 = vmul.f32 %v1958, 1.442695
        %v2417 = vpow.pop %v2416
        %v2418 = vmul.f32 %v1959, 1.442695
        %v2419 = vpow.pop %v2418
        %v2420 = vmul.f32 %v1960, 1.442695
        %v2421 = vpow.pop %v2420
        %v2422 = vmul.f32 %v1961, 1.442695
        %v2423 = vpow.pop %v2422
        %v2424 = vmul.f32 %v1962, 1.442695
        %v2425 = vpow.pop %v2424
        %v2426 = vmul.f32 %v1963, 1.442695
        %v2427 = vpow.pop %v2426
        %v2428 = vmul.f32 %v1964, 1.442695
        %v2429 = vpow.pop %v2428
        %v2430 = vmul.f32 %v1965, 1.442695
        %v2431 = vpow.pop %v2430
        %v2432 = vmul.f32 %v1966, 1.442695
        %v2433 = vpow.pop %v2432
        %v2434 = vmul.f32 %v1967, 1.442695
        %v2435 = vpow.pop %v2434
        %v2436 = vmul.f32 %v1968, 1.442695
        %v2437 = vpow.pop %v2436
        %v2438 = vmul.f32 %v1969, 1.442695
        %v2439 = vpow.pop %v2438
        %v2440 = vmul.f32 %v1970, 1.442695
        %v2441 = vpow.pop %v2440
        %v2442 = vmul.f32 %v1971, 1.442695
        %v2443 = vpow.pop %v2442
        %v2444 = vmul.f32 %v1972, 1.442695
        %v2445 = vpow.pop %v2444
        %v2446 = vmul.f32 %v1973, 1.442695
        %v2447 = vpow.pop %v2446
        %v2448 = vmul.f32 %v1974, 1.442695
        %v2449 = vpow.pop %v2448
        %v2450 = vmul.f32 %v1975, 1.442695
        %v2451 = vpow.pop %v2450
        %v2452 = vmul.f32 %v1976, 1.442695
        %v2453 = vpow.pop %v2452
        %v2454 = vmul.f32 %v1977, 1.442695
        %v2455 = vpow.pop %v2454
        %v2456 = vmul.f32 %v1978, 1.442695
        %v2457 = vpow.pop %v2456
        %v2458 = vmul.f32 %v1979, 1.442695
        %v2459 = vpow.pop %v2458
        %v2460 = vmul.f32 %v1980, 1.442695
        %v2461 = vpow.pop %v2460
        %v2462 = vmul.f32 %v1981, 1.442695
        %v2463 = vpow.pop %v2462
        %v2464 = vmul.f32 %v1982, 1.442695
        %v2465 = vpow.pop %v2464
        %v2466 = vmul.f32 %v1983, 1.442695
        %v2467 = vpow.pop %v2466
        %v2468 = vmul.f32 %v1984, 1.442695
        %v2469 = vpow.pop %v2468
        %v2470 = vmul.f32 %v1985, 1.442695
        %v2471 = vpow.pop %v2470
        %v2472 = vmul.f32 %v1986, 1.442695
        %v2473 = vpow.pop %v2472
        %v2474 = vmul.f32 %v1987, 1.442695
        %v2475 = vpow.pop %v2474
        %v2476 = vmul.f32 %v1988, 1.442695
        %v2477 = vpow.pop %v2476
        %v2478 = vmul.f32 %v1989, 1.442695
        %v2479 = vpow.pop %v2478
        %v2480 = vmul.f32 %v1990, 1.442695
        %v2481 = vpow.pop %v2480
        %v2482 = vmul.f32 %v1991, 1.442695
        %v2483 = vpow.pop %v2482
        %v2484 = vmul.f32 %v1992, 1.442695
        %v2485 = vpow.pop %v2484
        %v2486 = vmul.f32 %v1993, 1.442695
        %v2487 = vpow.pop %v2486
        %v2488 = vmul.f32 %v1994, 1.442695
        %v2489 = vpow.pop %v2488
        %v2490 = vmul.f32 %v1995, 1.442695
        %v2491 = vpow.pop %v2490
        %v2492 = vmul.f32 %v1996, 1.442695
        %v2493 = vpow.pop %v2492
        %v2494 = vmul.f32 %v1997, 1.442695
        %v2495 = vpow.pop %v2494
        %v2496 = vmul.f32 %v1998, 1.442695
        %v2497 = vpow.pop %v2496
        %v2498 = vmul.f32 %v1999, 1.442695
        %v2499 = vpow.pop %v2498
        %v2500 = vmul.f32 %v2000, 1.442695
        %v2501 = vpow.pop %v2500
        %v2502 = vmul.f32 %v2001, 1.442695
        %v2503 = vpow.pop %v2502
        %v2504 = vmul.f32 %v2002, 1.442695
        %v2505 = vpow.pop %v2504
        %v2506 = vmul.f32 %v2003, 1.442695
        %v2507 = vpow.pop %v2506
        %v2508 = vmul.f32 %v2004, 1.442695
        %v2509 = vpow.pop %v2508
        %v2510 = vmul.f32 %v2005, 1.442695
        %v2511 = vpow.pop %v2510
        %v2512 = vmul.f32 %v2006, 1.442695
        %v2513 = vpow.pop %v2512
        %v2514 = vmul.f32 %v2007, 1.442695
        %v2515 = vpow.pop %v2514
        %v2516 = vmul.f32 %v2008, 1.442695
        %v2517 = vpow.pop %v2516
        %v2518 = vmul.f32 %v2009, 1.442695
        %v2519 = vpow.pop %v2518
        %v2520 = vmul.f32 %v2010, 1.442695
        %v2521 = vpow.pop %v2520
        %v2522 = vmul.f32 %v2011, 1.442695
        %v2523 = vpow.pop %v2522
        %v2524 = vmul.f32 %v2012, 1.442695
        %v2525 = vpow.pop %v2524
        %v2526 = vmul.f32 %v2013, 1.442695
        %v2527 = vpow.pop %v2526
        %v2528 = vmul.f32 %v2014, 1.442695
        %v2529 = vpow.pop %v2528
        %v2530 = vmul.f32 %v2015, 1.442695
        %v2531 = vpow.pop %v2530
        %v2532 = vmul.f32 %v2016, 1.442695
        %v2533 = vpow.pop %v2532
        %v2534 = vmul.f32 %v2017, 1.442695
        %v2535 = vpow.pop %v2534
        %v2536 = vmul.f32 %v2018, 1.442695
        %v2537 = vpow.pop %v2536
        %v2538 = vmul.f32 %v2019, 1.442695
        %v2539 = vpow.pop %v2538
        %v2540 = vmul.f32 %v2020, 1.442695
        %v2541 = vpow.pop %v2540
        %v2542 = vmul.f32 %v2021, 1.442695
        %v2543 = vpow.pop %v2542
        %v2544 = vmul.f32 %v2022, 1.442695
        %v2545 = vpow.pop %v2544
        %v2546 = vmul.f32 %v2023, 1.442695
        %v2547 = vpow.pop %v2546
        %v2548 = vmul.f32 %v2024, 1.442695
        %v2549 = vpow.pop %v2548
        %v2550 = vmul.f32 %v2025, 1.442695
        %v2551 = vpow.pop %v2550
        %v2552 = vmul.f32 %v2026, 1.442695
        %v2553 = vpow.pop %v2552
        %v2554 = vmul.f32 %v2027, 1.442695
        %v2555 = vpow.pop %v2554
        %v2556 = vmul.f32 %v2028, 1.442695
        %v2557 = vpow.pop %v2556
        %v2558 = vmul.f32 %v2029, 1.442695
        %v2559 = vpow.pop %v2558
        %v2560 = vmul.f32 %v2030, 1.442695
        %v2561 = vpow.pop %v2560
        %v2562 = vmul.f32 %v2031, 1.442695
        %v2563 = vpow.pop %v2562
        %v2564 = vmul.f32 %v2032, 1.442695
        %v2565 = vpow.pop %v2564
        %v2566 = vmul.f32 %v2033, 1.442695
        %v2567 = vpow.pop %v2566
        %v2568 = vmul.f32 %v2034, 1.442695
        %v2569 = vpow.pop %v2568
        %v2570 = vmul.f32 %v2035, 1.442695
        %v2571 = vpow.pop %v2570
        %v2572 = vmul.f32 %v2036, 1.442695
        %v2573 = vpow.pop %v2572
        %v2574 = vmul.f32 %v2037, 1.442695
        %v2575 = vpow.pop %v2574
        %v2576 = vmul.f32 %v2038, 1.442695
        %v2577 = vpow.pop %v2576
        %v2578 = vmul.f32 %v2039, 1.442695
        %v2579 = vpow.pop %v2578
        %v2580 = vmul.f32 %v2040, 1.442695
        %v2581 = vpow.pop %v2580
        %v2582 = vmul.f32 %v2041, 1.442695
        %v2583 = vpow.pop %v2582
        %v2584 = vmul.f32 %v2042, 1.442695
        %v2585 = vpow.pop %v2584
        %v2586 = vmul.f32 %v2043, 1.442695
        %v2587 = vpow.pop %v2586
        %v2588 = vmul.f32 %v2044, 1.442695
        %v2589 = vpow.pop %v2588
        %v2590 = vmul.f32 %v2045, 1.442695
        %v2591 = vpow.pop %v2590
        %v2592 = vmul.f32 %v2046, 1.442695
        %v2593 = vpow.pop %v2592
        %v2594 = vmul.f32 %v2047, 1.442695
        %v2595 = vpow.pop %v2594
        %v2596 = vmul.f32 %v2048, 1.442695
        %v2597 = vpow.pop %v2596
        %v2598 = vmul.f32 %v2049, 1.442695
        %v2599 = vpow.pop %v2598
        %v2600 = vmul.f32 %v2050, 1.442695
        %v2601 = vpow.pop %v2600
        %v2602 = vmul.f32 %v2051, 1.442695
        %v2603 = vpow.pop %v2602
        %v2604 = vmul.f32 %v2052, 1.442695
        %v2605 = vpow.pop %v2604
        %v2606 = vmul.f32 %v2053, 1.442695
        %v2607 = vpow.pop %v2606
        %v2608 = vmul.f32 %v2054, 1.442695
        %v2609 = vpow.pop %v2608
        %v2610 = vmul.f32 %v2055, 1.442695
        %v2611 = vpow.pop %v2610
        %v2612 = vmul.f32 %v2056, 1.442695
        %v2613 = vpow.pop %v2612
        %v2614 = vmul.f32 %v2057, 1.442695
        %v2615 = vpow.pop %v2614
        %v2616 = vmul.f32 %v2058, 1.442695
        %v2617 = vpow.pop %v2616
        %v2618 = vmul.f32 %v2059, 1.442695
        %v2619 = vpow.pop %v2618
        %v2620 = vmul.f32 %v2060, 1.442695
        %v2621 = vpow.pop %v2620
        %v2622 = vmul.f32 %v2061, 1.442695
        %v2623 = vpow.pop %v2622
        %v2624 = vmul.f32 %v2062, 1.442695
        %v2625 = vpow.pop %v2624
        %v2626 = vmul.f32 %v2063, 1.442695
        %v2627 = vpow.pop %v2626
        %v2628 = vmul.f32 %v2064, 1.442695
        %v2629 = vpow.pop %v2628
        %v2630 = vmul.f32 %v2065, 1.442695
        %v2631 = vpow.pop %v2630
        %v2632 = vmul.f32 %v2066, 1.442695
        %v2633 = vpow.pop %v2632
        %v2634 = vmul.f32 %v2067, 1.442695
        %v2635 = vpow.pop %v2634
        %v2636 = vmul.f32 %v2068, 1.442695
        %v2637 = vpow.pop %v2636
        %v2638 = vmul.f32 %v2069, 1.442695
        %v2639 = vpow.pop %v2638
        %v2640 = vmul.f32 %v2070, 1.442695
        %v2641 = vpow.pop %v2640
        %v2642 = vmul.f32 %v2071, 1.442695
        %v2643 = vpow.pop %v2642
        %v2644 = vmul.f32 %v2072, 1.442695
        %v2645 = vpow.pop %v2644
        %v2646 = vmul.f32 %v2073, 1.442695
        %v2647 = vpow.pop %v2646
        %v2648 = vmul.f32 %v2074, 1.442695
        %v2649 = vpow.pop %v2648
        %v2650 = vmul.f32 %v2075, 1.442695
        %v2651 = vpow.pop %v2650
        %v2652 = vadd.f32 %v2141, %v2143
        %v2653 = vadd.f32 %v2652, %v2145
        %v2654 = vadd.f32 %v2653, %v2147
        %2655 = vadd.xlane.f32.xlu0 %v2654
        %v2656 = vpop.xlane.xlu0 %2655
        %v2657 = vadd.f32 %v2149, %v2151
        %v2658 = vadd.f32 %v2657, %v2153
        %v2659 = vadd.f32 %v2658, %v2155
        %2660 = vadd.xlane.f32.xlu0 %v2659
        %v2661 = vpop.xlane.xlu0 %2660
        %v2662 = vadd.f32 %v2157, %v2159
        %v2663 = vadd.f32 %v2662, %v2161
        %v2664 = vadd.f32 %v2663, %v2163
        %2665 = vadd.xlane.f32.xlu0 %v2664
        %v2666 = vpop.xlane.xlu0 %2665
        %v2667 = vadd.f32 %v2165, %v2167
        %v2668 = vadd.f32 %v2667, %v2169
        %v2669 = vadd.f32 %v2668, %v2171
        %2670 = vadd.xlane.f32.xlu0 %v2669
        %v2671 = vpop.xlane.xlu0 %2670
        %v2672 = vadd.f32 %v2173, %v2175
        %v2673 = vadd.f32 %v2672, %v2177
        %v2674 = vadd.f32 %v2673, %v2179
        %2675 = vadd.xlane.f32.xlu0 %v2674
        %v2676 = vpop.xlane.xlu0 %2675
        %v2677 = vadd.f32 %v2181, %v2183
        %v2678 = vadd.f32 %v2677, %v2185
        %v2679 = vadd.f32 %v2678, %v2187
        %2680 = vadd.xlane.f32.xlu0 %v2679
        %v2681 = vpop.xlane.xlu0 %2680
        %v2682 = vadd.f32 %v2189, %v2191
        %v2683 = vadd.f32 %v2682, %v2193
        %v2684 = vadd.f32 %v2683, %v2195
        %2685 = vadd.xlane.f32.xlu0 %v2684
        %v2686 = vpop.xlane.xlu0 %2685
        %v2687 = vadd.f32 %v2197, %v2199
        %v2688 = vadd.f32 %v2687, %v2201
        %v2689 = vadd.f32 %v2688, %v2203
        %2690 = vadd.xlane.f32.xlu0 %v2689
        %v2691 = vpop.xlane.xlu0 %2690
        %v2692 = vadd.f32 %v2205, %v2207
        %v2693 = vadd.f32 %v2692, %v2209
        %v2694 = vadd.f32 %v2693, %v2211
        %2695 = vadd.xlane.f32.xlu0 %v2694
        %v2696 = vpop.xlane.xlu0 %2695
        %v2697 = vadd.f32 %v2213, %v2215
        %v2698 = vadd.f32 %v2697, %v2217
        %v2699 = vadd.f32 %v2698, %v2219
        %2700 = vadd.xlane.f32.xlu0 %v2699
        %v2701 = vpop.xlane.xlu0 %2700
        %v2702 = vadd.f32 %v2221, %v2223
        %v2703 = vadd.f32 %v2702, %v2225
        %v2704 = vadd.f32 %v2703, %v2227
        %2705 = vadd.xlane.f32.xlu0 %v2704
        %v2706 = vpop.xlane.xlu0 %2705
        %v2707 = vadd.f32 %v2229, %v2231
        %v2708 = vadd.f32 %v2707, %v2233
        %v2709 = vadd.f32 %v2708, %v2235
        %2710 = vadd.xlane.f32.xlu0 %v2709
        %v2711 = vpop.xlane.xlu0 %2710
        %v2712 = vadd.f32 %v2237, %v2239
        %v2713 = vadd.f32 %v2712, %v2241
        %v2714 = vadd.f32 %v2713, %v2243
        %2715 = vadd.xlane.f32.xlu0 %v2714
        %v2716 = vpop.xlane.xlu0 %2715
        %v2717 = vadd.f32 %v2245, %v2247
        %v2718 = vadd.f32 %v2717, %v2249
        %v2719 = vadd.f32 %v2718, %v2251
        %2720 = vadd.xlane.f32.xlu0 %v2719
        %v2721 = vpop.xlane.xlu0 %2720
        %v2722 = vadd.f32 %v2253, %v2255
        %v2723 = vadd.f32 %v2722, %v2257
        %v2724 = vadd.f32 %v2723, %v2259
        %2725 = vadd.xlane.f32.xlu0 %v2724
        %v2726 = vpop.xlane.xlu0 %2725
        %v2727 = vadd.f32 %v2261, %v2263
        %v2728 = vadd.f32 %v2727, %v2265
        %v2729 = vadd.f32 %v2728, %v2267
        %2730 = vadd.xlane.f32.xlu0 %v2729
        %v2731 = vpop.xlane.xlu0 %2730
        %v2732 = vadd.f32 %v2269, %v2271
        %v2733 = vadd.f32 %v2732, %v2273
        %v2734 = vadd.f32 %v2733, %v2275
        %2735 = vadd.xlane.f32.xlu0 %v2734
        %v2736 = vpop.xlane.xlu0 %2735
        %v2737 = vadd.f32 %v2277, %v2279
        %v2738 = vadd.f32 %v2737, %v2281
        %v2739 = vadd.f32 %v2738, %v2283
        %2740 = vadd.xlane.f32.xlu0 %v2739
        %v2741 = vpop.xlane.xlu0 %2740
        %v2742 = vadd.f32 %v2285, %v2287
        %v2743 = vadd.f32 %v2742, %v2289
        %v2744 = vadd.f32 %v2743, %v2291
        %2745 = vadd.xlane.f32.xlu0 %v2744
        %v2746 = vpop.xlane.xlu0 %2745
        %v2747 = vadd.f32 %v2293, %v2295
        %v2748 = vadd.f32 %v2747, %v2297
        %v2749 = vadd.f32 %v2748, %v2299
        %2750 = vadd.xlane.f32.xlu0 %v2749
        %v2751 = vpop.xlane.xlu0 %2750
        %v2752 = vadd.f32 %v2301, %v2303
        %v2753 = vadd.f32 %v2752, %v2305
        %v2754 = vadd.f32 %v2753, %v2307
        %2755 = vadd.xlane.f32.xlu0 %v2754
        %v2756 = vpop.xlane.xlu0 %2755
        %v2757 = vadd.f32 %v2309, %v2311
        %v2758 = vadd.f32 %v2757, %v2313
        %v2759 = vadd.f32 %v2758, %v2315
        %2760 = vadd.xlane.f32.xlu0 %v2759
        %v2761 = vpop.xlane.xlu0 %2760
        %v2762 = vadd.f32 %v2317, %v2319
        %v2763 = vadd.f32 %v2762, %v2321
        %v2764 = vadd.f32 %v2763, %v2323
        %2765 = vadd.xlane.f32.xlu0 %v2764
        %v2766 = vpop.xlane.xlu0 %2765
        %v2767 = vadd.f32 %v2325, %v2327
        %v2768 = vadd.f32 %v2767, %v2329
        %v2769 = vadd.f32 %v2768, %v2331
        %2770 = vadd.xlane.f32.xlu0 %v2769
        %v2771 = vpop.xlane.xlu0 %2770
        %v2772 = vadd.f32 %v2333, %v2335
        %v2773 = vadd.f32 %v2772, %v2337
        %v2774 = vadd.f32 %v2773, %v2339
        %2775 = vadd.xlane.f32.xlu0 %v2774
        %v2776 = vpop.xlane.xlu0 %2775
        %v2777 = vadd.f32 %v2341, %v2343
        %v2778 = vadd.f32 %v2777, %v2345
        %v2779 = vadd.f32 %v2778, %v2347
        %2780 = vadd.xlane.f32.xlu0 %v2779
        %v2781 = vpop.xlane.xlu0 %2780
        %v2782 = vadd.f32 %v2349, %v2351
        %v2783 = vadd.f32 %v2782, %v2353
        %v2784 = vadd.f32 %v2783, %v2355
        %2785 = vadd.xlane.f32.xlu0 %v2784
        %v2786 = vpop.xlane.xlu0 %2785
        %v2787 = vadd.f32 %v2357, %v2359
        %v2788 = vadd.f32 %v2787, %v2361
        %v2789 = vadd.f32 %v2788, %v2363
        %2790 = vadd.xlane.f32.xlu0 %v2789
        %v2791 = vpop.xlane.xlu0 %2790
        %v2792 = vadd.f32 %v2365, %v2367
        %v2793 = vadd.f32 %v2792, %v2369
        %v2794 = vadd.f32 %v2793, %v2371
        %2795 = vadd.xlane.f32.xlu0 %v2794
        %v2796 = vpop.xlane.xlu0 %2795
        %v2797 = vadd.f32 %v2373, %v2375
        %v2798 = vadd.f32 %v2797, %v2377
        %v2799 = vadd.f32 %v2798, %v2379
        %2800 = vadd.xlane.f32.xlu0 %v2799
        %v2801 = vpop.xlane.xlu0 %2800
        %v2802 = vadd.f32 %v2381, %v2383
        %v2803 = vadd.f32 %v2802, %v2385
        %v2804 = vadd.f32 %v2803, %v2387
        %2805 = vadd.xlane.f32.xlu0 %v2804
        %v2806 = vpop.xlane.xlu0 %2805
        %v2807 = vadd.f32 %v2389, %v2391
        %v2808 = vadd.f32 %v2807, %v2393
        %v2809 = vadd.f32 %v2808, %v2395
        %2810 = vadd.xlane.f32.xlu0 %v2809
        %v2811 = vpop.xlane.xlu0 %2810
        %v2812 = vadd.f32 %v2397, %v2399
        %v2813 = vadd.f32 %v2812, %v2401
        %v2814 = vadd.f32 %v2813, %v2403
        %2815 = vadd.xlane.f32.xlu0 %v2814
        %v2816 = vpop.xlane.xlu0 %2815
        %v2817 = vadd.f32 %v2405, %v2407
        %v2818 = vadd.f32 %v2817, %v2409
        %v2819 = vadd.f32 %v2818, %v2411
        %2820 = vadd.xlane.f32.xlu0 %v2819
        %v2821 = vpop.xlane.xlu0 %2820
        %v2822 = vadd.f32 %v2413, %v2415
        %v2823 = vadd.f32 %v2822, %v2417
        %v2824 = vadd.f32 %v2823, %v2419
        %2825 = vadd.xlane.f32.xlu0 %v2824
        %v2826 = vpop.xlane.xlu0 %2825
        %v2827 = vadd.f32 %v2421, %v2423
        %v2828 = vadd.f32 %v2827, %v2425
        %v2829 = vadd.f32 %v2828, %v2427
        %2830 = vadd.xlane.f32.xlu0 %v2829
        %v2831 = vpop.xlane.xlu0 %2830
        %v2832 = vadd.f32 %v2429, %v2431
        %v2833 = vadd.f32 %v2832, %v2433
        %v2834 = vadd.f32 %v2833, %v2435
        %2835 = vadd.xlane.f32.xlu0 %v2834
        %v2836 = vpop.xlane.xlu0 %2835
        %v2837 = vadd.f32 %v2437, %v2439
        %v2838 = vadd.f32 %v2837, %v2441
        %v2839 = vadd.f32 %v2838, %v2443
        %2840 = vadd.xlane.f32.xlu0 %v2839
        %v2841 = vpop.xlane.xlu0 %2840
        %v2842 = vadd.f32 %v2445, %v2447
        %v2843 = vadd.f32 %v2842, %v2449
        %v2844 = vadd.f32 %v2843, %v2451
        %2845 = vadd.xlane.f32.xlu0 %v2844
        %v2846 = vpop.xlane.xlu0 %2845
        %v2847 = vadd.f32 %v2453, %v2455
        %v2848 = vadd.f32 %v2847, %v2457
        %v2849 = vadd.f32 %v2848, %v2459
        %2850 = vadd.xlane.f32.xlu0 %v2849
        %v2851 = vpop.xlane.xlu0 %2850
        %v2852 = vadd.f32 %v2461, %v2463
        %v2853 = vadd.f32 %v2852, %v2465
        %v2854 = vadd.f32 %v2853, %v2467
        %2855 = vadd.xlane.f32.xlu0 %v2854
        %v2856 = vpop.xlane.xlu0 %2855
        %v2857 = vadd.f32 %v2469, %v2471
        %v2858 = vadd.f32 %v2857, %v2473
        %v2859 = vadd.f32 %v2858, %v2475
        %2860 = vadd.xlane.f32.xlu0 %v2859
        %v2861 = vpop.xlane.xlu0 %2860
        %v2862 = vadd.f32 %v2477, %v2479
        %v2863 = vadd.f32 %v2862, %v2481
        %v2864 = vadd.f32 %v2863, %v2483
        %2865 = vadd.xlane.f32.xlu0 %v2864
        %v2866 = vpop.xlane.xlu0 %2865
        %v2867 = vadd.f32 %v2485, %v2487
        %v2868 = vadd.f32 %v2867, %v2489
        %v2869 = vadd.f32 %v2868, %v2491
        %2870 = vadd.xlane.f32.xlu0 %v2869
        %v2871 = vpop.xlane.xlu0 %2870
        %v2872 = vadd.f32 %v2493, %v2495
        %v2873 = vadd.f32 %v2872, %v2497
        %v2874 = vadd.f32 %v2873, %v2499
        %2875 = vadd.xlane.f32.xlu0 %v2874
        %v2876 = vpop.xlane.xlu0 %2875
        %v2877 = vadd.f32 %v2501, %v2503
        %v2878 = vadd.f32 %v2877, %v2505
        %v2879 = vadd.f32 %v2878, %v2507
        %2880 = vadd.xlane.f32.xlu0 %v2879
        %v2881 = vpop.xlane.xlu0 %2880
        %v2882 = vadd.f32 %v2509, %v2511
        %v2883 = vadd.f32 %v2882, %v2513
        %v2884 = vadd.f32 %v2883, %v2515
        %2885 = vadd.xlane.f32.xlu0 %v2884
        %v2886 = vpop.xlane.xlu0 %2885
        %v2887 = vadd.f32 %v2517, %v2519
        %v2888 = vadd.f32 %v2887, %v2521
        %v2889 = vadd.f32 %v2888, %v2523
        %2890 = vadd.xlane.f32.xlu0 %v2889
        %v2891 = vpop.xlane.xlu0 %2890
        %v2892 = vadd.f32 %v2525, %v2527
        %v2893 = vadd.f32 %v2892, %v2529
        %v2894 = vadd.f32 %v2893, %v2531
        %2895 = vadd.xlane.f32.xlu0 %v2894
        %v2896 = vpop.xlane.xlu0 %2895
        %v2897 = vadd.f32 %v2533, %v2535
        %v2898 = vadd.f32 %v2897, %v2537
        %v2899 = vadd.f32 %v2898, %v2539
        %2900 = vadd.xlane.f32.xlu0 %v2899
        %v2901 = vpop.xlane.xlu0 %2900
        %v2902 = vadd.f32 %v2541, %v2543
        %v2903 = vadd.f32 %v2902, %v2545
        %v2904 = vadd.f32 %v2903, %v2547
        %2905 = vadd.xlane.f32.xlu0 %v2904
        %v2906 = vpop.xlane.xlu0 %2905
        %v2907 = vadd.f32 %v2549, %v2551
        %v2908 = vadd.f32 %v2907, %v2553
        %v2909 = vadd.f32 %v2908, %v2555
        %2910 = vadd.xlane.f32.xlu0 %v2909
        %v2911 = vpop.xlane.xlu0 %2910
        %v2912 = vadd.f32 %v2557, %v2559
        %v2913 = vadd.f32 %v2912, %v2561
        %v2914 = vadd.f32 %v2913, %v2563
        %2915 = vadd.xlane.f32.xlu0 %v2914
        %v2916 = vpop.xlane.xlu0 %2915
        %v2917 = vadd.f32 %v2565, %v2567
        %v2918 = vadd.f32 %v2917, %v2569
        %v2919 = vadd.f32 %v2918, %v2571
        %2920 = vadd.xlane.f32.xlu0 %v2919
        %v2921 = vpop.xlane.xlu0 %2920
        %v2922 = vadd.f32 %v2573, %v2575
        %v2923 = vadd.f32 %v2922, %v2577
        %v2924 = vadd.f32 %v2923, %v2579
        %2925 = vadd.xlane.f32.xlu0 %v2924
        %v2926 = vpop.xlane.xlu0 %2925
        %v2927 = vadd.f32 %v2581, %v2583
        %v2928 = vadd.f32 %v2927, %v2585
        %v2929 = vadd.f32 %v2928, %v2587
        %2930 = vadd.xlane.f32.xlu0 %v2929
        %v2931 = vpop.xlane.xlu0 %2930
        %v2932 = vadd.f32 %v2589, %v2591
        %v2933 = vadd.f32 %v2932, %v2593
        %v2934 = vadd.f32 %v2933, %v2595
        %2935 = vadd.xlane.f32.xlu0 %v2934
        %v2936 = vpop.xlane.xlu0 %2935
        %v2937 = vadd.f32 %v2597, %v2599
        %v2938 = vadd.f32 %v2937, %v2601
        %v2939 = vadd.f32 %v2938, %v2603
        %2940 = vadd.xlane.f32.xlu0 %v2939
        %v2941 = vpop.xlane.xlu0 %2940
        %v2942 = vadd.f32 %v2605, %v2607
        %v2943 = vadd.f32 %v2942, %v2609
        %v2944 = vadd.f32 %v2943, %v2611
        %2945 = vadd.xlane.f32.xlu0 %v2944
        %v2946 = vpop.xlane.xlu0 %2945
        %v2947 = vadd.f32 %v2613, %v2615
        %v2948 = vadd.f32 %v2947, %v2617
        %v2949 = vadd.f32 %v2948, %v2619
        %2950 = vadd.xlane.f32.xlu0 %v2949
        %v2951 = vpop.xlane.xlu0 %2950
        %v2952 = vadd.f32 %v2621, %v2623
        %v2953 = vadd.f32 %v2952, %v2625
        %v2954 = vadd.f32 %v2953, %v2627
        %2955 = vadd.xlane.f32.xlu0 %v2954
        %v2956 = vpop.xlane.xlu0 %2955
        %v2957 = vadd.f32 %v2629, %v2631
        %v2958 = vadd.f32 %v2957, %v2633
        %v2959 = vadd.f32 %v2958, %v2635
        %2960 = vadd.xlane.f32.xlu0 %v2959
        %v2961 = vpop.xlane.xlu0 %2960
        %v2962 = vadd.f32 %v2637, %v2639
        %v2963 = vadd.f32 %v2962, %v2641
        %v2964 = vadd.f32 %v2963, %v2643
        %2965 = vadd.xlane.f32.xlu0 %v2964
        %v2966 = vpop.xlane.xlu0 %2965
        %v2967 = vadd.f32 %v2645, %v2647
        %v2968 = vadd.f32 %v2967, %v2649
        %v2969 = vadd.f32 %v2968, %v2651
        %2970 = vadd.xlane.f32.xlu0 %v2969
        %v2971 = vpop.xlane.xlu0 %2970
        %v2972 = vadd.f32 %v2076, %v2656
        %v2973 = vadd.f32 %v2077, %v2661
        %v2974 = vadd.f32 %v2078, %v2666
        %v2975 = vadd.f32 %v2079, %v2671
        %v2976 = vadd.f32 %v2080, %v2676
        %v2977 = vadd.f32 %v2081, %v2681
        %v2978 = vadd.f32 %v2082, %v2686
        %v2979 = vadd.f32 %v2083, %v2691
        %v2980 = vadd.f32 %v2084, %v2696
        %v2981 = vadd.f32 %v2085, %v2701
        %v2982 = vadd.f32 %v2086, %v2706
        %v2983 = vadd.f32 %v2087, %v2711
        %v2984 = vadd.f32 %v2088, %v2716
        %v2985 = vadd.f32 %v2089, %v2721
        %v2986 = vadd.f32 %v2090, %v2726
        %v2987 = vadd.f32 %v2091, %v2731
        %v2988 = vadd.f32 %v2092, %v2736
        %v2989 = vadd.f32 %v2093, %v2741
        %v2990 = vadd.f32 %v2094, %v2746
        %v2991 = vadd.f32 %v2095, %v2751
        %v2992 = vadd.f32 %v2096, %v2756
        %v2993 = vadd.f32 %v2097, %v2761
        %v2994 = vadd.f32 %v2098, %v2766
        %v2995 = vadd.f32 %v2099, %v2771
        %v2996 = vadd.f32 %v2100, %v2776
        %v2997 = vadd.f32 %v2101, %v2781
        %v2998 = vadd.f32 %v2102, %v2786
        %v2999 = vadd.f32 %v2103, %v2791
        %v3000 = vadd.f32 %v2104, %v2796
        %v3001 = vadd.f32 %v2105, %v2801
        %v3002 = vadd.f32 %v2106, %v2806
        %v3003 = vadd.f32 %v2107, %v2811
        %v3004 = vadd.f32 %v2108, %v2816
        %v3005 = vadd.f32 %v2109, %v2821
        %v3006 = vadd.f32 %v2110, %v2826
        %v3007 = vadd.f32 %v2111, %v2831
        %v3008 = vadd.f32 %v2112, %v2836
        %v3009 = vadd.f32 %v2113, %v2841
        %v3010 = vadd.f32 %v2114, %v2846
        %v3011 = vadd.f32 %v2115, %v2851
        %v3012 = vadd.f32 %v2116, %v2856
        %v3013 = vadd.f32 %v2117, %v2861
        %v3014 = vadd.f32 %v2118, %v2866
        %v3015 = vadd.f32 %v2119, %v2871
        %v3016 = vadd.f32 %v2120, %v2876
        %v3017 = vadd.f32 %v2121, %v2881
        %v3018 = vadd.f32 %v2122, %v2886
        %v3019 = vadd.f32 %v2123, %v2891
        %v3020 = vadd.f32 %v2124, %v2896
        %v3021 = vadd.f32 %v2125, %v2901
        %v3022 = vadd.f32 %v2126, %v2906
        %v3023 = vadd.f32 %v2127, %v2911
        %v3024 = vadd.f32 %v2128, %v2916
        %v3025 = vadd.f32 %v2129, %v2921
        %v3026 = vadd.f32 %v2130, %v2926
        %v3027 = vadd.f32 %v2131, %v2931
        %v3028 = vadd.f32 %v2132, %v2936
        %v3029 = vadd.f32 %v2133, %v2941
        %v3030 = vadd.f32 %v2134, %v2946
        %v3031 = vadd.f32 %v2135, %v2951
        %v3032 = vadd.f32 %v2136, %v2956
        %v3033 = vadd.f32 %v2137, %v2961
        %v3034 = vadd.f32 %v2138, %v2966
        %v3035 = vadd.f32 %v2139, %v2971
        %vm3036 = vcmask 7168
        %3037 = vst.msk [vmem:[#allocation4] sm:$0xff] %vm3036, %v2972
        %3038 = vst.msk [vmem:[#allocation4 + $0x8] sm:$0xff] %vm3036, %v2973
        %3039 = vst.msk [vmem:[#allocation4 + $0x10] sm:$0xff] %vm3036, %v2974
        %3040 = vst.msk [vmem:[#allocation4 + $0x18] sm:$0xff] %vm3036, %v2975
        %3041 = vst.msk [vmem:[#allocation4 + $0x20] sm:$0xff] %vm3036, %v2976
        %3042 = vst.msk [vmem:[#allocation4 + $0x28] sm:$0xff] %vm3036, %v2977
        %3043 = vst.msk [vmem:[#allocation4 + $0x30] sm:$0xff] %vm3036, %v2978
        %3044 = vst.msk [vmem:[#allocation4 + $0x38] sm:$0xff] %vm3036, %v2979
        %3045 = vst.msk [vmem:[#allocation4 + $0x40] sm:$0xff] %vm3036, %v2980
        %3046 = vst.msk [vmem:[#allocation4 + $0x48] sm:$0xff] %vm3036, %v2981
        %3047 = vst.msk [vmem:[#allocation4 + $0x50] sm:$0xff] %vm3036, %v2982
        %3048 = vst.msk [vmem:[#allocation4 + $0x58] sm:$0xff] %vm3036, %v2983
        %3049 = vst.msk [vmem:[#allocation4 + $0x60] sm:$0xff] %vm3036, %v2984
        %3050 = vst.msk [vmem:[#allocation4 + $0x68] sm:$0xff] %vm3036, %v2985
        %3051 = vst.msk [vmem:[#allocation4 + $0x70] sm:$0xff] %vm3036, %v2986
        %3052 = vst.msk [vmem:[#allocation4 + $0x78] sm:$0xff] %vm3036, %v2987
        %3053 = vst.msk [vmem:[#allocation4 + $0x80] sm:$0xff] %vm3036, %v2988
        %3054 = vst.msk [vmem:[#allocation4 + $0x88] sm:$0xff] %vm3036, %v2989
        %3055 = vst.msk [vmem:[#allocation4 + $0x90] sm:$0xff] %vm3036, %v2990
        %3056 = vst.msk [vmem:[#allocation4 + $0x98] sm:$0xff] %vm3036, %v2991
        %3057 = vst.msk [vmem:[#allocation4 + $0xa0] sm:$0xff] %vm3036, %v2992
        %3058 = vst.msk [vmem:[#allocation4 + $0xa8] sm:$0xff] %vm3036, %v2993
        %3059 = vst.msk [vmem:[#allocation4 + $0xb0] sm:$0xff] %vm3036, %v2994
        %3060 = vst.msk [vmem:[#allocation4 + $0xb8] sm:$0xff] %vm3036, %v2995
        %3061 = vst.msk [vmem:[#allocation4 + $0xc0] sm:$0xff] %vm3036, %v2996
        %3062 = vst.msk [vmem:[#allocation4 + $0xc8] sm:$0xff] %vm3036, %v2997
        %3063 = vst.msk [vmem:[#allocation4 + $0xd0] sm:$0xff] %vm3036, %v2998
        %3064 = vst.msk [vmem:[#allocation4 + $0xd8] sm:$0xff] %vm3036, %v2999
        %3065 = vst.msk [vmem:[#allocation4 + $0xe0] sm:$0xff] %vm3036, %v3000
        %3066 = vst.msk [vmem:[#allocation4 + $0xe8] sm:$0xff] %vm3036, %v3001
        %3067 = vst.msk [vmem:[#allocation4 + $0xf0] sm:$0xff] %vm3036, %v3002
        %3068 = vst.msk [vmem:[#allocation4 + $0xf8] sm:$0xff] %vm3036, %v3003
        %3069 = vst.msk [vmem:[#allocation4 + $0x100] sm:$0xff] %vm3036, %v3004
        %3070 = vst.msk [vmem:[#allocation4 + $0x108] sm:$0xff] %vm3036, %v3005
        %3071 = vst.msk [vmem:[#allocation4 + $0x110] sm:$0xff] %vm3036, %v3006
        %3072 = vst.msk [vmem:[#allocation4 + $0x118] sm:$0xff] %vm3036, %v3007
        %3073 = vst.msk [vmem:[#allocation4 + $0x120] sm:$0xff] %vm3036, %v3008
        %3074 = vst.msk [vmem:[#allocation4 + $0x128] sm:$0xff] %vm3036, %v3009
        %3075 = vst.msk [vmem:[#allocation4 + $0x130] sm:$0xff] %vm3036, %v3010
        %3076 = vst.msk [vmem:[#allocation4 + $0x138] sm:$0xff] %vm3036, %v3011
        %3077 = vst.msk [vmem:[#allocation4 + $0x140] sm:$0xff] %vm3036, %v3012
        %3078 = vst.msk [vmem:[#allocation4 + $0x148] sm:$0xff] %vm3036, %v3013
        %3079 = vst.msk [vmem:[#allocation4 + $0x150] sm:$0xff] %vm3036, %v3014
        %3080 = vst.msk [vmem:[#allocation4 + $0x158] sm:$0xff] %vm3036, %v3015
        %3081 = vst.msk [vmem:[#allocation4 + $0x160] sm:$0xff] %vm3036, %v3016
        %3082 = vst.msk [vmem:[#allocation4 + $0x168] sm:$0xff] %vm3036, %v3017
        %3083 = vst.msk [vmem:[#allocation4 + $0x170] sm:$0xff] %vm3036, %v3018
        %3084 = vst.msk [vmem:[#allocation4 + $0x178] sm:$0xff] %vm3036, %v3019
        %3085 = vst.msk [vmem:[#allocation4 + $0x180] sm:$0xff] %vm3036, %v3020
        %3086 = vst.msk [vmem:[#allocation4 + $0x188] sm:$0xff] %vm3036, %v3021
        %3087 = vst.msk [vmem:[#allocation4 + $0x190] sm:$0xff] %vm3036, %v3022
        %3088 = vst.msk [vmem:[#allocation4 + $0x198] sm:$0xff] %vm3036, %v3023
        %3089 = vst.msk [vmem:[#allocation4 + $0x1a0] sm:$0xff] %vm3036, %v3024
        %3090 = vst.msk [vmem:[#allocation4 + $0x1a8] sm:$0xff] %vm3036, %v3025
        %3091 = vst.msk [vmem:[#allocation4 + $0x1b0] sm:$0xff] %vm3036, %v3026
        %3092 = vst.msk [vmem:[#allocation4 + $0x1b8] sm:$0xff] %vm3036, %v3027
        %3093 = vst.msk [vmem:[#allocation4 + $0x1c0] sm:$0xff] %vm3036, %v3028
        %3094 = vst.msk [vmem:[#allocation4 + $0x1c8] sm:$0xff] %vm3036, %v3029
        %3095 = vst.msk [vmem:[#allocation4 + $0x1d0] sm:$0xff] %vm3036, %v3030
        %3096 = vst.msk [vmem:[#allocation4 + $0x1d8] sm:$0xff] %vm3036, %v3031
        %3097 = vst.msk [vmem:[#allocation4 + $0x1e0] sm:$0xff] %vm3036, %v3032
        %3098 = vst.msk [vmem:[#allocation4 + $0x1e8] sm:$0xff] %vm3036, %v3033
        %3099 = vst.msk [vmem:[#allocation4 + $0x1f0] sm:$0xff] %vm3036, %v3034
        %3100 = vst.msk [vmem:[#allocation4 + $0x1f8] sm:$0xff] %vm3036, %v3035
        %v3101 = vld [vmem:[%s310] sm:$0xff]
        %v3102 = vld [vmem:[%s310 + $0x8] sm:$0xff]
        %v3103 = vld [vmem:[%s310 + $0x10] sm:$0xff]
        %v3104 = vld [vmem:[%s310 + $0x18] sm:$0xff]
        %v3105 = vld [vmem:[%s310 + $0x20] sm:$0xff]
        %v3106 = vld [vmem:[%s310 + $0x28] sm:$0xff]
        %v3107 = vld [vmem:[%s310 + $0x30] sm:$0xff]
        %v3108 = vld [vmem:[%s310 + $0x38] sm:$0xff]
        %v3109 = vld [vmem:[%s310 + $0x40] sm:$0xff]
        %v3110 = vld [vmem:[%s310 + $0x48] sm:$0xff]
        %v3111 = vld [vmem:[%s310 + $0x50] sm:$0xff]
        %v3112 = vld [vmem:[%s310 + $0x58] sm:$0xff]
        %v3113 = vld [vmem:[%s310 + $0x60] sm:$0xff]
        %v3114 = vld [vmem:[%s310 + $0x68] sm:$0xff]
        %v3115 = vld [vmem:[%s310 + $0x70] sm:$0xff]
        %v3116 = vld [vmem:[%s310 + $0x78] sm:$0xff]
        %3117 = vmatprep.subr.mxu0 %v3102
        %3118 = vmatpush1.msra.mxu0 %v3101
        %3119 = vmatprep.subr.mxu0 %v3106
        %3120 = vmatpush1.msra.mxu0 %v3105
        %3121 = vmatprep.subr.mxu0 %v3110
        %3122 = vmatpush1.msra.mxu0 %v3109
        %3123 = vmatprep.subr.mxu0 %v3114
        %3124 = vmatpush1.msra.mxu0 %v3113
        %3125 = vmatprep.subr.mxu0 0.0
        %3126 = vmatpush1.msra.mxu0 0.0
        %3127 = vmatprep.subr.mxu0 0.0
        %3128 = vmatpush1.msra.mxu0 0.0
        %3129 = vmatprep.subr.mxu0 0.0
        %3130 = vmatpush1.msra.mxu0 0.0
        %3131 = vmatprep.subr.mxu0 0.0
        %3132 = vmatpush1.msra.mxu0 0.0
        %3133 = vmatprep.subr.mxu0 0.0
        %3134 = vmatpush1.msra.mxu0 0.0
        %3135 = vmatprep.subr.mxu0 0.0
        %3136 = vmatpush1.msra.mxu0 0.0
        %3137 = vmatprep.subr.mxu0 0.0
        %3138 = vmatpush1.msra.mxu0 0.0
        %3139 = vmatprep.subr.mxu0 0.0
        %3140 = vmatpush1.msra.mxu0 0.0
        %3141 = vmatprep.subr.mxu0 0.0
        %3142 = vmatpush1.msra.mxu0 0.0
        %3143 = vmatprep.subr.mxu0 0.0
        %3144 = vmatpush1.msra.mxu0 0.0
        %3145 = vmatprep.subr.mxu0 0.0
        %3146 = vmatpush1.msra.mxu0 0.0
        %3147 = vmatprep.subr.mxu0 0.0
        %3148 = vmatpush1.msra.mxu0 0.0
        %3149 = vmatprep.subr.mxu0 0.0
        %3150 = vmatpush1.msra.mxu0 0.0
        %3151 = vmatprep.subr.mxu0 0.0
        %3152 = vmatpush1.msra.mxu0 0.0
        %3153 = vmatprep.subr.mxu0 0.0
        %3154 = vmatpush1.msra.mxu0 0.0
        %3155 = vmatprep.subr.mxu0 0.0
        %3156 = vmatpush1.msra.mxu0 0.0
        %3157 = vmatprep.subr.mxu0 0.0
        %3158 = vmatpush1.msra.mxu0 0.0
        %3159 = vmatprep.subr.mxu0 0.0
        %3160 = vmatpush1.msra.mxu0 0.0
        %3161 = vmatprep.subr.mxu0 0.0
        %3162 = vmatpush1.msra.mxu0 0.0
        %3163 = vmatprep.subr.mxu0 0.0
        %3164 = vmatpush1.msra.mxu0 0.0
        %3165 = vmatprep.subr.mxu0 0.0
        %3166 = vmatpush1.msra.mxu0 0.0
        %3167 = vmatprep.subr.mxu0 0.0
        %3168 = vmatpush1.msra.mxu0 0.0
        %3169 = vmatprep.subr.mxu0 0.0
        %3170 = vmatpush1.msra.mxu0 0.0
        %3171 = vmatprep.subr.mxu0 0.0
        %3172 = vmatpush1.msra.mxu0 0.0
        %3173 = vmatprep.subr.mxu0 0.0
        %3174 = vmatpush1.msra.mxu0 0.0
        %3175 = vmatprep.subr.mxu0 0.0
        %3176 = vmatpush1.msra.mxu0 0.0
        %3177 = vmatprep.subr.mxu0 0.0
        %3178 = vmatpush1.msra.mxu0 0.0
        %3179 = vmatprep.subr.mxu0 0.0
        %3180 = vmatpush1.msra.mxu0 0.0
        %3181 = vmatprep.mubr.f32.mxu0 0.0
        %3182 = vmatmul.mubr.f32.gmra.mrb[0].mxu0 %v731
        %v3183 = vpop.f32.mrb[0].mxu0
        %v3184 = vadd.f32 0.0, %v3183
        %v3185 = vpop.f32.mrb[0].mxu0
        %v3186 = vadd.f32 0.0, %v3185
        %3187 = vmatprep.mubr.f32.mxu0 0.0
        %3188 = vmatmul.mubr.f32.gmra.mrb[0].mxu0 %v734
        %v3189 = vpop.f32.mrb[0].mxu0
        %v3190 = vadd.f32 0.0, %v3189
        %v3191 = vpop.f32.mrb[0].mxu0
        %v3192 = vadd.f32 0.0, %v3191
        %3193 = vmatprep.mubr.f32.mxu0 0.0
        %3194 = vmatmul.mubr.f32.gmra.mrb[0].mxu0 %v737
        %v3195 = vpop.f32.mrb[0].mxu0
        %v3196 = vadd.f32 0.0, %v3195
        %v3197 = vpop.f32.mrb[0].mxu0
        %v3198 = vadd.f32 0.0, %v3197
        %3199 = vmatprep.mubr.f32.mxu0 0.0
        %3200 = vmatmul.mubr.f32.gmra.mrb[0].mxu0 %v740
        %v3201 = vpop.f32.mrb[0].mxu0
        %v3202 = vadd.f32 0.0, %v3201
        %v3203 = vpop.f32.mrb[0].mxu0
        %v3204 = vadd.f32 0.0, %v3203
        %3205 = vmatprep.mubr.f32.mxu0 0.0
        %3206 = vmatmul.mubr.f32.gmra.mrb[0].mxu0 %v743
        %v3207 = vpop.f32.mrb[0].mxu0
        %v3208 = vadd.f32 0.0, %v3207
        %v3209 = vpop.f32.mrb[0].mxu0
        %v3210 = vadd.f32 0.0, %v3209
        %3211 = vmatprep.mubr.f32.mxu0 0.0
        %3212 = vmatmul.mubr.f32.gmra.mrb[0].mxu0 %v746
        %v3213 = vpop.f32.mrb[0].mxu0
        %v3214 = vadd.f32 0.0, %v3213
        %v3215 = vpop.f32.mrb[0].mxu0
        %v3216 = vadd.f32 0.0, %v3215
        %3217 = vmatprep.mubr.f32.mxu0 0.0
        %3218 = vmatmul.mubr.f32.gmra.mrb[0].mxu0 %v749
        %v3219 = vpop.f32.mrb[0].mxu0
        %v3220 = vadd.f32 0.0, %v3219
        %v3221 = vpop.f32.mrb[0].mxu0
        %v3222 = vadd.f32 0.0, %v3221
        %3223 = vmatprep.mubr.f32.mxu0 0.0
        %3224 = vmatmul.mubr.f32.gmra.mrb[0].mxu0 %v752
        %v3225 = vpop.f32.mrb[0].mxu0
        %v3226 = vadd.f32 0.0, %v3225
        %v3227 = vpop.f32.mrb[0].mxu0
        %v3228 = vadd.f32 0.0, %v3227
        %3229 = vmatprep.mubr.f32.mxu0 0.0
        %3230 = vmatmul.mubr.f32.gmra.mrb[0].mxu0 %v755
        %v3231 = vpop.f32.mrb[0].mxu0
        %v3232 = vadd.f32 0.0, %v3231
        %v3233 = vpop.f32.mrb[0].mxu0
        %v3234 = vadd.f32 0.0, %v3233
        %3235 = vmatprep.mubr.f32.mxu0 0.0
        %3236 = vmatmul.mubr.f32.gmra.mrb[0].mxu0 %v758
        %v3237 = vpop.f32.mrb[0].mxu0
        %v3238 = vadd.f32 0.0, %v3237
        %v3239 = vpop.f32.mrb[0].mxu0
        %v3240 = vadd.f32 0.0, %v3239
        %3241 = vmatprep.mubr.f32.mxu0 0.0
        %3242 = vmatmul.mubr.f32.gmra.mrb[0].mxu0 %v761
        %v3243 = vpop.f32.mrb[0].mxu0
        %v3244 = vadd.f32 0.0, %v3243
        %v3245 = vpop.f32.mrb[0].mxu0
        %v3246 = vadd.f32 0.0, %v3245
        %3247 = vmatprep.mubr.f32.mxu0 0.0
        %3248 = vmatmul.mubr.f32.gmra.mrb[0].mxu0 %v764
        %v3249 = vpop.f32.mrb[0].mxu0
        %v3250 = vadd.f32 0.0, %v3249
        %v3251 = vpop.f32.mrb[0].mxu0
        %v3252 = vadd.f32 0.0, %v3251
        %3253 = vmatprep.mubr.f32.mxu0 0.0
        %3254 = vmatmul.mubr.f32.gmra.mrb[0].mxu0 %v767
        %v3255 = vpop.f32.mrb[0].mxu0
        %v3256 = vadd.f32 0.0, %v3255
        %v3257 = vpop.f32.mrb[0].mxu0
        %v3258 = vadd.f32 0.0, %v3257
        %3259 = vmatprep.mubr.f32.mxu0 0.0
        %3260 = vmatmul.mubr.f32.gmra.mrb[0].mxu0 %v770
        %v3261 = vpop.f32.mrb[0].mxu0
        %v3262 = vadd.f32 0.0, %v3261
        %v3263 = vpop.f32.mrb[0].mxu0
        %v3264 = vadd.f32 0.0, %v3263
        %3265 = vmatprep.mubr.f32.mxu0 0.0
        %3266 = vmatmul.mubr.f32.gmra.mrb[0].mxu0 %v773
        %v3267 = vpop.f32.mrb[0].mxu0
        %v3268 = vadd.f32 0.0, %v3267
        %v3269 = vpop.f32.mrb[0].mxu0
        %v3270 = vadd.f32 0.0, %v3269
        %3271 = vmatprep.mubr.f32.mxu0 0.0
        %3272 = vmatmul.mubr.f32.gmra.mrb[0].mxu0 %v776
        %v3273 = vpop.f32.mrb[0].mxu0
        %v3274 = vadd.f32 0.0, %v3273
        %v3275 = vpop.f32.mrb[0].mxu0
        %v3276 = vadd.f32 0.0, %v3275
        %3277 = vmatprep.mubr.f32.mxu0 0.0
        %3278 = vmatmul.mubr.f32.gmra.mrb[0].mxu0 %v779
        %v3279 = vpop.f32.mrb[0].mxu0
        %v3280 = vadd.f32 0.0, %v3279
        %v3281 = vpop.f32.mrb[0].mxu0
        %v3282 = vadd.f32 0.0, %v3281
        %3283 = vmatprep.mubr.f32.mxu0 0.0
        %3284 = vmatmul.mubr.f32.gmra.mrb[0].mxu0 %v782
        %v3285 = vpop.f32.mrb[0].mxu0
        %v3286 = vadd.f32 0.0, %v3285
        %v3287 = vpop.f32.mrb[0].mxu0
        %v3288 = vadd.f32 0.0, %v3287
        %3289 = vmatprep.mubr.f32.mxu0 0.0
        %3290 = vmatmul.mubr.f32.gmra.mrb[0].mxu0 %v785
        %v3291 = vpop.f32.mrb[0].mxu0
        %v3292 = vadd.f32 0.0, %v3291
        %v3293 = vpop.f32.mrb[0].mxu0
        %v3294 = vadd.f32 0.0, %v3293
        %3295 = vmatprep.mubr.f32.mxu0 0.0
        %3296 = vmatmul.mubr.f32.gmra.mrb[0].mxu0 %v788
        %v3297 = vpop.f32.mrb[0].mxu0
        %v3298 = vadd.f32 0.0, %v3297
        %v3299 = vpop.f32.mrb[0].mxu0
        %v3300 = vadd.f32 0.0, %v3299
        %3301 = vmatprep.mubr.f32.mxu0 0.0
        %3302 = vmatmul.mubr.f32.gmra.mrb[0].mxu0 %v791
        %v3303 = vpop.f32.mrb[0].mxu0
        %v3304 = vadd.f32 0.0, %v3303
        %v3305 = vpop.f32.mrb[0].mxu0
        %v3306 = vadd.f32 0.0, %v3305
        %3307 = vmatprep.mubr.f32.mxu0 0.0
        %3308 = vmatmul.mubr.f32.gmra.mrb[0].mxu0 %v794
        %v3309 = vpop.f32.mrb[0].mxu0
        %v3310 = vadd.f32 0.0, %v3309
        %v3311 = vpop.f32.mrb[0].mxu0
        %v3312 = vadd.f32 0.0, %v3311
        %3313 = vmatprep.mubr.f32.mxu0 0.0
        %3314 = vmatmul.mubr.f32.gmra.mrb[0].mxu0 %v797
        %v3315 = vpop.f32.mrb[0].mxu0
        %v3316 = vadd.f32 0.0, %v3315
        %v3317 = vpop.f32.mrb[0].mxu0
        %v3318 = vadd.f32 0.0, %v3317
        %3319 = vmatprep.mubr.f32.mxu0 0.0
        %3320 = vmatmul.mubr.f32.gmra.mrb[0].mxu0 %v800
        %v3321 = vpop.f32.mrb[0].mxu0
        %v3322 = vadd.f32 0.0, %v3321
        %v3323 = vpop.f32.mrb[0].mxu0
        %v3324 = vadd.f32 0.0, %v3323
        %3325 = vmatprep.mubr.f32.mxu0 0.0
        %3326 = vmatmul.mubr.f32.gmra.mrb[0].mxu0 %v803
        %v3327 = vpop.f32.mrb[0].mxu0
        %v3328 = vadd.f32 0.0, %v3327
        %v3329 = vpop.f32.mrb[0].mxu0
        %v3330 = vadd.f32 0.0, %v3329
        %3331 = vmatprep.mubr.f32.mxu0 0.0
        %3332 = vmatmul.mubr.f32.gmra.mrb[0].mxu0 %v806
        %v3333 = vpop.f32.mrb[0].mxu0
        %v3334 = vadd.f32 0.0, %v3333
        %v3335 = vpop.f32.mrb[0].mxu0
        %v3336 = vadd.f32 0.0, %v3335
        %3337 = vmatprep.mubr.f32.mxu0 0.0
        %3338 = vmatmul.mubr.f32.gmra.mrb[0].mxu0 %v809
        %v3339 = vpop.f32.mrb[0].mxu0
        %v3340 = vadd.f32 0.0, %v3339
        %v3341 = vpop.f32.mrb[0].mxu0
        %v3342 = vadd.f32 0.0, %v3341
        %3343 = vmatprep.mubr.f32.mxu0 0.0
        %3344 = vmatmul.mubr.f32.gmra.mrb[0].mxu0 %v812
        %v3345 = vpop.f32.mrb[0].mxu0
        %v3346 = vadd.f32 0.0, %v3345
        %v3347 = vpop.f32.mrb[0].mxu0
        %v3348 = vadd.f32 0.0, %v3347
        %3349 = vmatprep.mubr.f32.mxu0 0.0
        %3350 = vmatmul.mubr.f32.gmra.mrb[0].mxu0 %v815
        %v3351 = vpop.f32.mrb[0].mxu0
        %v3352 = vadd.f32 0.0, %v3351
        %v3353 = vpop.f32.mrb[0].mxu0
        %v3354 = vadd.f32 0.0, %v3353
        %3355 = vmatprep.mubr.f32.mxu0 0.0
        %3356 = vmatmul.mubr.f32.gmra.mrb[0].mxu0 %v818
        %v3357 = vpop.f32.mrb[0].mxu0
        %v3358 = vadd.f32 0.0, %v3357
        %v3359 = vpop.f32.mrb[0].mxu0
        %v3360 = vadd.f32 0.0, %v3359
        %3361 = vmatprep.mubr.f32.mxu0 0.0
        %3362 = vmatmul.mubr.f32.gmra.mrb[0].mxu0 %v821
        %v3363 = vpop.f32.mrb[0].mxu0
        %v3364 = vadd.f32 0.0, %v3363
        %v3365 = vpop.f32.mrb[0].mxu0
        %v3366 = vadd.f32 0.0, %v3365
        %3367 = vmatprep.mubr.f32.mxu0 0.0
        %3368 = vmatmul.mubr.f32.gmra.mrb[0].mxu0 %v824
        %v3369 = vpop.f32.mrb[0].mxu0
        %v3370 = vadd.f32 0.0, %v3369
        %v3371 = vpop.f32.mrb[0].mxu0
        %v3372 = vadd.f32 0.0, %v3371
        %3373 = vmatprep.mubr.f32.mxu0 0.0
        %3374 = vmatmul.mubr.f32.gmra.mrb[0].mxu0 %v827
        %v3375 = vpop.f32.mrb[0].mxu0
        %v3376 = vadd.f32 0.0, %v3375
        %v3377 = vpop.f32.mrb[0].mxu0
        %v3378 = vadd.f32 0.0, %v3377
        %3379 = vmatprep.mubr.f32.mxu0 0.0
        %3380 = vmatmul.mubr.f32.gmra.mrb[0].mxu0 %v830
        %v3381 = vpop.f32.mrb[0].mxu0
        %v3382 = vadd.f32 0.0, %v3381
        %v3383 = vpop.f32.mrb[0].mxu0
        %v3384 = vadd.f32 0.0, %v3383
        %3385 = vmatprep.mubr.f32.mxu0 0.0
        %3386 = vmatmul.mubr.f32.gmra.mrb[0].mxu0 %v833
        %v3387 = vpop.f32.mrb[0].mxu0
        %v3388 = vadd.f32 0.0, %v3387
        %v3389 = vpop.f32.mrb[0].mxu0
        %v3390 = vadd.f32 0.0, %v3389
        %3391 = vmatprep.mubr.f32.mxu0 0.0
        %3392 = vmatmul.mubr.f32.gmra.mrb[0].mxu0 %v836
        %v3393 = vpop.f32.mrb[0].mxu0
        %v3394 = vadd.f32 0.0, %v3393
        %v3395 = vpop.f32.mrb[0].mxu0
        %v3396 = vadd.f32 0.0, %v3395
        %3397 = vmatprep.mubr.f32.mxu0 0.0
        %3398 = vmatmul.mubr.f32.gmra.mrb[0].mxu0 %v839
        %v3399 = vpop.f32.mrb[0].mxu0
        %v3400 = vadd.f32 0.0, %v3399
        %v3401 = vpop.f32.mrb[0].mxu0
        %v3402 = vadd.f32 0.0, %v3401
        %3403 = vmatprep.mubr.f32.mxu0 0.0
        %3404 = vmatmul.mubr.f32.gmra.mrb[0].mxu0 %v842
        %v3405 = vpop.f32.mrb[0].mxu0
        %v3406 = vadd.f32 0.0, %v3405
        %v3407 = vpop.f32.mrb[0].mxu0
        %v3408 = vadd.f32 0.0, %v3407
        %3409 = vmatprep.mubr.f32.mxu0 0.0
        %3410 = vmatmul.mubr.f32.gmra.mrb[0].mxu0 %v845
        %v3411 = vpop.f32.mrb[0].mxu0
        %v3412 = vadd.f32 0.0, %v3411
        %v3413 = vpop.f32.mrb[0].mxu0
        %v3414 = vadd.f32 0.0, %v3413
        %3415 = vmatprep.mubr.f32.mxu0 0.0
        %3416 = vmatmul.mubr.f32.gmra.mrb[0].mxu0 %v848
        %v3417 = vpop.f32.mrb[0].mxu0
        %v3418 = vadd.f32 0.0, %v3417
        %v3419 = vpop.f32.mrb[0].mxu0
        %v3420 = vadd.f32 0.0, %v3419
        %3421 = vmatprep.mubr.f32.mxu0 0.0
        %3422 = vmatmul.mubr.f32.gmra.mrb[0].mxu0 %v851
        %v3423 = vpop.f32.mrb[0].mxu0
        %v3424 = vadd.f32 0.0, %v3423
        %v3425 = vpop.f32.mrb[0].mxu0
        %v3426 = vadd.f32 0.0, %v3425
        %3427 = vmatprep.mubr.f32.mxu0 0.0
        %3428 = vmatmul.mubr.f32.gmra.mrb[0].mxu0 %v854
        %v3429 = vpop.f32.mrb[0].mxu0
        %v3430 = vadd.f32 0.0, %v3429
        %v3431 = vpop.f32.mrb[0].mxu0
        %v3432 = vadd.f32 0.0, %v3431
        %3433 = vmatprep.mubr.f32.mxu0 0.0
        %3434 = vmatmul.mubr.f32.gmra.mrb[0].mxu0 %v857
        %v3435 = vpop.f32.mrb[0].mxu0
        %v3436 = vadd.f32 0.0, %v3435
        %v3437 = vpop.f32.mrb[0].mxu0
        %v3438 = vadd.f32 0.0, %v3437
        %3439 = vmatprep.mubr.f32.mxu0 0.0
        %3440 = vmatmul.mubr.f32.gmra.mrb[0].mxu0 %v860
        %v3441 = vpop.f32.mrb[0].mxu0
        %v3442 = vadd.f32 0.0, %v3441
        %v3443 = vpop.f32.mrb[0].mxu0
        %v3444 = vadd.f32 0.0, %v3443
        %3445 = vmatprep.mubr.f32.mxu0 0.0
        %3446 = vmatmul.mubr.f32.gmra.mrb[0].mxu0 %v863
        %v3447 = vpop.f32.mrb[0].mxu0
        %v3448 = vadd.f32 0.0, %v3447
        %v3449 = vpop.f32.mrb[0].mxu0
        %v3450 = vadd.f32 0.0, %v3449
        %3451 = vmatprep.mubr.f32.mxu0 0.0
        %3452 = vmatmul.mubr.f32.gmra.mrb[0].mxu0 %v866
        %v3453 = vpop.f32.mrb[0].mxu0
        %v3454 = vadd.f32 0.0, %v3453
        %v3455 = vpop.f32.mrb[0].mxu0
        %v3456 = vadd.f32 0.0, %v3455
        %3457 = vmatprep.mubr.f32.mxu0 0.0
        %3458 = vmatmul.mubr.f32.gmra.mrb[0].mxu0 %v869
        %v3459 = vpop.f32.mrb[0].mxu0
        %v3460 = vadd.f32 0.0, %v3459
        %v3461 = vpop.f32.mrb[0].mxu0
        %v3462 = vadd.f32 0.0, %v3461
        %3463 = vmatprep.mubr.f32.mxu0 0.0
        %3464 = vmatmul.mubr.f32.gmra.mrb[0].mxu0 %v872
        %v3465 = vpop.f32.mrb[0].mxu0
        %v3466 = vadd.f32 0.0, %v3465
        %v3467 = vpop.f32.mrb[0].mxu0
        %v3468 = vadd.f32 0.0, %v3467
        %3469 = vmatprep.mubr.f32.mxu0 0.0
        %3470 = vmatmul.mubr.f32.gmra.mrb[0].mxu0 %v875
        %v3471 = vpop.f32.mrb[0].mxu0
        %v3472 = vadd.f32 0.0, %v3471
        %v3473 = vpop.f32.mrb[0].mxu0
        %v3474 = vadd.f32 0.0, %v3473
        %3475 = vmatprep.mubr.f32.mxu0 0.0
        %3476 = vmatmul.mubr.f32.gmra.mrb[0].mxu0 %v878
        %v3477 = vpop.f32.mrb[0].mxu0
        %v3478 = vadd.f32 0.0, %v3477
        %v3479 = vpop.f32.mrb[0].mxu0
        %v3480 = vadd.f32 0.0, %v3479
        %3481 = vmatprep.mubr.f32.mxu0 0.0
        %3482 = vmatmul.mubr.f32.gmra.mrb[0].mxu0 %v881
        %v3483 = vpop.f32.mrb[0].mxu0
        %v3484 = vadd.f32 0.0, %v3483
        %v3485 = vpop.f32.mrb[0].mxu0
        %v3486 = vadd.f32 0.0, %v3485
        %3487 = vmatprep.mubr.f32.mxu0 0.0
        %3488 = vmatmul.mubr.f32.gmra.mrb[0].mxu0 %v884
        %v3489 = vpop.f32.mrb[0].mxu0
        %v3490 = vadd.f32 0.0, %v3489
        %v3491 = vpop.f32.mrb[0].mxu0
        %v3492 = vadd.f32 0.0, %v3491
        %3493 = vmatprep.mubr.f32.mxu0 0.0
        %3494 = vmatmul.mubr.f32.gmra.mrb[0].mxu0 %v887
        %v3495 = vpop.f32.mrb[0].mxu0
        %v3496 = vadd.f32 0.0, %v3495
        %v3497 = vpop.f32.mrb[0].mxu0
        %v3498 = vadd.f32 0.0, %v3497
        %3499 = vmatprep.mubr.f32.mxu0 0.0
        %3500 = vmatmul.mubr.f32.gmra.mrb[0].mxu0 %v890
        %v3501 = vpop.f32.mrb[0].mxu0
        %v3502 = vadd.f32 0.0, %v3501
        %v3503 = vpop.f32.mrb[0].mxu0
        %v3504 = vadd.f32 0.0, %v3503
        %3505 = vmatprep.mubr.f32.mxu0 0.0
        %3506 = vmatmul.mubr.f32.gmra.mrb[0].mxu0 %v893
        %v3507 = vpop.f32.mrb[0].mxu0
        %v3508 = vadd.f32 0.0, %v3507
        %v3509 = vpop.f32.mrb[0].mxu0
        %v3510 = vadd.f32 0.0, %v3509
        %3511 = vmatprep.mubr.f32.mxu0 0.0
        %3512 = vmatmul.mubr.f32.gmra.mrb[0].mxu0 %v896
        %v3513 = vpop.f32.mrb[0].mxu0
        %v3514 = vadd.f32 0.0, %v3513
        %v3515 = vpop.f32.mrb[0].mxu0
        %v3516 = vadd.f32 0.0, %v3515
        %3517 = vmatprep.mubr.f32.mxu0 0.0
        %3518 = vmatmul.mubr.f32.gmra.mrb[0].mxu0 %v899
        %v3519 = vpop.f32.mrb[0].mxu0
        %v3520 = vadd.f32 0.0, %v3519
        %v3521 = vpop.f32.mrb[0].mxu0
        %v3522 = vadd.f32 0.0, %v3521
        %3523 = vmatprep.mubr.f32.mxu0 0.0
        %3524 = vmatmul.mubr.f32.gmra.mrb[0].mxu0 %v902
        %v3525 = vpop.f32.mrb[0].mxu0
        %v3526 = vadd.f32 0.0, %v3525
        %v3527 = vpop.f32.mrb[0].mxu0
        %v3528 = vadd.f32 0.0, %v3527
        %3529 = vmatprep.mubr.f32.mxu0 0.0
        %3530 = vmatmul.mubr.f32.gmra.mrb[0].mxu0 %v905
        %v3531 = vpop.f32.mrb[0].mxu0
        %v3532 = vadd.f32 0.0, %v3531
        %v3533 = vpop.f32.mrb[0].mxu0
        %v3534 = vadd.f32 0.0, %v3533
        %3535 = vmatprep.mubr.f32.mxu0 0.0
        %3536 = vmatmul.mubr.f32.gmra.mrb[0].mxu0 %v908
        %v3537 = vpop.f32.mrb[0].mxu0
        %v3538 = vadd.f32 0.0, %v3537
        %v3539 = vpop.f32.mrb[0].mxu0
        %v3540 = vadd.f32 0.0, %v3539
        %3541 = vmatprep.mubr.f32.mxu0 0.0
        %3542 = vmatmul.mubr.f32.gmra.mrb[0].mxu0 %v911
        %v3543 = vpop.f32.mrb[0].mxu0
        %v3544 = vadd.f32 0.0, %v3543
        %v3545 = vpop.f32.mrb[0].mxu0
        %v3546 = vadd.f32 0.0, %v3545
        %3547 = vmatprep.mubr.f32.mxu0 0.0
        %3548 = vmatmul.mubr.f32.gmra.mrb[0].mxu0 %v914
        %v3549 = vpop.f32.mrb[0].mxu0
        %v3550 = vadd.f32 0.0, %v3549
        %v3551 = vpop.f32.mrb[0].mxu0
        %v3552 = vadd.f32 0.0, %v3551
        %3553 = vmatprep.mubr.f32.mxu0 0.0
        %3554 = vmatmul.mubr.f32.gmra.mrb[0].mxu0 %v917
        %v3555 = vpop.f32.mrb[0].mxu0
        %v3556 = vadd.f32 0.0, %v3555
        %v3557 = vpop.f32.mrb[0].mxu0
        %v3558 = vadd.f32 0.0, %v3557
        %3559 = vmatprep.mubr.f32.mxu0 0.0
        %3560 = vmatmul.mubr.f32.gmra.mrb[0].mxu0 %v920
        %v3561 = vpop.f32.mrb[0].mxu0
        %v3562 = vadd.f32 0.0, %v3561
        %v3563 = vpop.f32.mrb[0].mxu0
        %v3564 = vadd.f32 0.0, %v3563
        %3565 = vdwg.mxu0
        %3566 = vmatprep.subr.mxu0 %v3104
        %3567 = vmatpush1.msra.mxu0 %v3103
        %3568 = vmatprep.subr.mxu0 %v3108
        %3569 = vmatpush1.msra.mxu0 %v3107
        %3570 = vmatprep.subr.mxu0 %v3112
        %3571 = vmatpush1.msra.mxu0 %v3111
        %3572 = vmatprep.subr.mxu0 %v3116
        %3573 = vmatpush1.msra.mxu0 %v3115
        %3574 = vmatprep.subr.mxu0 0.0
        %3575 = vmatpush1.msra.mxu0 0.0
        %3576 = vmatprep.subr.mxu0 0.0
        %3577 = vmatpush1.msra.mxu0 0.0
        %3578 = vmatprep.subr.mxu0 0.0
        %3579 = vmatpush1.msra.mxu0 0.0
        %3580 = vmatprep.subr.mxu0 0.0
        %3581 = vmatpush1.msra.mxu0 0.0
        %3582 = vmatprep.subr.mxu0 0.0
        %3583 = vmatpush1.msra.mxu0 0.0
        %3584 = vmatprep.subr.mxu0 0.0
        %3585 = vmatpush1.msra.mxu0 0.0
        %3586 = vmatprep.subr.mxu0 0.0
        %3587 = vmatpush1.msra.mxu0 0.0
        %3588 = vmatprep.subr.mxu0 0.0
        %3589 = vmatpush1.msra.mxu0 0.0
        %3590 = vmatprep.subr.mxu0 0.0
        %3591 = vmatpush1.msra.mxu0 0.0
        %3592 = vmatprep.subr.mxu0 0.0
        %3593 = vmatpush1.msra.mxu0 0.0
        %3594 = vmatprep.subr.mxu0 0.0
        %3595 = vmatpush1.msra.mxu0 0.0
        %3596 = vmatprep.subr.mxu0 0.0
        %3597 = vmatpush1.msra.mxu0 0.0
        %3598 = vmatprep.subr.mxu0 0.0
        %3599 = vmatpush1.msra.mxu0 0.0
        %3600 = vmatprep.subr.mxu0 0.0
        %3601 = vmatpush1.msra.mxu0 0.0
        %3602 = vmatprep.subr.mxu0 0.0
        %3603 = vmatpush1.msra.mxu0 0.0
        %3604 = vmatprep.subr.mxu0 0.0
        %3605 = vmatpush1.msra.mxu0 0.0
        %3606 = vmatprep.subr.mxu0 0.0
        %3607 = vmatpush1.msra.mxu0 0.0
        %3608 = vmatprep.subr.mxu0 0.0
        %3609 = vmatpush1.msra.mxu0 0.0
        %3610 = vmatprep.subr.mxu0 0.0
        %3611 = vmatpush1.msra.mxu0 0.0
        %3612 = vmatprep.subr.mxu0 0.0
        %3613 = vmatpush1.msra.mxu0 0.0
        %3614 = vmatprep.subr.mxu0 0.0
        %3615 = vmatpush1.msra.mxu0 0.0
        %3616 = vmatprep.subr.mxu0 0.0
        %3617 = vmatpush1.msra.mxu0 0.0
        %3618 = vmatprep.subr.mxu0 0.0
        %3619 = vmatpush1.msra.mxu0 0.0
        %3620 = vmatprep.subr.mxu0 0.0
        %3621 = vmatpush1.msra.mxu0 0.0
        %3622 = vmatprep.subr.mxu0 0.0
        %3623 = vmatpush1.msra.mxu0 0.0
        %3624 = vmatprep.subr.mxu0 0.0
        %3625 = vmatpush1.msra.mxu0 0.0
        %3626 = vmatprep.subr.mxu0 0.0
        %3627 = vmatpush1.msra.mxu0 0.0
        %3628 = vmatprep.subr.mxu0 0.0
        %3629 = vmatpush1.msra.mxu0 0.0
        %3630 = vmatprep.mubr.f32.mxu0 0.0
        %3631 = vmatmul.mubr.f32.gmra.mrb[0].mxu0 %v731
        %v3632 = vpop.f32.mrb[0].mxu0
        %v3633 = vadd.f32 0.0, %v3632
        %v3634 = vpop.f32.mrb[0].mxu0
        %v3635 = vadd.f32 0.0, %v3634
        %3636 = vmatprep.mubr.f32.mxu0 0.0
        %3637 = vmatmul.mubr.f32.gmra.mrb[0].mxu0 %v734
        %v3638 = vpop.f32.mrb[0].mxu0
        %v3639 = vadd.f32 0.0, %v3638
        %v3640 = vpop.f32.mrb[0].mxu0
        %v3641 = vadd.f32 0.0, %v3640
        %3642 = vmatprep.mubr.f32.mxu0 0.0
        %3643 = vmatmul.mubr.f32.gmra.mrb[0].mxu0 %v737
        %v3644 = vpop.f32.mrb[0].mxu0
        %v3645 = vadd.f32 0.0, %v3644
        %v3646 = vpop.f32.mrb[0].mxu0
        %v3647 = vadd.f32 0.0, %v3646
        %3648 = vmatprep.mubr.f32.mxu0 0.0
        %3649 = vmatmul.mubr.f32.gmra.mrb[0].mxu0 %v740
        %v3650 = vpop.f32.mrb[0].mxu0
        %v3651 = vadd.f32 0.0, %v3650
        %v3652 = vpop.f32.mrb[0].mxu0
        %v3653 = vadd.f32 0.0, %v3652
        %3654 = vmatprep.mubr.f32.mxu0 0.0
        %3655 = vmatmul.mubr.f32.gmra.mrb[0].mxu0 %v743
        %v3656 = vpop.f32.mrb[0].mxu0
        %v3657 = vadd.f32 0.0, %v3656
        %v3658 = vpop.f32.mrb[0].mxu0
        %v3659 = vadd.f32 0.0, %v3658
        %3660 = vmatprep.mubr.f32.mxu0 0.0
        %3661 = vmatmul.mubr.f32.gmra.mrb[0].mxu0 %v746
        %v3662 = vpop.f32.mrb[0].mxu0
        %v3663 = vadd.f32 0.0, %v3662
        %v3664 = vpop.f32.mrb[0].mxu0
        %v3665 = vadd.f32 0.0, %v3664
        %3666 = vmatprep.mubr.f32.mxu0 0.0
        %3667 = vmatmul.mubr.f32.gmra.mrb[0].mxu0 %v749
        %v3668 = vpop.f32.mrb[0].mxu0
        %v3669 = vadd.f32 0.0, %v3668
        %v3670 = vpop.f32.mrb[0].mxu0
        %v3671 = vadd.f32 0.0, %v3670
        %3672 = vmatprep.mubr.f32.mxu0 0.0
        %3673 = vmatmul.mubr.f32.gmra.mrb[0].mxu0 %v752
        %v3674 = vpop.f32.mrb[0].mxu0
        %v3675 = vadd.f32 0.0, %v3674
        %v3676 = vpop.f32.mrb[0].mxu0
        %v3677 = vadd.f32 0.0, %v3676
        %3678 = vmatprep.mubr.f32.mxu0 0.0
        %3679 = vmatmul.mubr.f32.gmra.mrb[0].mxu0 %v755
        %v3680 = vpop.f32.mrb[0].mxu0
        %v3681 = vadd.f32 0.0, %v3680
        %v3682 = vpop.f32.mrb[0].mxu0
        %v3683 = vadd.f32 0.0, %v3682
        %3684 = vmatprep.mubr.f32.mxu0 0.0
        %3685 = vmatmul.mubr.f32.gmra.mrb[0].mxu0 %v758
        %v3686 = vpop.f32.mrb[0].mxu0
        %v3687 = vadd.f32 0.0, %v3686
        %v3688 = vpop.f32.mrb[0].mxu0
        %v3689 = vadd.f32 0.0, %v3688
        %3690 = vmatprep.mubr.f32.mxu0 0.0
        %3691 = vmatmul.mubr.f32.gmra.mrb[0].mxu0 %v761
        %v3692 = vpop.f32.mrb[0].mxu0
        %v3693 = vadd.f32 0.0, %v3692
        %v3694 = vpop.f32.mrb[0].mxu0
        %v3695 = vadd.f32 0.0, %v3694
        %3696 = vmatprep.mubr.f32.mxu0 0.0
        %3697 = vmatmul.mubr.f32.gmra.mrb[0].mxu0 %v764
        %v3698 = vpop.f32.mrb[0].mxu0
        %v3699 = vadd.f32 0.0, %v3698
        %v3700 = vpop.f32.mrb[0].mxu0
        %v3701 = vadd.f32 0.0, %v3700
        %3702 = vmatprep.mubr.f32.mxu0 0.0
        %3703 = vmatmul.mubr.f32.gmra.mrb[0].mxu0 %v767
        %v3704 = vpop.f32.mrb[0].mxu0
        %v3705 = vadd.f32 0.0, %v3704
        %v3706 = vpop.f32.mrb[0].mxu0
        %v3707 = vadd.f32 0.0, %v3706
        %3708 = vmatprep.mubr.f32.mxu0 0.0
        %3709 = vmatmul.mubr.f32.gmra.mrb[0].mxu0 %v770
        %v3710 = vpop.f32.mrb[0].mxu0
        %v3711 = vadd.f32 0.0, %v3710
        %v3712 = vpop.f32.mrb[0].mxu0
        %v3713 = vadd.f32 0.0, %v3712
        %3714 = vmatprep.mubr.f32.mxu0 0.0
        %3715 = vmatmul.mubr.f32.gmra.mrb[0].mxu0 %v773
        %v3716 = vpop.f32.mrb[0].mxu0
        %v3717 = vadd.f32 0.0, %v3716
        %v3718 = vpop.f32.mrb[0].mxu0
        %v3719 = vadd.f32 0.0, %v3718
        %3720 = vmatprep.mubr.f32.mxu0 0.0
        %3721 = vmatmul.mubr.f32.gmra.mrb[0].mxu0 %v776
        %v3722 = vpop.f32.mrb[0].mxu0
        %v3723 = vadd.f32 0.0, %v3722
        %v3724 = vpop.f32.mrb[0].mxu0
        %v3725 = vadd.f32 0.0, %v3724
        %3726 = vmatprep.mubr.f32.mxu0 0.0
        %3727 = vmatmul.mubr.f32.gmra.mrb[0].mxu0 %v779
        %v3728 = vpop.f32.mrb[0].mxu0
        %v3729 = vadd.f32 0.0, %v3728
        %v3730 = vpop.f32.mrb[0].mxu0
        %v3731 = vadd.f32 0.0, %v3730
        %3732 = vmatprep.mubr.f32.mxu0 0.0
        %3733 = vmatmul.mubr.f32.gmra.mrb[0].mxu0 %v782
        %v3734 = vpop.f32.mrb[0].mxu0
        %v3735 = vadd.f32 0.0, %v3734
        %v3736 = vpop.f32.mrb[0].mxu0
        %v3737 = vadd.f32 0.0, %v3736
        %3738 = vmatprep.mubr.f32.mxu0 0.0
        %3739 = vmatmul.mubr.f32.gmra.mrb[0].mxu0 %v785
        %v3740 = vpop.f32.mrb[0].mxu0
        %v3741 = vadd.f32 0.0, %v3740
        %v3742 = vpop.f32.mrb[0].mxu0
        %v3743 = vadd.f32 0.0, %v3742
        %3744 = vmatprep.mubr.f32.mxu0 0.0
        %3745 = vmatmul.mubr.f32.gmra.mrb[0].mxu0 %v788
        %v3746 = vpop.f32.mrb[0].mxu0
        %v3747 = vadd.f32 0.0, %v3746
        %v3748 = vpop.f32.mrb[0].mxu0
        %v3749 = vadd.f32 0.0, %v3748
        %3750 = vmatprep.mubr.f32.mxu0 0.0
        %3751 = vmatmul.mubr.f32.gmra.mrb[0].mxu0 %v791
        %v3752 = vpop.f32.mrb[0].mxu0
        %v3753 = vadd.f32 0.0, %v3752
        %v3754 = vpop.f32.mrb[0].mxu0
        %v3755 = vadd.f32 0.0, %v3754
        %3756 = vmatprep.mubr.f32.mxu0 0.0
        %3757 = vmatmul.mubr.f32.gmra.mrb[0].mxu0 %v794
        %v3758 = vpop.f32.mrb[0].mxu0
        %v3759 = vadd.f32 0.0, %v3758
        %v3760 = vpop.f32.mrb[0].mxu0
        %v3761 = vadd.f32 0.0, %v3760
        %3762 = vmatprep.mubr.f32.mxu0 0.0
        %3763 = vmatmul.mubr.f32.gmra.mrb[0].mxu0 %v797
        %v3764 = vpop.f32.mrb[0].mxu0
        %v3765 = vadd.f32 0.0, %v3764
        %v3766 = vpop.f32.mrb[0].mxu0
        %v3767 = vadd.f32 0.0, %v3766
        %3768 = vmatprep.mubr.f32.mxu0 0.0
        %3769 = vmatmul.mubr.f32.gmra.mrb[0].mxu0 %v800
        %v3770 = vpop.f32.mrb[0].mxu0
        %v3771 = vadd.f32 0.0, %v3770
        %v3772 = vpop.f32.mrb[0].mxu0
        %v3773 = vadd.f32 0.0, %v3772
        %3774 = vmatprep.mubr.f32.mxu0 0.0
        %3775 = vmatmul.mubr.f32.gmra.mrb[0].mxu0 %v803
        %v3776 = vpop.f32.mrb[0].mxu0
        %v3777 = vadd.f32 0.0, %v3776
        %v3778 = vpop.f32.mrb[0].mxu0
        %v3779 = vadd.f32 0.0, %v3778
        %3780 = vmatprep.mubr.f32.mxu0 0.0
        %3781 = vmatmul.mubr.f32.gmra.mrb[0].mxu0 %v806
        %v3782 = vpop.f32.mrb[0].mxu0
        %v3783 = vadd.f32 0.0, %v3782
        %v3784 = vpop.f32.mrb[0].mxu0
        %v3785 = vadd.f32 0.0, %v3784
        %3786 = vmatprep.mubr.f32.mxu0 0.0
        %3787 = vmatmul.mubr.f32.gmra.mrb[0].mxu0 %v809
        %v3788 = vpop.f32.mrb[0].mxu0
        %v3789 = vadd.f32 0.0, %v3788
        %v3790 = vpop.f32.mrb[0].mxu0
        %v3791 = vadd.f32 0.0, %v3790
        %3792 = vmatprep.mubr.f32.mxu0 0.0
        %3793 = vmatmul.mubr.f32.gmra.mrb[0].mxu0 %v812
        %v3794 = vpop.f32.mrb[0].mxu0
        %v3795 = vadd.f32 0.0, %v3794
        %v3796 = vpop.f32.mrb[0].mxu0
        %v3797 = vadd.f32 0.0, %v3796
        %3798 = vmatprep.mubr.f32.mxu0 0.0
        %3799 = vmatmul.mubr.f32.gmra.mrb[0].mxu0 %v815
        %v3800 = vpop.f32.mrb[0].mxu0
        %v3801 = vadd.f32 0.0, %v3800
        %v3802 = vpop.f32.mrb[0].mxu0
        %v3803 = vadd.f32 0.0, %v3802
        %3804 = vmatprep.mubr.f32.mxu0 0.0
        %3805 = vmatmul.mubr.f32.gmra.mrb[0].mxu0 %v818
        %v3806 = vpop.f32.mrb[0].mxu0
        %v3807 = vadd.f32 0.0, %v3806
        %v3808 = vpop.f32.mrb[0].mxu0
        %v3809 = vadd.f32 0.0, %v3808
        %3810 = vmatprep.mubr.f32.mxu0 0.0
        %3811 = vmatmul.mubr.f32.gmra.mrb[0].mxu0 %v821
        %v3812 = vpop.f32.mrb[0].mxu0
        %v3813 = vadd.f32 0.0, %v3812
        %v3814 = vpop.f32.mrb[0].mxu0
        %v3815 = vadd.f32 0.0, %v3814
        %3816 = vmatprep.mubr.f32.mxu0 0.0
        %3817 = vmatmul.mubr.f32.gmra.mrb[0].mxu0 %v824
        %v3818 = vpop.f32.mrb[0].mxu0
        %v3819 = vadd.f32 0.0, %v3818
        %v3820 = vpop.f32.mrb[0].mxu0
        %v3821 = vadd.f32 0.0, %v3820
        %3822 = vmatprep.mubr.f32.mxu0 0.0
        %3823 = vmatmul.mubr.f32.gmra.mrb[0].mxu0 %v827
        %v3824 = vpop.f32.mrb[0].mxu0
        %v3825 = vadd.f32 0.0, %v3824
        %v3826 = vpop.f32.mrb[0].mxu0
        %v3827 = vadd.f32 0.0, %v3826
        %3828 = vmatprep.mubr.f32.mxu0 0.0
        %3829 = vmatmul.mubr.f32.gmra.mrb[0].mxu0 %v830
        %v3830 = vpop.f32.mrb[0].mxu0
        %v3831 = vadd.f32 0.0, %v3830
        %v3832 = vpop.f32.mrb[0].mxu0
        %v3833 = vadd.f32 0.0, %v3832
        %3834 = vmatprep.mubr.f32.mxu0 0.0
        %3835 = vmatmul.mubr.f32.gmra.mrb[0].mxu0 %v833
        %v3836 = vpop.f32.mrb[0].mxu0
        %v3837 = vadd.f32 0.0, %v3836
        %v3838 = vpop.f32.mrb[0].mxu0
        %v3839 = vadd.f32 0.0, %v3838
        %3840 = vmatprep.mubr.f32.mxu0 0.0
        %3841 = vmatmul.mubr.f32.gmra.mrb[0].mxu0 %v836
        %v3842 = vpop.f32.mrb[0].mxu0
        %v3843 = vadd.f32 0.0, %v3842
        %v3844 = vpop.f32.mrb[0].mxu0
        %v3845 = vadd.f32 0.0, %v3844
        %3846 = vmatprep.mubr.f32.mxu0 0.0
        %3847 = vmatmul.mubr.f32.gmra.mrb[0].mxu0 %v839
        %v3848 = vpop.f32.mrb[0].mxu0
        %v3849 = vadd.f32 0.0, %v3848
        %v3850 = vpop.f32.mrb[0].mxu0
        %v3851 = vadd.f32 0.0, %v3850
        %3852 = vmatprep.mubr.f32.mxu0 0.0
        %3853 = vmatmul.mubr.f32.gmra.mrb[0].mxu0 %v842
        %v3854 = vpop.f32.mrb[0].mxu0
        %v3855 = vadd.f32 0.0, %v3854
        %v3856 = vpop.f32.mrb[0].mxu0
        %v3857 = vadd.f32 0.0, %v3856
        %3858 = vmatprep.mubr.f32.mxu0 0.0
        %3859 = vmatmul.mubr.f32.gmra.mrb[0].mxu0 %v845
        %v3860 = vpop.f32.mrb[0].mxu0
        %v3861 = vadd.f32 0.0, %v3860
        %v3862 = vpop.f32.mrb[0].mxu0
        %v3863 = vadd.f32 0.0, %v3862
        %3864 = vmatprep.mubr.f32.mxu0 0.0
        %3865 = vmatmul.mubr.f32.gmra.mrb[0].mxu0 %v848
        %v3866 = vpop.f32.mrb[0].mxu0
        %v3867 = vadd.f32 0.0, %v3866
        %v3868 = vpop.f32.mrb[0].mxu0
        %v3869 = vadd.f32 0.0, %v3868
        %3870 = vmatprep.mubr.f32.mxu0 0.0
        %3871 = vmatmul.mubr.f32.gmra.mrb[0].mxu0 %v851
        %v3872 = vpop.f32.mrb[0].mxu0
        %v3873 = vadd.f32 0.0, %v3872
        %v3874 = vpop.f32.mrb[0].mxu0
        %v3875 = vadd.f32 0.0, %v3874
        %3876 = vmatprep.mubr.f32.mxu0 0.0
        %3877 = vmatmul.mubr.f32.gmra.mrb[0].mxu0 %v854
        %v3878 = vpop.f32.mrb[0].mxu0
        %v3879 = vadd.f32 0.0, %v3878
        %v3880 = vpop.f32.mrb[0].mxu0
        %v3881 = vadd.f32 0.0, %v3880
        %3882 = vmatprep.mubr.f32.mxu0 0.0
        %3883 = vmatmul.mubr.f32.gmra.mrb[0].mxu0 %v857
        %v3884 = vpop.f32.mrb[0].mxu0
        %v3885 = vadd.f32 0.0, %v3884
        %v3886 = vpop.f32.mrb[0].mxu0
        %v3887 = vadd.f32 0.0, %v3886
        %3888 = vmatprep.mubr.f32.mxu0 0.0
        %3889 = vmatmul.mubr.f32.gmra.mrb[0].mxu0 %v860
        %v3890 = vpop.f32.mrb[0].mxu0
        %v3891 = vadd.f32 0.0, %v3890
        %v3892 = vpop.f32.mrb[0].mxu0
        %v3893 = vadd.f32 0.0, %v3892
        %3894 = vmatprep.mubr.f32.mxu0 0.0
        %3895 = vmatmul.mubr.f32.gmra.mrb[0].mxu0 %v863
        %v3896 = vpop.f32.mrb[0].mxu0
        %v3897 = vadd.f32 0.0, %v3896
        %v3898 = vpop.f32.mrb[0].mxu0
        %v3899 = vadd.f32 0.0, %v3898
        %3900 = vmatprep.mubr.f32.mxu0 0.0
        %3901 = vmatmul.mubr.f32.gmra.mrb[0].mxu0 %v866
        %v3902 = vpop.f32.mrb[0].mxu0
        %v3903 = vadd.f32 0.0, %v3902
        %v3904 = vpop.f32.mrb[0].mxu0
        %v3905 = vadd.f32 0.0, %v3904
        %3906 = vmatprep.mubr.f32.mxu0 0.0
        %3907 = vmatmul.mubr.f32.gmra.mrb[0].mxu0 %v869
        %v3908 = vpop.f32.mrb[0].mxu0
        %v3909 = vadd.f32 0.0, %v3908
        %v3910 = vpop.f32.mrb[0].mxu0
        %v3911 = vadd.f32 0.0, %v3910
        %3912 = vmatprep.mubr.f32.mxu0 0.0
        %3913 = vmatmul.mubr.f32.gmra.mrb[0].mxu0 %v872
        %v3914 = vpop.f32.mrb[0].mxu0
        %v3915 = vadd.f32 0.0, %v3914
        %v3916 = vpop.f32.mrb[0].mxu0
        %v3917 = vadd.f32 0.0, %v3916
        %3918 = vmatprep.mubr.f32.mxu0 0.0
        %3919 = vmatmul.mubr.f32.gmra.mrb[0].mxu0 %v875
        %v3920 = vpop.f32.mrb[0].mxu0
        %v3921 = vadd.f32 0.0, %v3920
        %v3922 = vpop.f32.mrb[0].mxu0
        %v3923 = vadd.f32 0.0, %v3922
        %3924 = vmatprep.mubr.f32.mxu0 0.0
        %3925 = vmatmul.mubr.f32.gmra.mrb[0].mxu0 %v878
        %v3926 = vpop.f32.mrb[0].mxu0
        %v3927 = vadd.f32 0.0, %v3926
        %v3928 = vpop.f32.mrb[0].mxu0
        %v3929 = vadd.f32 0.0, %v3928
        %3930 = vmatprep.mubr.f32.mxu0 0.0
        %3931 = vmatmul.mubr.f32.gmra.mrb[0].mxu0 %v881
        %v3932 = vpop.f32.mrb[0].mxu0
        %v3933 = vadd.f32 0.0, %v3932
        %v3934 = vpop.f32.mrb[0].mxu0
        %v3935 = vadd.f32 0.0, %v3934
        %3936 = vmatprep.mubr.f32.mxu0 0.0
        %3937 = vmatmul.mubr.f32.gmra.mrb[0].mxu0 %v884
        %v3938 = vpop.f32.mrb[0].mxu0
        %v3939 = vadd.f32 0.0, %v3938
        %v3940 = vpop.f32.mrb[0].mxu0
        %v3941 = vadd.f32 0.0, %v3940
        %3942 = vmatprep.mubr.f32.mxu0 0.0
        %3943 = vmatmul.mubr.f32.gmra.mrb[0].mxu0 %v887
        %v3944 = vpop.f32.mrb[0].mxu0
        %v3945 = vadd.f32 0.0, %v3944
        %v3946 = vpop.f32.mrb[0].mxu0
        %v3947 = vadd.f32 0.0, %v3946
        %3948 = vmatprep.mubr.f32.mxu0 0.0
        %3949 = vmatmul.mubr.f32.gmra.mrb[0].mxu0 %v890
        %v3950 = vpop.f32.mrb[0].mxu0
        %v3951 = vadd.f32 0.0, %v3950
        %v3952 = vpop.f32.mrb[0].mxu0
        %v3953 = vadd.f32 0.0, %v3952
        %3954 = vmatprep.mubr.f32.mxu0 0.0
        %3955 = vmatmul.mubr.f32.gmra.mrb[0].mxu0 %v893
        %v3956 = vpop.f32.mrb[0].mxu0
        %v3957 = vadd.f32 0.0, %v3956
        %v3958 = vpop.f32.mrb[0].mxu0
        %v3959 = vadd.f32 0.0, %v3958
        %3960 = vmatprep.mubr.f32.mxu0 0.0
        %3961 = vmatmul.mubr.f32.gmra.mrb[0].mxu0 %v896
        %v3962 = vpop.f32.mrb[0].mxu0
        %v3963 = vadd.f32 0.0, %v3962
        %v3964 = vpop.f32.mrb[0].mxu0
        %v3965 = vadd.f32 0.0, %v3964
        %3966 = vmatprep.mubr.f32.mxu0 0.0
        %3967 = vmatmul.mubr.f32.gmra.mrb[0].mxu0 %v899
        %v3968 = vpop.f32.mrb[0].mxu0
        %v3969 = vadd.f32 0.0, %v3968
        %v3970 = vpop.f32.mrb[0].mxu0
        %v3971 = vadd.f32 0.0, %v3970
        %3972 = vmatprep.mubr.f32.mxu0 0.0
        %3973 = vmatmul.mubr.f32.gmra.mrb[0].mxu0 %v902
        %v3974 = vpop.f32.mrb[0].mxu0
        %v3975 = vadd.f32 0.0, %v3974
        %v3976 = vpop.f32.mrb[0].mxu0
        %v3977 = vadd.f32 0.0, %v3976
        %3978 = vmatprep.mubr.f32.mxu0 0.0
        %3979 = vmatmul.mubr.f32.gmra.mrb[0].mxu0 %v905
        %v3980 = vpop.f32.mrb[0].mxu0
        %v3981 = vadd.f32 0.0, %v3980
        %v3982 = vpop.f32.mrb[0].mxu0
        %v3983 = vadd.f32 0.0, %v3982
        %3984 = vmatprep.mubr.f32.mxu0 0.0
        %3985 = vmatmul.mubr.f32.gmra.mrb[0].mxu0 %v908
        %v3986 = vpop.f32.mrb[0].mxu0
        %v3987 = vadd.f32 0.0, %v3986
        %v3988 = vpop.f32.mrb[0].mxu0
        %v3989 = vadd.f32 0.0, %v3988
        %3990 = vmatprep.mubr.f32.mxu0 0.0
        %3991 = vmatmul.mubr.f32.gmra.mrb[0].mxu0 %v911
        %v3992 = vpop.f32.mrb[0].mxu0
        %v3993 = vadd.f32 0.0, %v3992
        %v3994 = vpop.f32.mrb[0].mxu0
        %v3995 = vadd.f32 0.0, %v3994
        %3996 = vmatprep.mubr.f32.mxu0 0.0
        %3997 = vmatmul.mubr.f32.gmra.mrb[0].mxu0 %v914
        %v3998 = vpop.f32.mrb[0].mxu0
        %v3999 = vadd.f32 0.0, %v3998
        %v4000 = vpop.f32.mrb[0].mxu0
        %v4001 = vadd.f32 0.0, %v4000
        %4002 = vmatprep.mubr.f32.mxu0 0.0
        %4003 = vmatmul.mubr.f32.gmra.mrb[0].mxu0 %v917
        %v4004 = vpop.f32.mrb[0].mxu0
        %v4005 = vadd.f32 0.0, %v4004
        %v4006 = vpop.f32.mrb[0].mxu0
        %v4007 = vadd.f32 0.0, %v4006
        %4008 = vmatprep.mubr.f32.mxu0 0.0
        %4009 = vmatmul.mubr.f32.gmra.mrb[0].mxu0 %v920
        %v4010 = vpop.f32.mrb[0].mxu0
        %v4011 = vadd.f32 0.0, %v4010
        %v4012 = vpop.f32.mrb[0].mxu0
        %v4013 = vadd.f32 0.0, %v4012
        %4014 = vdwg.mxu0
        %v4015 = vld [vmem:[%s328] sm:$0xf]
        %v4017 = vlaneseq
        %v4018 = vshrl.u32 %v4017, 7
        %v4019 = vsub.s32 0, %v4018
        %v4020 = vrot.slane %v4015, %v4019
        %v4021 = vlaneseq
        %v4022 = vshrl.u32 %v4021, 7
        %v4023 = vsub.s32 1, %v4022
        %v4024 = vrot.slane %v4015, %v4023
        %v4025 = vlaneseq
        %v4026 = vshrl.u32 %v4025, 7
        %v4027 = vsub.s32 2, %v4026
        %v4028 = vrot.slane %v4015, %v4027
        %v4029 = vlaneseq
        %v4030 = vshrl.u32 %v4029, 7
        %v4031 = vsub.s32 3, %v4030
        %v4032 = vrot.slane %v4015, %v4031
        %v4037 = vmul.f32 %v3184, %v4020
        %v4038 = vmul.f32 %v3186, %v4024
        %v4039 = vmul.f32 %v3633, %v4028
        %v4040 = vmul.f32 %v3635, %v4032
        %v4041 = vmul.f32 %v3190, %v4020
        %v4042 = vmul.f32 %v3192, %v4024
        %v4043 = vmul.f32 %v3639, %v4028
        %v4044 = vmul.f32 %v3641, %v4032
        %v4045 = vmul.f32 %v3196, %v4020
        %v4046 = vmul.f32 %v3198, %v4024
        %v4047 = vmul.f32 %v3645, %v4028
        %v4048 = vmul.f32 %v3647, %v4032
        %v4049 = vmul.f32 %v3202, %v4020
        %v4050 = vmul.f32 %v3204, %v4024
        %v4051 = vmul.f32 %v3651, %v4028
        %v4052 = vmul.f32 %v3653, %v4032
        %v4053 = vmul.f32 %v3208, %v4020
        %v4054 = vmul.f32 %v3210, %v4024
        %v4055 = vmul.f32 %v3657, %v4028
        %v4056 = vmul.f32 %v3659, %v4032
        %v4057 = vmul.f32 %v3214, %v4020
        %v4058 = vmul.f32 %v3216, %v4024
        %v4059 = vmul.f32 %v3663, %v4028
        %v4060 = vmul.f32 %v3665, %v4032
        %v4061 = vmul.f32 %v3220, %v4020
        %v4062 = vmul.f32 %v3222, %v4024
        %v4063 = vmul.f32 %v3669, %v4028
        %v4064 = vmul.f32 %v3671, %v4032
        %v4065 = vmul.f32 %v3226, %v4020
        %v4066 = vmul.f32 %v3228, %v4024
        %v4067 = vmul.f32 %v3675, %v4028
        %v4068 = vmul.f32 %v3677, %v4032
        %v4069 = vmul.f32 %v3232, %v4020
        %v4070 = vmul.f32 %v3234, %v4024
        %v4071 = vmul.f32 %v3681, %v4028
        %v4072 = vmul.f32 %v3683, %v4032
        %v4073 = vmul.f32 %v3238, %v4020
        %v4074 = vmul.f32 %v3240, %v4024
        %v4075 = vmul.f32 %v3687, %v4028
        %v4076 = vmul.f32 %v3689, %v4032
        %v4077 = vmul.f32 %v3244, %v4020
        %v4078 = vmul.f32 %v3246, %v4024
        %v4079 = vmul.f32 %v3693, %v4028
        %v4080 = vmul.f32 %v3695, %v4032
        %v4081 = vmul.f32 %v3250, %v4020
        %v4082 = vmul.f32 %v3252, %v4024
        %v4083 = vmul.f32 %v3699, %v4028
        %v4084 = vmul.f32 %v3701, %v4032
        %v4085 = vmul.f32 %v3256, %v4020
        %v4086 = vmul.f32 %v3258, %v4024
        %v4087 = vmul.f32 %v3705, %v4028
        %v4088 = vmul.f32 %v3707, %v4032
        %v4089 = vmul.f32 %v3262, %v4020
        %v4090 = vmul.f32 %v3264, %v4024
        %v4091 = vmul.f32 %v3711, %v4028
        %v4092 = vmul.f32 %v3713, %v4032
        %v4093 = vmul.f32 %v3268, %v4020
        %v4094 = vmul.f32 %v3270, %v4024
        %v4095 = vmul.f32 %v3717, %v4028
        %v4096 = vmul.f32 %v3719, %v4032
        %v4097 = vmul.f32 %v3274, %v4020
        %v4098 = vmul.f32 %v3276, %v4024
        %v4099 = vmul.f32 %v3723, %v4028
        %v4100 = vmul.f32 %v3725, %v4032
        %v4101 = vmul.f32 %v3280, %v4020
        %v4102 = vmul.f32 %v3282, %v4024
        %v4103 = vmul.f32 %v3729, %v4028
        %v4104 = vmul.f32 %v3731, %v4032
        %v4105 = vmul.f32 %v3286, %v4020
        %v4106 = vmul.f32 %v3288, %v4024
        %v4107 = vmul.f32 %v3735, %v4028
        %v4108 = vmul.f32 %v3737, %v4032
        %v4109 = vmul.f32 %v3292, %v4020
        %v4110 = vmul.f32 %v3294, %v4024
        %v4111 = vmul.f32 %v3741, %v4028
        %v4112 = vmul.f32 %v3743, %v4032
        %v4113 = vmul.f32 %v3298, %v4020
        %v4114 = vmul.f32 %v3300, %v4024
        %v4115 = vmul.f32 %v3747, %v4028
        %v4116 = vmul.f32 %v3749, %v4032
        %v4117 = vmul.f32 %v3304, %v4020
        %v4118 = vmul.f32 %v3306, %v4024
        %v4119 = vmul.f32 %v3753, %v4028
        %v4120 = vmul.f32 %v3755, %v4032
        %v4121 = vmul.f32 %v3310, %v4020
        %v4122 = vmul.f32 %v3312, %v4024
        %v4123 = vmul.f32 %v3759, %v4028
        %v4124 = vmul.f32 %v3761, %v4032
        %v4125 = vmul.f32 %v3316, %v4020
        %v4126 = vmul.f32 %v3318, %v4024
        %v4127 = vmul.f32 %v3765, %v4028
        %v4128 = vmul.f32 %v3767, %v4032
        %v4129 = vmul.f32 %v3322, %v4020
        %v4130 = vmul.f32 %v3324, %v4024
        %v4131 = vmul.f32 %v3771, %v4028
        %v4132 = vmul.f32 %v3773, %v4032
        %v4133 = vmul.f32 %v3328, %v4020
        %v4134 = vmul.f32 %v3330, %v4024
        %v4135 = vmul.f32 %v3777, %v4028
        %v4136 = vmul.f32 %v3779, %v4032
        %v4137 = vmul.f32 %v3334, %v4020
        %v4138 = vmul.f32 %v3336, %v4024
        %v4139 = vmul.f32 %v3783, %v4028
        %v4140 = vmul.f32 %v3785, %v4032
        %v4141 = vmul.f32 %v3340, %v4020
        %v4142 = vmul.f32 %v3342, %v4024
        %v4143 = vmul.f32 %v3789, %v4028
        %v4144 = vmul.f32 %v3791, %v4032
        %v4145 = vmul.f32 %v3346, %v4020
        %v4146 = vmul.f32 %v3348, %v4024
        %v4147 = vmul.f32 %v3795, %v4028
        %v4148 = vmul.f32 %v3797, %v4032
        %v4149 = vmul.f32 %v3352, %v4020
        %v4150 = vmul.f32 %v3354, %v4024
        %v4151 = vmul.f32 %v3801, %v4028
        %v4152 = vmul.f32 %v3803, %v4032
        %v4153 = vmul.f32 %v3358, %v4020
        %v4154 = vmul.f32 %v3360, %v4024
        %v4155 = vmul.f32 %v3807, %v4028
        %v4156 = vmul.f32 %v3809, %v4032
        %v4157 = vmul.f32 %v3364, %v4020
        %v4158 = vmul.f32 %v3366, %v4024
        %v4159 = vmul.f32 %v3813, %v4028
        %v4160 = vmul.f32 %v3815, %v4032
        %v4161 = vmul.f32 %v3370, %v4020
        %v4162 = vmul.f32 %v3372, %v4024
        %v4163 = vmul.f32 %v3819, %v4028
        %v4164 = vmul.f32 %v3821, %v4032
        %v4165 = vmul.f32 %v3376, %v4020
        %v4166 = vmul.f32 %v3378, %v4024
        %v4167 = vmul.f32 %v3825, %v4028
        %v4168 = vmul.f32 %v3827, %v4032
        %v4169 = vmul.f32 %v3382, %v4020
        %v4170 = vmul.f32 %v3384, %v4024
        %v4171 = vmul.f32 %v3831, %v4028
        %v4172 = vmul.f32 %v3833, %v4032
        %v4173 = vmul.f32 %v3388, %v4020
        %v4174 = vmul.f32 %v3390, %v4024
        %v4175 = vmul.f32 %v3837, %v4028
        %v4176 = vmul.f32 %v3839, %v4032
        %v4177 = vmul.f32 %v3394, %v4020
        %v4178 = vmul.f32 %v3396, %v4024
        %v4179 = vmul.f32 %v3843, %v4028
        %v4180 = vmul.f32 %v3845, %v4032
        %v4181 = vmul.f32 %v3400, %v4020
        %v4182 = vmul.f32 %v3402, %v4024
        %v4183 = vmul.f32 %v3849, %v4028
        %v4184 = vmul.f32 %v3851, %v4032
        %v4185 = vmul.f32 %v3406, %v4020
        %v4186 = vmul.f32 %v3408, %v4024
        %v4187 = vmul.f32 %v3855, %v4028
        %v4188 = vmul.f32 %v3857, %v4032
        %v4189 = vmul.f32 %v3412, %v4020
        %v4190 = vmul.f32 %v3414, %v4024
        %v4191 = vmul.f32 %v3861, %v4028
        %v4192 = vmul.f32 %v3863, %v4032
        %v4193 = vmul.f32 %v3418, %v4020
        %v4194 = vmul.f32 %v3420, %v4024
        %v4195 = vmul.f32 %v3867, %v4028
        %v4196 = vmul.f32 %v3869, %v4032
        %v4197 = vmul.f32 %v3424, %v4020
        %v4198 = vmul.f32 %v3426, %v4024
        %v4199 = vmul.f32 %v3873, %v4028
        %v4200 = vmul.f32 %v3875, %v4032
        %v4201 = vmul.f32 %v3430, %v4020
        %v4202 = vmul.f32 %v3432, %v4024
        %v4203 = vmul.f32 %v3879, %v4028
        %v4204 = vmul.f32 %v3881, %v4032
        %v4205 = vmul.f32 %v3436, %v4020
        %v4206 = vmul.f32 %v3438, %v4024
        %v4207 = vmul.f32 %v3885, %v4028
        %v4208 = vmul.f32 %v3887, %v4032
        %v4209 = vmul.f32 %v3442, %v4020
        %v4210 = vmul.f32 %v3444, %v4024
        %v4211 = vmul.f32 %v3891, %v4028
        %v4212 = vmul.f32 %v3893, %v4032
        %v4213 = vmul.f32 %v3448, %v4020
        %v4214 = vmul.f32 %v3450, %v4024
        %v4215 = vmul.f32 %v3897, %v4028
        %v4216 = vmul.f32 %v3899, %v4032
        %v4217 = vmul.f32 %v3454, %v4020
        %v4218 = vmul.f32 %v3456, %v4024
        %v4219 = vmul.f32 %v3903, %v4028
        %v4220 = vmul.f32 %v3905, %v4032
        %v4221 = vmul.f32 %v3460, %v4020
        %v4222 = vmul.f32 %v3462, %v4024
        %v4223 = vmul.f32 %v3909, %v4028
        %v4224 = vmul.f32 %v3911, %v4032
        %v4225 = vmul.f32 %v3466, %v4020
        %v4226 = vmul.f32 %v3468, %v4024
        %v4227 = vmul.f32 %v3915, %v4028
        %v4228 = vmul.f32 %v3917, %v4032
        %v4229 = vmul.f32 %v3472, %v4020
        %v4230 = vmul.f32 %v3474, %v4024
        %v4231 = vmul.f32 %v3921, %v4028
        %v4232 = vmul.f32 %v3923, %v4032
        %v4233 = vmul.f32 %v3478, %v4020
        %v4234 = vmul.f32 %v3480, %v4024
        %v4235 = vmul.f32 %v3927, %v4028
        %v4236 = vmul.f32 %v3929, %v4032
        %v4237 = vmul.f32 %v3484, %v4020
        %v4238 = vmul.f32 %v3486, %v4024
        %v4239 = vmul.f32 %v3933, %v4028
        %v4240 = vmul.f32 %v3935, %v4032
        %v4241 = vmul.f32 %v3490, %v4020
        %v4242 = vmul.f32 %v3492, %v4024
        %v4243 = vmul.f32 %v3939, %v4028
        %v4244 = vmul.f32 %v3941, %v4032
        %v4245 = vmul.f32 %v3496, %v4020
        %v4246 = vmul.f32 %v3498, %v4024
        %v4247 = vmul.f32 %v3945, %v4028
        %v4248 = vmul.f32 %v3947, %v4032
        %v4249 = vmul.f32 %v3502, %v4020
        %v4250 = vmul.f32 %v3504, %v4024
        %v4251 = vmul.f32 %v3951, %v4028
        %v4252 = vmul.f32 %v3953, %v4032
        %v4253 = vmul.f32 %v3508, %v4020
        %v4254 = vmul.f32 %v3510, %v4024
        %v4255 = vmul.f32 %v3957, %v4028
        %v4256 = vmul.f32 %v3959, %v4032
        %v4257 = vmul.f32 %v3514, %v4020
        %v4258 = vmul.f32 %v3516, %v4024
        %v4259 = vmul.f32 %v3963, %v4028
        %v4260 = vmul.f32 %v3965, %v4032
        %v4261 = vmul.f32 %v3520, %v4020
        %v4262 = vmul.f32 %v3522, %v4024
        %v4263 = vmul.f32 %v3969, %v4028
        %v4264 = vmul.f32 %v3971, %v4032
        %v4265 = vmul.f32 %v3526, %v4020
        %v4266 = vmul.f32 %v3528, %v4024
        %v4267 = vmul.f32 %v3975, %v4028
        %v4268 = vmul.f32 %v3977, %v4032
        %v4269 = vmul.f32 %v3532, %v4020
        %v4270 = vmul.f32 %v3534, %v4024
        %v4271 = vmul.f32 %v3981, %v4028
        %v4272 = vmul.f32 %v3983, %v4032
        %v4273 = vmul.f32 %v3538, %v4020
        %v4274 = vmul.f32 %v3540, %v4024
        %v4275 = vmul.f32 %v3987, %v4028
        %v4276 = vmul.f32 %v3989, %v4032
        %v4277 = vmul.f32 %v3544, %v4020
        %v4278 = vmul.f32 %v3546, %v4024
        %v4279 = vmul.f32 %v3993, %v4028
        %v4280 = vmul.f32 %v3995, %v4032
        %v4281 = vmul.f32 %v3550, %v4020
        %v4282 = vmul.f32 %v3552, %v4024
        %v4283 = vmul.f32 %v3999, %v4028
        %v4284 = vmul.f32 %v4001, %v4032
        %v4285 = vmul.f32 %v3556, %v4020
        %v4286 = vmul.f32 %v3558, %v4024
        %v4287 = vmul.f32 %v4005, %v4028
        %v4288 = vmul.f32 %v4007, %v4032
        %v4289 = vmul.f32 %v3562, %v4020
        %v4290 = vmul.f32 %v3564, %v4024
        %v4291 = vmul.f32 %v4011, %v4028
        %v4292 = vmul.f32 %v4013, %v4032
        %v4293 = vmax.f32 %v4037, %v4038
        %v4294 = vmax.f32 %v4293, %v4039
        %v4295 = vmax.f32 %v4294, %v4040
        %4296 = vmax.xlane.f32.xlu0 %v4295
        %v4297 = vpop.xlane.xlu0 %4296
        %v4298 = vmax.f32 %v4041, %v4042
        %v4299 = vmax.f32 %v4298, %v4043
        %v4300 = vmax.f32 %v4299, %v4044
        %4301 = vmax.xlane.f32.xlu0 %v4300
        %v4302 = vpop.xlane.xlu0 %4301
        %v4303 = vmax.f32 %v4045, %v4046
        %v4304 = vmax.f32 %v4303, %v4047
        %v4305 = vmax.f32 %v4304, %v4048
        %4306 = vmax.xlane.f32.xlu0 %v4305
        %v4307 = vpop.xlane.xlu0 %4306
        %v4308 = vmax.f32 %v4049, %v4050
        %v4309 = vmax.f32 %v4308, %v4051
        %v4310 = vmax.f32 %v4309, %v4052
        %4311 = vmax.xlane.f32.xlu0 %v4310
        %v4312 = vpop.xlane.xlu0 %4311
        %v4313 = vmax.f32 %v4053, %v4054
        %v4314 = vmax.f32 %v4313, %v4055
        %v4315 = vmax.f32 %v4314, %v4056
        %4316 = vmax.xlane.f32.xlu0 %v4315
        %v4317 = vpop.xlane.xlu0 %4316
        %v4318 = vmax.f32 %v4057, %v4058
        %v4319 = vmax.f32 %v4318, %v4059
        %v4320 = vmax.f32 %v4319, %v4060
        %4321 = vmax.xlane.f32.xlu0 %v4320
        %v4322 = vpop.xlane.xlu0 %4321
        %v4323 = vmax.f32 %v4061, %v4062
        %v4324 = vmax.f32 %v4323, %v4063
        %v4325 = vmax.f32 %v4324, %v4064
        %4326 = vmax.xlane.f32.xlu0 %v4325
        %v4327 = vpop.xlane.xlu0 %4326
        %v4328 = vmax.f32 %v4065, %v4066
        %v4329 = vmax.f32 %v4328, %v4067
        %v4330 = vmax.f32 %v4329, %v4068
        %4331 = vmax.xlane.f32.xlu0 %v4330
        %v4332 = vpop.xlane.xlu0 %4331
        %v4333 = vmax.f32 %v4069, %v4070
        %v4334 = vmax.f32 %v4333, %v4071
        %v4335 = vmax.f32 %v4334, %v4072
        %4336 = vmax.xlane.f32.xlu0 %v4335
        %v4337 = vpop.xlane.xlu0 %4336
        %v4338 = vmax.f32 %v4073, %v4074
        %v4339 = vmax.f32 %v4338, %v4075
        %v4340 = vmax.f32 %v4339, %v4076
        %4341 = vmax.xlane.f32.xlu0 %v4340
        %v4342 = vpop.xlane.xlu0 %4341
        %v4343 = vmax.f32 %v4077, %v4078
        %v4344 = vmax.f32 %v4343, %v4079
        %v4345 = vmax.f32 %v4344, %v4080
        %4346 = vmax.xlane.f32.xlu0 %v4345
        %v4347 = vpop.xlane.xlu0 %4346
        %v4348 = vmax.f32 %v4081, %v4082
        %v4349 = vmax.f32 %v4348, %v4083
        %v4350 = vmax.f32 %v4349, %v4084
        %4351 = vmax.xlane.f32.xlu0 %v4350
        %v4352 = vpop.xlane.xlu0 %4351
        %v4353 = vmax.f32 %v4085, %v4086
        %v4354 = vmax.f32 %v4353, %v4087
        %v4355 = vmax.f32 %v4354, %v4088
        %4356 = vmax.xlane.f32.xlu0 %v4355
        %v4357 = vpop.xlane.xlu0 %4356
        %v4358 = vmax.f32 %v4089, %v4090
        %v4359 = vmax.f32 %v4358, %v4091
        %v4360 = vmax.f32 %v4359, %v4092
        %4361 = vmax.xlane.f32.xlu0 %v4360
        %v4362 = vpop.xlane.xlu0 %4361
        %v4363 = vmax.f32 %v4093, %v4094
        %v4364 = vmax.f32 %v4363, %v4095
        %v4365 = vmax.f32 %v4364, %v4096
        %4366 = vmax.xlane.f32.xlu0 %v4365
        %v4367 = vpop.xlane.xlu0 %4366
        %v4368 = vmax.f32 %v4097, %v4098
        %v4369 = vmax.f32 %v4368, %v4099
        %v4370 = vmax.f32 %v4369, %v4100
        %4371 = vmax.xlane.f32.xlu0 %v4370
        %v4372 = vpop.xlane.xlu0 %4371
        %v4373 = vmax.f32 %v4101, %v4102
        %v4374 = vmax.f32 %v4373, %v4103
        %v4375 = vmax.f32 %v4374, %v4104
        %4376 = vmax.xlane.f32.xlu0 %v4375
        %v4377 = vpop.xlane.xlu0 %4376
        %v4378 = vmax.f32 %v4105, %v4106
        %v4379 = vmax.f32 %v4378, %v4107
        %v4380 = vmax.f32 %v4379, %v4108
        %4381 = vmax.xlane.f32.xlu0 %v4380
        %v4382 = vpop.xlane.xlu0 %4381
        %v4383 = vmax.f32 %v4109, %v4110
        %v4384 = vmax.f32 %v4383, %v4111
        %v4385 = vmax.f32 %v4384, %v4112
        %4386 = vmax.xlane.f32.xlu0 %v4385
        %v4387 = vpop.xlane.xlu0 %4386
        %v4388 = vmax.f32 %v4113, %v4114
        %v4389 = vmax.f32 %v4388, %v4115
        %v4390 = vmax.f32 %v4389, %v4116
        %4391 = vmax.xlane.f32.xlu0 %v4390
        %v4392 = vpop.xlane.xlu0 %4391
        %v4393 = vmax.f32 %v4117, %v4118
        %v4394 = vmax.f32 %v4393, %v4119
        %v4395 = vmax.f32 %v4394, %v4120
        %4396 = vmax.xlane.f32.xlu0 %v4395
        %v4397 = vpop.xlane.xlu0 %4396
        %v4398 = vmax.f32 %v4121, %v4122
        %v4399 = vmax.f32 %v4398, %v4123
        %v4400 = vmax.f32 %v4399, %v4124
        %4401 = vmax.xlane.f32.xlu0 %v4400
        %v4402 = vpop.xlane.xlu0 %4401
        %v4403 = vmax.f32 %v4125, %v4126
        %v4404 = vmax.f32 %v4403, %v4127
        %v4405 = vmax.f32 %v4404, %v4128
        %4406 = vmax.xlane.f32.xlu0 %v4405
        %v4407 = vpop.xlane.xlu0 %4406
        %v4408 = vmax.f32 %v4129, %v4130
        %v4409 = vmax.f32 %v4408, %v4131
        %v4410 = vmax.f32 %v4409, %v4132
        %4411 = vmax.xlane.f32.xlu0 %v4410
        %v4412 = vpop.xlane.xlu0 %4411
        %v4413 = vmax.f32 %v4133, %v4134
        %v4414 = vmax.f32 %v4413, %v4135
        %v4415 = vmax.f32 %v4414, %v4136
        %4416 = vmax.xlane.f32.xlu0 %v4415
        %v4417 = vpop.xlane.xlu0 %4416
        %v4418 = vmax.f32 %v4137, %v4138
        %v4419 = vmax.f32 %v4418, %v4139
        %v4420 = vmax.f32 %v4419, %v4140
        %4421 = vmax.xlane.f32.xlu0 %v4420
        %v4422 = vpop.xlane.xlu0 %4421
        %v4423 = vmax.f32 %v4141, %v4142
        %v4424 = vmax.f32 %v4423, %v4143
        %v4425 = vmax.f32 %v4424, %v4144
        %4426 = vmax.xlane.f32.xlu0 %v4425
        %v4427 = vpop.xlane.xlu0 %4426
        %v4428 = vmax.f32 %v4145, %v4146
        %v4429 = vmax.f32 %v4428, %v4147
        %v4430 = vmax.f32 %v4429, %v4148
        %4431 = vmax.xlane.f32.xlu0 %v4430
        %v4432 = vpop.xlane.xlu0 %4431
        %v4433 = vmax.f32 %v4149, %v4150
        %v4434 = vmax.f32 %v4433, %v4151
        %v4435 = vmax.f32 %v4434, %v4152
        %4436 = vmax.xlane.f32.xlu0 %v4435
        %v4437 = vpop.xlane.xlu0 %4436
        %v4438 = vmax.f32 %v4153, %v4154
        %v4439 = vmax.f32 %v4438, %v4155
        %v4440 = vmax.f32 %v4439, %v4156
        %4441 = vmax.xlane.f32.xlu0 %v4440
        %v4442 = vpop.xlane.xlu0 %4441
        %v4443 = vmax.f32 %v4157, %v4158
        %v4444 = vmax.f32 %v4443, %v4159
        %v4445 = vmax.f32 %v4444, %v4160
        %4446 = vmax.xlane.f32.xlu0 %v4445
        %v4447 = vpop.xlane.xlu0 %4446
        %v4448 = vmax.f32 %v4161, %v4162
        %v4449 = vmax.f32 %v4448, %v4163
        %v4450 = vmax.f32 %v4449, %v4164
        %4451 = vmax.xlane.f32.xlu0 %v4450
        %v4452 = vpop.xlane.xlu0 %4451
        %v4453 = vmax.f32 %v4165, %v4166
        %v4454 = vmax.f32 %v4453, %v4167
        %v4455 = vmax.f32 %v4454, %v4168
        %4456 = vmax.xlane.f32.xlu0 %v4455
        %v4457 = vpop.xlane.xlu0 %4456
        %v4458 = vmax.f32 %v4169, %v4170
        %v4459 = vmax.f32 %v4458, %v4171
        %v4460 = vmax.f32 %v4459, %v4172
        %4461 = vmax.xlane.f32.xlu0 %v4460
        %v4462 = vpop.xlane.xlu0 %4461
        %v4463 = vmax.f32 %v4173, %v4174
        %v4464 = vmax.f32 %v4463, %v4175
        %v4465 = vmax.f32 %v4464, %v4176
        %4466 = vmax.xlane.f32.xlu0 %v4465
        %v4467 = vpop.xlane.xlu0 %4466
        %v4468 = vmax.f32 %v4177, %v4178
        %v4469 = vmax.f32 %v4468, %v4179
        %v4470 = vmax.f32 %v4469, %v4180
        %4471 = vmax.xlane.f32.xlu0 %v4470
        %v4472 = vpop.xlane.xlu0 %4471
        %v4473 = vmax.f32 %v4181, %v4182
        %v4474 = vmax.f32 %v4473, %v4183
        %v4475 = vmax.f32 %v4474, %v4184
        %4476 = vmax.xlane.f32.xlu0 %v4475
        %v4477 = vpop.xlane.xlu0 %4476
        %v4478 = vmax.f32 %v4185, %v4186
        %v4479 = vmax.f32 %v4478, %v4187
        %v4480 = vmax.f32 %v4479, %v4188
        %4481 = vmax.xlane.f32.xlu0 %v4480
        %v4482 = vpop.xlane.xlu0 %4481
        %v4483 = vmax.f32 %v4189, %v4190
        %v4484 = vmax.f32 %v4483, %v4191
        %v4485 = vmax.f32 %v4484, %v4192
        %4486 = vmax.xlane.f32.xlu0 %v4485
        %v4487 = vpop.xlane.xlu0 %4486
        %v4488 = vmax.f32 %v4193, %v4194
        %v4489 = vmax.f32 %v4488, %v4195
        %v4490 = vmax.f32 %v4489, %v4196
        %4491 = vmax.xlane.f32.xlu0 %v4490
        %v4492 = vpop.xlane.xlu0 %4491
        %v4493 = vmax.f32 %v4197, %v4198
        %v4494 = vmax.f32 %v4493, %v4199
        %v4495 = vmax.f32 %v4494, %v4200
        %4496 = vmax.xlane.f32.xlu0 %v4495
        %v4497 = vpop.xlane.xlu0 %4496
        %v4498 = vmax.f32 %v4201, %v4202
        %v4499 = vmax.f32 %v4498, %v4203
        %v4500 = vmax.f32 %v4499, %v4204
        %4501 = vmax.xlane.f32.xlu0 %v4500
        %v4502 = vpop.xlane.xlu0 %4501
        %v4503 = vmax.f32 %v4205, %v4206
        %v4504 = vmax.f32 %v4503, %v4207
        %v4505 = vmax.f32 %v4504, %v4208
        %4506 = vmax.xlane.f32.xlu0 %v4505
        %v4507 = vpop.xlane.xlu0 %4506
        %v4508 = vmax.f32 %v4209, %v4210
        %v4509 = vmax.f32 %v4508, %v4211
        %v4510 = vmax.f32 %v4509, %v4212
        %4511 = vmax.xlane.f32.xlu0 %v4510
        %v4512 = vpop.xlane.xlu0 %4511
        %v4513 = vmax.f32 %v4213, %v4214
        %v4514 = vmax.f32 %v4513, %v4215
        %v4515 = vmax.f32 %v4514, %v4216
        %4516 = vmax.xlane.f32.xlu0 %v4515
        %v4517 = vpop.xlane.xlu0 %4516
        %v4518 = vmax.f32 %v4217, %v4218
        %v4519 = vmax.f32 %v4518, %v4219
        %v4520 = vmax.f32 %v4519, %v4220
        %4521 = vmax.xlane.f32.xlu0 %v4520
        %v4522 = vpop.xlane.xlu0 %4521
        %v4523 = vmax.f32 %v4221, %v4222
        %v4524 = vmax.f32 %v4523, %v4223
        %v4525 = vmax.f32 %v4524, %v4224
        %4526 = vmax.xlane.f32.xlu0 %v4525
        %v4527 = vpop.xlane.xlu0 %4526
        %v4528 = vmax.f32 %v4225, %v4226
        %v4529 = vmax.f32 %v4528, %v4227
        %v4530 = vmax.f32 %v4529, %v4228
        %4531 = vmax.xlane.f32.xlu0 %v4530
        %v4532 = vpop.xlane.xlu0 %4531
        %v4533 = vmax.f32 %v4229, %v4230
        %v4534 = vmax.f32 %v4533, %v4231
        %v4535 = vmax.f32 %v4534, %v4232
        %4536 = vmax.xlane.f32.xlu0 %v4535
        %v4537 = vpop.xlane.xlu0 %4536
        %v4538 = vmax.f32 %v4233, %v4234
        %v4539 = vmax.f32 %v4538, %v4235
        %v4540 = vmax.f32 %v4539, %v4236
        %4541 = vmax.xlane.f32.xlu0 %v4540
        %v4542 = vpop.xlane.xlu0 %4541
        %v4543 = vmax.f32 %v4237, %v4238
        %v4544 = vmax.f32 %v4543, %v4239
        %v4545 = vmax.f32 %v4544, %v4240
        %4546 = vmax.xlane.f32.xlu0 %v4545
        %v4547 = vpop.xlane.xlu0 %4546
        %v4548 = vmax.f32 %v4241, %v4242
        %v4549 = vmax.f32 %v4548, %v4243
        %v4550 = vmax.f32 %v4549, %v4244
        %4551 = vmax.xlane.f32.xlu0 %v4550
        %v4552 = vpop.xlane.xlu0 %4551
        %v4553 = vmax.f32 %v4245, %v4246
        %v4554 = vmax.f32 %v4553, %v4247
        %v4555 = vmax.f32 %v4554, %v4248
        %4556 = vmax.xlane.f32.xlu0 %v4555
        %v4557 = vpop.xlane.xlu0 %4556
        %v4558 = vmax.f32 %v4249, %v4250
        %v4559 = vmax.f32 %v4558, %v4251
        %v4560 = vmax.f32 %v4559, %v4252
        %4561 = vmax.xlane.f32.xlu0 %v4560
        %v4562 = vpop.xlane.xlu0 %4561
        %v4563 = vmax.f32 %v4253, %v4254
        %v4564 = vmax.f32 %v4563, %v4255
        %v4565 = vmax.f32 %v4564, %v4256
        %4566 = vmax.xlane.f32.xlu0 %v4565
        %v4567 = vpop.xlane.xlu0 %4566
        %v4568 = vmax.f32 %v4257, %v4258
        %v4569 = vmax.f32 %v4568, %v4259
        %v4570 = vmax.f32 %v4569, %v4260
        %4571 = vmax.xlane.f32.xlu0 %v4570
        %v4572 = vpop.xlane.xlu0 %4571
        %v4573 = vmax.f32 %v4261, %v4262
        %v4574 = vmax.f32 %v4573, %v4263
        %v4575 = vmax.f32 %v4574, %v4264
        %4576 = vmax.xlane.f32.xlu0 %v4575
        %v4577 = vpop.xlane.xlu0 %4576
        %v4578 = vmax.f32 %v4265, %v4266
        %v4579 = vmax.f32 %v4578, %v4267
        %v4580 = vmax.f32 %v4579, %v4268
        %4581 = vmax.xlane.f32.xlu0 %v4580
        %v4582 = vpop.xlane.xlu0 %4581
        %v4583 = vmax.f32 %v4269, %v4270
        %v4584 = vmax.f32 %v4583, %v4271
        %v4585 = vmax.f32 %v4584, %v4272
        %4586 = vmax.xlane.f32.xlu0 %v4585
        %v4587 = vpop.xlane.xlu0 %4586
        %v4588 = vmax.f32 %v4273, %v4274
        %v4589 = vmax.f32 %v4588, %v4275
        %v4590 = vmax.f32 %v4589, %v4276
        %4591 = vmax.xlane.f32.xlu0 %v4590
        %v4592 = vpop.xlane.xlu0 %4591
        %v4593 = vmax.f32 %v4277, %v4278
        %v4594 = vmax.f32 %v4593, %v4279
        %v4595 = vmax.f32 %v4594, %v4280
        %4596 = vmax.xlane.f32.xlu0 %v4595
        %v4597 = vpop.xlane.xlu0 %4596
        %v4598 = vmax.f32 %v4281, %v4282
        %v4599 = vmax.f32 %v4598, %v4283
        %v4600 = vmax.f32 %v4599, %v4284
        %4601 = vmax.xlane.f32.xlu0 %v4600
        %v4602 = vpop.xlane.xlu0 %4601
        %v4603 = vmax.f32 %v4285, %v4286
        %v4604 = vmax.f32 %v4603, %v4287
        %v4605 = vmax.f32 %v4604, %v4288
        %4606 = vmax.xlane.f32.xlu0 %v4605
        %v4607 = vpop.xlane.xlu0 %4606
        %v4608 = vmax.f32 %v4289, %v4290
        %v4609 = vmax.f32 %v4608, %v4291
        %v4610 = vmax.f32 %v4609, %v4292
        %4611 = vmax.xlane.f32.xlu0 %v4610
        %v4612 = vpop.xlane.xlu0 %4611
        %vm4613 = vcmp.eq.f32.partialorder %v4037, %v4297
        %vm4614 = vcmp.eq.f32.partialorder %v4038, %v4297
        %vm4615 = vcmp.eq.f32.partialorder %v4039, %v4297
        %vm4616 = vcmp.eq.f32.partialorder %v4040, %v4297
        %vm4617 = vcmp.eq.f32.partialorder %v4041, %v4302
        %vm4618 = vcmp.eq.f32.partialorder %v4042, %v4302
        %vm4619 = vcmp.eq.f32.partialorder %v4043, %v4302
        %vm4620 = vcmp.eq.f32.partialorder %v4044, %v4302
        %vm4621 = vcmp.eq.f32.partialorder %v4045, %v4307
        %vm4622 = vcmp.eq.f32.partialorder %v4046, %v4307
        %vm4623 = vcmp.eq.f32.partialorder %v4047, %v4307
        %vm4624 = vcmp.eq.f32.partialorder %v4048, %v4307
        %vm4625 = vcmp.eq.f32.partialorder %v4049, %v4312
        %vm4626 = vcmp.eq.f32.partialorder %v4050, %v4312
        %vm4627 = vcmp.eq.f32.partialorder %v4051, %v4312
        %vm4628 = vcmp.eq.f32.partialorder %v4052, %v4312
        %vm4629 = vcmp.eq.f32.partialorder %v4053, %v4317
        %vm4630 = vcmp.eq.f32.partialorder %v4054, %v4317
        %vm4631 = vcmp.eq.f32.partialorder %v4055, %v4317
        %vm4632 = vcmp.eq.f32.partialorder %v4056, %v4317
        %vm4633 = vcmp.eq.f32.partialorder %v4057, %v4322
        %vm4634 = vcmp.eq.f32.partialorder %v4058, %v4322
        %vm4635 = vcmp.eq.f32.partialorder %v4059, %v4322
        %vm4636 = vcmp.eq.f32.partialorder %v4060, %v4322
        %vm4637 = vcmp.eq.f32.partialorder %v4061, %v4327
        %vm4638 = vcmp.eq.f32.partialorder %v4062, %v4327
        %vm4639 = vcmp.eq.f32.partialorder %v4063, %v4327
        %vm4640 = vcmp.eq.f32.partialorder %v4064, %v4327
        %vm4641 = vcmp.eq.f32.partialorder %v4065, %v4332
        %vm4642 = vcmp.eq.f32.partialorder %v4066, %v4332
        %vm4643 = vcmp.eq.f32.partialorder %v4067, %v4332
        %vm4644 = vcmp.eq.f32.partialorder %v4068, %v4332
        %vm4645 = vcmp.eq.f32.partialorder %v4069, %v4337
        %vm4646 = vcmp.eq.f32.partialorder %v4070, %v4337
        %vm4647 = vcmp.eq.f32.partialorder %v4071, %v4337
        %vm4648 = vcmp.eq.f32.partialorder %v4072, %v4337
        %vm4649 = vcmp.eq.f32.partialorder %v4073, %v4342
        %vm4650 = vcmp.eq.f32.partialorder %v4074, %v4342
        %vm4651 = vcmp.eq.f32.partialorder %v4075, %v4342
        %vm4652 = vcmp.eq.f32.partialorder %v4076, %v4342
        %vm4653 = vcmp.eq.f32.partialorder %v4077, %v4347
        %vm4654 = vcmp.eq.f32.partialorder %v4078, %v4347
        %vm4655 = vcmp.eq.f32.partialorder %v4079, %v4347
        %vm4656 = vcmp.eq.f32.partialorder %v4080, %v4347
        %vm4657 = vcmp.eq.f32.partialorder %v4081, %v4352
        %vm4658 = vcmp.eq.f32.partialorder %v4082, %v4352
        %vm4659 = vcmp.eq.f32.partialorder %v4083, %v4352
        %vm4660 = vcmp.eq.f32.partialorder %v4084, %v4352
        %vm4661 = vcmp.eq.f32.partialorder %v4085, %v4357
        %vm4662 = vcmp.eq.f32.partialorder %v4086, %v4357
        %vm4663 = vcmp.eq.f32.partialorder %v4087, %v4357
        %vm4664 = vcmp.eq.f32.partialorder %v4088, %v4357
        %vm4665 = vcmp.eq.f32.partialorder %v4089, %v4362
        %vm4666 = vcmp.eq.f32.partialorder %v4090, %v4362
        %vm4667 = vcmp.eq.f32.partialorder %v4091, %v4362
        %vm4668 = vcmp.eq.f32.partialorder %v4092, %v4362
        %vm4669 = vcmp.eq.f32.partialorder %v4093, %v4367
        %vm4670 = vcmp.eq.f32.partialorder %v4094, %v4367
        %vm4671 = vcmp.eq.f32.partialorder %v4095, %v4367
        %vm4672 = vcmp.eq.f32.partialorder %v4096, %v4367
        %vm4673 = vcmp.eq.f32.partialorder %v4097, %v4372
        %vm4674 = vcmp.eq.f32.partialorder %v4098, %v4372
        %vm4675 = vcmp.eq.f32.partialorder %v4099, %v4372
        %vm4676 = vcmp.eq.f32.partialorder %v4100, %v4372
        %vm4677 = vcmp.eq.f32.partialorder %v4101, %v4377
        %vm4678 = vcmp.eq.f32.partialorder %v4102, %v4377
        %vm4679 = vcmp.eq.f32.partialorder %v4103, %v4377
        %vm4680 = vcmp.eq.f32.partialorder %v4104, %v4377
        %vm4681 = vcmp.eq.f32.partialorder %v4105, %v4382
        %vm4682 = vcmp.eq.f32.partialorder %v4106, %v4382
        %vm4683 = vcmp.eq.f32.partialorder %v4107, %v4382
        %vm4684 = vcmp.eq.f32.partialorder %v4108, %v4382
        %vm4685 = vcmp.eq.f32.partialorder %v4109, %v4387
        %vm4686 = vcmp.eq.f32.partialorder %v4110, %v4387
        %vm4687 = vcmp.eq.f32.partialorder %v4111, %v4387
        %vm4688 = vcmp.eq.f32.partialorder %v4112, %v4387
        %vm4689 = vcmp.eq.f32.partialorder %v4113, %v4392
        %vm4690 = vcmp.eq.f32.partialorder %v4114, %v4392
        %vm4691 = vcmp.eq.f32.partialorder %v4115, %v4392
        %vm4692 = vcmp.eq.f32.partialorder %v4116, %v4392
        %vm4693 = vcmp.eq.f32.partialorder %v4117, %v4397
        %vm4694 = vcmp.eq.f32.partialorder %v4118, %v4397
        %vm4695 = vcmp.eq.f32.partialorder %v4119, %v4397
        %vm4696 = vcmp.eq.f32.partialorder %v4120, %v4397
        %vm4697 = vcmp.eq.f32.partialorder %v4121, %v4402
        %vm4698 = vcmp.eq.f32.partialorder %v4122, %v4402
        %vm4699 = vcmp.eq.f32.partialorder %v4123, %v4402
        %vm4700 = vcmp.eq.f32.partialorder %v4124, %v4402
        %vm4701 = vcmp.eq.f32.partialorder %v4125, %v4407
        %vm4702 = vcmp.eq.f32.partialorder %v4126, %v4407
        %vm4703 = vcmp.eq.f32.partialorder %v4127, %v4407
        %vm4704 = vcmp.eq.f32.partialorder %v4128, %v4407
        %vm4705 = vcmp.eq.f32.partialorder %v4129, %v4412
        %vm4706 = vcmp.eq.f32.partialorder %v4130, %v4412
        %vm4707 = vcmp.eq.f32.partialorder %v4131, %v4412
        %vm4708 = vcmp.eq.f32.partialorder %v4132, %v4412
        %vm4709 = vcmp.eq.f32.partialorder %v4133, %v4417
        %vm4710 = vcmp.eq.f32.partialorder %v4134, %v4417
        %vm4711 = vcmp.eq.f32.partialorder %v4135, %v4417
        %vm4712 = vcmp.eq.f32.partialorder %v4136, %v4417
        %vm4713 = vcmp.eq.f32.partialorder %v4137, %v4422
        %vm4714 = vcmp.eq.f32.partialorder %v4138, %v4422
        %vm4715 = vcmp.eq.f32.partialorder %v4139, %v4422
        %vm4716 = vcmp.eq.f32.partialorder %v4140, %v4422
        %vm4717 = vcmp.eq.f32.partialorder %v4141, %v4427
        %vm4718 = vcmp.eq.f32.partialorder %v4142, %v4427
        %vm4719 = vcmp.eq.f32.partialorder %v4143, %v4427
        %vm4720 = vcmp.eq.f32.partialorder %v4144, %v4427
        %vm4721 = vcmp.eq.f32.partialorder %v4145, %v4432
        %vm4722 = vcmp.eq.f32.partialorder %v4146, %v4432
        %vm4723 = vcmp.eq.f32.partialorder %v4147, %v4432
        %vm4724 = vcmp.eq.f32.partialorder %v4148, %v4432
        %vm4725 = vcmp.eq.f32.partialorder %v4149, %v4437
        %vm4726 = vcmp.eq.f32.partialorder %v4150, %v4437
        %vm4727 = vcmp.eq.f32.partialorder %v4151, %v4437
        %vm4728 = vcmp.eq.f32.partialorder %v4152, %v4437
        %vm4729 = vcmp.eq.f32.partialorder %v4153, %v4442
        %vm4730 = vcmp.eq.f32.partialorder %v4154, %v4442
        %vm4731 = vcmp.eq.f32.partialorder %v4155, %v4442
        %vm4732 = vcmp.eq.f32.partialorder %v4156, %v4442
        %vm4733 = vcmp.eq.f32.partialorder %v4157, %v4447
        %vm4734 = vcmp.eq.f32.partialorder %v4158, %v4447
        %vm4735 = vcmp.eq.f32.partialorder %v4159, %v4447
        %vm4736 = vcmp.eq.f32.partialorder %v4160, %v4447
        %vm4737 = vcmp.eq.f32.partialorder %v4161, %v4452
        %vm4738 = vcmp.eq.f32.partialorder %v4162, %v4452
        %vm4739 = vcmp.eq.f32.partialorder %v4163, %v4452
        %vm4740 = vcmp.eq.f32.partialorder %v4164, %v4452
        %vm4741 = vcmp.eq.f32.partialorder %v4165, %v4457
        %vm4742 = vcmp.eq.f32.partialorder %v4166, %v4457
        %vm4743 = vcmp.eq.f32.partialorder %v4167, %v4457
        %vm4744 = vcmp.eq.f32.partialorder %v4168, %v4457
        %vm4745 = vcmp.eq.f32.partialorder %v4169, %v4462
        %vm4746 = vcmp.eq.f32.partialorder %v4170, %v4462
        %vm4747 = vcmp.eq.f32.partialorder %v4171, %v4462
        %vm4748 = vcmp.eq.f32.partialorder %v4172, %v4462
        %vm4749 = vcmp.eq.f32.partialorder %v4173, %v4467
        %vm4750 = vcmp.eq.f32.partialorder %v4174, %v4467
        %vm4751 = vcmp.eq.f32.partialorder %v4175, %v4467
        %vm4752 = vcmp.eq.f32.partialorder %v4176, %v4467
        %vm4753 = vcmp.eq.f32.partialorder %v4177, %v4472
        %vm4754 = vcmp.eq.f32.partialorder %v4178, %v4472
        %vm4755 = vcmp.eq.f32.partialorder %v4179, %v4472
        %vm4756 = vcmp.eq.f32.partialorder %v4180, %v4472
        %vm4757 = vcmp.eq.f32.partialorder %v4181, %v4477
        %vm4758 = vcmp.eq.f32.partialorder %v4182, %v4477
        %vm4759 = vcmp.eq.f32.partialorder %v4183, %v4477
        %vm4760 = vcmp.eq.f32.partialorder %v4184, %v4477
        %vm4761 = vcmp.eq.f32.partialorder %v4185, %v4482
        %vm4762 = vcmp.eq.f32.partialorder %v4186, %v4482
        %vm4763 = vcmp.eq.f32.partialorder %v4187, %v4482
        %vm4764 = vcmp.eq.f32.partialorder %v4188, %v4482
        %vm4765 = vcmp.eq.f32.partialorder %v4189, %v4487
        %vm4766 = vcmp.eq.f32.partialorder %v4190, %v4487
        %vm4767 = vcmp.eq.f32.partialorder %v4191, %v4487
        %vm4768 = vcmp.eq.f32.partialorder %v4192, %v4487
        %vm4769 = vcmp.eq.f32.partialorder %v4193, %v4492
        %vm4770 = vcmp.eq.f32.partialorder %v4194, %v4492
        %vm4771 = vcmp.eq.f32.partialorder %v4195, %v4492
        %vm4772 = vcmp.eq.f32.partialorder %v4196, %v4492
        %vm4773 = vcmp.eq.f32.partialorder %v4197, %v4497
        %vm4774 = vcmp.eq.f32.partialorder %v4198, %v4497
        %vm4775 = vcmp.eq.f32.partialorder %v4199, %v4497
        %vm4776 = vcmp.eq.f32.partialorder %v4200, %v4497
        %vm4777 = vcmp.eq.f32.partialorder %v4201, %v4502
        %vm4778 = vcmp.eq.f32.partialorder %v4202, %v4502
        %vm4779 = vcmp.eq.f32.partialorder %v4203, %v4502
        %vm4780 = vcmp.eq.f32.partialorder %v4204, %v4502
        %vm4781 = vcmp.eq.f32.partialorder %v4205, %v4507
        %vm4782 = vcmp.eq.f32.partialorder %v4206, %v4507
        %vm4783 = vcmp.eq.f32.partialorder %v4207, %v4507
        %vm4784 = vcmp.eq.f32.partialorder %v4208, %v4507
        %vm4785 = vcmp.eq.f32.partialorder %v4209, %v4512
        %vm4786 = vcmp.eq.f32.partialorder %v4210, %v4512
        %vm4787 = vcmp.eq.f32.partialorder %v4211, %v4512
        %vm4788 = vcmp.eq.f32.partialorder %v4212, %v4512
        %vm4789 = vcmp.eq.f32.partialorder %v4213, %v4517
        %vm4790 = vcmp.eq.f32.partialorder %v4214, %v4517
        %vm4791 = vcmp.eq.f32.partialorder %v4215, %v4517
        %vm4792 = vcmp.eq.f32.partialorder %v4216, %v4517
        %vm4793 = vcmp.eq.f32.partialorder %v4217, %v4522
        %vm4794 = vcmp.eq.f32.partialorder %v4218, %v4522
        %vm4795 = vcmp.eq.f32.partialorder %v4219, %v4522
        %vm4796 = vcmp.eq.f32.partialorder %v4220, %v4522
        %vm4797 = vcmp.eq.f32.partialorder %v4221, %v4527
        %vm4798 = vcmp.eq.f32.partialorder %v4222, %v4527
        %vm4799 = vcmp.eq.f32.partialorder %v4223, %v4527
        %vm4800 = vcmp.eq.f32.partialorder %v4224, %v4527
        %vm4801 = vcmp.eq.f32.partialorder %v4225, %v4532
        %vm4802 = vcmp.eq.f32.partialorder %v4226, %v4532
        %vm4803 = vcmp.eq.f32.partialorder %v4227, %v4532
        %vm4804 = vcmp.eq.f32.partialorder %v4228, %v4532
        %vm4805 = vcmp.eq.f32.partialorder %v4229, %v4537
        %vm4806 = vcmp.eq.f32.partialorder %v4230, %v4537
        %vm4807 = vcmp.eq.f32.partialorder %v4231, %v4537
        %vm4808 = vcmp.eq.f32.partialorder %v4232, %v4537
        %vm4809 = vcmp.eq.f32.partialorder %v4233, %v4542
        %vm4810 = vcmp.eq.f32.partialorder %v4234, %v4542
        %vm4811 = vcmp.eq.f32.partialorder %v4235, %v4542
        %vm4812 = vcmp.eq.f32.partialorder %v4236, %v4542
        %vm4813 = vcmp.eq.f32.partialorder %v4237, %v4547
        %vm4814 = vcmp.eq.f32.partialorder %v4238, %v4547
        %vm4815 = vcmp.eq.f32.partialorder %v4239, %v4547
        %vm4816 = vcmp.eq.f32.partialorder %v4240, %v4547
        %vm4817 = vcmp.eq.f32.partialorder %v4241, %v4552
        %vm4818 = vcmp.eq.f32.partialorder %v4242, %v4552
        %vm4819 = vcmp.eq.f32.partialorder %v4243, %v4552
        %vm4820 = vcmp.eq.f32.partialorder %v4244, %v4552
        %vm4821 = vcmp.eq.f32.partialorder %v4245, %v4557
        %vm4822 = vcmp.eq.f32.partialorder %v4246, %v4557
        %vm4823 = vcmp.eq.f32.partialorder %v4247, %v4557
        %vm4824 = vcmp.eq.f32.partialorder %v4248, %v4557
        %vm4825 = vcmp.eq.f32.partialorder %v4249, %v4562
        %vm4826 = vcmp.eq.f32.partialorder %v4250, %v4562
        %vm4827 = vcmp.eq.f32.partialorder %v4251, %v4562
        %vm4828 = vcmp.eq.f32.partialorder %v4252, %v4562
        %vm4829 = vcmp.eq.f32.partialorder %v4253, %v4567
        %vm4830 = vcmp.eq.f32.partialorder %v4254, %v4567
        %vm4831 = vcmp.eq.f32.partialorder %v4255, %v4567
        %vm4832 = vcmp.eq.f32.partialorder %v4256, %v4567
        %vm4833 = vcmp.eq.f32.partialorder %v4257, %v4572
        %vm4834 = vcmp.eq.f32.partialorder %v4258, %v4572
        %vm4835 = vcmp.eq.f32.partialorder %v4259, %v4572
        %vm4836 = vcmp.eq.f32.partialorder %v4260, %v4572
        %vm4837 = vcmp.eq.f32.partialorder %v4261, %v4577
        %vm4838 = vcmp.eq.f32.partialorder %v4262, %v4577
        %vm4839 = vcmp.eq.f32.partialorder %v4263, %v4577
        %vm4840 = vcmp.eq.f32.partialorder %v4264, %v4577
        %vm4841 = vcmp.eq.f32.partialorder %v4265, %v4582
        %vm4842 = vcmp.eq.f32.partialorder %v4266, %v4582
        %vm4843 = vcmp.eq.f32.partialorder %v4267, %v4582
        %vm4844 = vcmp.eq.f32.partialorder %v4268, %v4582
        %vm4845 = vcmp.eq.f32.partialorder %v4269, %v4587
        %vm4846 = vcmp.eq.f32.partialorder %v4270, %v4587
        %vm4847 = vcmp.eq.f32.partialorder %v4271, %v4587
        %vm4848 = vcmp.eq.f32.partialorder %v4272, %v4587
        %vm4849 = vcmp.eq.f32.partialorder %v4273, %v4592
        %vm4850 = vcmp.eq.f32.partialorder %v4274, %v4592
        %vm4851 = vcmp.eq.f32.partialorder %v4275, %v4592
        %vm4852 = vcmp.eq.f32.partialorder %v4276, %v4592
        %vm4853 = vcmp.eq.f32.partialorder %v4277, %v4597
        %vm4854 = vcmp.eq.f32.partialorder %v4278, %v4597
        %vm4855 = vcmp.eq.f32.partialorder %v4279, %v4597
        %vm4856 = vcmp.eq.f32.partialorder %v4280, %v4597
        %vm4857 = vcmp.eq.f32.partialorder %v4281, %v4602
        %vm4858 = vcmp.eq.f32.partialorder %v4282, %v4602
        %vm4859 = vcmp.eq.f32.partialorder %v4283, %v4602
        %vm4860 = vcmp.eq.f32.partialorder %v4284, %v4602
        %vm4861 = vcmp.eq.f32.partialorder %v4285, %v4607
        %vm4862 = vcmp.eq.f32.partialorder %v4286, %v4607
        %vm4863 = vcmp.eq.f32.partialorder %v4287, %v4607
        %vm4864 = vcmp.eq.f32.partialorder %v4288, %v4607
        %vm4865 = vcmp.eq.f32.partialorder %v4289, %v4612
        %vm4866 = vcmp.eq.f32.partialorder %v4290, %v4612
        %vm4867 = vcmp.eq.f32.partialorder %v4291, %v4612
        %vm4868 = vcmp.eq.f32.partialorder %v4292, %v4612
        %v4869 = vsel %vm4613, %v3184, -inf
        %v4870 = vsel %vm4614, %v3186, -inf
        %v4871 = vsel %vm4615, %v3633, -inf
        %v4872 = vsel %vm4616, %v3635, -inf
        %v4873 = vsel %vm4617, %v3190, -inf
        %v4874 = vsel %vm4618, %v3192, -inf
        %v4875 = vsel %vm4619, %v3639, -inf
        %v4876 = vsel %vm4620, %v3641, -inf
        %v4877 = vsel %vm4621, %v3196, -inf
        %v4878 = vsel %vm4622, %v3198, -inf
        %v4879 = vsel %vm4623, %v3645, -inf
        %v4880 = vsel %vm4624, %v3647, -inf
        %v4881 = vsel %vm4625, %v3202, -inf
        %v4882 = vsel %vm4626, %v3204, -inf
        %v4883 = vsel %vm4627, %v3651, -inf
        %v4884 = vsel %vm4628, %v3653, -inf
        %v4885 = vsel %vm4629, %v3208, -inf
        %v4886 = vsel %vm4630, %v3210, -inf
        %v4887 = vsel %vm4631, %v3657, -inf
        %v4888 = vsel %vm4632, %v3659, -inf
        %v4889 = vsel %vm4633, %v3214, -inf
        %v4890 = vsel %vm4634, %v3216, -inf
        %v4891 = vsel %vm4635, %v3663, -inf
        %v4892 = vsel %vm4636, %v3665, -inf
        %v4893 = vsel %vm4637, %v3220, -inf
        %v4894 = vsel %vm4638, %v3222, -inf
        %v4895 = vsel %vm4639, %v3669, -inf
        %v4896 = vsel %vm4640, %v3671, -inf
        %v4897 = vsel %vm4641, %v3226, -inf
        %v4898 = vsel %vm4642, %v3228, -inf
        %v4899 = vsel %vm4643, %v3675, -inf
        %v4900 = vsel %vm4644, %v3677, -inf
        %v4901 = vsel %vm4645, %v3232, -inf
        %v4902 = vsel %vm4646, %v3234, -inf
        %v4903 = vsel %vm4647, %v3681, -inf
        %v4904 = vsel %vm4648, %v3683, -inf
        %v4905 = vsel %vm4649, %v3238, -inf
        %v4906 = vsel %vm4650, %v3240, -inf
        %v4907 = vsel %vm4651, %v3687, -inf
        %v4908 = vsel %vm4652, %v3689, -inf
        %v4909 = vsel %vm4653, %v3244, -inf
        %v4910 = vsel %vm4654, %v3246, -inf
        %v4911 = vsel %vm4655, %v3693, -inf
        %v4912 = vsel %vm4656, %v3695, -inf
        %v4913 = vsel %vm4657, %v3250, -inf
        %v4914 = vsel %vm4658, %v3252, -inf
        %v4915 = vsel %vm4659, %v3699, -inf
        %v4916 = vsel %vm4660, %v3701, -inf
        %v4917 = vsel %vm4661, %v3256, -inf
        %v4918 = vsel %vm4662, %v3258, -inf
        %v4919 = vsel %vm4663, %v3705, -inf
        %v4920 = vsel %vm4664, %v3707, -inf
        %v4921 = vsel %vm4665, %v3262, -inf
        %v4922 = vsel %vm4666, %v3264, -inf
        %v4923 = vsel %vm4667, %v3711, -inf
        %v4924 = vsel %vm4668, %v3713, -inf
        %v4925 = vsel %vm4669, %v3268, -inf
        %v4926 = vsel %vm4670, %v3270, -inf
        %v4927 = vsel %vm4671, %v3717, -inf
        %v4928 = vsel %vm4672, %v3719, -inf
        %v4929 = vsel %vm4673, %v3274, -inf
        %v4930 = vsel %vm4674, %v3276, -inf
        %v4931 = vsel %vm4675, %v3723, -inf
        %v4932 = vsel %vm4676, %v3725, -inf
        %v4933 = vsel %vm4677, %v3280, -inf
        %v4934 = vsel %vm4678, %v3282, -inf
        %v4935 = vsel %vm4679, %v3729, -inf
        %v4936 = vsel %vm4680, %v3731, -inf
        %v4937 = vsel %vm4681, %v3286, -inf
        %v4938 = vsel %vm4682, %v3288, -inf
        %v4939 = vsel %vm4683, %v3735, -inf
        %v4940 = vsel %vm4684, %v3737, -inf
        %v4941 = vsel %vm4685, %v3292, -inf
        %v4942 = vsel %vm4686, %v3294, -inf
        %v4943 = vsel %vm4687, %v3741, -inf
        %v4944 = vsel %vm4688, %v3743, -inf
        %v4945 = vsel %vm4689, %v3298, -inf
        %v4946 = vsel %vm4690, %v3300, -inf
        %v4947 = vsel %vm4691, %v3747, -inf
        %v4948 = vsel %vm4692, %v3749, -inf
        %v4949 = vsel %vm4693, %v3304, -inf
        %v4950 = vsel %vm4694, %v3306, -inf
        %v4951 = vsel %vm4695, %v3753, -inf
        %v4952 = vsel %vm4696, %v3755, -inf
        %v4953 = vsel %vm4697, %v3310, -inf
        %v4954 = vsel %vm4698, %v3312, -inf
        %v4955 = vsel %vm4699, %v3759, -inf
        %v4956 = vsel %vm4700, %v3761, -inf
        %v4957 = vsel %vm4701, %v3316, -inf
        %v4958 = vsel %vm4702, %v3318, -inf
        %v4959 = vsel %vm4703, %v3765, -inf
        %v4960 = vsel %vm4704, %v3767, -inf
        %v4961 = vsel %vm4705, %v3322, -inf
        %v4962 = vsel %vm4706, %v3324, -inf
        %v4963 = vsel %vm4707, %v3771, -inf
        %v4964 = vsel %vm4708, %v3773, -inf
        %v4965 = vsel %vm4709, %v3328, -inf
        %v4966 = vsel %vm4710, %v3330, -inf
        %v4967 = vsel %vm4711, %v3777, -inf
        %v4968 = vsel %vm4712, %v3779, -inf
        %v4969 = vsel %vm4713, %v3334, -inf
        %v4970 = vsel %vm4714, %v3336, -inf
        %v4971 = vsel %vm4715, %v3783, -inf
        %v4972 = vsel %vm4716, %v3785, -inf
        %v4973 = vsel %vm4717, %v3340, -inf
        %v4974 = vsel %vm4718, %v3342, -inf
        %v4975 = vsel %vm4719, %v3789, -inf
        %v4976 = vsel %vm4720, %v3791, -inf
        %v4977 = vsel %vm4721, %v3346, -inf
        %v4978 = vsel %vm4722, %v3348, -inf
        %v4979 = vsel %vm4723, %v3795, -inf
        %v4980 = vsel %vm4724, %v3797, -inf
        %v4981 = vsel %vm4725, %v3352, -inf
        %v4982 = vsel %vm4726, %v3354, -inf
        %v4983 = vsel %vm4727, %v3801, -inf
        %v4984 = vsel %vm4728, %v3803, -inf
        %v4985 = vsel %vm4729, %v3358, -inf
        %v4986 = vsel %vm4730, %v3360, -inf
        %v4987 = vsel %vm4731, %v3807, -inf
        %v4988 = vsel %vm4732, %v3809, -inf
        %v4989 = vsel %vm4733, %v3364, -inf
        %v4990 = vsel %vm4734, %v3366, -inf
        %v4991 = vsel %vm4735, %v3813, -inf
        %v4992 = vsel %vm4736, %v3815, -inf
        %v4993 = vsel %vm4737, %v3370, -inf
        %v4994 = vsel %vm4738, %v3372, -inf
        %v4995 = vsel %vm4739, %v3819, -inf
        %v4996 = vsel %vm4740, %v3821, -inf
        %v4997 = vsel %vm4741, %v3376, -inf
        %v4998 = vsel %vm4742, %v3378, -inf
        %v4999 = vsel %vm4743, %v3825, -inf
        %v5000 = vsel %vm4744, %v3827, -inf
        %v5001 = vsel %vm4745, %v3382, -inf
        %v5002 = vsel %vm4746, %v3384, -inf
        %v5003 = vsel %vm4747, %v3831, -inf
        %v5004 = vsel %vm4748, %v3833, -inf
        %v5005 = vsel %vm4749, %v3388, -inf
        %v5006 = vsel %vm4750, %v3390, -inf
        %v5007 = vsel %vm4751, %v3837, -inf
        %v5008 = vsel %vm4752, %v3839, -inf
        %v5009 = vsel %vm4753, %v3394, -inf
        %v5010 = vsel %vm4754, %v3396, -inf
        %v5011 = vsel %vm4755, %v3843, -inf
        %v5012 = vsel %vm4756, %v3845, -inf
        %v5013 = vsel %vm4757, %v3400, -inf
        %v5014 = vsel %vm4758, %v3402, -inf
        %v5015 = vsel %vm4759, %v3849, -inf
        %v5016 = vsel %vm4760, %v3851, -inf
        %v5017 = vsel %vm4761, %v3406, -inf
        %v5018 = vsel %vm4762, %v3408, -inf
        %v5019 = vsel %vm4763, %v3855, -inf
        %v5020 = vsel %vm4764, %v3857, -inf
        %v5021 = vsel %vm4765, %v3412, -inf
        %v5022 = vsel %vm4766, %v3414, -inf
        %v5023 = vsel %vm4767, %v3861, -inf
        %v5024 = vsel %vm4768, %v3863, -inf
        %v5025 = vsel %vm4769, %v3418, -inf
        %v5026 = vsel %vm4770, %v3420, -inf
        %v5027 = vsel %vm4771, %v3867, -inf
        %v5028 = vsel %vm4772, %v3869, -inf
        %v5029 = vsel %vm4773, %v3424, -inf
        %v5030 = vsel %vm4774, %v3426, -inf
        %v5031 = vsel %vm4775, %v3873, -inf
        %v5032 = vsel %vm4776, %v3875, -inf
        %v5033 = vsel %vm4777, %v3430, -inf
        %v5034 = vsel %vm4778, %v3432, -inf
        %v5035 = vsel %vm4779, %v3879, -inf
        %v5036 = vsel %vm4780, %v3881, -inf
        %v5037 = vsel %vm4781, %v3436, -inf
        %v5038 = vsel %vm4782, %v3438, -inf
        %v5039 = vsel %vm4783, %v3885, -inf
        %v5040 = vsel %vm4784, %v3887, -inf
        %v5041 = vsel %vm4785, %v3442, -inf
        %v5042 = vsel %vm4786, %v3444, -inf
        %v5043 = vsel %vm4787, %v3891, -inf
        %v5044 = vsel %vm4788, %v3893, -inf
        %v5045 = vsel %vm4789, %v3448, -inf
        %v5046 = vsel %vm4790, %v3450, -inf
        %v5047 = vsel %vm4791, %v3897, -inf
        %v5048 = vsel %vm4792, %v3899, -inf
        %v5049 = vsel %vm4793, %v3454, -inf
        %v5050 = vsel %vm4794, %v3456, -inf
        %v5051 = vsel %vm4795, %v3903, -inf
        %v5052 = vsel %vm4796, %v3905, -inf
        %v5053 = vsel %vm4797, %v3460, -inf
        %v5054 = vsel %vm4798, %v3462, -inf
        %v5055 = vsel %vm4799, %v3909, -inf
        %v5056 = vsel %vm4800, %v3911, -inf
        %v5057 = vsel %vm4801, %v3466, -inf
        %v5058 = vsel %vm4802, %v3468, -inf
        %v5059 = vsel %vm4803, %v3915, -inf
        %v5060 = vsel %vm4804, %v3917, -inf
        %v5061 = vsel %vm4805, %v3472, -inf
        %v5062 = vsel %vm4806, %v3474, -inf
        %v5063 = vsel %vm4807, %v3921, -inf
        %v5064 = vsel %vm4808, %v3923, -inf
        %v5065 = vsel %vm4809, %v3478, -inf
        %v5066 = vsel %vm4810, %v3480, -inf
        %v5067 = vsel %vm4811, %v3927, -inf
        %v5068 = vsel %vm4812, %v3929, -inf
        %v5069 = vsel %vm4813, %v3484, -inf
        %v5070 = vsel %vm4814, %v3486, -inf
        %v5071 = vsel %vm4815, %v3933, -inf
        %v5072 = vsel %vm4816, %v3935, -inf
        %v5073 = vsel %vm4817, %v3490, -inf
        %v5074 = vsel %vm4818, %v3492, -inf
        %v5075 = vsel %vm4819, %v3939, -inf
        %v5076 = vsel %vm4820, %v3941, -inf
        %v5077 = vsel %vm4821, %v3496, -inf
        %v5078 = vsel %vm4822, %v3498, -inf
        %v5079 = vsel %vm4823, %v3945, -inf
        %v5080 = vsel %vm4824, %v3947, -inf
        %v5081 = vsel %vm4825, %v3502, -inf
        %v5082 = vsel %vm4826, %v3504, -inf
        %v5083 = vsel %vm4827, %v3951, -inf
        %v5084 = vsel %vm4828, %v3953, -inf
        %v5085 = vsel %vm4829, %v3508, -inf
        %v5086 = vsel %vm4830, %v3510, -inf
        %v5087 = vsel %vm4831, %v3957, -inf
        %v5088 = vsel %vm4832, %v3959, -inf
        %v5089 = vsel %vm4833, %v3514, -inf
        %v5090 = vsel %vm4834, %v3516, -inf
        %v5091 = vsel %vm4835, %v3963, -inf
        %v5092 = vsel %vm4836, %v3965, -inf
        %v5093 = vsel %vm4837, %v3520, -inf
        %v5094 = vsel %vm4838, %v3522, -inf
        %v5095 = vsel %vm4839, %v3969, -inf
        %v5096 = vsel %vm4840, %v3971, -inf
        %v5097 = vsel %vm4841, %v3526, -inf
        %v5098 = vsel %vm4842, %v3528, -inf
        %v5099 = vsel %vm4843, %v3975, -inf
        %v5100 = vsel %vm4844, %v3977, -inf
        %v5101 = vsel %vm4845, %v3532, -inf
        %v5102 = vsel %vm4846, %v3534, -inf
        %v5103 = vsel %vm4847, %v3981, -inf
        %v5104 = vsel %vm4848, %v3983, -inf
        %v5105 = vsel %vm4849, %v3538, -inf
        %v5106 = vsel %vm4850, %v3540, -inf
        %v5107 = vsel %vm4851, %v3987, -inf
        %v5108 = vsel %vm4852, %v3989, -inf
        %v5109 = vsel %vm4853, %v3544, -inf
        %v5110 = vsel %vm4854, %v3546, -inf
        %v5111 = vsel %vm4855, %v3993, -inf
        %v5112 = vsel %vm4856, %v3995, -inf
        %v5113 = vsel %vm4857, %v3550, -inf
        %v5114 = vsel %vm4858, %v3552, -inf
        %v5115 = vsel %vm4859, %v3999, -inf
        %v5116 = vsel %vm4860, %v4001, -inf
        %v5117 = vsel %vm4861, %v3556, -inf
        %v5118 = vsel %vm4862, %v3558, -inf
        %v5119 = vsel %vm4863, %v4005, -inf
        %v5120 = vsel %vm4864, %v4007, -inf
        %v5121 = vsel %vm4865, %v3562, -inf
        %v5122 = vsel %vm4866, %v3564, -inf
        %v5123 = vsel %vm4867, %v4011, -inf
        %v5124 = vsel %vm4868, %v4013, -inf
        %v5125 = vmax.f32 %v4869, %v4870
        %v5126 = vmax.f32 %v5125, %v4871
        %v5127 = vmax.f32 %v5126, %v4872
        %5128 = vmax.xlane.f32.xlu0 %v5127
        %v5129 = vpop.xlane.xlu0 %5128
        %v5130 = vmax.f32 %v4873, %v4874
        %v5131 = vmax.f32 %v5130, %v4875
        %v5132 = vmax.f32 %v5131, %v4876
        %5133 = vmax.xlane.f32.xlu0 %v5132
        %v5134 = vpop.xlane.xlu0 %5133
        %v5135 = vmax.f32 %v4877, %v4878
        %v5136 = vmax.f32 %v5135, %v4879
        %v5137 = vmax.f32 %v5136, %v4880
        %5138 = vmax.xlane.f32.xlu0 %v5137
        %v5139 = vpop.xlane.xlu0 %5138
        %v5140 = vmax.f32 %v4881, %v4882
        %v5141 = vmax.f32 %v5140, %v4883
        %v5142 = vmax.f32 %v5141, %v4884
        %5143 = vmax.xlane.f32.xlu0 %v5142
        %v5144 = vpop.xlane.xlu0 %5143
        %v5145 = vmax.f32 %v4885, %v4886
        %v5146 = vmax.f32 %v5145, %v4887
        %v5147 = vmax.f32 %v5146, %v4888
        %5148 = vmax.xlane.f32.xlu0 %v5147
        %v5149 = vpop.xlane.xlu0 %5148
        %v5150 = vmax.f32 %v4889, %v4890
        %v5151 = vmax.f32 %v5150, %v4891
        %v5152 = vmax.f32 %v5151, %v4892
        %5153 = vmax.xlane.f32.xlu0 %v5152
        %v5154 = vpop.xlane.xlu0 %5153
        %v5155 = vmax.f32 %v4893, %v4894
        %v5156 = vmax.f32 %v5155, %v4895
        %v5157 = vmax.f32 %v5156, %v4896
        %5158 = vmax.xlane.f32.xlu0 %v5157
        %v5159 = vpop.xlane.xlu0 %5158
        %v5160 = vmax.f32 %v4897, %v4898
        %v5161 = vmax.f32 %v5160, %v4899
        %v5162 = vmax.f32 %v5161, %v4900
        %5163 = vmax.xlane.f32.xlu0 %v5162
        %v5164 = vpop.xlane.xlu0 %5163
        %v5165 = vmax.f32 %v4901, %v4902
        %v5166 = vmax.f32 %v5165, %v4903
        %v5167 = vmax.f32 %v5166, %v4904
        %5168 = vmax.xlane.f32.xlu0 %v5167
        %v5169 = vpop.xlane.xlu0 %5168
        %v5170 = vmax.f32 %v4905, %v4906
        %v5171 = vmax.f32 %v5170, %v4907
        %v5172 = vmax.f32 %v5171, %v4908
        %5173 = vmax.xlane.f32.xlu0 %v5172
        %v5174 = vpop.xlane.xlu0 %5173
        %v5175 = vmax.f32 %v4909, %v4910
        %v5176 = vmax.f32 %v5175, %v4911
        %v5177 = vmax.f32 %v5176, %v4912
        %5178 = vmax.xlane.f32.xlu0 %v5177
        %v5179 = vpop.xlane.xlu0 %5178
        %v5180 = vmax.f32 %v4913, %v4914
        %v5181 = vmax.f32 %v5180, %v4915
        %v5182 = vmax.f32 %v5181, %v4916
        %5183 = vmax.xlane.f32.xlu0 %v5182
        %v5184 = vpop.xlane.xlu0 %5183
        %v5185 = vmax.f32 %v4917, %v4918
        %v5186 = vmax.f32 %v5185, %v4919
        %v5187 = vmax.f32 %v5186, %v4920
        %5188 = vmax.xlane.f32.xlu0 %v5187
        %v5189 = vpop.xlane.xlu0 %5188
        %v5190 = vmax.f32 %v4921, %v4922
        %v5191 = vmax.f32 %v5190, %v4923
        %v5192 = vmax.f32 %v5191, %v4924
        %5193 = vmax.xlane.f32.xlu0 %v5192
        %v5194 = vpop.xlane.xlu0 %5193
        %v5195 = vmax.f32 %v4925, %v4926
        %v5196 = vmax.f32 %v5195, %v4927
        %v5197 = vmax.f32 %v5196, %v4928
        %5198 = vmax.xlane.f32.xlu0 %v5197
        %v5199 = vpop.xlane.xlu0 %5198
        %v5200 = vmax.f32 %v4929, %v4930
        %v5201 = vmax.f32 %v5200, %v4931
        %v5202 = vmax.f32 %v5201, %v4932
        %5203 = vmax.xlane.f32.xlu0 %v5202
        %v5204 = vpop.xlane.xlu0 %5203
        %v5205 = vmax.f32 %v4933, %v4934
        %v5206 = vmax.f32 %v5205, %v4935
        %v5207 = vmax.f32 %v5206, %v4936
        %5208 = vmax.xlane.f32.xlu0 %v5207
        %v5209 = vpop.xlane.xlu0 %5208
        %v5210 = vmax.f32 %v4937, %v4938
        %v5211 = vmax.f32 %v5210, %v4939
        %v5212 = vmax.f32 %v5211, %v4940
        %5213 = vmax.xlane.f32.xlu0 %v5212
        %v5214 = vpop.xlane.xlu0 %5213
        %v5215 = vmax.f32 %v4941, %v4942
        %v5216 = vmax.f32 %v5215, %v4943
        %v5217 = vmax.f32 %v5216, %v4944
        %5218 = vmax.xlane.f32.xlu0 %v5217
        %v5219 = vpop.xlane.xlu0 %5218
        %v5220 = vmax.f32 %v4945, %v4946
        %v5221 = vmax.f32 %v5220, %v4947
        %v5222 = vmax.f32 %v5221, %v4948
        %5223 = vmax.xlane.f32.xlu0 %v5222
        %v5224 = vpop.xlane.xlu0 %5223
        %v5225 = vmax.f32 %v4949, %v4950
        %v5226 = vmax.f32 %v5225, %v4951
        %v5227 = vmax.f32 %v5226, %v4952
        %5228 = vmax.xlane.f32.xlu0 %v5227
        %v5229 = vpop.xlane.xlu0 %5228
        %v5230 = vmax.f32 %v4953, %v4954
        %v5231 = vmax.f32 %v5230, %v4955
        %v5232 = vmax.f32 %v5231, %v4956
        %5233 = vmax.xlane.f32.xlu0 %v5232
        %v5234 = vpop.xlane.xlu0 %5233
        %v5235 = vmax.f32 %v4957, %v4958
        %v5236 = vmax.f32 %v5235, %v4959
        %v5237 = vmax.f32 %v5236, %v4960
        %5238 = vmax.xlane.f32.xlu0 %v5237
        %v5239 = vpop.xlane.xlu0 %5238
        %v5240 = vmax.f32 %v4961, %v4962
        %v5241 = vmax.f32 %v5240, %v4963
        %v5242 = vmax.f32 %v5241, %v4964
        %5243 = vmax.xlane.f32.xlu0 %v5242
        %v5244 = vpop.xlane.xlu0 %5243
        %v5245 = vmax.f32 %v4965, %v4966
        %v5246 = vmax.f32 %v5245, %v4967
        %v5247 = vmax.f32 %v5246, %v4968
        %5248 = vmax.xlane.f32.xlu0 %v5247
        %v5249 = vpop.xlane.xlu0 %5248
        %v5250 = vmax.f32 %v4969, %v4970
        %v5251 = vmax.f32 %v5250, %v4971
        %v5252 = vmax.f32 %v5251, %v4972
        %5253 = vmax.xlane.f32.xlu0 %v5252
        %v5254 = vpop.xlane.xlu0 %5253
        %v5255 = vmax.f32 %v4973, %v4974
        %v5256 = vmax.f32 %v5255, %v4975
        %v5257 = vmax.f32 %v5256, %v4976
        %5258 = vmax.xlane.f32.xlu0 %v5257
        %v5259 = vpop.xlane.xlu0 %5258
        %v5260 = vmax.f32 %v4977, %v4978
        %v5261 = vmax.f32 %v5260, %v4979
        %v5262 = vmax.f32 %v5261, %v4980
        %5263 = vmax.xlane.f32.xlu0 %v5262
        %v5264 = vpop.xlane.xlu0 %5263
        %v5265 = vmax.f32 %v4981, %v4982
        %v5266 = vmax.f32 %v5265, %v4983
        %v5267 = vmax.f32 %v5266, %v4984
        %5268 = vmax.xlane.f32.xlu0 %v5267
        %v5269 = vpop.xlane.xlu0 %5268
        %v5270 = vmax.f32 %v4985, %v4986
        %v5271 = vmax.f32 %v5270, %v4987
        %v5272 = vmax.f32 %v5271, %v4988
        %5273 = vmax.xlane.f32.xlu0 %v5272
        %v5274 = vpop.xlane.xlu0 %5273
        %v5275 = vmax.f32 %v4989, %v4990
        %v5276 = vmax.f32 %v5275, %v4991
        %v5277 = vmax.f32 %v5276, %v4992
        %5278 = vmax.xlane.f32.xlu0 %v5277
        %v5279 = vpop.xlane.xlu0 %5278
        %v5280 = vmax.f32 %v4993, %v4994
        %v5281 = vmax.f32 %v5280, %v4995
        %v5282 = vmax.f32 %v5281, %v4996
        %5283 = vmax.xlane.f32.xlu0 %v5282
        %v5284 = vpop.xlane.xlu0 %5283
        %v5285 = vmax.f32 %v4997, %v4998
        %v5286 = vmax.f32 %v5285, %v4999
        %v5287 = vmax.f32 %v5286, %v5000
        %5288 = vmax.xlane.f32.xlu0 %v5287
        %v5289 = vpop.xlane.xlu0 %5288
        %v5290 = vmax.f32 %v5001, %v5002
        %v5291 = vmax.f32 %v5290, %v5003
        %v5292 = vmax.f32 %v5291, %v5004
        %5293 = vmax.xlane.f32.xlu0 %v5292
        %v5294 = vpop.xlane.xlu0 %5293
        %v5295 = vmax.f32 %v5005, %v5006
        %v5296 = vmax.f32 %v5295, %v5007
        %v5297 = vmax.f32 %v5296, %v5008
        %5298 = vmax.xlane.f32.xlu0 %v5297
        %v5299 = vpop.xlane.xlu0 %5298
        %v5300 = vmax.f32 %v5009, %v5010
        %v5301 = vmax.f32 %v5300, %v5011
        %v5302 = vmax.f32 %v5301, %v5012
        %5303 = vmax.xlane.f32.xlu0 %v5302
        %v5304 = vpop.xlane.xlu0 %5303
        %v5305 = vmax.f32 %v5013, %v5014
        %v5306 = vmax.f32 %v5305, %v5015
        %v5307 = vmax.f32 %v5306, %v5016
        %5308 = vmax.xlane.f32.xlu0 %v5307
        %v5309 = vpop.xlane.xlu0 %5308
        %v5310 = vmax.f32 %v5017, %v5018
        %v5311 = vmax.f32 %v5310, %v5019
        %v5312 = vmax.f32 %v5311, %v5020
        %5313 = vmax.xlane.f32.xlu0 %v5312
        %v5314 = vpop.xlane.xlu0 %5313
        %v5315 = vmax.f32 %v5021, %v5022
        %v5316 = vmax.f32 %v5315, %v5023
        %v5317 = vmax.f32 %v5316, %v5024
        %5318 = vmax.xlane.f32.xlu0 %v5317
        %v5319 = vpop.xlane.xlu0 %5318
        %v5320 = vmax.f32 %v5025, %v5026
        %v5321 = vmax.f32 %v5320, %v5027
        %v5322 = vmax.f32 %v5321, %v5028
        %5323 = vmax.xlane.f32.xlu0 %v5322
        %v5324 = vpop.xlane.xlu0 %5323
        %v5325 = vmax.f32 %v5029, %v5030
        %v5326 = vmax.f32 %v5325, %v5031
        %v5327 = vmax.f32 %v5326, %v5032
        %5328 = vmax.xlane.f32.xlu0 %v5327
        %v5329 = vpop.xlane.xlu0 %5328
        %v5330 = vmax.f32 %v5033, %v5034
        %v5331 = vmax.f32 %v5330, %v5035
        %v5332 = vmax.f32 %v5331, %v5036
        %5333 = vmax.xlane.f32.xlu0 %v5332
        %v5334 = vpop.xlane.xlu0 %5333
        %v5335 = vmax.f32 %v5037, %v5038
        %v5336 = vmax.f32 %v5335, %v5039
        %v5337 = vmax.f32 %v5336, %v5040
        %5338 = vmax.xlane.f32.xlu0 %v5337
        %v5339 = vpop.xlane.xlu0 %5338
        %v5340 = vmax.f32 %v5041, %v5042
        %v5341 = vmax.f32 %v5340, %v5043
        %v5342 = vmax.f32 %v5341, %v5044
        %5343 = vmax.xlane.f32.xlu0 %v5342
        %v5344 = vpop.xlane.xlu0 %5343
        %v5345 = vmax.f32 %v5045, %v5046
        %v5346 = vmax.f32 %v5345, %v5047
        %v5347 = vmax.f32 %v5346, %v5048
        %5348 = vmax.xlane.f32.xlu0 %v5347
        %v5349 = vpop.xlane.xlu0 %5348
        %v5350 = vmax.f32 %v5049, %v5050
        %v5351 = vmax.f32 %v5350, %v5051
        %v5352 = vmax.f32 %v5351, %v5052
        %5353 = vmax.xlane.f32.xlu0 %v5352
        %v5354 = vpop.xlane.xlu0 %5353
        %v5355 = vmax.f32 %v5053, %v5054
        %v5356 = vmax.f32 %v5355, %v5055
        %v5357 = vmax.f32 %v5356, %v5056
        %5358 = vmax.xlane.f32.xlu0 %v5357
        %v5359 = vpop.xlane.xlu0 %5358
        %v5360 = vmax.f32 %v5057, %v5058
        %v5361 = vmax.f32 %v5360, %v5059
        %v5362 = vmax.f32 %v5361, %v5060
        %5363 = vmax.xlane.f32.xlu0 %v5362
        %v5364 = vpop.xlane.xlu0 %5363
        %v5365 = vmax.f32 %v5061, %v5062
        %v5366 = vmax.f32 %v5365, %v5063
        %v5367 = vmax.f32 %v5366, %v5064
        %5368 = vmax.xlane.f32.xlu0 %v5367
        %v5369 = vpop.xlane.xlu0 %5368
        %v5370 = vmax.f32 %v5065, %v5066
        %v5371 = vmax.f32 %v5370, %v5067
        %v5372 = vmax.f32 %v5371, %v5068
        %5373 = vmax.xlane.f32.xlu0 %v5372
        %v5374 = vpop.xlane.xlu0 %5373
        %v5375 = vmax.f32 %v5069, %v5070
        %v5376 = vmax.f32 %v5375, %v5071
        %v5377 = vmax.f32 %v5376, %v5072
        %5378 = vmax.xlane.f32.xlu0 %v5377
        %v5379 = vpop.xlane.xlu0 %5378
        %v5380 = vmax.f32 %v5073, %v5074
        %v5381 = vmax.f32 %v5380, %v5075
        %v5382 = vmax.f32 %v5381, %v5076
        %5383 = vmax.xlane.f32.xlu0 %v5382
        %v5384 = vpop.xlane.xlu0 %5383
        %v5385 = vmax.f32 %v5077, %v5078
        %v5386 = vmax.f32 %v5385, %v5079
        %v5387 = vmax.f32 %v5386, %v5080
        %5388 = vmax.xlane.f32.xlu0 %v5387
        %v5389 = vpop.xlane.xlu0 %5388
        %v5390 = vmax.f32 %v5081, %v5082
        %v5391 = vmax.f32 %v5390, %v5083
        %v5392 = vmax.f32 %v5391, %v5084
        %5393 = vmax.xlane.f32.xlu0 %v5392
        %v5394 = vpop.xlane.xlu0 %5393
        %v5395 = vmax.f32 %v5085, %v5086
        %v5396 = vmax.f32 %v5395, %v5087
        %v5397 = vmax.f32 %v5396, %v5088
        %5398 = vmax.xlane.f32.xlu0 %v5397
        %v5399 = vpop.xlane.xlu0 %5398
        %v5400 = vmax.f32 %v5089, %v5090
        %v5401 = vmax.f32 %v5400, %v5091
        %v5402 = vmax.f32 %v5401, %v5092
        %5403 = vmax.xlane.f32.xlu0 %v5402
        %v5404 = vpop.xlane.xlu0 %5403
        %v5405 = vmax.f32 %v5093, %v5094
        %v5406 = vmax.f32 %v5405, %v5095
        %v5407 = vmax.f32 %v5406, %v5096
        %5408 = vmax.xlane.f32.xlu0 %v5407
        %v5409 = vpop.xlane.xlu0 %5408
        %v5410 = vmax.f32 %v5097, %v5098
        %v5411 = vmax.f32 %v5410, %v5099
        %v5412 = vmax.f32 %v5411, %v5100
        %5413 = vmax.xlane.f32.xlu0 %v5412
        %v5414 = vpop.xlane.xlu0 %5413
        %v5415 = vmax.f32 %v5101, %v5102
        %v5416 = vmax.f32 %v5415, %v5103
        %v5417 = vmax.f32 %v5416, %v5104
        %5418 = vmax.xlane.f32.xlu0 %v5417
        %v5419 = vpop.xlane.xlu0 %5418
        %v5420 = vmax.f32 %v5105, %v5106
        %v5421 = vmax.f32 %v5420, %v5107
        %v5422 = vmax.f32 %v5421, %v5108
        %5423 = vmax.xlane.f32.xlu0 %v5422
        %v5424 = vpop.xlane.xlu0 %5423
        %v5425 = vmax.f32 %v5109, %v5110
        %v5426 = vmax.f32 %v5425, %v5111
        %v5427 = vmax.f32 %v5426, %v5112
        %5428 = vmax.xlane.f32.xlu0 %v5427
        %v5429 = vpop.xlane.xlu0 %5428
        %v5430 = vmax.f32 %v5113, %v5114
        %v5431 = vmax.f32 %v5430, %v5115
        %v5432 = vmax.f32 %v5431, %v5116
        %5433 = vmax.xlane.f32.xlu0 %v5432
        %v5434 = vpop.xlane.xlu0 %5433
        %v5435 = vmax.f32 %v5117, %v5118
        %v5436 = vmax.f32 %v5435, %v5119
        %v5437 = vmax.f32 %v5436, %v5120
        %5438 = vmax.xlane.f32.xlu0 %v5437
        %v5439 = vpop.xlane.xlu0 %5438
        %v5440 = vmax.f32 %v5121, %v5122
        %v5441 = vmax.f32 %v5440, %v5123
        %v5442 = vmax.f32 %v5441, %v5124
        %5443 = vmax.xlane.f32.xlu0 %v5442
        %v5444 = vpop.xlane.xlu0 %5443
        %v5445 = vld [vmem:[#allocation2] sm:$0xff]
        %v5446 = vld [vmem:[#allocation2 + $0x8] sm:$0xff]
        %v5447 = vld [vmem:[#allocation2 + $0x10] sm:$0xff]
        %v5448 = vld [vmem:[#allocation2 + $0x18] sm:$0xff]
        %v5449 = vld [vmem:[#allocation2 + $0x20] sm:$0xff]
        %v5450 = vld [vmem:[#allocation2 + $0x28] sm:$0xff]
        %v5451 = vld [vmem:[#allocation2 + $0x30] sm:$0xff]
        %v5452 = vld [vmem:[#allocation2 + $0x38] sm:$0xff]
        %v5453 = vld [vmem:[#allocation2 + $0x40] sm:$0xff]
        %v5454 = vld [vmem:[#allocation2 + $0x48] sm:$0xff]
        %v5455 = vld [vmem:[#allocation2 + $0x50] sm:$0xff]
        %v5456 = vld [vmem:[#allocation2 + $0x58] sm:$0xff]
        %v5457 = vld [vmem:[#allocation2 + $0x60] sm:$0xff]
        %v5458 = vld [vmem:[#allocation2 + $0x68] sm:$0xff]
        %v5459 = vld [vmem:[#allocation2 + $0x70] sm:$0xff]
        %v5460 = vld [vmem:[#allocation2 + $0x78] sm:$0xff]
        %v5461 = vld [vmem:[#allocation2 + $0x80] sm:$0xff]
        %v5462 = vld [vmem:[#allocation2 + $0x88] sm:$0xff]
        %v5463 = vld [vmem:[#allocation2 + $0x90] sm:$0xff]
        %v5464 = vld [vmem:[#allocation2 + $0x98] sm:$0xff]
        %v5465 = vld [vmem:[#allocation2 + $0xa0] sm:$0xff]
        %v5466 = vld [vmem:[#allocation2 + $0xa8] sm:$0xff]
        %v5467 = vld [vmem:[#allocation2 + $0xb0] sm:$0xff]
        %v5468 = vld [vmem:[#allocation2 + $0xb8] sm:$0xff]
        %v5469 = vld [vmem:[#allocation2 + $0xc0] sm:$0xff]
        %v5470 = vld [vmem:[#allocation2 + $0xc8] sm:$0xff]
        %v5471 = vld [vmem:[#allocation2 + $0xd0] sm:$0xff]
        %v5472 = vld [vmem:[#allocation2 + $0xd8] sm:$0xff]
        %v5473 = vld [vmem:[#allocation2 + $0xe0] sm:$0xff]
        %v5474 = vld [vmem:[#allocation2 + $0xe8] sm:$0xff]
        %v5475 = vld [vmem:[#allocation2 + $0xf0] sm:$0xff]
        %v5476 = vld [vmem:[#allocation2 + $0xf8] sm:$0xff]
        %v5477 = vld [vmem:[#allocation2 + $0x100] sm:$0xff]
        %v5478 = vld [vmem:[#allocation2 + $0x108] sm:$0xff]
        %v5479 = vld [vmem:[#allocation2 + $0x110] sm:$0xff]
        %v5480 = vld [vmem:[#allocation2 + $0x118] sm:$0xff]
        %v5481 = vld [vmem:[#allocation2 + $0x120] sm:$0xff]
        %v5482 = vld [vmem:[#allocation2 + $0x128] sm:$0xff]
        %v5483 = vld [vmem:[#allocation2 + $0x130] sm:$0xff]
        %v5484 = vld [vmem:[#allocation2 + $0x138] sm:$0xff]
        %v5485 = vld [vmem:[#allocation2 + $0x140] sm:$0xff]
        %v5486 = vld [vmem:[#allocation2 + $0x148] sm:$0xff]
        %v5487 = vld [vmem:[#allocation2 + $0x150] sm:$0xff]
        %v5488 = vld [vmem:[#allocation2 + $0x158] sm:$0xff]
        %v5489 = vld [vmem:[#allocation2 + $0x160] sm:$0xff]
        %v5490 = vld [vmem:[#allocation2 + $0x168] sm:$0xff]
        %v5491 = vld [vmem:[#allocation2 + $0x170] sm:$0xff]
        %v5492 = vld [vmem:[#allocation2 + $0x178] sm:$0xff]
        %v5493 = vld [vmem:[#allocation2 + $0x180] sm:$0xff]
        %v5494 = vld [vmem:[#allocation2 + $0x188] sm:$0xff]
        %v5495 = vld [vmem:[#allocation2 + $0x190] sm:$0xff]
        %v5496 = vld [vmem:[#allocation2 + $0x198] sm:$0xff]
        %v5497 = vld [vmem:[#allocation2 + $0x1a0] sm:$0xff]
        %v5498 = vld [vmem:[#allocation2 + $0x1a8] sm:$0xff]
        %v5499 = vld [vmem:[#allocation2 + $0x1b0] sm:$0xff]
        %v5500 = vld [vmem:[#allocation2 + $0x1b8] sm:$0xff]
        %v5501 = vld [vmem:[#allocation2 + $0x1c0] sm:$0xff]
        %v5502 = vld [vmem:[#allocation2 + $0x1c8] sm:$0xff]
        %v5503 = vld [vmem:[#allocation2 + $0x1d0] sm:$0xff]
        %v5504 = vld [vmem:[#allocation2 + $0x1d8] sm:$0xff]
        %v5505 = vld [vmem:[#allocation2 + $0x1e0] sm:$0xff]
        %v5506 = vld [vmem:[#allocation2 + $0x1e8] sm:$0xff]
        %v5507 = vld [vmem:[#allocation2 + $0x1f0] sm:$0xff]
        %v5508 = vld [vmem:[#allocation2 + $0x1f8] sm:$0xff]
        %vm5509 = vcmp.gt.f32.partialorder %v4297, %v5445
        %vm5510 = vcmp.gt.f32.partialorder %v4302, %v5446
        %vm5511 = vcmp.gt.f32.partialorder %v4307, %v5447
        %vm5512 = vcmp.gt.f32.partialorder %v4312, %v5448
        %vm5513 = vcmp.gt.f32.partialorder %v4317, %v5449
        %vm5514 = vcmp.gt.f32.partialorder %v4322, %v5450
        %vm5515 = vcmp.gt.f32.partialorder %v4327, %v5451
        %vm5516 = vcmp.gt.f32.partialorder %v4332, %v5452
        %vm5517 = vcmp.gt.f32.partialorder %v4337, %v5453
        %vm5518 = vcmp.gt.f32.partialorder %v4342, %v5454
        %vm5519 = vcmp.gt.f32.partialorder %v4347, %v5455
        %vm5520 = vcmp.gt.f32.partialorder %v4352, %v5456
        %vm5521 = vcmp.gt.f32.partialorder %v4357, %v5457
        %vm5522 = vcmp.gt.f32.partialorder %v4362, %v5458
        %vm5523 = vcmp.gt.f32.partialorder %v4367, %v5459
        %vm5524 = vcmp.gt.f32.partialorder %v4372, %v5460
        %vm5525 = vcmp.gt.f32.partialorder %v4377, %v5461
        %vm5526 = vcmp.gt.f32.partialorder %v4382, %v5462
        %vm5527 = vcmp.gt.f32.partialorder %v4387, %v5463
        %vm5528 = vcmp.gt.f32.partialorder %v4392, %v5464
        %vm5529 = vcmp.gt.f32.partialorder %v4397, %v5465
        %vm5530 = vcmp.gt.f32.partialorder %v4402, %v5466
        %vm5531 = vcmp.gt.f32.partialorder %v4407, %v5467
        %vm5532 = vcmp.gt.f32.partialorder %v4412, %v5468
        %vm5533 = vcmp.gt.f32.partialorder %v4417, %v5469
        %vm5534 = vcmp.gt.f32.partialorder %v4422, %v5470
        %vm5535 = vcmp.gt.f32.partialorder %v4427, %v5471
        %vm5536 = vcmp.gt.f32.partialorder %v4432, %v5472
        %vm5537 = vcmp.gt.f32.partialorder %v4437, %v5473
        %vm5538 = vcmp.gt.f32.partialorder %v4442, %v5474
        %vm5539 = vcmp.gt.f32.partialorder %v4447, %v5475
        %vm5540 = vcmp.gt.f32.partialorder %v4452, %v5476
        %vm5541 = vcmp.gt.f32.partialorder %v4457, %v5477
        %vm5542 = vcmp.gt.f32.partialorder %v4462, %v5478
        %vm5543 = vcmp.gt.f32.partialorder %v4467, %v5479
        %vm5544 = vcmp.gt.f32.partialorder %v4472, %v5480
        %vm5545 = vcmp.gt.f32.partialorder %v4477, %v5481
        %vm5546 = vcmp.gt.f32.partialorder %v4482, %v5482
        %vm5547 = vcmp.gt.f32.partialorder %v4487, %v5483
        %vm5548 = vcmp.gt.f32.partialorder %v4492, %v5484
        %vm5549 = vcmp.gt.f32.partialorder %v4497, %v5485
        %vm5550 = vcmp.gt.f32.partialorder %v4502, %v5486
        %vm5551 = vcmp.gt.f32.partialorder %v4507, %v5487
        %vm5552 = vcmp.gt.f32.partialorder %v4512, %v5488
        %vm5553 = vcmp.gt.f32.partialorder %v4517, %v5489
        %vm5554 = vcmp.gt.f32.partialorder %v4522, %v5490
        %vm5555 = vcmp.gt.f32.partialorder %v4527, %v5491
        %vm5556 = vcmp.gt.f32.partialorder %v4532, %v5492
        %vm5557 = vcmp.gt.f32.partialorder %v4537, %v5493
        %vm5558 = vcmp.gt.f32.partialorder %v4542, %v5494
        %vm5559 = vcmp.gt.f32.partialorder %v4547, %v5495
        %vm5560 = vcmp.gt.f32.partialorder %v4552, %v5496
        %vm5561 = vcmp.gt.f32.partialorder %v4557, %v5497
        %vm5562 = vcmp.gt.f32.partialorder %v4562, %v5498
        %vm5563 = vcmp.gt.f32.partialorder %v4567, %v5499
        %vm5564 = vcmp.gt.f32.partialorder %v4572, %v5500
        %vm5565 = vcmp.gt.f32.partialorder %v4577, %v5501
        %vm5566 = vcmp.gt.f32.partialorder %v4582, %v5502
        %vm5567 = vcmp.gt.f32.partialorder %v4587, %v5503
        %vm5568 = vcmp.gt.f32.partialorder %v4592, %v5504
        %vm5569 = vcmp.gt.f32.partialorder %v4597, %v5505
        %vm5570 = vcmp.gt.f32.partialorder %v4602, %v5506
        %vm5571 = vcmp.gt.f32.partialorder %v4607, %v5507
        %vm5572 = vcmp.gt.f32.partialorder %v4612, %v5508
        %v5573 = vld [vmem:[#allocation3] sm:$0xff]
        %v5574 = vld [vmem:[#allocation3 + $0x8] sm:$0xff]
        %v5575 = vld [vmem:[#allocation3 + $0x10] sm:$0xff]
        %v5576 = vld [vmem:[#allocation3 + $0x18] sm:$0xff]
        %v5577 = vld [vmem:[#allocation3 + $0x20] sm:$0xff]
        %v5578 = vld [vmem:[#allocation3 + $0x28] sm:$0xff]
        %v5579 = vld [vmem:[#allocation3 + $0x30] sm:$0xff]
        %v5580 = vld [vmem:[#allocation3 + $0x38] sm:$0xff]
        %v5581 = vld [vmem:[#allocation3 + $0x40] sm:$0xff]
        %v5582 = vld [vmem:[#allocation3 + $0x48] sm:$0xff]
        %v5583 = vld [vmem:[#allocation3 + $0x50] sm:$0xff]
        %v5584 = vld [vmem:[#allocation3 + $0x58] sm:$0xff]
        %v5585 = vld [vmem:[#allocation3 + $0x60] sm:$0xff]
        %v5586 = vld [vmem:[#allocation3 + $0x68] sm:$0xff]
        %v5587 = vld [vmem:[#allocation3 + $0x70] sm:$0xff]
        %v5588 = vld [vmem:[#allocation3 + $0x78] sm:$0xff]
        %v5589 = vld [vmem:[#allocation3 + $0x80] sm:$0xff]
        %v5590 = vld [vmem:[#allocation3 + $0x88] sm:$0xff]
        %v5591 = vld [vmem:[#allocation3 + $0x90] sm:$0xff]
        %v5592 = vld [vmem:[#allocation3 + $0x98] sm:$0xff]
        %v5593 = vld [vmem:[#allocation3 + $0xa0] sm:$0xff]
        %v5594 = vld [vmem:[#allocation3 + $0xa8] sm:$0xff]
        %v5595 = vld [vmem:[#allocation3 + $0xb0] sm:$0xff]
        %v5596 = vld [vmem:[#allocation3 + $0xb8] sm:$0xff]
        %v5597 = vld [vmem:[#allocation3 + $0xc0] sm:$0xff]
        %v5598 = vld [vmem:[#allocation3 + $0xc8] sm:$0xff]
        %v5599 = vld [vmem:[#allocation3 + $0xd0] sm:$0xff]
        %v5600 = vld [vmem:[#allocation3 + $0xd8] sm:$0xff]
        %v5601 = vld [vmem:[#allocation3 + $0xe0] sm:$0xff]
        %v5602 = vld [vmem:[#allocation3 + $0xe8] sm:$0xff]
        %v5603 = vld [vmem:[#allocation3 + $0xf0] sm:$0xff]
        %v5604 = vld [vmem:[#allocation3 + $0xf8] sm:$0xff]
        %v5605 = vld [vmem:[#allocation3 + $0x100] sm:$0xff]
        %v5606 = vld [vmem:[#allocation3 + $0x108] sm:$0xff]
        %v5607 = vld [vmem:[#allocation3 + $0x110] sm:$0xff]
        %v5608 = vld [vmem:[#allocation3 + $0x118] sm:$0xff]
        %v5609 = vld [vmem:[#allocation3 + $0x120] sm:$0xff]
        %v5610 = vld [vmem:[#allocation3 + $0x128] sm:$0xff]
        %v5611 = vld [vmem:[#allocation3 + $0x130] sm:$0xff]
        %v5612 = vld [vmem:[#allocation3 + $0x138] sm:$0xff]
        %v5613 = vld [vmem:[#allocation3 + $0x140] sm:$0xff]
        %v5614 = vld [vmem:[#allocation3 + $0x148] sm:$0xff]
        %v5615 = vld [vmem:[#allocation3 + $0x150] sm:$0xff]
        %v5616 = vld [vmem:[#allocation3 + $0x158] sm:$0xff]
        %v5617 = vld [vmem:[#allocation3 + $0x160] sm:$0xff]
        %v5618 = vld [vmem:[#allocation3 + $0x168] sm:$0xff]
        %v5619 = vld [vmem:[#allocation3 + $0x170] sm:$0xff]
        %v5620 = vld [vmem:[#allocation3 + $0x178] sm:$0xff]
        %v5621 = vld [vmem:[#allocation3 + $0x180] sm:$0xff]
        %v5622 = vld [vmem:[#allocation3 + $0x188] sm:$0xff]
        %v5623 = vld [vmem:[#allocation3 + $0x190] sm:$0xff]
        %v5624 = vld [vmem:[#allocation3 + $0x198] sm:$0xff]
        %v5625 = vld [vmem:[#allocation3 + $0x1a0] sm:$0xff]
        %v5626 = vld [vmem:[#allocation3 + $0x1a8] sm:$0xff]
        %v5627 = vld [vmem:[#allocation3 + $0x1b0] sm:$0xff]
        %v5628 = vld [vmem:[#allocation3 + $0x1b8] sm:$0xff]
        %v5629 = vld [vmem:[#allocation3 + $0x1c0] sm:$0xff]
        %v5630 = vld [vmem:[#allocation3 + $0x1c8] sm:$0xff]
        %v5631 = vld [vmem:[#allocation3 + $0x1d0] sm:$0xff]
        %v5632 = vld [vmem:[#allocation3 + $0x1d8] sm:$0xff]
        %v5633 = vld [vmem:[#allocation3 + $0x1e0] sm:$0xff]
        %v5634 = vld [vmem:[#allocation3 + $0x1e8] sm:$0xff]
        %v5635 = vld [vmem:[#allocation3 + $0x1f0] sm:$0xff]
        %v5636 = vld [vmem:[#allocation3 + $0x1f8] sm:$0xff]
        %v5637 = vsel %vm5509, %v5129, %v5573
        %v5638 = vsel %vm5510, %v5134, %v5574
        %v5639 = vsel %vm5511, %v5139, %v5575
        %v5640 = vsel %vm5512, %v5144, %v5576
        %v5641 = vsel %vm5513, %v5149, %v5577
        %v5642 = vsel %vm5514, %v5154, %v5578
        %v5643 = vsel %vm5515, %v5159, %v5579
        %v5644 = vsel %vm5516, %v5164, %v5580
        %v5645 = vsel %vm5517, %v5169, %v5581
        %v5646 = vsel %vm5518, %v5174, %v5582
        %v5647 = vsel %vm5519, %v5179, %v5583
        %v5648 = vsel %vm5520, %v5184, %v5584
        %v5649 = vsel %vm5521, %v5189, %v5585
        %v5650 = vsel %vm5522, %v5194, %v5586
        %v5651 = vsel %vm5523, %v5199, %v5587
        %v5652 = vsel %vm5524, %v5204, %v5588
        %v5653 = vsel %vm5525, %v5209, %v5589
        %v5654 = vsel %vm5526, %v5214, %v5590
        %v5655 = vsel %vm5527, %v5219, %v5591
        %v5656 = vsel %vm5528, %v5224, %v5592
        %v5657 = vsel %vm5529, %v5229, %v5593
        %v5658 = vsel %vm5530, %v5234, %v5594
        %v5659 = vsel %vm5531, %v5239, %v5595
        %v5660 = vsel %vm5532, %v5244, %v5596
        %v5661 = vsel %vm5533, %v5249, %v5597
        %v5662 = vsel %vm5534, %v5254, %v5598
        %v5663 = vsel %vm5535, %v5259, %v5599
        %v5664 = vsel %vm5536, %v5264, %v5600
        %v5665 = vsel %vm5537, %v5269, %v5601
        %v5666 = vsel %vm5538, %v5274, %v5602
        %v5667 = vsel %vm5539, %v5279, %v5603
        %v5668 = vsel %vm5540, %v5284, %v5604
        %v5669 = vsel %vm5541, %v5289, %v5605
        %v5670 = vsel %vm5542, %v5294, %v5606
        %v5671 = vsel %vm5543, %v5299, %v5607
        %v5672 = vsel %vm5544, %v5304, %v5608
        %v5673 = vsel %vm5545, %v5309, %v5609
        %v5674 = vsel %vm5546, %v5314, %v5610
        %v5675 = vsel %vm5547, %v5319, %v5611
        %v5676 = vsel %vm5548, %v5324, %v5612
        %v5677 = vsel %vm5549, %v5329, %v5613
        %v5678 = vsel %vm5550, %v5334, %v5614
        %v5679 = vsel %vm5551, %v5339, %v5615
        %v5680 = vsel %vm5552, %v5344, %v5616
        %v5681 = vsel %vm5553, %v5349, %v5617
        %v5682 = vsel %vm5554, %v5354, %v5618
        %v5683 = vsel %vm5555, %v5359, %v5619
        %v5684 = vsel %vm5556, %v5364, %v5620
        %v5685 = vsel %vm5557, %v5369, %v5621
        %v5686 = vsel %vm5558, %v5374, %v5622
        %v5687 = vsel %vm5559, %v5379, %v5623
        %v5688 = vsel %vm5560, %v5384, %v5624
        %v5689 = vsel %vm5561, %v5389, %v5625
        %v5690 = vsel %vm5562, %v5394, %v5626
        %v5691 = vsel %vm5563, %v5399, %v5627
        %v5692 = vsel %vm5564, %v5404, %v5628
        %v5693 = vsel %vm5565, %v5409, %v5629
        %v5694 = vsel %vm5566, %v5414, %v5630
        %v5695 = vsel %vm5567, %v5419, %v5631
        %v5696 = vsel %vm5568, %v5424, %v5632
        %v5697 = vsel %vm5569, %v5429, %v5633
        %v5698 = vsel %vm5570, %v5434, %v5634
        %v5699 = vsel %vm5571, %v5439, %v5635
        %v5700 = vsel %vm5572, %v5444, %v5636
        %5701 = vst.msk [vmem:[#allocation3] sm:$0xff] %vm3036, %v5637
        %5702 = vst.msk [vmem:[#allocation3 + $0x8] sm:$0xff] %vm3036, %v5638
        %5703 = vst.msk [vmem:[#allocation3 + $0x10] sm:$0xff] %vm3036, %v5639
        %5704 = vst.msk [vmem:[#allocation3 + $0x18] sm:$0xff] %vm3036, %v5640
        %5705 = vst.msk [vmem:[#allocation3 + $0x20] sm:$0xff] %vm3036, %v5641
        %5706 = vst.msk [vmem:[#allocation3 + $0x28] sm:$0xff] %vm3036, %v5642
        %5707 = vst.msk [vmem:[#allocation3 + $0x30] sm:$0xff] %vm3036, %v5643
        %5708 = vst.msk [vmem:[#allocation3 + $0x38] sm:$0xff] %vm3036, %v5644
        %5709 = vst.msk [vmem:[#allocation3 + $0x40] sm:$0xff] %vm3036, %v5645
        %5710 = vst.msk [vmem:[#allocation3 + $0x48] sm:$0xff] %vm3036, %v5646
        %5711 = vst.msk [vmem:[#allocation3 + $0x50] sm:$0xff] %vm3036, %v5647
        %5712 = vst.msk [vmem:[#allocation3 + $0x58] sm:$0xff] %vm3036, %v5648
        %5713 = vst.msk [vmem:[#allocation3 + $0x60] sm:$0xff] %vm3036, %v5649
        %5714 = vst.msk [vmem:[#allocation3 + $0x68] sm:$0xff] %vm3036, %v5650
        %5715 = vst.msk [vmem:[#allocation3 + $0x70] sm:$0xff] %vm3036, %v5651
        %5716 = vst.msk [vmem:[#allocation3 + $0x78] sm:$0xff] %vm3036, %v5652
        %5717 = vst.msk [vmem:[#allocation3 + $0x80] sm:$0xff] %vm3036, %v5653
        %5718 = vst.msk [vmem:[#allocation3 + $0x88] sm:$0xff] %vm3036, %v5654
        %5719 = vst.msk [vmem:[#allocation3 + $0x90] sm:$0xff] %vm3036, %v5655
        %5720 = vst.msk [vmem:[#allocation3 + $0x98] sm:$0xff] %vm3036, %v5656
        %5721 = vst.msk [vmem:[#allocation3 + $0xa0] sm:$0xff] %vm3036, %v5657
        %5722 = vst.msk [vmem:[#allocation3 + $0xa8] sm:$0xff] %vm3036, %v5658
        %5723 = vst.msk [vmem:[#allocation3 + $0xb0] sm:$0xff] %vm3036, %v5659
        %5724 = vst.msk [vmem:[#allocation3 + $0xb8] sm:$0xff] %vm3036, %v5660
        %5725 = vst.msk [vmem:[#allocation3 + $0xc0] sm:$0xff] %vm3036, %v5661
        %5726 = vst.msk [vmem:[#allocation3 + $0xc8] sm:$0xff] %vm3036, %v5662
        %5727 = vst.msk [vmem:[#allocation3 + $0xd0] sm:$0xff] %vm3036, %v5663
        %5728 = vst.msk [vmem:[#allocation3 + $0xd8] sm:$0xff] %vm3036, %v5664
        %5729 = vst.msk [vmem:[#allocation3 + $0xe0] sm:$0xff] %vm3036, %v5665
        %5730 = vst.msk [vmem:[#allocation3 + $0xe8] sm:$0xff] %vm3036, %v5666
        %5731 = vst.msk [vmem:[#allocation3 + $0xf0] sm:$0xff] %vm3036, %v5667
        %5732 = vst.msk [vmem:[#allocation3 + $0xf8] sm:$0xff] %vm3036, %v5668
        %5733 = vst.msk [vmem:[#allocation3 + $0x100] sm:$0xff] %vm3036, %v5669
        %5734 = vst.msk [vmem:[#allocation3 + $0x108] sm:$0xff] %vm3036, %v5670
        %5735 = vst.msk [vmem:[#allocation3 + $0x110] sm:$0xff] %vm3036, %v5671
        %5736 = vst.msk [vmem:[#allocation3 + $0x118] sm:$0xff] %vm3036, %v5672
        %5737 = vst.msk [vmem:[#allocation3 + $0x120] sm:$0xff] %vm3036, %v5673
        %5738 = vst.msk [vmem:[#allocation3 + $0x128] sm:$0xff] %vm3036, %v5674
        %5739 = vst.msk [vmem:[#allocation3 + $0x130] sm:$0xff] %vm3036, %v5675
        %5740 = vst.msk [vmem:[#allocation3 + $0x138] sm:$0xff] %vm3036, %v5676
        %5741 = vst.msk [vmem:[#allocation3 + $0x140] sm:$0xff] %vm3036, %v5677
        %5742 = vst.msk [vmem:[#allocation3 + $0x148] sm:$0xff] %vm3036, %v5678
        %5743 = vst.msk [vmem:[#allocation3 + $0x150] sm:$0xff] %vm3036, %v5679
        %5744 = vst.msk [vmem:[#allocation3 + $0x158] sm:$0xff] %vm3036, %v5680
        %5745 = vst.msk [vmem:[#allocation3 + $0x160] sm:$0xff] %vm3036, %v5681
        %5746 = vst.msk [vmem:[#allocation3 + $0x168] sm:$0xff] %vm3036, %v5682
        %5747 = vst.msk [vmem:[#allocation3 + $0x170] sm:$0xff] %vm3036, %v5683
        %5748 = vst.msk [vmem:[#allocation3 + $0x178] sm:$0xff] %vm3036, %v5684
        %5749 = vst.msk [vmem:[#allocation3 + $0x180] sm:$0xff] %vm3036, %v5685
        %5750 = vst.msk [vmem:[#allocation3 + $0x188] sm:$0xff] %vm3036, %v5686
        %5751 = vst.msk [vmem:[#allocation3 + $0x190] sm:$0xff] %vm3036, %v5687
        %5752 = vst.msk [vmem:[#allocation3 + $0x198] sm:$0xff] %vm3036, %v5688
        %5753 = vst.msk [vmem:[#allocation3 + $0x1a0] sm:$0xff] %vm3036, %v5689
        %5754 = vst.msk [vmem:[#allocation3 + $0x1a8] sm:$0xff] %vm3036, %v5690
        %5755 = vst.msk [vmem:[#allocation3 + $0x1b0] sm:$0xff] %vm3036, %v5691
        %5756 = vst.msk [vmem:[#allocation3 + $0x1b8] sm:$0xff] %vm3036, %v5692
        %5757 = vst.msk [vmem:[#allocation3 + $0x1c0] sm:$0xff] %vm3036, %v5693
        %5758 = vst.msk [vmem:[#allocation3 + $0x1c8] sm:$0xff] %vm3036, %v5694
        %5759 = vst.msk [vmem:[#allocation3 + $0x1d0] sm:$0xff] %vm3036, %v5695
        %5760 = vst.msk [vmem:[#allocation3 + $0x1d8] sm:$0xff] %vm3036, %v5696
        %5761 = vst.msk [vmem:[#allocation3 + $0x1e0] sm:$0xff] %vm3036, %v5697
        %5762 = vst.msk [vmem:[#allocation3 + $0x1e8] sm:$0xff] %vm3036, %v5698
        %5763 = vst.msk [vmem:[#allocation3 + $0x1f0] sm:$0xff] %vm3036, %v5699
        %5764 = vst.msk [vmem:[#allocation3 + $0x1f8] sm:$0xff] %vm3036, %v5700
        %v5765 = vld [vmem:[#allocation2] sm:$0xff]
        %v5766 = vld [vmem:[#allocation2 + $0x8] sm:$0xff]
        %v5767 = vld [vmem:[#allocation2 + $0x10] sm:$0xff]
        %v5768 = vld [vmem:[#allocation2 + $0x18] sm:$0xff]
        %v5769 = vld [vmem:[#allocation2 + $0x20] sm:$0xff]
        %v5770 = vld [vmem:[#allocation2 + $0x28] sm:$0xff]
        %v5771 = vld [vmem:[#allocation2 + $0x30] sm:$0xff]
        %v5772 = vld [vmem:[#allocation2 + $0x38] sm:$0xff]
        %v5773 = vld [vmem:[#allocation2 + $0x40] sm:$0xff]
        %v5774 = vld [vmem:[#allocation2 + $0x48] sm:$0xff]
        %v5775 = vld [vmem:[#allocation2 + $0x50] sm:$0xff]
        %v5776 = vld [vmem:[#allocation2 + $0x58] sm:$0xff]
        %v5777 = vld [vmem:[#allocation2 + $0x60] sm:$0xff]
        %v5778 = vld [vmem:[#allocation2 + $0x68] sm:$0xff]
        %v5779 = vld [vmem:[#allocation2 + $0x70] sm:$0xff]
        %v5780 = vld [vmem:[#allocation2 + $0x78] sm:$0xff]
        %v5781 = vld [vmem:[#allocation2 + $0x80] sm:$0xff]
        %v5782 = vld [vmem:[#allocation2 + $0x88] sm:$0xff]
        %v5783 = vld [vmem:[#allocation2 + $0x90] sm:$0xff]
        %v5784 = vld [vmem:[#allocation2 + $0x98] sm:$0xff]
        %v5785 = vld [vmem:[#allocation2 + $0xa0] sm:$0xff]
        %v5786 = vld [vmem:[#allocation2 + $0xa8] sm:$0xff]
        %v5787 = vld [vmem:[#allocation2 + $0xb0] sm:$0xff]
        %v5788 = vld [vmem:[#allocation2 + $0xb8] sm:$0xff]
        %v5789 = vld [vmem:[#allocation2 + $0xc0] sm:$0xff]
        %v5790 = vld [vmem:[#allocation2 + $0xc8] sm:$0xff]
        %v5791 = vld [vmem:[#allocation2 + $0xd0] sm:$0xff]
        %v5792 = vld [vmem:[#allocation2 + $0xd8] sm:$0xff]
        %v5793 = vld [vmem:[#allocation2 + $0xe0] sm:$0xff]
        %v5794 = vld [vmem:[#allocation2 + $0xe8] sm:$0xff]
        %v5795 = vld [vmem:[#allocation2 + $0xf0] sm:$0xff]
        %v5796 = vld [vmem:[#allocation2 + $0xf8] sm:$0xff]
        %v5797 = vld [vmem:[#allocation2 + $0x100] sm:$0xff]
        %v5798 = vld [vmem:[#allocation2 + $0x108] sm:$0xff]
        %v5799 = vld [vmem:[#allocation2 + $0x110] sm:$0xff]
        %v5800 = vld [vmem:[#allocation2 + $0x118] sm:$0xff]
        %v5801 = vld [vmem:[#allocation2 + $0x120] sm:$0xff]
        %v5802 = vld [vmem:[#allocation2 + $0x128] sm:$0xff]
        %v5803 = vld [vmem:[#allocation2 + $0x130] sm:$0xff]
        %v5804 = vld [vmem:[#allocation2 + $0x138] sm:$0xff]
        %v5805 = vld [vmem:[#allocation2 + $0x140] sm:$0xff]
        %v5806 = vld [vmem:[#allocation2 + $0x148] sm:$0xff]
        %v5807 = vld [vmem:[#allocation2 + $0x150] sm:$0xff]
        %v5808 = vld [vmem:[#allocation2 + $0x158] sm:$0xff]
        %v5809 = vld [vmem:[#allocation2 + $0x160] sm:$0xff]
        %v5810 = vld [vmem:[#allocation2 + $0x168] sm:$0xff]
        %v5811 = vld [vmem:[#allocation2 + $0x170] sm:$0xff]
        %v5812 = vld [vmem:[#allocation2 + $0x178] sm:$0xff]
        %v5813 = vld [vmem:[#allocation2 + $0x180] sm:$0xff]
        %v5814 = vld [vmem:[#allocation2 + $0x188] sm:$0xff]
        %v5815 = vld [vmem:[#allocation2 + $0x190] sm:$0xff]
        %v5816 = vld [vmem:[#allocation2 + $0x198] sm:$0xff]
        %v5817 = vld [vmem:[#allocation2 + $0x1a0] sm:$0xff]
        %v5818 = vld [vmem:[#allocation2 + $0x1a8] sm:$0xff]
        %v5819 = vld [vmem:[#allocation2 + $0x1b0] sm:$0xff]
        %v5820 = vld [vmem:[#allocation2 + $0x1b8] sm:$0xff]
        %v5821 = vld [vmem:[#allocation2 + $0x1c0] sm:$0xff]
        %v5822 = vld [vmem:[#allocation2 + $0x1c8] sm:$0xff]
        %v5823 = vld [vmem:[#allocation2 + $0x1d0] sm:$0xff]
        %v5824 = vld [vmem:[#allocation2 + $0x1d8] sm:$0xff]
        %v5825 = vld [vmem:[#allocation2 + $0x1e0] sm:$0xff]
        %v5826 = vld [vmem:[#allocation2 + $0x1e8] sm:$0xff]
        %v5827 = vld [vmem:[#allocation2 + $0x1f0] sm:$0xff]
        %v5828 = vld [vmem:[#allocation2 + $0x1f8] sm:$0xff]
        %v5829 = vmax.f32 %v5765, %v4297
        %v5830 = vmax.f32 %v5766, %v4302
        %v5831 = vmax.f32 %v5767, %v4307
        %v5832 = vmax.f32 %v5768, %v4312
        %v5833 = vmax.f32 %v5769, %v4317
        %v5834 = vmax.f32 %v5770, %v4322
        %v5835 = vmax.f32 %v5771, %v4327
        %v5836 = vmax.f32 %v5772, %v4332
        %v5837 = vmax.f32 %v5773, %v4337
        %v5838 = vmax.f32 %v5774, %v4342
        %v5839 = vmax.f32 %v5775, %v4347
        %v5840 = vmax.f32 %v5776, %v4352
        %v5841 = vmax.f32 %v5777, %v4357
        %v5842 = vmax.f32 %v5778, %v4362
        %v5843 = vmax.f32 %v5779, %v4367
        %v5844 = vmax.f32 %v5780, %v4372
        %v5845 = vmax.f32 %v5781, %v4377
        %v5846 = vmax.f32 %v5782, %v4382
        %v5847 = vmax.f32 %v5783, %v4387
        %v5848 = vmax.f32 %v5784, %v4392
        %v5849 = vmax.f32 %v5785, %v4397
        %v5850 = vmax.f32 %v5786, %v4402
        %v5851 = vmax.f32 %v5787, %v4407
        %v5852 = vmax.f32 %v5788, %v4412
        %v5853 = vmax.f32 %v5789, %v4417
        %v5854 = vmax.f32 %v5790, %v4422
        %v5855 = vmax.f32 %v5791, %v4427
        %v5856 = vmax.f32 %v5792, %v4432
        %v5857 = vmax.f32 %v5793, %v4437
        %v5858 = vmax.f32 %v5794, %v4442
        %v5859 = vmax.f32 %v5795, %v4447
        %v5860 = vmax.f32 %v5796, %v4452
        %v5861 = vmax.f32 %v5797, %v4457
        %v5862 = vmax.f32 %v5798, %v4462
        %v5863 = vmax.f32 %v5799, %v4467
        %v5864 = vmax.f32 %v5800, %v4472
        %v5865 = vmax.f32 %v5801, %v4477
        %v5866 = vmax.f32 %v5802, %v4482
        %v5867 = vmax.f32 %v5803, %v4487
        %v5868 = vmax.f32 %v5804, %v4492
        %v5869 = vmax.f32 %v5805, %v4497
        %v5870 = vmax.f32 %v5806, %v4502
        %v5871 = vmax.f32 %v5807, %v4507
        %v5872 = vmax.f32 %v5808, %v4512
        %v5873 = vmax.f32 %v5809, %v4517
        %v5874 = vmax.f32 %v5810, %v4522
        %v5875 = vmax.f32 %v5811, %v4527
        %v5876 = vmax.f32 %v5812, %v4532
        %v5877 = vmax.f32 %v5813, %v4537
        %v5878 = vmax.f32 %v5814, %v4542
        %v5879 = vmax.f32 %v5815, %v4547
        %v5880 = vmax.f32 %v5816, %v4552
        %v5881 = vmax.f32 %v5817, %v4557
        %v5882 = vmax.f32 %v5818, %v4562
        %v5883 = vmax.f32 %v5819, %v4567
        %v5884 = vmax.f32 %v5820, %v4572
        %v5885 = vmax.f32 %v5821, %v4577
        %v5886 = vmax.f32 %v5822, %v4582
        %v5887 = vmax.f32 %v5823, %v4587
        %v5888 = vmax.f32 %v5824, %v4592
        %v5889 = vmax.f32 %v5825, %v4597
        %v5890 = vmax.f32 %v5826, %v4602
        %v5891 = vmax.f32 %v5827, %v4607
        %v5892 = vmax.f32 %v5828, %v4612
        %5893 = vst.msk [vmem:[#allocation2] sm:$0xff] %vm3036, %v5829
        %5894 = vst.msk [vmem:[#allocation2 + $0x8] sm:$0xff] %vm3036, %v5830
        %5895 = vst.msk [vmem:[#allocation2 + $0x10] sm:$0xff] %vm3036, %v5831
        %5896 = vst.msk [vmem:[#allocation2 + $0x18] sm:$0xff] %vm3036, %v5832
        %5897 = vst.msk [vmem:[#allocation2 + $0x20] sm:$0xff] %vm3036, %v5833
        %5898 = vst.msk [vmem:[#allocation2 + $0x28] sm:$0xff] %vm3036, %v5834
        %5899 = vst.msk [vmem:[#allocation2 + $0x30] sm:$0xff] %vm3036, %v5835
        %5900 = vst.msk [vmem:[#allocation2 + $0x38] sm:$0xff] %vm3036, %v5836
        %5901 = vst.msk [vmem:[#allocation2 + $0x40] sm:$0xff] %vm3036, %v5837
        %5902 = vst.msk [vmem:[#allocation2 + $0x48] sm:$0xff] %vm3036, %v5838
        %5903 = vst.msk [vmem:[#allocation2 + $0x50] sm:$0xff] %vm3036, %v5839
        %5904 = vst.msk [vmem:[#allocation2 + $0x58] sm:$0xff] %vm3036, %v5840
        %5905 = vst.msk [vmem:[#allocation2 + $0x60] sm:$0xff] %vm3036, %v5841
        %5906 = vst.msk [vmem:[#allocation2 + $0x68] sm:$0xff] %vm3036, %v5842
        %5907 = vst.msk [vmem:[#allocation2 + $0x70] sm:$0xff] %vm3036, %v5843
        %5908 = vst.msk [vmem:[#allocation2 + $0x78] sm:$0xff] %vm3036, %v5844
        %5909 = vst.msk [vmem:[#allocation2 + $0x80] sm:$0xff] %vm3036, %v5845
        %5910 = vst.msk [vmem:[#allocation2 + $0x88] sm:$0xff] %vm3036, %v5846
        %5911 = vst.msk [vmem:[#allocation2 + $0x90] sm:$0xff] %vm3036, %v5847
        %5912 = vst.msk [vmem:[#allocation2 + $0x98] sm:$0xff] %vm3036, %v5848
        %5913 = vst.msk [vmem:[#allocation2 + $0xa0] sm:$0xff] %vm3036, %v5849
        %5914 = vst.msk [vmem:[#allocation2 + $0xa8] sm:$0xff] %vm3036, %v5850
        %5915 = vst.msk [vmem:[#allocation2 + $0xb0] sm:$0xff] %vm3036, %v5851
        %5916 = vst.msk [vmem:[#allocation2 + $0xb8] sm:$0xff] %vm3036, %v5852
        %5917 = vst.msk [vmem:[#allocation2 + $0xc0] sm:$0xff] %vm3036, %v5853
        %5918 = vst.msk [vmem:[#allocation2 + $0xc8] sm:$0xff] %vm3036, %v5854
        %5919 = vst.msk [vmem:[#allocation2 + $0xd0] sm:$0xff] %vm3036, %v5855
        %5920 = vst.msk [vmem:[#allocation2 + $0xd8] sm:$0xff] %vm3036, %v5856
        %5921 = vst.msk [vmem:[#allocation2 + $0xe0] sm:$0xff] %vm3036, %v5857
        %5922 = vst.msk [vmem:[#allocation2 + $0xe8] sm:$0xff] %vm3036, %v5858
        %5923 = vst.msk [vmem:[#allocation2 + $0xf0] sm:$0xff] %vm3036, %v5859
        %5924 = vst.msk [vmem:[#allocation2 + $0xf8] sm:$0xff] %vm3036, %v5860
        %5925 = vst.msk [vmem:[#allocation2 + $0x100] sm:$0xff] %vm3036, %v5861
        %5926 = vst.msk [vmem:[#allocation2 + $0x108] sm:$0xff] %vm3036, %v5862
        %5927 = vst.msk [vmem:[#allocation2 + $0x110] sm:$0xff] %vm3036, %v5863
        %5928 = vst.msk [vmem:[#allocation2 + $0x118] sm:$0xff] %vm3036, %v5864
        %5929 = vst.msk [vmem:[#allocation2 + $0x120] sm:$0xff] %vm3036, %v5865
        %5930 = vst.msk [vmem:[#allocation2 + $0x128] sm:$0xff] %vm3036, %v5866
        %5931 = vst.msk [vmem:[#allocation2 + $0x130] sm:$0xff] %vm3036, %v5867
        %5932 = vst.msk [vmem:[#allocation2 + $0x138] sm:$0xff] %vm3036, %v5868
        %5933 = vst.msk [vmem:[#allocation2 + $0x140] sm:$0xff] %vm3036, %v5869
        %5934 = vst.msk [vmem:[#allocation2 + $0x148] sm:$0xff] %vm3036, %v5870
        %5935 = vst.msk [vmem:[#allocation2 + $0x150] sm:$0xff] %vm3036, %v5871
        %5936 = vst.msk [vmem:[#allocation2 + $0x158] sm:$0xff] %vm3036, %v5872
        %5937 = vst.msk [vmem:[#allocation2 + $0x160] sm:$0xff] %vm3036, %v5873
        %5938 = vst.msk [vmem:[#allocation2 + $0x168] sm:$0xff] %vm3036, %v5874
        %5939 = vst.msk [vmem:[#allocation2 + $0x170] sm:$0xff] %vm3036, %v5875
        %5940 = vst.msk [vmem:[#allocation2 + $0x178] sm:$0xff] %vm3036, %v5876
        %5941 = vst.msk [vmem:[#allocation2 + $0x180] sm:$0xff] %vm3036, %v5877
        %5942 = vst.msk [vmem:[#allocation2 + $0x188] sm:$0xff] %vm3036, %v5878
        %5943 = vst.msk [vmem:[#allocation2 + $0x190] sm:$0xff] %vm3036, %v5879
        %5944 = vst.msk [vmem:[#allocation2 + $0x198] sm:$0xff] %vm3036, %v5880
        %5945 = vst.msk [vmem:[#allocation2 + $0x1a0] sm:$0xff] %vm3036, %v5881
        %5946 = vst.msk [vmem:[#allocation2 + $0x1a8] sm:$0xff] %vm3036, %v5882
        %5947 = vst.msk [vmem:[#allocation2 + $0x1b0] sm:$0xff] %vm3036, %v5883
        %5948 = vst.msk [vmem:[#allocation2 + $0x1b8] sm:$0xff] %vm3036, %v5884
        %5949 = vst.msk [vmem:[#allocation2 + $0x1c0] sm:$0xff] %vm3036, %v5885
        %5950 = vst.msk [vmem:[#allocation2 + $0x1c8] sm:$0xff] %vm3036, %v5886
        %5951 = vst.msk [vmem:[#allocation2 + $0x1d0] sm:$0xff] %vm3036, %v5887
        %5952 = vst.msk [vmem:[#allocation2 + $0x1d8] sm:$0xff] %vm3036, %v5888
        %5953 = vst.msk [vmem:[#allocation2 + $0x1e0] sm:$0xff] %vm3036, %v5889
        %5954 = vst.msk [vmem:[#allocation2 + $0x1e8] sm:$0xff] %vm3036, %v5890
        %5955 = vst.msk [vmem:[#allocation2 + $0x1f0] sm:$0xff] %vm3036, %v5891
        %5956 = vst.msk [vmem:[#allocation2 + $0x1f8] sm:$0xff] %vm3036, %v5892
        %p5957 = scmp.eq.s32.totalorder %s34, 1
        // Predicated region
        $region57: #{tpu_custom_call.1} parent=35 // pred_check
          %p5958 = pneg %p5957
        $region58: #{tpu_custom_call.1} parent=35 // pred_check_branch
          %5960 = sbr.rel (%p5958) target = $region60
        $region59: #{tpu_custom_call.1} parent=35 // pred_region
          %v5961 = vld [vmem:[#allocation3] sm:$0xff]
          %v5962 = vld [vmem:[#allocation3 + $0x8] sm:$0xff]
          %v5963 = vld [vmem:[#allocation3 + $0x10] sm:$0xff]
          %v5964 = vld [vmem:[#allocation3 + $0x18] sm:$0xff]
          %v5965 = vld [vmem:[#allocation3 + $0x20] sm:$0xff]
          %v5966 = vld [vmem:[#allocation3 + $0x28] sm:$0xff]
          %v5967 = vld [vmem:[#allocation3 + $0x30] sm:$0xff]
          %v5968 = vld [vmem:[#allocation3 + $0x38] sm:$0xff]
          %v5969 = vld [vmem:[#allocation3 + $0x40] sm:$0xff]
          %v5970 = vld [vmem:[#allocation3 + $0x48] sm:$0xff]
          %v5971 = vld [vmem:[#allocation3 + $0x50] sm:$0xff]
          %v5972 = vld [vmem:[#allocation3 + $0x58] sm:$0xff]
          %v5973 = vld [vmem:[#allocation3 + $0x60] sm:$0xff]
          %v5974 = vld [vmem:[#allocation3 + $0x68] sm:$0xff]
          %v5975 = vld [vmem:[#allocation3 + $0x70] sm:$0xff]
          %v5976 = vld [vmem:[#allocation3 + $0x78] sm:$0xff]
          %v5977 = vld [vmem:[#allocation3 + $0x80] sm:$0xff]
          %v5978 = vld [vmem:[#allocation3 + $0x88] sm:$0xff]
          %v5979 = vld [vmem:[#allocation3 + $0x90] sm:$0xff]
          %v5980 = vld [vmem:[#allocation3 + $0x98] sm:$0xff]
          %v5981 = vld [vmem:[#allocation3 + $0xa0] sm:$0xff]
          %v5982 = vld [vmem:[#allocation3 + $0xa8] sm:$0xff]
          %v5983 = vld [vmem:[#allocation3 + $0xb0] sm:$0xff]
          %v5984 = vld [vmem:[#allocation3 + $0xb8] sm:$0xff]
          %v5985 = vld [vmem:[#allocation3 + $0xc0] sm:$0xff]
          %v5986 = vld [vmem:[#allocation3 + $0xc8] sm:$0xff]
          %v5987 = vld [vmem:[#allocation3 + $0xd0] sm:$0xff]
          %v5988 = vld [vmem:[#allocation3 + $0xd8] sm:$0xff]
          %v5989 = vld [vmem:[#allocation3 + $0xe0] sm:$0xff]
          %v5990 = vld [vmem:[#allocation3 + $0xe8] sm:$0xff]
          %v5991 = vld [vmem:[#allocation3 + $0xf0] sm:$0xff]
          %v5992 = vld [vmem:[#allocation3 + $0xf8] sm:$0xff]
          %v5993 = vld [vmem:[#allocation3 + $0x100] sm:$0xff]
          %v5994 = vld [vmem:[#allocation3 + $0x108] sm:$0xff]
          %v5995 = vld [vmem:[#allocation3 + $0x110] sm:$0xff]
          %v5996 = vld [vmem:[#allocation3 + $0x118] sm:$0xff]
          %v5997 = vld [vmem:[#allocation3 + $0x120] sm:$0xff]
          %v5998 = vld [vmem:[#allocation3 + $0x128] sm:$0xff]
          %v5999 = vld [vmem:[#allocation3 + $0x130] sm:$0xff]
          %v6000 = vld [vmem:[#allocation3 + $0x138] sm:$0xff]
          %v6001 = vld [vmem:[#allocation3 + $0x140] sm:$0xff]
          %v6002 = vld [vmem:[#allocation3 + $0x148] sm:$0xff]
          %v6003 = vld [vmem:[#allocation3 + $0x150] sm:$0xff]
          %v6004 = vld [vmem:[#allocation3 + $0x158] sm:$0xff]
          %v6005 = vld [vmem:[#allocation3 + $0x160] sm:$0xff]
          %v6006 = vld [vmem:[#allocation3 + $0x168] sm:$0xff]
          %v6007 = vld [vmem:[#allocation3 + $0x170] sm:$0xff]
          %v6008 = vld [vmem:[#allocation3 + $0x178] sm:$0xff]
          %v6009 = vld [vmem:[#allocation3 + $0x180] sm:$0xff]
          %v6010 = vld [vmem:[#allocation3 + $0x188] sm:$0xff]
          %v6011 = vld [vmem:[#allocation3 + $0x190] sm:$0xff]
          %v6012 = vld [vmem:[#allocation3 + $0x198] sm:$0xff]
          %v6013 = vld [vmem:[#allocation3 + $0x1a0] sm:$0xff]
          %v6014 = vld [vmem:[#allocation3 + $0x1a8] sm:$0xff]
          %v6015 = vld [vmem:[#allocation3 + $0x1b0] sm:$0xff]
          %v6016 = vld [vmem:[#allocation3 + $0x1b8] sm:$0xff]
          %v6017 = vld [vmem:[#allocation3 + $0x1c0] sm:$0xff]
          %v6018 = vld [vmem:[#allocation3 + $0x1c8] sm:$0xff]
          %v6019 = vld [vmem:[#allocation3 + $0x1d0] sm:$0xff]
          %v6020 = vld [vmem:[#allocation3 + $0x1d8] sm:$0xff]
          %v6021 = vld [vmem:[#allocation3 + $0x1e0] sm:$0xff]
          %v6022 = vld [vmem:[#allocation3 + $0x1e8] sm:$0xff]
          %v6023 = vld [vmem:[#allocation3 + $0x1f0] sm:$0xff]
          %v6024 = vld [vmem:[#allocation3 + $0x1f8] sm:$0xff]
          %v6025 = vmul.f32 %v5961, 0.02
          %v6026 = vmul.f32 %v5962, 0.02
          %v6027 = vmul.f32 %v5963, 0.02
          %v6028 = vmul.f32 %v5964, 0.02
          %v6029 = vmul.f32 %v5965, 0.02
          %v6030 = vmul.f32 %v5966, 0.02
          %v6031 = vmul.f32 %v5967, 0.02
          %v6032 = vmul.f32 %v5968, 0.02
          %v6033 = vmul.f32 %v5969, 0.02
          %v6034 = vmul.f32 %v5970, 0.02
          %v6035 = vmul.f32 %v5971, 0.02
          %v6036 = vmul.f32 %v5972, 0.02
          %v6037 = vmul.f32 %v5973, 0.02
          %v6038 = vmul.f32 %v5974, 0.02
          %v6039 = vmul.f32 %v5975, 0.02
          %v6040 = vmul.f32 %v5976, 0.02
          %v6041 = vmul.f32 %v5977, 0.02
          %v6042 = vmul.f32 %v5978, 0.02
          %v6043 = vmul.f32 %v5979, 0.02
          %v6044 = vmul.f32 %v5980, 0.02
          %v6045 = vmul.f32 %v5981, 0.02
          %v6046 = vmul.f32 %v5982, 0.02
          %v6047 = vmul.f32 %v5983, 0.02
          %v6048 = vmul.f32 %v5984, 0.02
          %v6049 = vmul.f32 %v5985, 0.02
          %v6050 = vmul.f32 %v5986, 0.02
          %v6051 = vmul.f32 %v5987, 0.02
          %v6052 = vmul.f32 %v5988, 0.02
          %v6053 = vmul.f32 %v5989, 0.02
          %v6054 = vmul.f32 %v5990, 0.02
          %v6055 = vmul.f32 %v5991, 0.02
          %v6056 = vmul.f32 %v5992, 0.02
          %v6057 = vmul.f32 %v5993, 0.02
          %v6058 = vmul.f32 %v5994, 0.02
          %v6059 = vmul.f32 %v5995, 0.02
          %v6060 = vmul.f32 %v5996, 0.02
          %v6061 = vmul.f32 %v5997, 0.02
          %v6062 = vmul.f32 %v5998, 0.02
          %v6063 = vmul.f32 %v5999, 0.02
          %v6064 = vmul.f32 %v6000, 0.02
          %v6065 = vmul.f32 %v6001, 0.02
          %v6066 = vmul.f32 %v6002, 0.02
          %v6067 = vmul.f32 %v6003, 0.02
          %v6068 = vmul.f32 %v6004, 0.02
          %v6069 = vmul.f32 %v6005, 0.02
          %v6070 = vmul.f32 %v6006, 0.02
          %v6071 = vmul.f32 %v6007, 0.02
          %v6072 = vmul.f32 %v6008, 0.02
          %v6073 = vmul.f32 %v6009, 0.02
          %v6074 = vmul.f32 %v6010, 0.02
          %v6075 = vmul.f32 %v6011, 0.02
          %v6076 = vmul.f32 %v6012, 0.02
          %v6077 = vmul.f32 %v6013, 0.02
          %v6078 = vmul.f32 %v6014, 0.02
          %v6079 = vmul.f32 %v6015, 0.02
          %v6080 = vmul.f32 %v6016, 0.02
          %v6081 = vmul.f32 %v6017, 0.02
          %v6082 = vmul.f32 %v6018, 0.02
          %v6083 = vmul.f32 %v6019, 0.02
          %v6084 = vmul.f32 %v6020, 0.02
          %v6085 = vmul.f32 %v6021, 0.02
          %v6086 = vmul.f32 %v6022, 0.02
          %v6087 = vmul.f32 %v6023, 0.02
          %v6088 = vmul.f32 %v6024, 0.02
          %v6089 = vmul.f32 %v6025, 1.442695
          %v6090 = vpow.pop %v6089
          %v6091 = vmul.f32 %v6026, 1.442695
          %v6092 = vpow.pop %v6091
          %v6093 = vmul.f32 %v6027, 1.442695
          %v6094 = vpow.pop %v6093
          %v6095 = vmul.f32 %v6028, 1.442695
          %v6096 = vpow.pop %v6095
          %v6097 = vmul.f32 %v6029, 1.442695
          %v6098 = vpow.pop %v6097
          %v6099 = vmul.f32 %v6030, 1.442695
          %v6100 = vpow.pop %v6099
          %v6101 = vmul.f32 %v6031, 1.442695
          %v6102 = vpow.pop %v6101
          %v6103 = vmul.f32 %v6032, 1.442695
          %v6104 = vpow.pop %v6103
          %v6105 = vmul.f32 %v6033, 1.442695
          %v6106 = vpow.pop %v6105
          %v6107 = vmul.f32 %v6034, 1.442695
          %v6108 = vpow.pop %v6107
          %v6109 = vmul.f32 %v6035, 1.442695
          %v6110 = vpow.pop %v6109
          %v6111 = vmul.f32 %v6036, 1.442695
          %v6112 = vpow.pop %v6111
          %v6113 = vmul.f32 %v6037, 1.442695
          %v6114 = vpow.pop %v6113
          %v6115 = vmul.f32 %v6038, 1.442695
          %v6116 = vpow.pop %v6115
          %v6117 = vmul.f32 %v6039, 1.442695
          %v6118 = vpow.pop %v6117
          %v6119 = vmul.f32 %v6040, 1.442695
          %v6120 = vpow.pop %v6119
          %v6121 = vmul.f32 %v6041, 1.442695
          %v6122 = vpow.pop %v6121
          %v6123 = vmul.f32 %v6042, 1.442695
          %v6124 = vpow.pop %v6123
          %v6125 = vmul.f32 %v6043, 1.442695
          %v6126 = vpow.pop %v6125
          %v6127 = vmul.f32 %v6044, 1.442695
          %v6128 = vpow.pop %v6127
          %v6129 = vmul.f32 %v6045, 1.442695
          %v6130 = vpow.pop %v6129
          %v6131 = vmul.f32 %v6046, 1.442695
          %v6132 = vpow.pop %v6131
          %v6133 = vmul.f32 %v6047, 1.442695
          %v6134 = vpow.pop %v6133
          %v6135 = vmul.f32 %v6048, 1.442695
          %v6136 = vpow.pop %v6135
          %v6137 = vmul.f32 %v6049, 1.442695
          %v6138 = vpow.pop %v6137
          %v6139 = vmul.f32 %v6050, 1.442695
          %v6140 = vpow.pop %v6139
          %v6141 = vmul.f32 %v6051, 1.442695
          %v6142 = vpow.pop %v6141
          %v6143 = vmul.f32 %v6052, 1.442695
          %v6144 = vpow.pop %v6143
          %v6145 = vmul.f32 %v6053, 1.442695
          %v6146 = vpow.pop %v6145
          %v6147 = vmul.f32 %v6054, 1.442695
          %v6148 = vpow.pop %v6147
          %v6149 = vmul.f32 %v6055, 1.442695
          %v6150 = vpow.pop %v6149
          %v6151 = vmul.f32 %v6056, 1.442695
          %v6152 = vpow.pop %v6151
          %v6153 = vmul.f32 %v6057, 1.442695
          %v6154 = vpow.pop %v6153
          %v6155 = vmul.f32 %v6058, 1.442695
          %v6156 = vpow.pop %v6155
          %v6157 = vmul.f32 %v6059, 1.442695
          %v6158 = vpow.pop %v6157
          %v6159 = vmul.f32 %v6060, 1.442695
          %v6160 = vpow.pop %v6159
          %v6161 = vmul.f32 %v6061, 1.442695
          %v6162 = vpow.pop %v6161
          %v6163 = vmul.f32 %v6062, 1.442695
          %v6164 = vpow.pop %v6163
          %v6165 = vmul.f32 %v6063, 1.442695
          %v6166 = vpow.pop %v6165
          %v6167 = vmul.f32 %v6064, 1.442695
          %v6168 = vpow.pop %v6167
          %v6169 = vmul.f32 %v6065, 1.442695
          %v6170 = vpow.pop %v6169
          %v6171 = vmul.f32 %v6066, 1.442695
          %v6172 = vpow.pop %v6171
          %v6173 = vmul.f32 %v6067, 1.442695
          %v6174 = vpow.pop %v6173
          %v6175 = vmul.f32 %v6068, 1.442695
          %v6176 = vpow.pop %v6175
          %v6177 = vmul.f32 %v6069, 1.442695
          %v6178 = vpow.pop %v6177
          %v6179 = vmul.f32 %v6070, 1.442695
          %v6180 = vpow.pop %v6179
          %v6181 = vmul.f32 %v6071, 1.442695
          %v6182 = vpow.pop %v6181
          %v6183 = vmul.f32 %v6072, 1.442695
          %v6184 = vpow.pop %v6183
          %v6185 = vmul.f32 %v6073, 1.442695
          %v6186 = vpow.pop %v6185
          %v6187 = vmul.f32 %v6074, 1.442695
          %v6188 = vpow.pop %v6187
          %v6189 = vmul.f32 %v6075, 1.442695
          %v6190 = vpow.pop %v6189
          %v6191 = vmul.f32 %v6076, 1.442695
          %v6192 = vpow.pop %v6191
          %v6193 = vmul.f32 %v6077, 1.442695
          %v6194 = vpow.pop %v6193
          %v6195 = vmul.f32 %v6078, 1.442695
          %v6196 = vpow.pop %v6195
          %v6197 = vmul.f32 %v6079, 1.442695
          %v6198 = vpow.pop %v6197
          %v6199 = vmul.f32 %v6080, 1.442695
          %v6200 = vpow.pop %v6199
          %v6201 = vmul.f32 %v6081, 1.442695
          %v6202 = vpow.pop %v6201
          %v6203 = vmul.f32 %v6082, 1.442695
          %v6204 = vpow.pop %v6203
          %v6205 = vmul.f32 %v6083, 1.442695
          %v6206 = vpow.pop %v6205
          %v6207 = vmul.f32 %v6084, 1.442695
          %v6208 = vpow.pop %v6207
          %v6209 = vmul.f32 %v6085, 1.442695
          %v6210 = vpow.pop %v6209
          %v6211 = vmul.f32 %v6086, 1.442695
          %v6212 = vpow.pop %v6211
          %v6213 = vmul.f32 %v6087, 1.442695
          %v6214 = vpow.pop %v6213
          %v6215 = vmul.f32 %v6088, 1.442695
          %v6216 = vpow.pop %v6215
          %v6217 = vld [vmem:[#allocation4] sm:$0xff]
          %v6218 = vld [vmem:[#allocation4 + $0x8] sm:$0xff]
          %v6219 = vld [vmem:[#allocation4 + $0x10] sm:$0xff]
          %v6220 = vld [vmem:[#allocation4 + $0x18] sm:$0xff]
          %v6221 = vld [vmem:[#allocation4 + $0x20] sm:$0xff]
          %v6222 = vld [vmem:[#allocation4 + $0x28] sm:$0xff]
          %v6223 = vld [vmem:[#allocation4 + $0x30] sm:$0xff]
          %v6224 = vld [vmem:[#allocation4 + $0x38] sm:$0xff]
          %v6225 = vld [vmem:[#allocation4 + $0x40] sm:$0xff]
          %v6226 = vld [vmem:[#allocation4 + $0x48] sm:$0xff]
          %v6227 = vld [vmem:[#allocation4 + $0x50] sm:$0xff]
          %v6228 = vld [vmem:[#allocation4 + $0x58] sm:$0xff]
          %v6229 = vld [vmem:[#allocation4 + $0x60] sm:$0xff]
          %v6230 = vld [vmem:[#allocation4 + $0x68] sm:$0xff]
          %v6231 = vld [vmem:[#allocation4 + $0x70] sm:$0xff]
          %v6232 = vld [vmem:[#allocation4 + $0x78] sm:$0xff]
          %v6233 = vld [vmem:[#allocation4 + $0x80] sm:$0xff]
          %v6234 = vld [vmem:[#allocation4 + $0x88] sm:$0xff]
          %v6235 = vld [vmem:[#allocation4 + $0x90] sm:$0xff]
          %v6236 = vld [vmem:[#allocation4 + $0x98] sm:$0xff]
          %v6237 = vld [vmem:[#allocation4 + $0xa0] sm:$0xff]
          %v6238 = vld [vmem:[#allocation4 + $0xa8] sm:$0xff]
          %v6239 = vld [vmem:[#allocation4 + $0xb0] sm:$0xff]
          %v6240 = vld [vmem:[#allocation4 + $0xb8] sm:$0xff]
          %v6241 = vld [vmem:[#allocation4 + $0xc0] sm:$0xff]
          %v6242 = vld [vmem:[#allocation4 + $0xc8] sm:$0xff]
          %v6243 = vld [vmem:[#allocation4 + $0xd0] sm:$0xff]
          %v6244 = vld [vmem:[#allocation4 + $0xd8] sm:$0xff]
          %v6245 = vld [vmem:[#allocation4 + $0xe0] sm:$0xff]
          %v6246 = vld [vmem:[#allocation4 + $0xe8] sm:$0xff]
          %v6247 = vld [vmem:[#allocation4 + $0xf0] sm:$0xff]
          %v6248 = vld [vmem:[#allocation4 + $0xf8] sm:$0xff]
          %v6249 = vld [vmem:[#allocation4 + $0x100] sm:$0xff]
          %v6250 = vld [vmem:[#allocation4 + $0x108] sm:$0xff]
          %v6251 = vld [vmem:[#allocation4 + $0x110] sm:$0xff]
          %v6252 = vld [vmem:[#allocation4 + $0x118] sm:$0xff]
          %v6253 = vld [vmem:[#allocation4 + $0x120] sm:$0xff]
          %v6254 = vld [vmem:[#allocation4 + $0x128] sm:$0xff]
          %v6255 = vld [vmem:[#allocation4 + $0x130] sm:$0xff]
          %v6256 = vld [vmem:[#allocation4 + $0x138] sm:$0xff]
          %v6257 = vld [vmem:[#allocation4 + $0x140] sm:$0xff]
          %v6258 = vld [vmem:[#allocation4 + $0x148] sm:$0xff]
          %v6259 = vld [vmem:[#allocation4 + $0x150] sm:$0xff]
          %v6260 = vld [vmem:[#allocation4 + $0x158] sm:$0xff]
          %v6261 = vld [vmem:[#allocation4 + $0x160] sm:$0xff]
          %v6262 = vld [vmem:[#allocation4 + $0x168] sm:$0xff]
          %v6263 = vld [vmem:[#allocation4 + $0x170] sm:$0xff]
          %v6264 = vld [vmem:[#allocation4 + $0x178] sm:$0xff]
          %v6265 = vld [vmem:[#allocation4 + $0x180] sm:$0xff]
          %v6266 = vld [vmem:[#allocation4 + $0x188] sm:$0xff]
          %v6267 = vld [vmem:[#allocation4 + $0x190] sm:$0xff]
          %v6268 = vld [vmem:[#allocation4 + $0x198] sm:$0xff]
          %v6269 = vld [vmem:[#allocation4 + $0x1a0] sm:$0xff]
          %v6270 = vld [vmem:[#allocation4 + $0x1a8] sm:$0xff]
          %v6271 = vld [vmem:[#allocation4 + $0x1b0] sm:$0xff]
          %v6272 = vld [vmem:[#allocation4 + $0x1b8] sm:$0xff]
          %v6273 = vld [vmem:[#allocation4 + $0x1c0] sm:$0xff]
          %v6274 = vld [vmem:[#allocation4 + $0x1c8] sm:$0xff]
          %v6275 = vld [vmem:[#allocation4 + $0x1d0] sm:$0xff]
          %v6276 = vld [vmem:[#allocation4 + $0x1d8] sm:$0xff]
          %v6277 = vld [vmem:[#allocation4 + $0x1e0] sm:$0xff]
          %v6278 = vld [vmem:[#allocation4 + $0x1e8] sm:$0xff]
          %v6279 = vld [vmem:[#allocation4 + $0x1f0] sm:$0xff]
          %v6280 = vld [vmem:[#allocation4 + $0x1f8] sm:$0xff]
          %v6281 = vadd.f32 %v6090, %v6217
          %v6282 = vadd.f32 %v6092, %v6218
          %v6283 = vadd.f32 %v6094, %v6219
          %v6284 = vadd.f32 %v6096, %v6220
          %v6285 = vadd.f32 %v6098, %v6221
          %v6286 = vadd.f32 %v6100, %v6222
          %v6287 = vadd.f32 %v6102, %v6223
          %v6288 = vadd.f32 %v6104, %v6224
          %v6289 = vadd.f32 %v6106, %v6225
          %v6290 = vadd.f32 %v6108, %v6226
          %v6291 = vadd.f32 %v6110, %v6227
          %v6292 = vadd.f32 %v6112, %v6228
          %v6293 = vadd.f32 %v6114, %v6229
          %v6294 = vadd.f32 %v6116, %v6230
          %v6295 = vadd.f32 %v6118, %v6231
          %v6296 = vadd.f32 %v6120, %v6232
          %v6297 = vadd.f32 %v6122, %v6233
          %v6298 = vadd.f32 %v6124, %v6234
          %v6299 = vadd.f32 %v6126, %v6235
          %v6300 = vadd.f32 %v6128, %v6236
          %v6301 = vadd.f32 %v6130, %v6237
          %v6302 = vadd.f32 %v6132, %v6238
          %v6303 = vadd.f32 %v6134, %v6239
          %v6304 = vadd.f32 %v6136, %v6240
          %v6305 = vadd.f32 %v6138, %v6241
          %v6306 = vadd.f32 %v6140, %v6242
          %v6307 = vadd.f32 %v6142, %v6243
          %v6308 = vadd.f32 %v6144, %v6244
          %v6309 = vadd.f32 %v6146, %v6245
          %v6310 = vadd.f32 %v6148, %v6246
          %v6311 = vadd.f32 %v6150, %v6247
          %v6312 = vadd.f32 %v6152, %v6248
          %v6313 = vadd.f32 %v6154, %v6249
          %v6314 = vadd.f32 %v6156, %v6250
          %v6315 = vadd.f32 %v6158, %v6251
          %v6316 = vadd.f32 %v6160, %v6252
          %v6317 = vadd.f32 %v6162, %v6253
          %v6318 = vadd.f32 %v6164, %v6254
          %v6319 = vadd.f32 %v6166, %v6255
          %v6320 = vadd.f32 %v6168, %v6256
          %v6321 = vadd.f32 %v6170, %v6257
          %v6322 = vadd.f32 %v6172, %v6258
          %v6323 = vadd.f32 %v6174, %v6259
          %v6324 = vadd.f32 %v6176, %v6260
          %v6325 = vadd.f32 %v6178, %v6261
          %v6326 = vadd.f32 %v6180, %v6262
          %v6327 = vadd.f32 %v6182, %v6263
          %v6328 = vadd.f32 %v6184, %v6264
          %v6329 = vadd.f32 %v6186, %v6265
          %v6330 = vadd.f32 %v6188, %v6266
          %v6331 = vadd.f32 %v6190, %v6267
          %v6332 = vadd.f32 %v6192, %v6268
          %v6333 = vadd.f32 %v6194, %v6269
          %v6334 = vadd.f32 %v6196, %v6270
          %v6335 = vadd.f32 %v6198, %v6271
          %v6336 = vadd.f32 %v6200, %v6272
          %v6337 = vadd.f32 %v6202, %v6273
          %v6338 = vadd.f32 %v6204, %v6274
          %v6339 = vadd.f32 %v6206, %v6275
          %v6340 = vadd.f32 %v6208, %v6276
          %v6341 = vadd.f32 %v6210, %v6277
          %v6342 = vadd.f32 %v6212, %v6278
          %v6343 = vadd.f32 %v6214, %v6279
          %v6344 = vadd.f32 %v6216, %v6280
          %v6345 = vlog2.pop %v6281
          %v6346 = vmul.f32 %v6345, 0.6931472
          %v6347 = vlog2.pop %v6282
          %v6348 = vmul.f32 %v6347, 0.6931472
          %v6349 = vlog2.pop %v6283
          %v6350 = vmul.f32 %v6349, 0.6931472
          %v6351 = vlog2.pop %v6284
          %v6352 = vmul.f32 %v6351, 0.6931472
          %v6353 = vlog2.pop %v6285
          %v6354 = vmul.f32 %v6353, 0.6931472
          %v6355 = vlog2.pop %v6286
          %v6356 = vmul.f32 %v6355, 0.6931472
          %v6357 = vlog2.pop %v6287
          %v6358 = vmul.f32 %v6357, 0.6931472
          %v6359 = vlog2.pop %v6288
          %v6360 = vmul.f32 %v6359, 0.6931472
          %v6361 = vlog2.pop %v6289
          %v6362 = vmul.f32 %v6361, 0.6931472
          %v6363 = vlog2.pop %v6290
          %v6364 = vmul.f32 %v6363, 0.6931472
          %v6365 = vlog2.pop %v6291
          %v6366 = vmul.f32 %v6365, 0.6931472
          %v6367 = vlog2.pop %v6292
          %v6368 = vmul.f32 %v6367, 0.6931472
          %v6369 = vlog2.pop %v6293
          %v6370 = vmul.f32 %v6369, 0.6931472
          %v6371 = vlog2.pop %v6294
          %v6372 = vmul.f32 %v6371, 0.6931472
          %v6373 = vlog2.pop %v6295
          %v6374 = vmul.f32 %v6373, 0.6931472
          %v6375 = vlog2.pop %v6296
          %v6376 = vmul.f32 %v6375, 0.6931472
          %v6377 = vlog2.pop %v6297
          %v6378 = vmul.f32 %v6377, 0.6931472
          %v6379 = vlog2.pop %v6298
          %v6380 = vmul.f32 %v6379, 0.6931472
          %v6381 = vlog2.pop %v6299
          %v6382 = vmul.f32 %v6381, 0.6931472
          %v6383 = vlog2.pop %v6300
          %v6384 = vmul.f32 %v6383, 0.6931472
          %v6385 = vlog2.pop %v6301
          %v6386 = vmul.f32 %v6385, 0.6931472
          %v6387 = vlog2.pop %v6302
          %v6388 = vmul.f32 %v6387, 0.6931472
          %v6389 = vlog2.pop %v6303
          %v6390 = vmul.f32 %v6389, 0.6931472
          %v6391 = vlog2.pop %v6304
          %v6392 = vmul.f32 %v6391, 0.6931472
          %v6393 = vlog2.pop %v6305
          %v6394 = vmul.f32 %v6393, 0.6931472
          %v6395 = vlog2.pop %v6306
          %v6396 = vmul.f32 %v6395, 0.6931472
          %v6397 = vlog2.pop %v6307
          %v6398 = vmul.f32 %v6397, 0.6931472
          %v6399 = vlog2.pop %v6308
          %v6400 = vmul.f32 %v6399, 0.6931472
          %v6401 = vlog2.pop %v6309
          %v6402 = vmul.f32 %v6401, 0.6931472
          %v6403 = vlog2.pop %v6310
          %v6404 = vmul.f32 %v6403, 0.6931472
          %v6405 = vlog2.pop %v6311
          %v6406 = vmul.f32 %v6405, 0.6931472
          %v6407 = vlog2.pop %v6312
          %v6408 = vmul.f32 %v6407, 0.6931472
          %v6409 = vlog2.pop %v6313
          %v6410 = vmul.f32 %v6409, 0.6931472
          %v6411 = vlog2.pop %v6314
          %v6412 = vmul.f32 %v6411, 0.6931472
          %v6413 = vlog2.pop %v6315
          %v6414 = vmul.f32 %v6413, 0.6931472
          %v6415 = vlog2.pop %v6316
          %v6416 = vmul.f32 %v6415, 0.6931472
          %v6417 = vlog2.pop %v6317
          %v6418 = vmul.f32 %v6417, 0.6931472
          %v6419 = vlog2.pop %v6318
          %v6420 = vmul.f32 %v6419, 0.6931472
          %v6421 = vlog2.pop %v6319
          %v6422 = vmul.f32 %v6421, 0.6931472
          %v6423 = vlog2.pop %v6320
          %v6424 = vmul.f32 %v6423, 0.6931472
          %v6425 = vlog2.pop %v6321
          %v6426 = vmul.f32 %v6425, 0.6931472
          %v6427 = vlog2.pop %v6322
          %v6428 = vmul.f32 %v6427, 0.6931472
          %v6429 = vlog2.pop %v6323
          %v6430 = vmul.f32 %v6429, 0.6931472
          %v6431 = vlog2.pop %v6324
          %v6432 = vmul.f32 %v6431, 0.6931472
          %v6433 = vlog2.pop %v6325
          %v6434 = vmul.f32 %v6433, 0.6931472
          %v6435 = vlog2.pop %v6326
          %v6436 = vmul.f32 %v6435, 0.6931472
          %v6437 = vlog2.pop %v6327
          %v6438 = vmul.f32 %v6437, 0.6931472
          %v6439 = vlog2.pop %v6328
          %v6440 = vmul.f32 %v6439, 0.6931472
          %v6441 = vlog2.pop %v6329
          %v6442 = vmul.f32 %v6441, 0.6931472
          %v6443 = vlog2.pop %v6330
          %v6444 = vmul.f32 %v6443, 0.6931472
          %v6445 = vlog2.pop %v6331
          %v6446 = vmul.f32 %v6445, 0.6931472
          %v6447 = vlog2.pop %v6332
          %v6448 = vmul.f32 %v6447, 0.6931472
          %v6449 = vlog2.pop %v6333
          %v6450 = vmul.f32 %v6449, 0.6931472
          %v6451 = vlog2.pop %v6334
          %v6452 = vmul.f32 %v6451, 0.6931472
          %v6453 = vlog2.pop %v6335
          %v6454 = vmul.f32 %v6453, 0.6931472
          %v6455 = vlog2.pop %v6336
          %v6456 = vmul.f32 %v6455, 0.6931472
          %v6457 = vlog2.pop %v6337
          %v6458 = vmul.f32 %v6457, 0.6931472
          %v6459 = vlog2.pop %v6338
          %v6460 = vmul.f32 %v6459, 0.6931472
          %v6461 = vlog2.pop %v6339
          %v6462 = vmul.f32 %v6461, 0.6931472
          %v6463 = vlog2.pop %v6340
          %v6464 = vmul.f32 %v6463, 0.6931472
          %v6465 = vlog2.pop %v6341
          %v6466 = vmul.f32 %v6465, 0.6931472
          %v6467 = vlog2.pop %v6342
          %v6468 = vmul.f32 %v6467, 0.6931472
          %v6469 = vlog2.pop %v6343
          %v6470 = vmul.f32 %v6469, 0.6931472
          %v6471 = vlog2.pop %v6344
          %v6472 = vmul.f32 %v6471, 0.6931472
          %v6473 = vsub.f32 %v6346, %v6025
          %v6474 = vsub.f32 %v6348, %v6026
          %v6475 = vsub.f32 %v6350, %v6027
          %v6476 = vsub.f32 %v6352, %v6028
          %v6477 = vsub.f32 %v6354, %v6029
          %v6478 = vsub.f32 %v6356, %v6030
          %v6479 = vsub.f32 %v6358, %v6031
          %v6480 = vsub.f32 %v6360, %v6032
          %v6481 = vsub.f32 %v6362, %v6033
          %v6482 = vsub.f32 %v6364, %v6034
          %v6483 = vsub.f32 %v6366, %v6035
          %v6484 = vsub.f32 %v6368, %v6036
          %v6485 = vsub.f32 %v6370, %v6037
          %v6486 = vsub.f32 %v6372, %v6038
          %v6487 = vsub.f32 %v6374, %v6039
          %v6488 = vsub.f32 %v6376, %v6040
          %v6489 = vsub.f32 %v6378, %v6041
          %v6490 = vsub.f32 %v6380, %v6042
          %v6491 = vsub.f32 %v6382, %v6043
          %v6492 = vsub.f32 %v6384, %v6044
          %v6493 = vsub.f32 %v6386, %v6045
          %v6494 = vsub.f32 %v6388, %v6046
          %v6495 = vsub.f32 %v6390, %v6047
          %v6496 = vsub.f32 %v6392, %v6048
          %v6497 = vsub.f32 %v6394, %v6049
          %v6498 = vsub.f32 %v6396, %v6050
          %v6499 = vsub.f32 %v6398, %v6051
          %v6500 = vsub.f32 %v6400, %v6052
          %v6501 = vsub.f32 %v6402, %v6053
          %v6502 = vsub.f32 %v6404, %v6054
          %v6503 = vsub.f32 %v6406, %v6055
          %v6504 = vsub.f32 %v6408, %v6056
          %v6505 = vsub.f32 %v6410, %v6057
          %v6506 = vsub.f32 %v6412, %v6058
          %v6507 = vsub.f32 %v6414, %v6059
          %v6508 = vsub.f32 %v6416, %v6060
          %v6509 = vsub.f32 %v6418, %v6061
          %v6510 = vsub.f32 %v6420, %v6062
          %v6511 = vsub.f32 %v6422, %v6063
          %v6512 = vsub.f32 %v6424, %v6064
          %v6513 = vsub.f32 %v6426, %v6065
          %v6514 = vsub.f32 %v6428, %v6066
          %v6515 = vsub.f32 %v6430, %v6067
          %v6516 = vsub.f32 %v6432, %v6068
          %v6517 = vsub.f32 %v6434, %v6069
          %v6518 = vsub.f32 %v6436, %v6070
          %v6519 = vsub.f32 %v6438, %v6071
          %v6520 = vsub.f32 %v6440, %v6072
          %v6521 = vsub.f32 %v6442, %v6073
          %v6522 = vsub.f32 %v6444, %v6074
          %v6523 = vsub.f32 %v6446, %v6075
          %v6524 = vsub.f32 %v6448, %v6076
          %v6525 = vsub.f32 %v6450, %v6077
          %v6526 = vsub.f32 %v6452, %v6078
          %v6527 = vsub.f32 %v6454, %v6079
          %v6528 = vsub.f32 %v6456, %v6080
          %v6529 = vsub.f32 %v6458, %v6081
          %v6530 = vsub.f32 %v6460, %v6082
          %v6531 = vsub.f32 %v6462, %v6083
          %v6532 = vsub.f32 %v6464, %v6084
          %v6533 = vsub.f32 %v6466, %v6085
          %v6534 = vsub.f32 %v6468, %v6086
          %v6535 = vsub.f32 %v6470, %v6087
          %v6536 = vsub.f32 %v6472, %v6088
          %v6537 = vsel %vm3036, %v6473, 0.0
          %v6538 = vsel %vm3036, %v6474, 0.0
          %v6539 = vadd.f32 %v6537, %v6538
          %v6540 = vsel %vm3036, %v6475, 0.0
          %v6541 = vadd.f32 %v6539, %v6540
          %v6542 = vsel %vm3036, %v6476, 0.0
          %v6543 = vadd.f32 %v6541, %v6542
          %v6544 = vsel %vm3036, %v6477, 0.0
          %v6545 = vadd.f32 %v6543, %v6544
          %v6546 = vsel %vm3036, %v6478, 0.0
          %v6547 = vadd.f32 %v6545, %v6546
          %v6548 = vsel %vm3036, %v6479, 0.0
          %v6549 = vadd.f32 %v6547, %v6548
          %v6550 = vsel %vm3036, %v6480, 0.0
          %v6551 = vadd.f32 %v6549, %v6550
          %v6552 = vsel %vm3036, %v6481, 0.0
          %v6553 = vadd.f32 %v6551, %v6552
          %v6554 = vsel %vm3036, %v6482, 0.0
          %v6555 = vadd.f32 %v6553, %v6554
          %v6556 = vsel %vm3036, %v6483, 0.0
          %v6557 = vadd.f32 %v6555, %v6556
          %v6558 = vsel %vm3036, %v6484, 0.0
          %v6559 = vadd.f32 %v6557, %v6558
          %v6560 = vsel %vm3036, %v6485, 0.0
          %v6561 = vadd.f32 %v6559, %v6560
          %v6562 = vsel %vm3036, %v6486, 0.0
          %v6563 = vadd.f32 %v6561, %v6562
          %v6564 = vsel %vm3036, %v6487, 0.0
          %v6565 = vadd.f32 %v6563, %v6564
          %v6566 = vsel %vm3036, %v6488, 0.0
          %v6567 = vadd.f32 %v6565, %v6566
          %v6568 = vsel %vm3036, %v6489, 0.0
          %v6569 = vadd.f32 %v6567, %v6568
          %v6570 = vsel %vm3036, %v6490, 0.0
          %v6571 = vadd.f32 %v6569, %v6570
          %v6572 = vsel %vm3036, %v6491, 0.0
          %v6573 = vadd.f32 %v6571, %v6572
          %v6574 = vsel %vm3036, %v6492, 0.0
          %v6575 = vadd.f32 %v6573, %v6574
          %v6576 = vsel %vm3036, %v6493, 0.0
          %v6577 = vadd.f32 %v6575, %v6576
          %v6578 = vsel %vm3036, %v6494, 0.0
          %v6579 = vadd.f32 %v6577, %v6578
          %v6580 = vsel %vm3036, %v6495, 0.0
          %v6581 = vadd.f32 %v6579, %v6580
          %v6582 = vsel %vm3036, %v6496, 0.0
          %v6583 = vadd.f32 %v6581, %v6582
          %v6584 = vsel %vm3036, %v6497, 0.0
          %v6585 = vadd.f32 %v6583, %v6584
          %v6586 = vsel %vm3036, %v6498, 0.0
          %v6587 = vadd.f32 %v6585, %v6586
          %v6588 = vsel %vm3036, %v6499, 0.0
          %v6589 = vadd.f32 %v6587, %v6588
          %v6590 = vsel %vm3036, %v6500, 0.0
          %v6591 = vadd.f32 %v6589, %v6590
          %v6592 = vsel %vm3036, %v6501, 0.0
          %v6593 = vadd.f32 %v6591, %v6592
          %v6594 = vsel %vm3036, %v6502, 0.0
          %v6595 = vadd.f32 %v6593, %v6594
          %v6596 = vsel %vm3036, %v6503, 0.0
          %v6597 = vadd.f32 %v6595, %v6596
          %v6598 = vsel %vm3036, %v6504, 0.0
          %v6599 = vadd.f32 %v6597, %v6598
          %v6600 = vsel %vm3036, %v6505, 0.0
          %v6601 = vadd.f32 %v6599, %v6600
          %v6602 = vsel %vm3036, %v6506, 0.0
          %v6603 = vadd.f32 %v6601, %v6602
          %v6604 = vsel %vm3036, %v6507, 0.0
          %v6605 = vadd.f32 %v6603, %v6604
          %v6606 = vsel %vm3036, %v6508, 0.0
          %v6607 = vadd.f32 %v6605, %v6606
          %v6608 = vsel %vm3036, %v6509, 0.0
          %v6609 = vadd.f32 %v6607, %v6608
          %v6610 = vsel %vm3036, %v6510, 0.0
          %v6611 = vadd.f32 %v6609, %v6610
          %v6612 = vsel %vm3036, %v6511, 0.0
          %v6613 = vadd.f32 %v6611, %v6612
          %v6614 = vsel %vm3036, %v6512, 0.0
          %v6615 = vadd.f32 %v6613, %v6614
          %v6616 = vsel %vm3036, %v6513, 0.0
          %v6617 = vadd.f32 %v6615, %v6616
          %v6618 = vsel %vm3036, %v6514, 0.0
          %v6619 = vadd.f32 %v6617, %v6618
          %v6620 = vsel %vm3036, %v6515, 0.0
          %v6621 = vadd.f32 %v6619, %v6620
          %v6622 = vsel %vm3036, %v6516, 0.0
          %v6623 = vadd.f32 %v6621, %v6622
          %v6624 = vsel %vm3036, %v6517, 0.0
          %v6625 = vadd.f32 %v6623, %v6624
          %v6626 = vsel %vm3036, %v6518, 0.0
          %v6627 = vadd.f32 %v6625, %v6626
          %v6628 = vsel %vm3036, %v6519, 0.0
          %v6629 = vadd.f32 %v6627, %v6628
          %v6630 = vsel %vm3036, %v6520, 0.0
          %v6631 = vadd.f32 %v6629, %v6630
          %v6632 = vsel %vm3036, %v6521, 0.0
          %v6633 = vadd.f32 %v6631, %v6632
          %v6634 = vsel %vm3036, %v6522, 0.0
          %v6635 = vadd.f32 %v6633, %v6634
          %v6636 = vsel %vm3036, %v6523, 0.0
          %v6637 = vadd.f32 %v6635, %v6636
          %v6638 = vsel %vm3036, %v6524, 0.0
          %v6639 = vadd.f32 %v6637, %v6638
          %v6640 = vsel %vm3036, %v6525, 0.0
          %v6641 = vadd.f32 %v6639, %v6640
          %v6642 = vsel %vm3036, %v6526, 0.0
          %v6643 = vadd.f32 %v6641, %v6642
          %v6644 = vsel %vm3036, %v6527, 0.0
          %v6645 = vadd.f32 %v6643, %v6644
          %v6646 = vsel %vm3036, %v6528, 0.0
          %v6647 = vadd.f32 %v6645, %v6646
          %v6648 = vsel %vm3036, %v6529, 0.0
          %v6649 = vadd.f32 %v6647, %v6648
          %v6650 = vsel %vm3036, %v6530, 0.0
          %v6651 = vadd.f32 %v6649, %v6650
          %v6652 = vsel %vm3036, %v6531, 0.0
          %v6653 = vadd.f32 %v6651, %v6652
          %v6654 = vsel %vm3036, %v6532, 0.0
          %v6655 = vadd.f32 %v6653, %v6654
          %v6656 = vsel %vm3036, %v6533, 0.0
          %v6657 = vadd.f32 %v6655, %v6656
          %v6658 = vsel %vm3036, %v6534, 0.0
          %v6659 = vadd.f32 %v6657, %v6658
          %v6660 = vsel %vm3036, %v6535, 0.0
          %v6661 = vadd.f32 %v6659, %v6660
          %v6662 = vsel %vm3036, %v6536, 0.0
          %v6663 = vadd.f32 %v6661, %v6662
          %6664 = vadd.xlane.f32.xlu0 %v6663
          %v6665 = vpop.xlane.xlu0 %6664
          %v6666 = vrot.slane %v6665, 4
          %v6667 = vadd.f32 %v6665, %v6666
          %v6668 = vrot.slane %v6667, 2
          %v6669 = vadd.f32 %v6667, %v6668
          %v6670 = vrot.slane %v6669, 1
          %v6671 = vadd.f32 %v6669, %v6670
          %s6672 = vtos %v6671
          %v6673 = vstv %s6672
          %v6674 = vadd.f32 %v6673, 0.0
          %6675 = vst [vmem:[%s367] sm:$0xff] %v6674
        $region60: #{tpu_custom_call.1} parent=35 // pred_fallthru
          _
        %s6676 = sand.u32 %s168, 1
        %s6677 = scalar_lea.sflag [#allocation7], %s6676
        %s6678 = sand.u32 %s168, 1
        %s6679 = smul.addr %s6678, 8
        %s6680 = scalar_lea.vmem [#allocation13], %s6679
        // Predicated region
        $region61: #{tpu_custom_call.1} parent=35 // pred_check
          %p6681 = pneg %p178
        $region62: #{tpu_custom_call.1} parent=35 // pred_check_branch
          %6683 = sbr.rel (%p6681) target = $region64
        $region63: #{tpu_custom_call.1} parent=35 // pred_region
          %s6685 = ssub.s32 128, 128
          %6686 = vsyncadd %s6677, %s6685
          %s6687 = smul.addr %s32, 2
          %s6688 = sadd.s32 %s33, %s6687
          %s6689 = smul.addr %s6688, 128
          %s6690 = scalar_lea.hbm %s4, %s6689
          %s6692 = sshll.u32 %s6680, 4
          %s6693 = int_to_ptr.vmem [resolvable:$true] %s6692
          %6695 = dma.vmem_to_hbm [thread:$0]  %s6693, 128, %s6690, %s6677
        $region64: #{tpu_custom_call.1} parent=35 // pred_fallthru
          _
      $region36: #{tpu_custom_call.1} parent=5 // pred_fallthru
        _
      %p6696 = scmp.le.s32.totalorder 2, %s22
      // Predicated region
      $region65: #{tpu_custom_call.1} parent=5 // pred_check
        %p6697 = pneg %p6696
      $region66: #{tpu_custom_call.1} parent=5 // pred_check_branch
        %6699 = sbr.rel (%p6697) target = $region68
      $region67: #{tpu_custom_call.1} parent=5 // pred_region
        %s6700 = ssub.s32 %s22, 2
        // Predicated region
        $region69: #{tpu_custom_call.1} parent=67 // pred_check
          %p6701 = pneg %p184
        $region70: #{tpu_custom_call.1} parent=67 // pred_check_branch
          %6703 = sbr.rel (%p6701) target = $region72
        $region71: #{tpu_custom_call.1} parent=67 // pred_region
          %s6704 = sand.u32 %s169, 1
          %s6705 = scalar_lea.sflag [#allocation7], %s6704
          %s6706 = sand.u32 %s169, 1
          %s6707 = smul.addr %s6706, 8
          %s6708 = scalar_lea.vmem [#allocation13], %s6707
          %6709 = dma.done %s6705, 128
        $region72: #{tpu_custom_call.1} parent=67 // pred_fallthru
          _
      $region68: #{tpu_custom_call.1} parent=5 // pred_fallthru
        _
    $region6: #{tpu_custom_call.1} parent=1 // loop_footer
      %s26 = sadd.s32 1, %s22
    $region7: #{tpu_custom_call.1} parent=1 // loop_footer_branch
      %21 = sbr.rel target = $region3
    $region8: #{tpu_custom_call.1} parent=1 // loop_exit
      _
    %6710 = vsyncpa [#allocation6], 1
    %s6711 = scalar_lea.sflag [#allocation6], 1
    %6712 = vsyncpa %s6711, 1
    %6713 = vsyncpa [#allocation9], 1
    %s6714 = scalar_lea.sflag [#allocation9], 1
    %6715 = vsyncpa %s6714, 1
    %6716 = vsyncpa [#allocation12], 1
    %s6717 = scalar_lea.sflag [#allocation12], 1
    %6718 = vsyncpa %s6717, 1
    %6719 = vsyncpa [#allocation7], 1
    %s6720 = scalar_lea.sflag [#allocation7], 1
    %6721 = vsyncpa %s6720, 1

</llo_original>
